<compile_context>
chip_gen: v6e
topology: v6e:2x2x1
jax: 0.10.0
libtpu: 0.0.40
codegen_flags: <defaults>
</compile_context>

<pallas_src>
import jax
import jax.numpy as jnp
from jax.experimental import pallas as pl
from jax.experimental.pallas import tpu as pltpu

D_IN = 768
D_HID = 1380
D_HID_PAD = 1408   # 11 * 128 — lane-dense hidden dim
D_OUT = 768


def _round_up(n, m):
    return ((n + m - 1) // m) * m


def _mlp_kernel(x_ref, w1_ref, b1_ref, w2_ref, b2_ref, o_ref):
    # In-kernel cast to bf16 (hides under the MXU shadow; single HBM read of x).
    x = x_ref[...].astype(jnp.bfloat16)
    # fc1: bf16 operands on the MXU, f32 accumulation.
    h = jnp.dot(x, w1_ref[...], preferred_element_type=jnp.float32)
    # Bias add + ReLU in f32 (clean VPU path on all chips, incl. v5e's no-bf16 VPU).
    h = jnp.maximum(h + b1_ref[...], 0.0)
    # fc2: downcast the LHS to bf16 only for the matmul operands; accumulate in f32.
    y = jnp.dot(h.astype(jnp.bfloat16), w2_ref[...],
                preferred_element_type=jnp.float32)
    o_ref[...] = (y + b2_ref[...]).astype(o_ref.dtype)


def prepare_params(w1, b1, w2, b2):
    """One-time layout plumbing (do this at model init, NOT per forward call).

    w1 : (768, 1380), b1 : (1380,)   [already transposed vs. torch .weight]
    w2 : (1380, 768), b2 : (768,)
    Returns padded bf16 weights + f32 biases ready for the kernel.
    """
    w1p = jnp.pad(w1, ((0, 0), (0, D_HID_PAD - D_HID))).astype(jnp.bfloat16)
    b1p = jnp.pad(jnp.reshape(b1, (1, -1)).astype(jnp.float32),
                  ((0, 0), (0, D_HID_PAD - D_HID)))
    w2p = jnp.pad(w2, ((0, D_HID_PAD - D_HID), (0, 0))).astype(jnp.bfloat16)
    b2p = jnp.reshape(b2, (1, -1)).astype(jnp.float32)
    return w1p, b1p, w2p, b2p


def text_encoder_forward(x, w1p, b1p, w2p, b2p, *, tm=512,
                         out_dtype=jnp.bfloat16):
    """relu(x @ W1 + b1) @ W2 + b2, on pre-prepared (padded, bf16) weights.

    x        : (..., 768) float (f32 or bf16; cast happens inside the kernel)
    w1p/b1p/w2p/b2p : outputs of prepare_params
    tm       : row tile (512 default; clamped for tiny inputs)
    Returns (..., 768) in out_dtype.
    """
    lead_shape = x.shape[:-1]
    x2d = x.reshape(-1, D_IN)            # row-major flatten: metadata-only
    M = x2d.shape[0]

    # Clamp the tile for tiny inputs; keep it a multiple of 16 (bf16 sublane pack).
    tm = min(tm, _round_up(M, 16))
    grid = (pl.cdiv(M, tm),)             # ragged last block is clipped on store

    out_itemsize = jnp.dtype(out_dtype).itemsize
    flops = 4 * M * D_IN * D_HID_PAD
    bytes_accessed = (M * D_IN * x2d.dtype.itemsize
                      + M * D_OUT * out_itemsize
                      + D_IN * D_HID_PAD * 2      # W1 bf16
                      + D_HID_PAD * D_OUT * 2     # W2 bf16
                      + D_HID_PAD * 4 + D_OUT * 4)

    out = pl.pallas_call(
        _mlp_kernel,
        out_shape=jax.ShapeDtypeStruct((M, D_OUT), out_dtype),
        grid_spec=pltpu.PrefetchScalarGridSpec(
            num_scalar_prefetch=0,
            grid=grid,
            in_specs=[
                pl.BlockSpec((tm, D_IN), lambda i: (i, 0)),          # x tile (native dtype)
                pl.BlockSpec((D_IN, D_HID_PAD), lambda i: (0, 0)),   # W1, VMEM-resident
                pl.BlockSpec((1, D_HID_PAD), lambda i: (0, 0)),      # b1 (f32)
                pl.BlockSpec((D_HID_PAD, D_OUT), lambda i: (0, 0)),  # W2, VMEM-resident
                pl.BlockSpec((1, D_OUT), lambda i: (0, 0)),          # b2 (f32)
            ],
            out_specs=pl.BlockSpec((tm, D_OUT), lambda i: (i, 0)),
        ),
        compiler_params=pltpu.CompilerParams(
            dimension_semantics=("parallel",),   # megacore-shards row tiles on v7x
            vmem_limit_bytes=48 << 20,           # actual footprint ~18 MiB at tm=512
        ),
        cost_estimate=pl.CostEstimate(flops=flops, transcendentals=0,
                                      bytes_accessed=bytes_accessed),
    )(x2d, w1p, b1p, w2p, b2p)

    return out.reshape(*lead_shape, D_OUT)


def init_params(key):
    """PyTorch nn.Linear-style init: U(-1/sqrt(fan_in), 1/sqrt(fan_in))."""
    k1, k2, k3, k4 = jax.random.split(key, 4)
    bound1 = 1.0 / jnp.sqrt(jnp.float32(D_IN))
    bound2 = 1.0 / jnp.sqrt(jnp.float32(D_HID))
    w1 = jax.random.uniform(k1, (D_IN, D_HID), jnp.float32, -bound1, bound1)
    b1 = jax.random.uniform(k2, (D_HID,), jnp.float32, -bound1, bound1)
    w2 = jax.random.uniform(k3, (D_HID, D_OUT), jnp.float32, -bound2, bound2)
    b2 = jax.random.uniform(k4, (D_OUT,), jnp.float32, -bound2, bound2)
    return w1, b1, w2, b2


def reference_forward_bf16(x, w1, b1, w2, b2):
    """Reference matching the kernel's dtype policy (bf16 operands, f32 accum).

    NOTE: differs from an f32 PyTorch reference at the ~1e-2 relative level.
    """
    h = jnp.dot(x.astype(jnp.bfloat16), w1.astype(jnp.bfloat16),
                preferred_element_type=jnp.float32) + b1.reshape(1, -1)
    h = jnp.maximum(h, 0.0)
    y = jnp.dot(h.astype(jnp.bfloat16), w2.astype(jnp.bfloat16),
                preferred_element_type=jnp.float32)
    return y + b2.reshape(1, -1)


if __name__ == "__main__":
    key = jax.random.PRNGKey(0)
    kp, kx1, kx2 = jax.random.split(key, 3)
    w1, b1, w2, b2 = init_params(kp)

    # One-time weight prep (hoisted out of the forward path).
    w1p, b1p, w2p, b2p = prepare_params(w1, b1, w2, b2)

    # ---- test 1: small "text" batch: batch=2, seq=8, hidden=768 ----
    batch, seq = 2, 8
    x = jax.random.normal(kx1, (batch, seq, D_IN), jnp.float32)
    out = text_encoder_forward(x, w1p, b1p, w2p, b2p)
    jax.block_until_ready(out)

    ref = reference_forward_bf16(x.reshape(-1, D_IN), w1, b1, w2, b2)
    ref = ref.reshape(batch, seq, D_OUT)
    assert out.shape == (batch, seq, D_OUT)
    assert jnp.max(jnp.abs(out.astype(jnp.float32) - ref)) < 1e-2

    # ---- test 2: CLIP-like ragged M (2*77=154 rows, exercises block clipping) ----
    batch2, seq2 = 2, 77
    x2 = jax.random.normal(kx2, (batch2, seq2, D_IN), jnp.float32)
    out2 = text_encoder_forward(x2, w1p, b1p, w2p, b2p)
    jax.block_until_ready(out2)

    ref2 = reference_forward_bf16(x2.reshape(-1, D_IN), w1, b1, w2, b2)
    ref2 = ref2.reshape(batch2, seq2, D_OUT)
    assert out2.shape == (batch2, seq2, D_OUT)
    assert jnp.max(jnp.abs(out2.astype(jnp.float32) - ref2)) < 1e-2

    print("KERNEL_OK")
</pallas_src>

<mosaic_0001>
module attributes {stable_mosaic.version = 11 : i64} {
  func.func @_mlp_kernel(%arg0: i32, %arg1: memref<16x768xf32, #tpu.memory_space<vmem>>, %arg2: memref<768x1408xbf16, #tpu.memory_space<vmem>>, %arg3: memref<1x1408xf32, #tpu.memory_space<vmem>>, %arg4: memref<1408x768xbf16, #tpu.memory_space<vmem>>, %arg5: memref<1x768xf32, #tpu.memory_space<vmem>>, %arg6: memref<16x768xbf16, #tpu.memory_space<vmem>>) attributes {dimension_semantics = [#tpu.dimension_semantics<parallel>], iteration_bounds = array<i64: 1>, scalar_prefetch = 0 : i64, scratch_operands = 0 : i64, tpu.core_type = #tpu.core_type<tc>, window_params = [{transform_indices = @transform_0, window_bounds = array<i64: 16, 768>}, {pipeline_mode = #tpu.pipeline_mode<synchronous>, transform_indices = @transform_1, window_bounds = array<i64: 768, 1408>}, {pipeline_mode = #tpu.pipeline_mode<synchronous>, transform_indices = @transform_2, window_bounds = array<i64: 1, 1408>}, {pipeline_mode = #tpu.pipeline_mode<synchronous>, transform_indices = @transform_3, window_bounds = array<i64: 1408, 768>}, {pipeline_mode = #tpu.pipeline_mode<synchronous>, transform_indices = @transform_4, window_bounds = array<i64: 1, 768>}, {transform_indices = @transform_5, window_bounds = array<i64: 16, 768>}]} {
    %c0 = arith.constant 0 : index
    %c0_0 = arith.constant 0 : index
    %0 = vector.load %arg1[%c0, %c0_0] : memref<16x768xf32, #tpu.memory_space<vmem>>, vector<16x768xf32>
    %1 = arith.truncf %0 : vector<16x768xf32> to vector<16x768xbf16>
    %c0_1 = arith.constant 0 : index
    %c0_2 = arith.constant 0 : index
    %2 = vector.load %arg2[%c0_1, %c0_2] : memref<768x1408xbf16, #tpu.memory_space<vmem>>, vector<768x1408xbf16>
    %cst = arith.constant dense<0.000000e+00> : vector<16x1408xf32>
    %3 = tpu.matmul %1, %2, %cst {dimension_numbers = #tpu.dot_dimension_numbers<[1], [0], [0], [1], [0, 0, 1, 1], [], []>} : vector<16x768xbf16>, vector<768x1408xbf16>, vector<16x1408xf32> -> vector<16x1408xf32>
    %c0_3 = arith.constant 0 : index
    %c0_4 = arith.constant 0 : index
    %4 = vector.load %arg3[%c0_3, %c0_4] : memref<1x1408xf32, #tpu.memory_space<vmem>>, vector<1x1408xf32>
    %5 = vector.broadcast %4 : vector<1x1408xf32> to vector<16x1408xf32>
    %6 = arith.addf %3, %5 : vector<16x1408xf32>
    %cst_5 = arith.constant 0.000000e+00 : f32
    %7 = vector.broadcast %cst_5 : f32 to vector<16x1408xf32>
    %8 = arith.maximumf %6, %7 : vector<16x1408xf32>
    %9 = arith.truncf %8 : vector<16x1408xf32> to vector<16x1408xbf16>
    %c0_6 = arith.constant 0 : index
    %c0_7 = arith.constant 0 : index
    %10 = vector.load %arg4[%c0_6, %c0_7] : memref<1408x768xbf16, #tpu.memory_space<vmem>>, vector<1408x768xbf16>
    %cst_8 = arith.constant dense<0.000000e+00> : vector<16x768xf32>
    %11 = tpu.matmul %9, %10, %cst_8 {dimension_numbers = #tpu.dot_dimension_numbers<[1], [0], [0], [1], [0, 0, 1, 1], [], []>} : vector<16x1408xbf16>, vector<1408x768xbf16>, vector<16x768xf32> -> vector<16x768xf32>
    %c0_9 = arith.constant 0 : index
    %c0_10 = arith.constant 0 : index
    %12 = vector.load %arg5[%c0_9, %c0_10] : memref<1x768xf32, #tpu.memory_space<vmem>>, vector<1x768xf32>
    %13 = vector.broadcast %12 : vector<1x768xf32> to vector<16x768xf32>
    %14 = arith.addf %11, %13 : vector<16x768xf32>
    %15 = arith.truncf %14 : vector<16x768xf32> to vector<16x768xbf16>
    %c0_11 = arith.constant 0 : index
    %c0_12 = arith.constant 0 : index
    %16 = vector.load %arg6[%c0_11, %c0_12] : memref<16x768xbf16, #tpu.memory_space<vmem>>, vector<16x768xbf16>
    tpu.vector_store %arg6[%c0_11, %c0_12], %15 {strides = array<i32>} : memref<16x768xbf16, #tpu.memory_space<vmem>>, vector<16x768xbf16>,
    return
  }
  func.func @transform_0(%arg0: i32) -> (i32, i32) {
    %c0_i32 = arith.constant 0 : i32
    %c0_i32_0 = arith.constant 0 : i32
    return %arg0, %c0_i32 : i32, i32
  }
  func.func @transform_1(%arg0: i32) -> (i32, i32) {
    %c0_i32 = arith.constant 0 : i32
    %c0_i32_0 = arith.constant 0 : i32
    %c0_i32_1 = arith.constant 0 : i32
    return %c0_i32, %c0_i32_0 : i32, i32
  }
  func.func @transform_2(%arg0: i32) -> (i32, i32) {
    %c0_i32 = arith.constant 0 : i32
    %c0_i32_0 = arith.constant 0 : i32
    %c0_i32_1 = arith.constant 0 : i32
    return %c0_i32, %c0_i32_0 : i32, i32
  }
  func.func @transform_3(%arg0: i32) -> (i32, i32) {
    %c0_i32 = arith.constant 0 : i32
    %c0_i32_0 = arith.constant 0 : i32
    %c0_i32_1 = arith.constant 0 : i32
    return %c0_i32, %c0_i32_0 : i32, i32
  }
  func.func @transform_4(%arg0: i32) -> (i32, i32) {
    %c0_i32 = arith.constant 0 : i32
    %c0_i32_0 = arith.constant 0 : i32
    %c0_i32_1 = arith.constant 0 : i32
    return %c0_i32, %c0_i32_0 : i32, i32
  }
  func.func @transform_5(%arg0: i32) -> (i32, i32) {
    %c0_i32 = arith.constant 0 : i32
    %c0_i32_0 = arith.constant 0 : i32
    return %arg0, %c0_i32 : i32, i32
  }
}

</mosaic_0001>

<llo_original>
// kernel: tpu_custom_call.1
$region0: #{tpu_custom_call.1}
  #allocation0 [shape = 'u32[]', space=smem, size = 0x4, offset = 0x4, fixed_abs, tag = 'smem constant byte address 0x4 - core index']
  #allocation1 [shape = 'u32[144,128]{1,0:T(1,128)}', space=vmem, size = 0x12000, scoped, tag = 'internal scratch']
  %s0 = inlined_call_operand.hbm [shape: f32[16,768], index: 0, kind: input, shape index: {}]
  %s1 = inlined_call_operand.hbm [shape: bf16[768,1408], index: 1, kind: input, shape index: {}]
  %s2 = inlined_call_operand.hbm [shape: f32[1,1408], index: 2, kind: input, shape index: {}]
  %s3 = inlined_call_operand.hbm [shape: bf16[1408,768], index: 3, kind: input, shape index: {}]
  %s4 = inlined_call_operand.hbm [shape: f32[1,768], index: 4, kind: input, shape index: {}]
  %s5 = inlined_call_operand.hbm [shape: bf16[16,768], index: 5, kind: output, shape index: {}]
  %s6 = sld [smem:[#allocation0]]
  $region50: #{tpu_custom_call.1} parent=0
    _
  %s8 = ssub.s32 1, %s6
  %s9 = scalar_select 0, %s8, %s6
  $region1: #{tpu_custom_call.1} parent=0
    #allocation2 [shape = 'u8[49152]{0}', space=vmem, size = 0xc000, scoped, tag = 'input window, operand 0, single buffered']
    #allocation3 [shape = 's32[1]{0}', space=sflag, size = 0x4, scoped, tag = 'scoped memory for tpu_custom_call.1']
    #allocation4 [shape = 's32[1]{0}', space=sflag, size = 0x4, scoped, tag = 'scoped memory for tpu_custom_call.1']
    #allocation5 [shape = 'u8[2162688]{0}', space=vmem, size = 0x210000, scoped, tag = 'input window, operand 1, single buffered']
    #allocation6 [shape = 's32[1]{0}', space=sflag, size = 0x4, scoped, tag = 'scoped memory for tpu_custom_call.1']
    #allocation7 [shape = 'u8[5632]{0}', space=vmem, size = 0x1800, scoped, tag = 'input window, operand 2, single buffered']
    #allocation8 [shape = 'u8[2162688]{0}', space=vmem, size = 0x210000, scoped, tag = 'input window, operand 3, single buffered']
    #allocation9 [shape = 's32[1]{0}', space=sflag, size = 0x4, scoped, tag = 'scoped memory for tpu_custom_call.1']
    #allocation10 [shape = 'u8[3072]{0}', space=vmem, size = 0xc00, scoped, tag = 'input window, operand 4, single buffered']
    #allocation11 [shape = 'u8[24576]{0}', space=vmem, size = 0x6000, scoped, tag = 'output window, operand 0, single buffered']
    %10 = vsyncpa [#allocation3], 0
    %11 = vsyncpa [#allocation6], 0
    %12 = vsyncpa [#allocation9], 0
    %13 = vsyncpa [#allocation4], 0
    // Predicated region
    $region2: #{tpu_custom_call.1} parent=1 // pred_check
      _
    $region3: #{tpu_custom_call.1} parent=1 // pred_check_branch
      %15 = sbr.rel (0) target = $region5
    $region4: #{tpu_custom_call.1} parent=1 // pred_region
      %s17 = ssub.s32 1536, 1536
      %18 = vsyncadd [#allocation3], %s17
      %s19 = sshll.u32 [#allocation2], 4
      %s20 = int_to_ptr.vmem [resolvable:$true] %s19
      %25 = dma.hbm_to_vmem [thread:$0]  %s0, 1536, %s20, [#allocation3], 768, 768, 48
    $region5: #{tpu_custom_call.1} parent=1 // pred_fallthru
      _
    // Predicated region
    $region6: #{tpu_custom_call.1} parent=1 // pred_check
      _
    $region7: #{tpu_custom_call.1} parent=1 // pred_check_branch
      %27 = sbr.rel (0) target = $region9
    $region8: #{tpu_custom_call.1} parent=1 // pred_region
      %s29 = ssub.s32 67584, 67584
      %30 = vsyncadd [#allocation6], %s29
      %s31 = sshll.u32 [#allocation5], 4
      %s32 = int_to_ptr.vmem [resolvable:$true] %s31
      %37 = dma.hbm_to_vmem [thread:$0]  %s1, 67584, %s32, [#allocation6], 704, 704, 44
    $region9: #{tpu_custom_call.1} parent=1 // pred_fallthru
      _
    // Predicated region
    $region10: #{tpu_custom_call.1} parent=1 // pred_check
      _
    $region11: #{tpu_custom_call.1} parent=1 // pred_check_branch
      %39 = sbr.rel (0) target = $region13
    $region12: #{tpu_custom_call.1} parent=1 // pred_region
      %s41 = ssub.s32 176, 176
      %42 = vsyncadd [#allocation6], %s41
      %s44 = sshll.u32 [#allocation7], 4
      %s45 = int_to_ptr.vmem [resolvable:$true] %s44
      %47 = dma.hbm_to_vmem [thread:$0]  %s2, 176, %s45, [#allocation6]
    $region13: #{tpu_custom_call.1} parent=1 // pred_fallthru
      _
    // Predicated region
    $region14: #{tpu_custom_call.1} parent=1 // pred_check
      _
    $region15: #{tpu_custom_call.1} parent=1 // pred_check_branch
      %49 = sbr.rel (0) target = $region17
    $region16: #{tpu_custom_call.1} parent=1 // pred_region
      %s51 = ssub.s32 67584, 67584
      %52 = vsyncadd [#allocation9], %s51
      %s53 = sshll.u32 [#allocation8], 4
      %s54 = int_to_ptr.vmem [resolvable:$true] %s53
      %59 = dma.hbm_to_vmem [thread:$0]  %s3, 67584, %s54, [#allocation9], 384, 384, 24
    $region17: #{tpu_custom_call.1} parent=1 // pred_fallthru
      _
    // Predicated region
    $region18: #{tpu_custom_call.1} parent=1 // pred_check
      _
    $region19: #{tpu_custom_call.1} parent=1 // pred_check_branch
      %61 = sbr.rel (0) target = $region21
    $region20: #{tpu_custom_call.1} parent=1 // pred_region
      %s63 = ssub.s32 96, 96
      %64 = vsyncadd [#allocation9], %s63
      %s66 = sshll.u32 [#allocation10], 4
      %s67 = int_to_ptr.vmem [resolvable:$true] %s66
      %69 = dma.hbm_to_vmem [thread:$0]  %s4, 96, %s67, [#allocation9]
    $region21: #{tpu_custom_call.1} parent=1 // pred_fallthru
      _
    // Predicated region
    $region22: #{tpu_custom_call.1} parent=1 // pred_check
      _
    $region23: #{tpu_custom_call.1} parent=1 // pred_check_branch
      %71 = sbr.rel (0) target = $region25
    $region24: #{tpu_custom_call.1} parent=1 // pred_region
      %72 = dma.done [#allocation3], 1536
    $region25: #{tpu_custom_call.1} parent=1 // pred_fallthru
      _
    // Predicated region
    $region26: #{tpu_custom_call.1} parent=1 // pred_check
      _
    $region27: #{tpu_custom_call.1} parent=1 // pred_check_branch
      %74 = sbr.rel (0) target = $region29
    $region28: #{tpu_custom_call.1} parent=1 // pred_region
      %75 = dma.done [#allocation6], 67584
    $region29: #{tpu_custom_call.1} parent=1 // pred_fallthru
      _
    // Predicated region
    $region30: #{tpu_custom_call.1} parent=1 // pred_check
      _
    $region31: #{tpu_custom_call.1} parent=1 // pred_check_branch
      %77 = sbr.rel (0) target = $region33
    $region32: #{tpu_custom_call.1} parent=1 // pred_region
      %78 = dma.done [#allocation6], 176
    $region33: #{tpu_custom_call.1} parent=1 // pred_fallthru
      _
    // Predicated region
    $region34: #{tpu_custom_call.1} parent=1 // pred_check
      _
    $region35: #{tpu_custom_call.1} parent=1 // pred_check_branch
      %80 = sbr.rel (0) target = $region37
    $region36: #{tpu_custom_call.1} parent=1 // pred_region
      %81 = dma.done [#allocation9], 67584
    $region37: #{tpu_custom_call.1} parent=1 // pred_fallthru
      _
    // Predicated region
    $region38: #{tpu_custom_call.1} parent=1 // pred_check
      _
    $region39: #{tpu_custom_call.1} parent=1 // pred_check_branch
      %83 = sbr.rel (0) target = $region41
    $region40: #{tpu_custom_call.1} parent=1 // pred_region
      %84 = dma.done [#allocation9], 96
    $region41: #{tpu_custom_call.1} parent=1 // pred_fallthru
      _
    %v86 = vld [vmem:[#allocation2] sm:$0xff]
    %v87 = vld [vmem:[#allocation2 + $0x8] sm:$0xff]
    %v88 = vld [vmem:[#allocation2 + $0x10] sm:$0xff]
    %v89 = vld [vmem:[#allocation2 + $0x18] sm:$0xff]
    %v90 = vld [vmem:[#allocation2 + $0x20] sm:$0xff]
    %v91 = vld [vmem:[#allocation2 + $0x28] sm:$0xff]
    %v92 = vld [vmem:[#allocation2 + $0x30] sm:$0xff]
    %v93 = vld [vmem:[#allocation2 + $0x38] sm:$0xff]
    %v94 = vld [vmem:[#allocation2 + $0x40] sm:$0xff]
    %v95 = vld [vmem:[#allocation2 + $0x48] sm:$0xff]
    %v96 = vld [vmem:[#allocation2 + $0x50] sm:$0xff]
    %v97 = vld [vmem:[#allocation2 + $0x58] sm:$0xff]
    %v98 = vpack.c.bf16 %v92, %v86
    %v99 = vpack.c.bf16 %v93, %v87
    %v100 = vpack.c.bf16 %v94, %v88
    %v101 = vpack.c.bf16 %v95, %v89
    %v102 = vpack.c.bf16 %v96, %v90
    %v103 = vpack.c.bf16 %v97, %v91
    %v104 = vld [vmem:[#allocation5] sm:$0xff]
    %v105 = vld [vmem:[#allocation5 + $0x8] sm:$0xff]
    %v106 = vld [vmem:[#allocation5 + $0x10] sm:$0xff]
    %v107 = vld [vmem:[#allocation5 + $0x18] sm:$0xff]
    %v108 = vld [vmem:[#allocation5 + $0x20] sm:$0xff]
    %v109 = vld [vmem:[#allocation5 + $0x28] sm:$0xf]
    %v110 = vld [vmem:[#allocation5 + $0x2c] sm:$0xff]
    %v111 = vld [vmem:[#allocation5 + $0x34] sm:$0xff]
    %v112 = vld [vmem:[#allocation5 + $0x3c] sm:$0xff]
    %v113 = vld [vmem:[#allocation5 + $0x44] sm:$0xff]
    %v114 = vld [vmem:[#allocation5 + $0x4c] sm:$0xff]
    %v115 = vld [vmem:[#allocation5 + $0x54] sm:$0xf]
    %v116 = vld [vmem:[#allocation5 + $0x58] sm:$0xff]
    %v117 = vld [vmem:[#allocation5 + $0x60] sm:$0xff]
    %v118 = vld [vmem:[#allocation5 + $0x68] sm:$0xff]
    %v119 = vld [vmem:[#allocation5 + $0x70] sm:$0xff]
    %v120 = vld [vmem:[#allocation5 + $0x78] sm:$0xff]
    %v121 = vld [vmem:[#allocation5 + $0x80] sm:$0xf]
    %v122 = vld [vmem:[#allocation5 + $0x84] sm:$0xff]
    %v123 = vld [vmem:[#allocation5 + $0x8c] sm:$0xff]
    %v124 = vld [vmem:[#allocation5 + $0x94] sm:$0xff]
    %v125 = vld [vmem:[#allocation5 + $0x9c] sm:$0xff]
    %v126 = vld [vmem:[#allocation5 + $0xa4] sm:$0xff]
    %v127 = vld [vmem:[#allocation5 + $0xac] sm:$0xf]
    %v128 = vld [vmem:[#allocation5 + $0xb0] sm:$0xff]
    %v129 = vld [vmem:[#allocation5 + $0xb8] sm:$0xff]
    %v130 = vld [vmem:[#allocation5 + $0xc0] sm:$0xff]
    %v131 = vld [vmem:[#allocation5 + $0xc8] sm:$0xff]
    %v132 = vld [vmem:[#allocation5 + $0xd0] sm:$0xff]
    %v133 = vld [vmem:[#allocation5 + $0xd8] sm:$0xf]
    %v134 = vld [vmem:[#allocation5 + $0xdc] sm:$0xff]
    %v135 = vld [vmem:[#allocation5 + $0xe4] sm:$0xff]
    %v136 = vld [vmem:[#allocation5 + $0xec] sm:$0xff]
    %v137 = vld [vmem:[#allocation5 + $0xf4] sm:$0xff]
    %v138 = vld [vmem:[#allocation5 + $0xfc] sm:$0xff]
    %v139 = vld [vmem:[#allocation5 + $0x104] sm:$0xf]
    %v140 = vld [vmem:[#allocation5 + $0x108] sm:$0xff]
    %v141 = vld [vmem:[#allocation5 + $0x110] sm:$0xff]
    %v142 = vld [vmem:[#allocation5 + $0x118] sm:$0xff]
    %v143 = vld [vmem:[#allocation5 + $0x120] sm:$0xff]
    %v144 = vld [vmem:[#allocation5 + $0x128] sm:$0xff]
    %v145 = vld [vmem:[#allocation5 + $0x130] sm:$0xf]
    %v146 = vld [vmem:[#allocation5 + $0x134] sm:$0xff]
    %v147 = vld [vmem:[#allocation5 + $0x13c] sm:$0xff]
    %v148 = vld [vmem:[#allocation5 + $0x144] sm:$0xff]
    %v149 = vld [vmem:[#allocation5 + $0x14c] sm:$0xff]
    %v150 = vld [vmem:[#allocation5 + $0x154] sm:$0xff]
    %v151 = vld [vmem:[#allocation5 + $0x15c] sm:$0xf]
    %v152 = vld [vmem:[#allocation5 + $0x160] sm:$0xff]
    %v153 = vld [vmem:[#allocation5 + $0x168] sm:$0xff]
    %v154 = vld [vmem:[#allocation5 + $0x170] sm:$0xff]
    %v155 = vld [vmem:[#allocation5 + $0x178] sm:$0xff]
    %v156 = vld [vmem:[#allocation5 + $0x180] sm:$0xff]
    %v157 = vld [vmem:[#allocation5 + $0x188] sm:$0xf]
    %v158 = vld [vmem:[#allocation5 + $0x18c] sm:$0xff]
    %v159 = vld [vmem:[#allocation5 + $0x194] sm:$0xff]
    %v160 = vld [vmem:[#allocation5 + $0x19c] sm:$0xff]
    %v161 = vld [vmem:[#allocation5 + $0x1a4] sm:$0xff]
    %v162 = vld [vmem:[#allocation5 + $0x1ac] sm:$0xff]
    %v163 = vld [vmem:[#allocation5 + $0x1b4] sm:$0xf]
    %v164 = vld [vmem:[#allocation5 + $0x1b8] sm:$0xff]
    %v165 = vld [vmem:[#allocation5 + $0x1c0] sm:$0xff]
    %v166 = vld [vmem:[#allocation5 + $0x1c8] sm:$0xff]
    %v167 = vld [vmem:[#allocation5 + $0x1d0] sm:$0xff]
    %v168 = vld [vmem:[#allocation5 + $0x1d8] sm:$0xff]
    %v169 = vld [vmem:[#allocation5 + $0x1e0] sm:$0xf]
    %v170 = vld [vmem:[#allocation5 + $0x1e4] sm:$0xff]
    %v171 = vld [vmem:[#allocation5 + $0x1ec] sm:$0xff]
    %v172 = vld [vmem:[#allocation5 + $0x1f4] sm:$0xff]
    %v173 = vld [vmem:[#allocation5 + $0x1fc] sm:$0xff]
    %v174 = vld [vmem:[#allocation5 + $0x204] sm:$0xff]
    %v175 = vld [vmem:[#allocation5 + $0x20c] sm:$0xf]
    %v176 = vld [vmem:[#allocation5 + $0x210] sm:$0xff]
    %v177 = vld [vmem:[#allocation5 + $0x218] sm:$0xff]
    %v178 = vld [vmem:[#allocation5 + $0x220] sm:$0xff]
    %v179 = vld [vmem:[#allocation5 + $0x228] sm:$0xff]
    %v180 = vld [vmem:[#allocation5 + $0x230] sm:$0xff]
    %v181 = vld [vmem:[#allocation5 + $0x238] sm:$0xf]
    %v182 = vld [vmem:[#allocation5 + $0x23c] sm:$0xff]
    %v183 = vld [vmem:[#allocation5 + $0x244] sm:$0xff]
    %v184 = vld [vmem:[#allocation5 + $0x24c] sm:$0xff]
    %v185 = vld [vmem:[#allocation5 + $0x254] sm:$0xff]
    %v186 = vld [vmem:[#allocation5 + $0x25c] sm:$0xff]
    %v187 = vld [vmem:[#allocation5 + $0x264] sm:$0xf]
    %v188 = vld [vmem:[#allocation5 + $0x268] sm:$0xff]
    %v189 = vld [vmem:[#allocation5 + $0x270] sm:$0xff]
    %v190 = vld [vmem:[#allocation5 + $0x278] sm:$0xff]
    %v191 = vld [vmem:[#allocation5 + $0x280] sm:$0xff]
    %v192 = vld [vmem:[#allocation5 + $0x288] sm:$0xff]
    %v193 = vld [vmem:[#allocation5 + $0x290] sm:$0xf]
    %v194 = vld [vmem:[#allocation5 + $0x294] sm:$0xff]
    %v195 = vld [vmem:[#allocation5 + $0x29c] sm:$0xff]
    %v196 = vld [vmem:[#allocation5 + $0x2a4] sm:$0xff]
    %v197 = vld [vmem:[#allocation5 + $0x2ac] sm:$0xff]
    %v198 = vld [vmem:[#allocation5 + $0x2b4] sm:$0xff]
    %v199 = vld [vmem:[#allocation5 + $0x2bc] sm:$0xf]
    %v200 = vld [vmem:[#allocation5 + $0x2c0] sm:$0xff]
    %v201 = vld [vmem:[#allocation5 + $0x2c8] sm:$0xff]
    %v202 = vld [vmem:[#allocation5 + $0x2d0] sm:$0xff]
    %v203 = vld [vmem:[#allocation5 + $0x2d8] sm:$0xff]
    %v204 = vld [vmem:[#allocation5 + $0x2e0] sm:$0xff]
    %v205 = vld [vmem:[#allocation5 + $0x2e8] sm:$0xf]
    %v206 = vld [vmem:[#allocation5 + $0x2ec] sm:$0xff]
    %v207 = vld [vmem:[#allocation5 + $0x2f4] sm:$0xff]
    %v208 = vld [vmem:[#allocation5 + $0x2fc] sm:$0xff]
    %v209 = vld [vmem:[#allocation5 + $0x304] sm:$0xff]
    %v210 = vld [vmem:[#allocation5 + $0x30c] sm:$0xff]
    %v211 = vld [vmem:[#allocation5 + $0x314] sm:$0xf]
    %v212 = vld [vmem:[#allocation5 + $0x318] sm:$0xff]
    %v213 = vld [vmem:[#allocation5 + $0x320] sm:$0xff]
    %v214 = vld [vmem:[#allocation5 + $0x328] sm:$0xff]
    %v215 = vld [vmem:[#allocation5 + $0x330] sm:$0xff]
    %v216 = vld [vmem:[#allocation5 + $0x338] sm:$0xff]
    %v217 = vld [vmem:[#allocation5 + $0x340] sm:$0xf]
    %v218 = vld [vmem:[#allocation5 + $0x344] sm:$0xff]
    %v219 = vld [vmem:[#allocation5 + $0x34c] sm:$0xff]
    %v220 = vld [vmem:[#allocation5 + $0x354] sm:$0xff]
    %v221 = vld [vmem:[#allocation5 + $0x35c] sm:$0xff]
    %v222 = vld [vmem:[#allocation5 + $0x364] sm:$0xff]
    %v223 = vld [vmem:[#allocation5 + $0x36c] sm:$0xf]
    %v224 = vld [vmem:[#allocation5 + $0x370] sm:$0xff]
    %v225 = vld [vmem:[#allocation5 + $0x378] sm:$0xff]
    %v226 = vld [vmem:[#allocation5 + $0x380] sm:$0xff]
    %v227 = vld [vmem:[#allocation5 + $0x388] sm:$0xff]
    %v228 = vld [vmem:[#allocation5 + $0x390] sm:$0xff]
    %v229 = vld [vmem:[#allocation5 + $0x398] sm:$0xf]
    %v230 = vld [vmem:[#allocation5 + $0x39c] sm:$0xff]
    %v231 = vld [vmem:[#allocation5 + $0x3a4] sm:$0xff]
    %v232 = vld [vmem:[#allocation5 + $0x3ac] sm:$0xff]
    %v233 = vld [vmem:[#allocation5 + $0x3b4] sm:$0xff]
    %v234 = vld [vmem:[#allocation5 + $0x3bc] sm:$0xff]
    %v235 = vld [vmem:[#allocation5 + $0x3c4] sm:$0xf]
    %v236 = vld [vmem:[#allocation5 + $0x3c8] sm:$0xff]
    %v237 = vld [vmem:[#allocation5 + $0x3d0] sm:$0xff]
    %v238 = vld [vmem:[#allocation5 + $0x3d8] sm:$0xff]
    %v239 = vld [vmem:[#allocation5 + $0x3e0] sm:$0xff]
    %v240 = vld [vmem:[#allocation5 + $0x3e8] sm:$0xff]
    %v241 = vld [vmem:[#allocation5 + $0x3f0] sm:$0xf]
    %v242 = vld [vmem:[#allocation5 + $0x3f4] sm:$0xff]
    %v243 = vld [vmem:[#allocation5 + $0x3fc] sm:$0xff]
    %v244 = vld [vmem:[#allocation5 + $0x404] sm:$0xff]
    %v245 = vld [vmem:[#allocation5 + $0x40c] sm:$0xff]
    %v246 = vld [vmem:[#allocation5 + $0x414] sm:$0xff]
    %v247 = vld [vmem:[#allocation5 + $0x41c] sm:$0xf]
    %v248 = vld [vmem:[#allocation5 + $0x420] sm:$0xff]
    %v249 = vld [vmem:[#allocation5 + $0x428] sm:$0xff]
    %v250 = vld [vmem:[#allocation5 + $0x430] sm:$0xff]
    %v251 = vld [vmem:[#allocation5 + $0x438] sm:$0xff]
    %v252 = vld [vmem:[#allocation5 + $0x440] sm:$0xff]
    %v253 = vld [vmem:[#allocation5 + $0x448] sm:$0xf]
    %v254 = vld [vmem:[#allocation5 + $0x44c] sm:$0xff]
    %v255 = vld [vmem:[#allocation5 + $0x454] sm:$0xff]
    %v256 = vld [vmem:[#allocation5 + $0x45c] sm:$0xff]
    %v257 = vld [vmem:[#allocation5 + $0x464] sm:$0xff]
    %v258 = vld [vmem:[#allocation5 + $0x46c] sm:$0xff]
    %v259 = vld [vmem:[#allocation5 + $0x474] sm:$0xf]
    %v260 = vld [vmem:[#allocation5 + $0x478] sm:$0xff]
    %v261 = vld [vmem:[#allocation5 + $0x480] sm:$0xff]
    %v262 = vld [vmem:[#allocation5 + $0x488] sm:$0xff]
    %v263 = vld [vmem:[#allocation5 + $0x490] sm:$0xff]
    %v264 = vld [vmem:[#allocation5 + $0x498] sm:$0xff]
    %v265 = vld [vmem:[#allocation5 + $0x4a0] sm:$0xf]
    %v266 = vld [vmem:[#allocation5 + $0x4a4] sm:$0xff]
    %v267 = vld [vmem:[#allocation5 + $0x4ac] sm:$0xff]
    %v268 = vld [vmem:[#allocation5 + $0x4b4] sm:$0xff]
    %v269 = vld [vmem:[#allocation5 + $0x4bc] sm:$0xff]
    %v270 = vld [vmem:[#allocation5 + $0x4c4] sm:$0xff]
    %v271 = vld [vmem:[#allocation5 + $0x4cc] sm:$0xf]
    %v272 = vld [vmem:[#allocation5 + $0x4d0] sm:$0xff]
    %v273 = vld [vmem:[#allocation5 + $0x4d8] sm:$0xff]
    %v274 = vld [vmem:[#allocation5 + $0x4e0] sm:$0xff]
    %v275 = vld [vmem:[#allocation5 + $0x4e8] sm:$0xff]
    %v276 = vld [vmem:[#allocation5 + $0x4f0] sm:$0xff]
    %v277 = vld [vmem:[#allocation5 + $0x4f8] sm:$0xf]
    %v278 = vld [vmem:[#allocation5 + $0x4fc] sm:$0xff]
    %v279 = vld [vmem:[#allocation5 + $0x504] sm:$0xff]
    %v280 = vld [vmem:[#allocation5 + $0x50c] sm:$0xff]
    %v281 = vld [vmem:[#allocation5 + $0x514] sm:$0xff]
    %v282 = vld [vmem:[#allocation5 + $0x51c] sm:$0xff]
    %v283 = vld [vmem:[#allocation5 + $0x524] sm:$0xf]
    %v284 = vld [vmem:[#allocation5 + $0x528] sm:$0xff]
    %v285 = vld [vmem:[#allocation5 + $0x530] sm:$0xff]
    %v286 = vld [vmem:[#allocation5 + $0x538] sm:$0xff]
    %v287 = vld [vmem:[#allocation5 + $0x540] sm:$0xff]
    %v288 = vld [vmem:[#allocation5 + $0x548] sm:$0xff]
    %v289 = vld [vmem:[#allocation5 + $0x550] sm:$0xf]
    %v290 = vld [vmem:[#allocation5 + $0x554] sm:$0xff]
    %v291 = vld [vmem:[#allocation5 + $0x55c] sm:$0xff]
    %v292 = vld [vmem:[#allocation5 + $0x564] sm:$0xff]
    %v293 = vld [vmem:[#allocation5 + $0x56c] sm:$0xff]
    %v294 = vld [vmem:[#allocation5 + $0x574] sm:$0xff]
    %v295 = vld [vmem:[#allocation5 + $0x57c] sm:$0xf]
    %v296 = vld [vmem:[#allocation5 + $0x580] sm:$0xff]
    %v297 = vld [vmem:[#allocation5 + $0x588] sm:$0xff]
    %v298 = vld [vmem:[#allocation5 + $0x590] sm:$0xff]
    %v299 = vld [vmem:[#allocation5 + $0x598] sm:$0xff]
    %v300 = vld [vmem:[#allocation5 + $0x5a0] sm:$0xff]
    %v301 = vld [vmem:[#allocation5 + $0x5a8] sm:$0xf]
    %v302 = vld [vmem:[#allocation5 + $0x5ac] sm:$0xff]
    %v303 = vld [vmem:[#allocation5 + $0x5b4] sm:$0xff]
    %v304 = vld [vmem:[#allocation5 + $0x5bc] sm:$0xff]
    %v305 = vld [vmem:[#allocation5 + $0x5c4] sm:$0xff]
    %v306 = vld [vmem:[#allocation5 + $0x5cc] sm:$0xff]
    %v307 = vld [vmem:[#allocation5 + $0x5d4] sm:$0xf]
    %v308 = vld [vmem:[#allocation5 + $0x5d8] sm:$0xff]
    %v309 = vld [vmem:[#allocation5 + $0x5e0] sm:$0xff]
    %v310 = vld [vmem:[#allocation5 + $0x5e8] sm:$0xff]
    %v311 = vld [vmem:[#allocation5 + $0x5f0] sm:$0xff]
    %v312 = vld [vmem:[#allocation5 + $0x5f8] sm:$0xff]
    %v313 = vld [vmem:[#allocation5 + $0x600] sm:$0xf]
    %v314 = vld [vmem:[#allocation5 + $0x604] sm:$0xff]
    %v315 = vld [vmem:[#allocation5 + $0x60c] sm:$0xff]
    %v316 = vld [vmem:[#allocation5 + $0x614] sm:$0xff]
    %v317 = vld [vmem:[#allocation5 + $0x61c] sm:$0xff]
    %v318 = vld [vmem:[#allocation5 + $0x624] sm:$0xff]
    %v319 = vld [vmem:[#allocation5 + $0x62c] sm:$0xf]
    %v320 = vld [vmem:[#allocation5 + $0x630] sm:$0xff]
    %v321 = vld [vmem:[#allocation5 + $0x638] sm:$0xff]
    %v322 = vld [vmem:[#allocation5 + $0x640] sm:$0xff]
    %v323 = vld [vmem:[#allocation5 + $0x648] sm:$0xff]
    %v324 = vld [vmem:[#allocation5 + $0x650] sm:$0xff]
    %v325 = vld [vmem:[#allocation5 + $0x658] sm:$0xf]
    %v326 = vld [vmem:[#allocation5 + $0x65c] sm:$0xff]
    %v327 = vld [vmem:[#allocation5 + $0x664] sm:$0xff]
    %v328 = vld [vmem:[#allocation5 + $0x66c] sm:$0xff]
    %v329 = vld [vmem:[#allocation5 + $0x674] sm:$0xff]
    %v330 = vld [vmem:[#allocation5 + $0x67c] sm:$0xff]
    %v331 = vld [vmem:[#allocation5 + $0x684] sm:$0xf]
    %v332 = vld [vmem:[#allocation5 + $0x688] sm:$0xff]
    %v333 = vld [vmem:[#allocation5 + $0x690] sm:$0xff]
    %v334 = vld [vmem:[#allocation5 + $0x698] sm:$0xff]
    %v335 = vld [vmem:[#allocation5 + $0x6a0] sm:$0xff]
    %v336 = vld [vmem:[#allocation5 + $0x6a8] sm:$0xff]
    %v337 = vld [vmem:[#allocation5 + $0x6b0] sm:$0xf]
    %v338 = vld [vmem:[#allocation5 + $0x6b4] sm:$0xff]
    %v339 = vld [vmem:[#allocation5 + $0x6bc] sm:$0xff]
    %v340 = vld [vmem:[#allocation5 + $0x6c4] sm:$0xff]
    %v341 = vld [vmem:[#allocation5 + $0x6cc] sm:$0xff]
    %v342 = vld [vmem:[#allocation5 + $0x6d4] sm:$0xff]
    %v343 = vld [vmem:[#allocation5 + $0x6dc] sm:$0xf]
    %v344 = vld [vmem:[#allocation5 + $0x6e0] sm:$0xff]
    %v345 = vld [vmem:[#allocation5 + $0x6e8] sm:$0xff]
    %v346 = vld [vmem:[#allocation5 + $0x6f0] sm:$0xff]
    %v347 = vld [vmem:[#allocation5 + $0x6f8] sm:$0xff]
    %v348 = vld [vmem:[#allocation5 + $0x700] sm:$0xff]
    %v349 = vld [vmem:[#allocation5 + $0x708] sm:$0xf]
    %v350 = vld [vmem:[#allocation5 + $0x70c] sm:$0xff]
    %v351 = vld [vmem:[#allocation5 + $0x714] sm:$0xff]
    %v352 = vld [vmem:[#allocation5 + $0x71c] sm:$0xff]
    %v353 = vld [vmem:[#allocation5 + $0x724] sm:$0xff]
    %v354 = vld [vmem:[#allocation5 + $0x72c] sm:$0xff]
    %v355 = vld [vmem:[#allocation5 + $0x734] sm:$0xf]
    %v356 = vld [vmem:[#allocation5 + $0x738] sm:$0xff]
    %v357 = vld [vmem:[#allocation5 + $0x740] sm:$0xff]
    %v358 = vld [vmem:[#allocation5 + $0x748] sm:$0xff]
    %v359 = vld [vmem:[#allocation5 + $0x750] sm:$0xff]
    %v360 = vld [vmem:[#allocation5 + $0x758] sm:$0xff]
    %v361 = vld [vmem:[#allocation5 + $0x760] sm:$0xf]
    %v362 = vld [vmem:[#allocation5 + $0x764] sm:$0xff]
    %v363 = vld [vmem:[#allocation5 + $0x76c] sm:$0xff]
    %v364 = vld [vmem:[#allocation5 + $0x774] sm:$0xff]
    %v365 = vld [vmem:[#allocation5 + $0x77c] sm:$0xff]
    %v366 = vld [vmem:[#allocation5 + $0x784] sm:$0xff]
    %v367 = vld [vmem:[#allocation5 + $0x78c] sm:$0xf]
    %v368 = vld [vmem:[#allocation5 + $0x790] sm:$0xff]
    %v369 = vld [vmem:[#allocation5 + $0x798] sm:$0xff]
    %v370 = vld [vmem:[#allocation5 + $0x7a0] sm:$0xff]
    %v371 = vld [vmem:[#allocation5 + $0x7a8] sm:$0xff]
    %v372 = vld [vmem:[#allocation5 + $0x7b0] sm:$0xff]
    %v373 = vld [vmem:[#allocation5 + $0x7b8] sm:$0xf]
    %v374 = vld [vmem:[#allocation5 + $0x7bc] sm:$0xff]
    %v375 = vld [vmem:[#allocation5 + $0x7c4] sm:$0xff]
    %v376 = vld [vmem:[#allocation5 + $0x7cc] sm:$0xff]
    %v377 = vld [vmem:[#allocation5 + $0x7d4] sm:$0xff]
    %v378 = vld [vmem:[#allocation5 + $0x7dc] sm:$0xff]
    %v379 = vld [vmem:[#allocation5 + $0x7e4] sm:$0xf]
    %v380 = vld [vmem:[#allocation5 + $0x7e8] sm:$0xff]
    %v381 = vld [vmem:[#allocation5 + $0x7f0] sm:$0xff]
    %v382 = vld [vmem:[#allocation5 + $0x7f8] sm:$0xff]
    %v383 = vld [vmem:[#allocation5 + $0x800] sm:$0xff]
    %v384 = vld [vmem:[#allocation5 + $0x808] sm:$0xff]
    %v385 = vld [vmem:[#allocation5 + $0x810] sm:$0xf]
    %v386 = vld [vmem:[#allocation5 + $0x814] sm:$0xff]
    %v387 = vld [vmem:[#allocation5 + $0x81c] sm:$0xff]
    %v388 = vld [vmem:[#allocation5 + $0x824] sm:$0xff]
    %v389 = vld [vmem:[#allocation5 + $0x82c] sm:$0xff]
    %v390 = vld [vmem:[#allocation5 + $0x834] sm:$0xff]
    %v391 = vld [vmem:[#allocation5 + $0x83c] sm:$0xf]
    %v392 = vld [vmem:[#allocation5 + $0x840] sm:$0xff]
    %v393 = vld [vmem:[#allocation5 + $0x848] sm:$0xff]
    %v394 = vld [vmem:[#allocation5 + $0x850] sm:$0xff]
    %v395 = vld [vmem:[#allocation5 + $0x858] sm:$0xff]
    %v396 = vld [vmem:[#allocation5 + $0x860] sm:$0xff]
    %v397 = vld [vmem:[#allocation5 + $0x868] sm:$0xf]
    %v398 = vld [vmem:[#allocation5 + $0x86c] sm:$0xff]
    %v399 = vld [vmem:[#allocation5 + $0x874] sm:$0xff]
    %v400 = vld [vmem:[#allocation5 + $0x87c] sm:$0xff]
    %v401 = vld [vmem:[#allocation5 + $0x884] sm:$0xff]
    %v402 = vld [vmem:[#allocation5 + $0x88c] sm:$0xff]
    %v403 = vld [vmem:[#allocation5 + $0x894] sm:$0xf]
    %v404 = vld [vmem:[#allocation5 + $0x898] sm:$0xff]
    %v405 = vld [vmem:[#allocation5 + $0x8a0] sm:$0xff]
    %v406 = vld [vmem:[#allocation5 + $0x8a8] sm:$0xff]
    %v407 = vld [vmem:[#allocation5 + $0x8b0] sm:$0xff]
    %v408 = vld [vmem:[#allocation5 + $0x8b8] sm:$0xff]
    %v409 = vld [vmem:[#allocation5 + $0x8c0] sm:$0xf]
    %v410 = vld [vmem:[#allocation5 + $0x8c4] sm:$0xff]
    %v411 = vld [vmem:[#allocation5 + $0x8cc] sm:$0xff]
    %v412 = vld [vmem:[#allocation5 + $0x8d4] sm:$0xff]
    %v413 = vld [vmem:[#allocation5 + $0x8dc] sm:$0xff]
    %v414 = vld [vmem:[#allocation5 + $0x8e4] sm:$0xff]
    %v415 = vld [vmem:[#allocation5 + $0x8ec] sm:$0xf]
    %v416 = vld [vmem:[#allocation5 + $0x8f0] sm:$0xff]
    %v417 = vld [vmem:[#allocation5 + $0x8f8] sm:$0xff]
    %v418 = vld [vmem:[#allocation5 + $0x900] sm:$0xff]
    %v419 = vld [vmem:[#allocation5 + $0x908] sm:$0xff]
    %v420 = vld [vmem:[#allocation5 + $0x910] sm:$0xff]
    %v421 = vld [vmem:[#allocation5 + $0x918] sm:$0xf]
    %v422 = vld [vmem:[#allocation5 + $0x91c] sm:$0xff]
    %v423 = vld [vmem:[#allocation5 + $0x924] sm:$0xff]
    %v424 = vld [vmem:[#allocation5 + $0x92c] sm:$0xff]
    %v425 = vld [vmem:[#allocation5 + $0x934] sm:$0xff]
    %v426 = vld [vmem:[#allocation5 + $0x93c] sm:$0xff]
    %v427 = vld [vmem:[#allocation5 + $0x944] sm:$0xf]
    %v428 = vld [vmem:[#allocation5 + $0x948] sm:$0xff]
    %v429 = vld [vmem:[#allocation5 + $0x950] sm:$0xff]
    %v430 = vld [vmem:[#allocation5 + $0x958] sm:$0xff]
    %v431 = vld [vmem:[#allocation5 + $0x960] sm:$0xff]
    %v432 = vld [vmem:[#allocation5 + $0x968] sm:$0xff]
    %v433 = vld [vmem:[#allocation5 + $0x970] sm:$0xf]
    %v434 = vld [vmem:[#allocation5 + $0x974] sm:$0xff]
    %v435 = vld [vmem:[#allocation5 + $0x97c] sm:$0xff]
    %v436 = vld [vmem:[#allocation5 + $0x984] sm:$0xff]
    %v437 = vld [vmem:[#allocation5 + $0x98c] sm:$0xff]
    %v438 = vld [vmem:[#allocation5 + $0x994] sm:$0xff]
    %v439 = vld [vmem:[#allocation5 + $0x99c] sm:$0xf]
    %v440 = vld [vmem:[#allocation5 + $0x9a0] sm:$0xff]
    %v441 = vld [vmem:[#allocation5 + $0x9a8] sm:$0xff]
    %v442 = vld [vmem:[#allocation5 + $0x9b0] sm:$0xff]
    %v443 = vld [vmem:[#allocation5 + $0x9b8] sm:$0xff]
    %v444 = vld [vmem:[#allocation5 + $0x9c0] sm:$0xff]
    %v445 = vld [vmem:[#allocation5 + $0x9c8] sm:$0xf]
    %v446 = vld [vmem:[#allocation5 + $0x9cc] sm:$0xff]
    %v447 = vld [vmem:[#allocation5 + $0x9d4] sm:$0xff]
    %v448 = vld [vmem:[#allocation5 + $0x9dc] sm:$0xff]
    %v449 = vld [vmem:[#allocation5 + $0x9e4] sm:$0xff]
    %v450 = vld [vmem:[#allocation5 + $0x9ec] sm:$0xff]
    %v451 = vld [vmem:[#allocation5 + $0x9f4] sm:$0xf]
    %v452 = vld [vmem:[#allocation5 + $0x9f8] sm:$0xff]
    %v453 = vld [vmem:[#allocation5 + $0xa00] sm:$0xff]
    %v454 = vld [vmem:[#allocation5 + $0xa08] sm:$0xff]
    %v455 = vld [vmem:[#allocation5 + $0xa10] sm:$0xff]
    %v456 = vld [vmem:[#allocation5 + $0xa18] sm:$0xff]
    %v457 = vld [vmem:[#allocation5 + $0xa20] sm:$0xf]
    %v458 = vld [vmem:[#allocation5 + $0xa24] sm:$0xff]
    %v459 = vld [vmem:[#allocation5 + $0xa2c] sm:$0xff]
    %v460 = vld [vmem:[#allocation5 + $0xa34] sm:$0xff]
    %v461 = vld [vmem:[#allocation5 + $0xa3c] sm:$0xff]
    %v462 = vld [vmem:[#allocation5 + $0xa44] sm:$0xff]
    %v463 = vld [vmem:[#allocation5 + $0xa4c] sm:$0xf]
    %v464 = vld [vmem:[#allocation5 + $0xa50] sm:$0xff]
    %v465 = vld [vmem:[#allocation5 + $0xa58] sm:$0xff]
    %v466 = vld [vmem:[#allocation5 + $0xa60] sm:$0xff]
    %v467 = vld [vmem:[#allocation5 + $0xa68] sm:$0xff]
    %v468 = vld [vmem:[#allocation5 + $0xa70] sm:$0xff]
    %v469 = vld [vmem:[#allocation5 + $0xa78] sm:$0xf]
    %v470 = vld [vmem:[#allocation5 + $0xa7c] sm:$0xff]
    %v471 = vld [vmem:[#allocation5 + $0xa84] sm:$0xff]
    %v472 = vld [vmem:[#allocation5 + $0xa8c] sm:$0xff]
    %v473 = vld [vmem:[#allocation5 + $0xa94] sm:$0xff]
    %v474 = vld [vmem:[#allocation5 + $0xa9c] sm:$0xff]
    %v475 = vld [vmem:[#allocation5 + $0xaa4] sm:$0xf]
    %v476 = vld [vmem:[#allocation5 + $0xaa8] sm:$0xff]
    %v477 = vld [vmem:[#allocation5 + $0xab0] sm:$0xff]
    %v478 = vld [vmem:[#allocation5 + $0xab8] sm:$0xff]
    %v479 = vld [vmem:[#allocation5 + $0xac0] sm:$0xff]
    %v480 = vld [vmem:[#allocation5 + $0xac8] sm:$0xff]
    %v481 = vld [vmem:[#allocation5 + $0xad0] sm:$0xf]
    %v482 = vld [vmem:[#allocation5 + $0xad4] sm:$0xff]
    %v483 = vld [vmem:[#allocation5 + $0xadc] sm:$0xff]
    %v484 = vld [vmem:[#allocation5 + $0xae4] sm:$0xff]
    %v485 = vld [vmem:[#allocation5 + $0xaec] sm:$0xff]
    %v486 = vld [vmem:[#allocation5 + $0xaf4] sm:$0xff]
    %v487 = vld [vmem:[#allocation5 + $0xafc] sm:$0xf]
    %v488 = vld [vmem:[#allocation5 + $0xb00] sm:$0xff]
    %v489 = vld [vmem:[#allocation5 + $0xb08] sm:$0xff]
    %v490 = vld [vmem:[#allocation5 + $0xb10] sm:$0xff]
    %v491 = vld [vmem:[#allocation5 + $0xb18] sm:$0xff]
    %v492 = vld [vmem:[#allocation5 + $0xb20] sm:$0xff]
    %v493 = vld [vmem:[#allocation5 + $0xb28] sm:$0xf]
    %v494 = vld [vmem:[#allocation5 + $0xb2c] sm:$0xff]
    %v495 = vld [vmem:[#allocation5 + $0xb34] sm:$0xff]
    %v496 = vld [vmem:[#allocation5 + $0xb3c] sm:$0xff]
    %v497 = vld [vmem:[#allocation5 + $0xb44] sm:$0xff]
    %v498 = vld [vmem:[#allocation5 + $0xb4c] sm:$0xff]
    %v499 = vld [vmem:[#allocation5 + $0xb54] sm:$0xf]
    %v500 = vld [vmem:[#allocation5 + $0xb58] sm:$0xff]
    %v501 = vld [vmem:[#allocation5 + $0xb60] sm:$0xff]
    %v502 = vld [vmem:[#allocation5 + $0xb68] sm:$0xff]
    %v503 = vld [vmem:[#allocation5 + $0xb70] sm:$0xff]
    %v504 = vld [vmem:[#allocation5 + $0xb78] sm:$0xff]
    %v505 = vld [vmem:[#allocation5 + $0xb80] sm:$0xf]
    %v506 = vld [vmem:[#allocation5 + $0xb84] sm:$0xff]
    %v507 = vld [vmem:[#allocation5 + $0xb8c] sm:$0xff]
    %v508 = vld [vmem:[#allocation5 + $0xb94] sm:$0xff]
    %v509 = vld [vmem:[#allocation5 + $0xb9c] sm:$0xff]
    %v510 = vld [vmem:[#allocation5 + $0xba4] sm:$0xff]
    %v511 = vld [vmem:[#allocation5 + $0xbac] sm:$0xf]
    %v512 = vld [vmem:[#allocation5 + $0xbb0] sm:$0xff]
    %v513 = vld [vmem:[#allocation5 + $0xbb8] sm:$0xff]
    %v514 = vld [vmem:[#allocation5 + $0xbc0] sm:$0xff]
    %v515 = vld [vmem:[#allocation5 + $0xbc8] sm:$0xff]
    %v516 = vld [vmem:[#allocation5 + $0xbd0] sm:$0xff]
    %v517 = vld [vmem:[#allocation5 + $0xbd8] sm:$0xf]
    %v518 = vld [vmem:[#allocation5 + $0xbdc] sm:$0xff]
    %v519 = vld [vmem:[#allocation5 + $0xbe4] sm:$0xff]
    %v520 = vld [vmem:[#allocation5 + $0xbec] sm:$0xff]
    %v521 = vld [vmem:[#allocation5 + $0xbf4] sm:$0xff]
    %v522 = vld [vmem:[#allocation5 + $0xbfc] sm:$0xff]
    %v523 = vld [vmem:[#allocation5 + $0xc04] sm:$0xf]
    %v524 = vld [vmem:[#allocation5 + $0xc08] sm:$0xff]
    %v525 = vld [vmem:[#allocation5 + $0xc10] sm:$0xff]
    %v526 = vld [vmem:[#allocation5 + $0xc18] sm:$0xff]
    %v527 = vld [vmem:[#allocation5 + $0xc20] sm:$0xff]
    %v528 = vld [vmem:[#allocation5 + $0xc28] sm:$0xff]
    %v529 = vld [vmem:[#allocation5 + $0xc30] sm:$0xf]
    %v530 = vld [vmem:[#allocation5 + $0xc34] sm:$0xff]
    %v531 = vld [vmem:[#allocation5 + $0xc3c] sm:$0xff]
    %v532 = vld [vmem:[#allocation5 + $0xc44] sm:$0xff]
    %v533 = vld [vmem:[#allocation5 + $0xc4c] sm:$0xff]
    %v534 = vld [vmem:[#allocation5 + $0xc54] sm:$0xff]
    %v535 = vld [vmem:[#allocation5 + $0xc5c] sm:$0xf]
    %v536 = vld [vmem:[#allocation5 + $0xc60] sm:$0xff]
    %v537 = vld [vmem:[#allocation5 + $0xc68] sm:$0xff]
    %v538 = vld [vmem:[#allocation5 + $0xc70] sm:$0xff]
    %v539 = vld [vmem:[#allocation5 + $0xc78] sm:$0xff]
    %v540 = vld [vmem:[#allocation5 + $0xc80] sm:$0xff]
    %v541 = vld [vmem:[#allocation5 + $0xc88] sm:$0xf]
    %v542 = vld [vmem:[#allocation5 + $0xc8c] sm:$0xff]
    %v543 = vld [vmem:[#allocation5 + $0xc94] sm:$0xff]
    %v544 = vld [vmem:[#allocation5 + $0xc9c] sm:$0xff]
    %v545 = vld [vmem:[#allocation5 + $0xca4] sm:$0xff]
    %v546 = vld [vmem:[#allocation5 + $0xcac] sm:$0xff]
    %v547 = vld [vmem:[#allocation5 + $0xcb4] sm:$0xf]
    %v548 = vld [vmem:[#allocation5 + $0xcb8] sm:$0xff]
    %v549 = vld [vmem:[#allocation5 + $0xcc0] sm:$0xff]
    %v550 = vld [vmem:[#allocation5 + $0xcc8] sm:$0xff]
    %v551 = vld [vmem:[#allocation5 + $0xcd0] sm:$0xff]
    %v552 = vld [vmem:[#allocation5 + $0xcd8] sm:$0xff]
    %v553 = vld [vmem:[#allocation5 + $0xce0] sm:$0xf]
    %v554 = vld [vmem:[#allocation5 + $0xce4] sm:$0xff]
    %v555 = vld [vmem:[#allocation5 + $0xcec] sm:$0xff]
    %v556 = vld [vmem:[#allocation5 + $0xcf4] sm:$0xff]
    %v557 = vld [vmem:[#allocation5 + $0xcfc] sm:$0xff]
    %v558 = vld [vmem:[#allocation5 + $0xd04] sm:$0xff]
    %v559 = vld [vmem:[#allocation5 + $0xd0c] sm:$0xf]
    %v560 = vld [vmem:[#allocation5 + $0xd10] sm:$0xff]
    %v561 = vld [vmem:[#allocation5 + $0xd18] sm:$0xff]
    %v562 = vld [vmem:[#allocation5 + $0xd20] sm:$0xff]
    %v563 = vld [vmem:[#allocation5 + $0xd28] sm:$0xff]
    %v564 = vld [vmem:[#allocation5 + $0xd30] sm:$0xff]
    %v565 = vld [vmem:[#allocation5 + $0xd38] sm:$0xf]
    %v566 = vld [vmem:[#allocation5 + $0xd3c] sm:$0xff]
    %v567 = vld [vmem:[#allocation5 + $0xd44] sm:$0xff]
    %v568 = vld [vmem:[#allocation5 + $0xd4c] sm:$0xff]
    %v569 = vld [vmem:[#allocation5 + $0xd54] sm:$0xff]
    %v570 = vld [vmem:[#allocation5 + $0xd5c] sm:$0xff]
    %v571 = vld [vmem:[#allocation5 + $0xd64] sm:$0xf]
    %v572 = vld [vmem:[#allocation5 + $0xd68] sm:$0xff]
    %v573 = vld [vmem:[#allocation5 + $0xd70] sm:$0xff]
    %v574 = vld [vmem:[#allocation5 + $0xd78] sm:$0xff]
    %v575 = vld [vmem:[#allocation5 + $0xd80] sm:$0xff]
    %v576 = vld [vmem:[#allocation5 + $0xd88] sm:$0xff]
    %v577 = vld [vmem:[#allocation5 + $0xd90] sm:$0xf]
    %v578 = vld [vmem:[#allocation5 + $0xd94] sm:$0xff]
    %v579 = vld [vmem:[#allocation5 + $0xd9c] sm:$0xff]
    %v580 = vld [vmem:[#allocation5 + $0xda4] sm:$0xff]
    %v581 = vld [vmem:[#allocation5 + $0xdac] sm:$0xff]
    %v582 = vld [vmem:[#allocation5 + $0xdb4] sm:$0xff]
    %v583 = vld [vmem:[#allocation5 + $0xdbc] sm:$0xf]
    %v584 = vld [vmem:[#allocation5 + $0xdc0] sm:$0xff]
    %v585 = vld [vmem:[#allocation5 + $0xdc8] sm:$0xff]
    %v586 = vld [vmem:[#allocation5 + $0xdd0] sm:$0xff]
    %v587 = vld [vmem:[#allocation5 + $0xdd8] sm:$0xff]
    %v588 = vld [vmem:[#allocation5 + $0xde0] sm:$0xff]
    %v589 = vld [vmem:[#allocation5 + $0xde8] sm:$0xf]
    %v590 = vld [vmem:[#allocation5 + $0xdec] sm:$0xff]
    %v591 = vld [vmem:[#allocation5 + $0xdf4] sm:$0xff]
    %v592 = vld [vmem:[#allocation5 + $0xdfc] sm:$0xff]
    %v593 = vld [vmem:[#allocation5 + $0xe04] sm:$0xff]
    %v594 = vld [vmem:[#allocation5 + $0xe0c] sm:$0xff]
    %v595 = vld [vmem:[#allocation5 + $0xe14] sm:$0xf]
    %v596 = vld [vmem:[#allocation5 + $0xe18] sm:$0xff]
    %v597 = vld [vmem:[#allocation5 + $0xe20] sm:$0xff]
    %v598 = vld [vmem:[#allocation5 + $0xe28] sm:$0xff]
    %v599 = vld [vmem:[#allocation5 + $0xe30] sm:$0xff]
    %v600 = vld [vmem:[#allocation5 + $0xe38] sm:$0xff]
    %v601 = vld [vmem:[#allocation5 + $0xe40] sm:$0xf]
    %v602 = vld [vmem:[#allocation5 + $0xe44] sm:$0xff]
    %v603 = vld [vmem:[#allocation5 + $0xe4c] sm:$0xff]
    %v604 = vld [vmem:[#allocation5 + $0xe54] sm:$0xff]
    %v605 = vld [vmem:[#allocation5 + $0xe5c] sm:$0xff]
    %v606 = vld [vmem:[#allocation5 + $0xe64] sm:$0xff]
    %v607 = vld [vmem:[#allocation5 + $0xe6c] sm:$0xf]
    %v608 = vld [vmem:[#allocation5 + $0xe70] sm:$0xff]
    %v609 = vld [vmem:[#allocation5 + $0xe78] sm:$0xff]
    %v610 = vld [vmem:[#allocation5 + $0xe80] sm:$0xff]
    %v611 = vld [vmem:[#allocation5 + $0xe88] sm:$0xff]
    %v612 = vld [vmem:[#allocation5 + $0xe90] sm:$0xff]
    %v613 = vld [vmem:[#allocation5 + $0xe98] sm:$0xf]
    %v614 = vld [vmem:[#allocation5 + $0xe9c] sm:$0xff]
    %v615 = vld [vmem:[#allocation5 + $0xea4] sm:$0xff]
    %v616 = vld [vmem:[#allocation5 + $0xeac] sm:$0xff]
    %v617 = vld [vmem:[#allocation5 + $0xeb4] sm:$0xff]
    %v618 = vld [vmem:[#allocation5 + $0xebc] sm:$0xff]
    %v619 = vld [vmem:[#allocation5 + $0xec4] sm:$0xf]
    %v620 = vld [vmem:[#allocation5 + $0xec8] sm:$0xff]
    %v621 = vld [vmem:[#allocation5 + $0xed0] sm:$0xff]
    %v622 = vld [vmem:[#allocation5 + $0xed8] sm:$0xff]
    %v623 = vld [vmem:[#allocation5 + $0xee0] sm:$0xff]
    %v624 = vld [vmem:[#allocation5 + $0xee8] sm:$0xff]
    %v625 = vld [vmem:[#allocation5 + $0xef0] sm:$0xf]
    %v626 = vld [vmem:[#allocation5 + $0xef4] sm:$0xff]
    %v627 = vld [vmem:[#allocation5 + $0xefc] sm:$0xff]
    %v628 = vld [vmem:[#allocation5 + $0xf04] sm:$0xff]
    %v629 = vld [vmem:[#allocation5 + $0xf0c] sm:$0xff]
    %v630 = vld [vmem:[#allocation5 + $0xf14] sm:$0xff]
    %v631 = vld [vmem:[#allocation5 + $0xf1c] sm:$0xf]
    %v632 = vld [vmem:[#allocation5 + $0xf20] sm:$0xff]
    %v633 = vld [vmem:[#allocation5 + $0xf28] sm:$0xff]
    %v634 = vld [vmem:[#allocation5 + $0xf30] sm:$0xff]
    %v635 = vld [vmem:[#allocation5 + $0xf38] sm:$0xff]
    %v636 = vld [vmem:[#allocation5 + $0xf40] sm:$0xff]
    %v637 = vld [vmem:[#allocation5 + $0xf48] sm:$0xf]
    %v638 = vld [vmem:[#allocation5 + $0xf4c] sm:$0xff]
    %v639 = vld [vmem:[#allocation5 + $0xf54] sm:$0xff]
    %v640 = vld [vmem:[#allocation5 + $0xf5c] sm:$0xff]
    %v641 = vld [vmem:[#allocation5 + $0xf64] sm:$0xff]
    %v642 = vld [vmem:[#allocation5 + $0xf6c] sm:$0xff]
    %v643 = vld [vmem:[#allocation5 + $0xf74] sm:$0xf]
    %v644 = vld [vmem:[#allocation5 + $0xf78] sm:$0xff]
    %v645 = vld [vmem:[#allocation5 + $0xf80] sm:$0xff]
    %v646 = vld [vmem:[#allocation5 + $0xf88] sm:$0xff]
    %v647 = vld [vmem:[#allocation5 + $0xf90] sm:$0xff]
    %v648 = vld [vmem:[#allocation5 + $0xf98] sm:$0xff]
    %v649 = vld [vmem:[#allocation5 + $0xfa0] sm:$0xf]
    %v650 = vld [vmem:[#allocation5 + $0xfa4] sm:$0xff]
    %v651 = vld [vmem:[#allocation5 + $0xfac] sm:$0xff]
    %v652 = vld [vmem:[#allocation5 + $0xfb4] sm:$0xff]
    %v653 = vld [vmem:[#allocation5 + $0xfbc] sm:$0xff]
    %v654 = vld [vmem:[#allocation5 + $0xfc4] sm:$0xff]
    %v655 = vld [vmem:[#allocation5 + $0xfcc] sm:$0xf]
    %v656 = vld [vmem:[#allocation5 + $0xfd0] sm:$0xff]
    %v657 = vld [vmem:[#allocation5 + $0xfd8] sm:$0xff]
    %v658 = vld [vmem:[#allocation5 + $0xfe0] sm:$0xff]
    %v659 = vld [vmem:[#allocation5 + $0xfe8] sm:$0xff]
    %v660 = vld [vmem:[#allocation5 + $0xff0] sm:$0xff]
    %v661 = vld [vmem:[#allocation5 + $0xff8] sm:$0xf]
    %v662 = vld [vmem:[#allocation5 + $0xffc] sm:$0xff]
    %v663 = vld [vmem:[#allocation5 + $0x1004] sm:$0xff]
    %v664 = vld [vmem:[#allocation5 + $0x100c] sm:$0xff]
    %v665 = vld [vmem:[#allocation5 + $0x1014] sm:$0xff]
    %v666 = vld [vmem:[#allocation5 + $0x101c] sm:$0xff]
    %v667 = vld [vmem:[#allocation5 + $0x1024] sm:$0xf]
    %v668 = vld [vmem:[#allocation5 + $0x1028] sm:$0xff]
    %v669 = vld [vmem:[#allocation5 + $0x1030] sm:$0xff]
    %v670 = vld [vmem:[#allocation5 + $0x1038] sm:$0xff]
    %v671 = vld [vmem:[#allocation5 + $0x1040] sm:$0xff]
    %v672 = vld [vmem:[#allocation5 + $0x1048] sm:$0xff]
    %v673 = vld [vmem:[#allocation5 + $0x1050] sm:$0xf]
    %v674 = vld [vmem:[#allocation5 + $0x1054] sm:$0xff]
    %v675 = vld [vmem:[#allocation5 + $0x105c] sm:$0xff]
    %v676 = vld [vmem:[#allocation5 + $0x1064] sm:$0xff]
    %v677 = vld [vmem:[#allocation5 + $0x106c] sm:$0xff]
    %v678 = vld [vmem:[#allocation5 + $0x1074] sm:$0xff]
    %v679 = vld [vmem:[#allocation5 + $0x107c] sm:$0xf]
    %v680 = vld [vmem:[#allocation7] sm:$0xff]
    %v681 = vld [vmem:[#allocation7 + $0x8] sm:$0x7]
    %v684 = vlaneseq
    %v685 = vshrl.u32 %v684, 7
    %v686 = vsub.s32 0, %v685
    %v687 = vrot.slane %v680, %v686
    %v688 = vlaneseq
    %v689 = vshrl.u32 %v688, 7
    %v690 = vsub.s32 1, %v689
    %v691 = vrot.slane %v680, %v690
    %v692 = vlaneseq
    %v693 = vshrl.u32 %v692, 7
    %v694 = vsub.s32 2, %v693
    %v695 = vrot.slane %v680, %v694
    %v696 = vlaneseq
    %v697 = vshrl.u32 %v696, 7
    %v698 = vsub.s32 3, %v697
    %v699 = vrot.slane %v680, %v698
    %v700 = vlaneseq
    %v701 = vshrl.u32 %v700, 7
    %v702 = vsub.s32 4, %v701
    %v703 = vrot.slane %v680, %v702
    %v704 = vlaneseq
    %v705 = vshrl.u32 %v704, 7
    %v706 = vsub.s32 5, %v705
    %v707 = vrot.slane %v680, %v706
    %v708 = vlaneseq
    %v709 = vshrl.u32 %v708, 7
    %v710 = vsub.s32 6, %v709
    %v711 = vrot.slane %v680, %v710
    %v712 = vlaneseq
    %v713 = vshrl.u32 %v712, 7
    %v714 = vsub.s32 7, %v713
    %v715 = vrot.slane %v680, %v714
    %v716 = vlaneseq
    %v717 = vshrl.u32 %v716, 7
    %v718 = vsub.s32 0, %v717
    %v719 = vrot.slane %v681, %v718
    %v720 = vlaneseq
    %v721 = vshrl.u32 %v720, 7
    %v722 = vsub.s32 1, %v721
    %v723 = vrot.slane %v681, %v722
    %v724 = vlaneseq
    %v725 = vshrl.u32 %v724, 7
    %v726 = vsub.s32 2, %v725
    %v727 = vrot.slane %v681, %v726
    %v1315 = vunpack.c.l.b16 %v104
    %v1316 = vunpack.c.h.b16 %v104
    %v1317 = vunpack.c.l.b16 %v105
    %v1318 = vunpack.c.h.b16 %v105
    %v1319 = vunpack.c.l.b16 %v106
    %v1320 = vunpack.c.h.b16 %v106
    %v1321 = vunpack.c.l.b16 %v107
    %v1322 = vunpack.c.h.b16 %v107
    %v1323 = vunpack.c.l.b16 %v108
    %v1324 = vunpack.c.h.b16 %v108
    %v1325 = vunpack.c.l.b16 %v109
    %v1326 = vunpack.c.l.b16 %v110
    %v1327 = vunpack.c.h.b16 %v110
    %v1328 = vunpack.c.l.b16 %v111
    %v1329 = vunpack.c.h.b16 %v111
    %v1330 = vunpack.c.l.b16 %v112
    %v1331 = vunpack.c.h.b16 %v112
    %v1332 = vunpack.c.l.b16 %v113
    %v1333 = vunpack.c.h.b16 %v113
    %v1334 = vunpack.c.l.b16 %v114
    %v1335 = vunpack.c.h.b16 %v114
    %v1336 = vunpack.c.l.b16 %v115
    %v1337 = vunpack.c.l.b16 %v116
    %v1338 = vunpack.c.h.b16 %v116
    %v1339 = vunpack.c.l.b16 %v117
    %v1340 = vunpack.c.h.b16 %v117
    %v1341 = vunpack.c.l.b16 %v118
    %v1342 = vunpack.c.h.b16 %v118
    %v1343 = vunpack.c.l.b16 %v119
    %v1344 = vunpack.c.h.b16 %v119
    %v1345 = vunpack.c.l.b16 %v120
    %v1346 = vunpack.c.h.b16 %v120
    %v1347 = vunpack.c.l.b16 %v121
    %v1348 = vunpack.c.l.b16 %v122
    %v1349 = vunpack.c.h.b16 %v122
    %v1350 = vunpack.c.l.b16 %v123
    %v1351 = vunpack.c.h.b16 %v123
    %v1352 = vunpack.c.l.b16 %v124
    %v1353 = vunpack.c.h.b16 %v124
    %v1354 = vunpack.c.l.b16 %v125
    %v1355 = vunpack.c.h.b16 %v125
    %v1356 = vunpack.c.l.b16 %v126
    %v1357 = vunpack.c.h.b16 %v126
    %v1358 = vunpack.c.l.b16 %v127
    %v1359 = vunpack.c.l.b16 %v128
    %v1360 = vunpack.c.h.b16 %v128
    %v1361 = vunpack.c.l.b16 %v129
    %v1362 = vunpack.c.h.b16 %v129
    %v1363 = vunpack.c.l.b16 %v130
    %v1364 = vunpack.c.h.b16 %v130
    %v1365 = vunpack.c.l.b16 %v131
    %v1366 = vunpack.c.h.b16 %v131
    %v1367 = vunpack.c.l.b16 %v132
    %v1368 = vunpack.c.h.b16 %v132
    %v1369 = vunpack.c.l.b16 %v133
    %v1370 = vunpack.c.l.b16 %v134
    %v1371 = vunpack.c.h.b16 %v134
    %v1372 = vunpack.c.l.b16 %v135
    %v1373 = vunpack.c.h.b16 %v135
    %v1374 = vunpack.c.l.b16 %v136
    %v1375 = vunpack.c.h.b16 %v136
    %v1376 = vunpack.c.l.b16 %v137
    %v1377 = vunpack.c.h.b16 %v137
    %v1378 = vunpack.c.l.b16 %v138
    %v1379 = vunpack.c.h.b16 %v138
    %v1380 = vunpack.c.l.b16 %v139
    %v1381 = vunpack.c.l.b16 %v140
    %v1382 = vunpack.c.h.b16 %v140
    %v1383 = vunpack.c.l.b16 %v141
    %v1384 = vunpack.c.h.b16 %v141
    %v1385 = vunpack.c.l.b16 %v142
    %v1386 = vunpack.c.h.b16 %v142
    %v1387 = vunpack.c.l.b16 %v143
    %v1388 = vunpack.c.h.b16 %v143
    %v1389 = vunpack.c.l.b16 %v144
    %v1390 = vunpack.c.h.b16 %v144
    %v1391 = vunpack.c.l.b16 %v145
    %v1392 = vunpack.c.l.b16 %v146
    %v1393 = vunpack.c.h.b16 %v146
    %v1394 = vunpack.c.l.b16 %v147
    %v1395 = vunpack.c.h.b16 %v147
    %v1396 = vunpack.c.l.b16 %v148
    %v1397 = vunpack.c.h.b16 %v148
    %v1398 = vunpack.c.l.b16 %v149
    %v1399 = vunpack.c.h.b16 %v149
    %v1400 = vunpack.c.l.b16 %v150
    %v1401 = vunpack.c.h.b16 %v150
    %v1402 = vunpack.c.l.b16 %v151
    %v1403 = vunpack.c.l.b16 %v152
    %v1404 = vunpack.c.h.b16 %v152
    %v1405 = vunpack.c.l.b16 %v153
    %v1406 = vunpack.c.h.b16 %v153
    %v1407 = vunpack.c.l.b16 %v154
    %v1408 = vunpack.c.h.b16 %v154
    %v1409 = vunpack.c.l.b16 %v155
    %v1410 = vunpack.c.h.b16 %v155
    %v1411 = vunpack.c.l.b16 %v156
    %v1412 = vunpack.c.h.b16 %v156
    %v1413 = vunpack.c.l.b16 %v157
    %v1414 = vunpack.c.l.b16 %v158
    %v1415 = vunpack.c.h.b16 %v158
    %v1416 = vunpack.c.l.b16 %v159
    %v1417 = vunpack.c.h.b16 %v159
    %v1418 = vunpack.c.l.b16 %v160
    %v1419 = vunpack.c.h.b16 %v160
    %v1420 = vunpack.c.l.b16 %v161
    %v1421 = vunpack.c.h.b16 %v161
    %v1422 = vunpack.c.l.b16 %v162
    %v1423 = vunpack.c.h.b16 %v162
    %v1424 = vunpack.c.l.b16 %v163
    %v1425 = vunpack.c.l.b16 %v164
    %v1426 = vunpack.c.h.b16 %v164
    %v1427 = vunpack.c.l.b16 %v165
    %v1428 = vunpack.c.h.b16 %v165
    %v1429 = vunpack.c.l.b16 %v166
    %v1430 = vunpack.c.h.b16 %v166
    %v1431 = vunpack.c.l.b16 %v167
    %v1432 = vunpack.c.h.b16 %v167
    %v1433 = vunpack.c.l.b16 %v168
    %v1434 = vunpack.c.h.b16 %v168
    %v1435 = vunpack.c.l.b16 %v169
    %v1436 = vunpack.c.l.b16 %v170
    %v1437 = vunpack.c.h.b16 %v170
    %v1438 = vunpack.c.l.b16 %v171
    %v1439 = vunpack.c.h.b16 %v171
    %v1440 = vunpack.c.l.b16 %v172
    %v1441 = vunpack.c.h.b16 %v172
    %v1442 = vunpack.c.l.b16 %v173
    %v1443 = vunpack.c.h.b16 %v173
    %v1444 = vunpack.c.l.b16 %v174
    %v1445 = vunpack.c.h.b16 %v174
    %v1446 = vunpack.c.l.b16 %v175
    %v1447 = vunpack.c.l.b16 %v176
    %v1448 = vunpack.c.h.b16 %v176
    %v1449 = vunpack.c.l.b16 %v177
    %v1450 = vunpack.c.h.b16 %v177
    %v1451 = vunpack.c.l.b16 %v178
    %v1452 = vunpack.c.h.b16 %v178
    %v1453 = vunpack.c.l.b16 %v179
    %v1454 = vunpack.c.h.b16 %v179
    %v1455 = vunpack.c.l.b16 %v180
    %v1456 = vunpack.c.h.b16 %v180
    %v1457 = vunpack.c.l.b16 %v181
    %v1458 = vunpack.c.l.b16 %v182
    %v1459 = vunpack.c.h.b16 %v182
    %v1460 = vunpack.c.l.b16 %v183
    %v1461 = vunpack.c.h.b16 %v183
    %v1462 = vunpack.c.l.b16 %v184
    %v1463 = vunpack.c.h.b16 %v184
    %v1464 = vunpack.c.l.b16 %v185
    %v1465 = vunpack.c.h.b16 %v185
    %v1466 = vunpack.c.l.b16 %v186
    %v1467 = vunpack.c.h.b16 %v186
    %v1468 = vunpack.c.l.b16 %v187
    %v1469 = vunpack.c.l.b16 %v188
    %v1470 = vunpack.c.h.b16 %v188
    %v1471 = vunpack.c.l.b16 %v189
    %v1472 = vunpack.c.h.b16 %v189
    %v1473 = vunpack.c.l.b16 %v190
    %v1474 = vunpack.c.h.b16 %v190
    %v1475 = vunpack.c.l.b16 %v191
    %v1476 = vunpack.c.h.b16 %v191
    %v1477 = vunpack.c.l.b16 %v192
    %v1478 = vunpack.c.h.b16 %v192
    %v1479 = vunpack.c.l.b16 %v193
    %v1480 = vunpack.c.l.b16 %v194
    %v1481 = vunpack.c.h.b16 %v194
    %v1482 = vunpack.c.l.b16 %v195
    %v1483 = vunpack.c.h.b16 %v195
    %v1484 = vunpack.c.l.b16 %v196
    %v1485 = vunpack.c.h.b16 %v196
    %v1486 = vunpack.c.l.b16 %v197
    %v1487 = vunpack.c.h.b16 %v197
    %v1488 = vunpack.c.l.b16 %v198
    %v1489 = vunpack.c.h.b16 %v198
    %v1490 = vunpack.c.l.b16 %v199
    %v1491 = vunpack.c.l.b16 %v200
    %v1492 = vunpack.c.h.b16 %v200
    %v1493 = vunpack.c.l.b16 %v201
    %v1494 = vunpack.c.h.b16 %v201
    %v1495 = vunpack.c.l.b16 %v202
    %v1496 = vunpack.c.h.b16 %v202
    %v1497 = vunpack.c.l.b16 %v203
    %v1498 = vunpack.c.h.b16 %v203
    %v1499 = vunpack.c.l.b16 %v204
    %v1500 = vunpack.c.h.b16 %v204
    %v1501 = vunpack.c.l.b16 %v205
    %v1502 = vunpack.c.l.b16 %v206
    %v1503 = vunpack.c.h.b16 %v206
    %v1504 = vunpack.c.l.b16 %v207
    %v1505 = vunpack.c.h.b16 %v207
    %v1506 = vunpack.c.l.b16 %v208
    %v1507 = vunpack.c.h.b16 %v208
    %v1508 = vunpack.c.l.b16 %v209
    %v1509 = vunpack.c.h.b16 %v209
    %v1510 = vunpack.c.l.b16 %v210
    %v1511 = vunpack.c.h.b16 %v210
    %v1512 = vunpack.c.l.b16 %v211
    %v1513 = vunpack.c.l.b16 %v212
    %v1514 = vunpack.c.h.b16 %v212
    %v1515 = vunpack.c.l.b16 %v213
    %v1516 = vunpack.c.h.b16 %v213
    %v1517 = vunpack.c.l.b16 %v214
    %v1518 = vunpack.c.h.b16 %v214
    %v1519 = vunpack.c.l.b16 %v215
    %v1520 = vunpack.c.h.b16 %v215
    %v1521 = vunpack.c.l.b16 %v216
    %v1522 = vunpack.c.h.b16 %v216
    %v1523 = vunpack.c.l.b16 %v217
    %v1524 = vunpack.c.l.b16 %v218
    %v1525 = vunpack.c.h.b16 %v218
    %v1526 = vunpack.c.l.b16 %v219
    %v1527 = vunpack.c.h.b16 %v219
    %v1528 = vunpack.c.l.b16 %v220
    %v1529 = vunpack.c.h.b16 %v220
    %v1530 = vunpack.c.l.b16 %v221
    %v1531 = vunpack.c.h.b16 %v221
    %v1532 = vunpack.c.l.b16 %v222
    %v1533 = vunpack.c.h.b16 %v222
    %v1534 = vunpack.c.l.b16 %v223
    %v1535 = vunpack.c.l.b16 %v224
    %v1536 = vunpack.c.h.b16 %v224
    %v1537 = vunpack.c.l.b16 %v225
    %v1538 = vunpack.c.h.b16 %v225
    %v1539 = vunpack.c.l.b16 %v226
    %v1540 = vunpack.c.h.b16 %v226
    %v1541 = vunpack.c.l.b16 %v227
    %v1542 = vunpack.c.h.b16 %v227
    %v1543 = vunpack.c.l.b16 %v228
    %v1544 = vunpack.c.h.b16 %v228
    %v1545 = vunpack.c.l.b16 %v229
    %v1546 = vunpack.c.l.b16 %v230
    %v1547 = vunpack.c.h.b16 %v230
    %v1548 = vunpack.c.l.b16 %v231
    %v1549 = vunpack.c.h.b16 %v231
    %v1550 = vunpack.c.l.b16 %v232
    %v1551 = vunpack.c.h.b16 %v232
    %v1552 = vunpack.c.l.b16 %v233
    %v1553 = vunpack.c.h.b16 %v233
    %v1554 = vunpack.c.l.b16 %v234
    %v1555 = vunpack.c.h.b16 %v234
    %v1556 = vunpack.c.l.b16 %v235
    %v1557 = vunpack.c.l.b16 %v236
    %v1558 = vunpack.c.h.b16 %v236
    %v1559 = vunpack.c.l.b16 %v237
    %v1560 = vunpack.c.h.b16 %v237
    %v1561 = vunpack.c.l.b16 %v238
    %v1562 = vunpack.c.h.b16 %v238
    %v1563 = vunpack.c.l.b16 %v239
    %v1564 = vunpack.c.h.b16 %v239
    %v1565 = vunpack.c.l.b16 %v240
    %v1566 = vunpack.c.h.b16 %v240
    %v1567 = vunpack.c.l.b16 %v241
    %v1568 = vunpack.c.l.b16 %v242
    %v1569 = vunpack.c.h.b16 %v242
    %v1570 = vunpack.c.l.b16 %v243
    %v1571 = vunpack.c.h.b16 %v243
    %v1572 = vunpack.c.l.b16 %v244
    %v1573 = vunpack.c.h.b16 %v244
    %v1574 = vunpack.c.l.b16 %v245
    %v1575 = vunpack.c.h.b16 %v245
    %v1576 = vunpack.c.l.b16 %v246
    %v1577 = vunpack.c.h.b16 %v246
    %v1578 = vunpack.c.l.b16 %v247
    %v1579 = vunpack.c.l.b16 %v248
    %v1580 = vunpack.c.h.b16 %v248
    %v1581 = vunpack.c.l.b16 %v249
    %v1582 = vunpack.c.h.b16 %v249
    %v1583 = vunpack.c.l.b16 %v250
    %v1584 = vunpack.c.h.b16 %v250
    %v1585 = vunpack.c.l.b16 %v251
    %v1586 = vunpack.c.h.b16 %v251
    %v1587 = vunpack.c.l.b16 %v252
    %v1588 = vunpack.c.h.b16 %v252
    %v1589 = vunpack.c.l.b16 %v253
    %v1590 = vunpack.c.l.b16 %v254
    %v1591 = vunpack.c.h.b16 %v254
    %v1592 = vunpack.c.l.b16 %v255
    %v1593 = vunpack.c.h.b16 %v255
    %v1594 = vunpack.c.l.b16 %v256
    %v1595 = vunpack.c.h.b16 %v256
    %v1596 = vunpack.c.l.b16 %v257
    %v1597 = vunpack.c.h.b16 %v257
    %v1598 = vunpack.c.l.b16 %v258
    %v1599 = vunpack.c.h.b16 %v258
    %v1600 = vunpack.c.l.b16 %v259
    %v1601 = vunpack.c.l.b16 %v260
    %v1602 = vunpack.c.h.b16 %v260
    %v1603 = vunpack.c.l.b16 %v261
    %v1604 = vunpack.c.h.b16 %v261
    %v1605 = vunpack.c.l.b16 %v262
    %v1606 = vunpack.c.h.b16 %v262
    %v1607 = vunpack.c.l.b16 %v263
    %v1608 = vunpack.c.h.b16 %v263
    %v1609 = vunpack.c.l.b16 %v264
    %v1610 = vunpack.c.h.b16 %v264
    %v1611 = vunpack.c.l.b16 %v265
    %v1612 = vunpack.c.l.b16 %v266
    %v1613 = vunpack.c.h.b16 %v266
    %v1614 = vunpack.c.l.b16 %v267
    %v1615 = vunpack.c.h.b16 %v267
    %v1616 = vunpack.c.l.b16 %v268
    %v1617 = vunpack.c.h.b16 %v268
    %v1618 = vunpack.c.l.b16 %v269
    %v1619 = vunpack.c.h.b16 %v269
    %v1620 = vunpack.c.l.b16 %v270
    %v1621 = vunpack.c.h.b16 %v270
    %v1622 = vunpack.c.l.b16 %v271
    %v1623 = vunpack.c.l.b16 %v272
    %v1624 = vunpack.c.h.b16 %v272
    %v1625 = vunpack.c.l.b16 %v273
    %v1626 = vunpack.c.h.b16 %v273
    %v1627 = vunpack.c.l.b16 %v274
    %v1628 = vunpack.c.h.b16 %v274
    %v1629 = vunpack.c.l.b16 %v275
    %v1630 = vunpack.c.h.b16 %v275
    %v1631 = vunpack.c.l.b16 %v276
    %v1632 = vunpack.c.h.b16 %v276
    %v1633 = vunpack.c.l.b16 %v277
    %v1634 = vunpack.c.l.b16 %v278
    %v1635 = vunpack.c.h.b16 %v278
    %v1636 = vunpack.c.l.b16 %v279
    %v1637 = vunpack.c.h.b16 %v279
    %v1638 = vunpack.c.l.b16 %v280
    %v1639 = vunpack.c.h.b16 %v280
    %v1640 = vunpack.c.l.b16 %v281
    %v1641 = vunpack.c.h.b16 %v281
    %v1642 = vunpack.c.l.b16 %v282
    %v1643 = vunpack.c.h.b16 %v282
    %v1644 = vunpack.c.l.b16 %v283
    %v1645 = vunpack.c.l.b16 %v284
    %v1646 = vunpack.c.h.b16 %v284
    %v1647 = vunpack.c.l.b16 %v285
    %v1648 = vunpack.c.h.b16 %v285
    %v1649 = vunpack.c.l.b16 %v286
    %v1650 = vunpack.c.h.b16 %v286
    %v1651 = vunpack.c.l.b16 %v287
    %v1652 = vunpack.c.h.b16 %v287
    %v1653 = vunpack.c.l.b16 %v288
    %v1654 = vunpack.c.h.b16 %v288
    %v1655 = vunpack.c.l.b16 %v289
    %v1656 = vunpack.c.l.b16 %v290
    %v1657 = vunpack.c.h.b16 %v290
    %v1658 = vunpack.c.l.b16 %v291
    %v1659 = vunpack.c.h.b16 %v291
    %v1660 = vunpack.c.l.b16 %v292
    %v1661 = vunpack.c.h.b16 %v292
    %v1662 = vunpack.c.l.b16 %v293
    %v1663 = vunpack.c.h.b16 %v293
    %v1664 = vunpack.c.l.b16 %v294
    %v1665 = vunpack.c.h.b16 %v294
    %v1666 = vunpack.c.l.b16 %v295
    %v1667 = vunpack.c.l.b16 %v296
    %v1668 = vunpack.c.h.b16 %v296
    %v1669 = vunpack.c.l.b16 %v297
    %v1670 = vunpack.c.h.b16 %v297
    %v1671 = vunpack.c.l.b16 %v298
    %v1672 = vunpack.c.h.b16 %v298
    %v1673 = vunpack.c.l.b16 %v299
    %v1674 = vunpack.c.h.b16 %v299
    %v1675 = vunpack.c.l.b16 %v300
    %v1676 = vunpack.c.h.b16 %v300
    %v1677 = vunpack.c.l.b16 %v301
    %v1678 = vunpack.c.l.b16 %v302
    %v1679 = vunpack.c.h.b16 %v302
    %v1680 = vunpack.c.l.b16 %v303
    %v1681 = vunpack.c.h.b16 %v303
    %v1682 = vunpack.c.l.b16 %v304
    %v1683 = vunpack.c.h.b16 %v304
    %v1684 = vunpack.c.l.b16 %v305
    %v1685 = vunpack.c.h.b16 %v305
    %v1686 = vunpack.c.l.b16 %v306
    %v1687 = vunpack.c.h.b16 %v306
    %v1688 = vunpack.c.l.b16 %v307
    %v1689 = vunpack.c.l.b16 %v308
    %v1690 = vunpack.c.h.b16 %v308
    %v1691 = vunpack.c.l.b16 %v309
    %v1692 = vunpack.c.h.b16 %v309
    %v1693 = vunpack.c.l.b16 %v310
    %v1694 = vunpack.c.h.b16 %v310
    %v1695 = vunpack.c.l.b16 %v311
    %v1696 = vunpack.c.h.b16 %v311
    %v1697 = vunpack.c.l.b16 %v312
    %v1698 = vunpack.c.h.b16 %v312
    %v1699 = vunpack.c.l.b16 %v313
    %v1700 = vunpack.c.l.b16 %v314
    %v1701 = vunpack.c.h.b16 %v314
    %v1702 = vunpack.c.l.b16 %v315
    %v1703 = vunpack.c.h.b16 %v315
    %v1704 = vunpack.c.l.b16 %v316
    %v1705 = vunpack.c.h.b16 %v316
    %v1706 = vunpack.c.l.b16 %v317
    %v1707 = vunpack.c.h.b16 %v317
    %v1708 = vunpack.c.l.b16 %v318
    %v1709 = vunpack.c.h.b16 %v318
    %v1710 = vunpack.c.l.b16 %v319
    %v1711 = vunpack.c.l.b16 %v320
    %v1712 = vunpack.c.h.b16 %v320
    %v1713 = vunpack.c.l.b16 %v321
    %v1714 = vunpack.c.h.b16 %v321
    %v1715 = vunpack.c.l.b16 %v322
    %v1716 = vunpack.c.h.b16 %v322
    %v1717 = vunpack.c.l.b16 %v323
    %v1718 = vunpack.c.h.b16 %v323
    %v1719 = vunpack.c.l.b16 %v324
    %v1720 = vunpack.c.h.b16 %v324
    %v1721 = vunpack.c.l.b16 %v325
    %v1722 = vunpack.c.l.b16 %v326
    %v1723 = vunpack.c.h.b16 %v326
    %v1724 = vunpack.c.l.b16 %v327
    %v1725 = vunpack.c.h.b16 %v327
    %v1726 = vunpack.c.l.b16 %v328
    %v1727 = vunpack.c.h.b16 %v328
    %v1728 = vunpack.c.l.b16 %v329
    %v1729 = vunpack.c.h.b16 %v329
    %v1730 = vunpack.c.l.b16 %v330
    %v1731 = vunpack.c.h.b16 %v330
    %v1732 = vunpack.c.l.b16 %v331
    %v1733 = vunpack.c.l.b16 %v332
    %v1734 = vunpack.c.h.b16 %v332
    %v1735 = vunpack.c.l.b16 %v333
    %v1736 = vunpack.c.h.b16 %v333
    %v1737 = vunpack.c.l.b16 %v334
    %v1738 = vunpack.c.h.b16 %v334
    %v1739 = vunpack.c.l.b16 %v335
    %v1740 = vunpack.c.h.b16 %v335
    %v1741 = vunpack.c.l.b16 %v336
    %v1742 = vunpack.c.h.b16 %v336
    %v1743 = vunpack.c.l.b16 %v337
    %v1744 = vunpack.c.l.b16 %v338
    %v1745 = vunpack.c.h.b16 %v338
    %v1746 = vunpack.c.l.b16 %v339
    %v1747 = vunpack.c.h.b16 %v339
    %v1748 = vunpack.c.l.b16 %v340
    %v1749 = vunpack.c.h.b16 %v340
    %v1750 = vunpack.c.l.b16 %v341
    %v1751 = vunpack.c.h.b16 %v341
    %v1752 = vunpack.c.l.b16 %v342
    %v1753 = vunpack.c.h.b16 %v342
    %v1754 = vunpack.c.l.b16 %v343
    %v1755 = vunpack.c.l.b16 %v344
    %v1756 = vunpack.c.h.b16 %v344
    %v1757 = vunpack.c.l.b16 %v345
    %v1758 = vunpack.c.h.b16 %v345
    %v1759 = vunpack.c.l.b16 %v346
    %v1760 = vunpack.c.h.b16 %v346
    %v1761 = vunpack.c.l.b16 %v347
    %v1762 = vunpack.c.h.b16 %v347
    %v1763 = vunpack.c.l.b16 %v348
    %v1764 = vunpack.c.h.b16 %v348
    %v1765 = vunpack.c.l.b16 %v349
    %v1766 = vunpack.c.l.b16 %v350
    %v1767 = vunpack.c.h.b16 %v350
    %v1768 = vunpack.c.l.b16 %v351
    %v1769 = vunpack.c.h.b16 %v351
    %v1770 = vunpack.c.l.b16 %v352
    %v1771 = vunpack.c.h.b16 %v352
    %v1772 = vunpack.c.l.b16 %v353
    %v1773 = vunpack.c.h.b16 %v353
    %v1774 = vunpack.c.l.b16 %v354
    %v1775 = vunpack.c.h.b16 %v354
    %v1776 = vunpack.c.l.b16 %v355
    %v1777 = vunpack.c.l.b16 %v356
    %v1778 = vunpack.c.h.b16 %v356
    %v1779 = vunpack.c.l.b16 %v357
    %v1780 = vunpack.c.h.b16 %v357
    %v1781 = vunpack.c.l.b16 %v358
    %v1782 = vunpack.c.h.b16 %v358
    %v1783 = vunpack.c.l.b16 %v359
    %v1784 = vunpack.c.h.b16 %v359
    %v1785 = vunpack.c.l.b16 %v360
    %v1786 = vunpack.c.h.b16 %v360
    %v1787 = vunpack.c.l.b16 %v361
    %v1788 = vunpack.c.l.b16 %v362
    %v1789 = vunpack.c.h.b16 %v362
    %v1790 = vunpack.c.l.b16 %v363
    %v1791 = vunpack.c.h.b16 %v363
    %v1792 = vunpack.c.l.b16 %v364
    %v1793 = vunpack.c.h.b16 %v364
    %v1794 = vunpack.c.l.b16 %v365
    %v1795 = vunpack.c.h.b16 %v365
    %v1796 = vunpack.c.l.b16 %v366
    %v1797 = vunpack.c.h.b16 %v366
    %v1798 = vunpack.c.l.b16 %v367
    %v1799 = vunpack.c.l.b16 %v368
    %v1800 = vunpack.c.h.b16 %v368
    %v1801 = vunpack.c.l.b16 %v369
    %v1802 = vunpack.c.h.b16 %v369
    %v1803 = vunpack.c.l.b16 %v370
    %v1804 = vunpack.c.h.b16 %v370
    %v1805 = vunpack.c.l.b16 %v371
    %v1806 = vunpack.c.h.b16 %v371
    %v1807 = vunpack.c.l.b16 %v372
    %v1808 = vunpack.c.h.b16 %v372
    %v1809 = vunpack.c.l.b16 %v373
    %v1810 = vunpack.c.l.b16 %v374
    %v1811 = vunpack.c.h.b16 %v374
    %v1812 = vunpack.c.l.b16 %v375
    %v1813 = vunpack.c.h.b16 %v375
    %v1814 = vunpack.c.l.b16 %v376
    %v1815 = vunpack.c.h.b16 %v376
    %v1816 = vunpack.c.l.b16 %v377
    %v1817 = vunpack.c.h.b16 %v377
    %v1818 = vunpack.c.l.b16 %v378
    %v1819 = vunpack.c.h.b16 %v378
    %v1820 = vunpack.c.l.b16 %v379
    %v1821 = vunpack.c.l.b16 %v380
    %v1822 = vunpack.c.h.b16 %v380
    %v1823 = vunpack.c.l.b16 %v381
    %v1824 = vunpack.c.h.b16 %v381
    %v1825 = vunpack.c.l.b16 %v382
    %v1826 = vunpack.c.h.b16 %v382
    %v1827 = vunpack.c.l.b16 %v383
    %v1828 = vunpack.c.h.b16 %v383
    %v1829 = vunpack.c.l.b16 %v384
    %v1830 = vunpack.c.h.b16 %v384
    %v1831 = vunpack.c.l.b16 %v385
    %v1832 = vunpack.c.l.b16 %v386
    %v1833 = vunpack.c.h.b16 %v386
    %v1834 = vunpack.c.l.b16 %v387
    %v1835 = vunpack.c.h.b16 %v387
    %v1836 = vunpack.c.l.b16 %v388
    %v1837 = vunpack.c.h.b16 %v388
    %v1838 = vunpack.c.l.b16 %v389
    %v1839 = vunpack.c.h.b16 %v389
    %v1840 = vunpack.c.l.b16 %v390
    %v1841 = vunpack.c.h.b16 %v390
    %v1842 = vunpack.c.l.b16 %v391
    %v1843 = vunpack.c.l.b16 %v392
    %v1844 = vunpack.c.h.b16 %v392
    %v1845 = vunpack.c.l.b16 %v393
    %v1846 = vunpack.c.h.b16 %v393
    %v1847 = vunpack.c.l.b16 %v394
    %v1848 = vunpack.c.h.b16 %v394
    %v1849 = vunpack.c.l.b16 %v395
    %v1850 = vunpack.c.h.b16 %v395
    %v1851 = vunpack.c.l.b16 %v396
    %v1852 = vunpack.c.h.b16 %v396
    %v1853 = vunpack.c.l.b16 %v397
    %v1854 = vunpack.c.l.b16 %v398
    %v1855 = vunpack.c.h.b16 %v398
    %v1856 = vunpack.c.l.b16 %v399
    %v1857 = vunpack.c.h.b16 %v399
    %v1858 = vunpack.c.l.b16 %v400
    %v1859 = vunpack.c.h.b16 %v400
    %v1860 = vunpack.c.l.b16 %v401
    %v1861 = vunpack.c.h.b16 %v401
    %v1862 = vunpack.c.l.b16 %v402
    %v1863 = vunpack.c.h.b16 %v402
    %v1864 = vunpack.c.l.b16 %v403
    %v1865 = vunpack.c.l.b16 %v404
    %v1866 = vunpack.c.h.b16 %v404
    %v1867 = vunpack.c.l.b16 %v405
    %v1868 = vunpack.c.h.b16 %v405
    %v1869 = vunpack.c.l.b16 %v406
    %v1870 = vunpack.c.h.b16 %v406
    %v1871 = vunpack.c.l.b16 %v407
    %v1872 = vunpack.c.h.b16 %v407
    %v1873 = vunpack.c.l.b16 %v408
    %v1874 = vunpack.c.h.b16 %v408
    %v1875 = vunpack.c.l.b16 %v409
    %v1876 = vunpack.c.l.b16 %v410
    %v1877 = vunpack.c.h.b16 %v410
    %v1878 = vunpack.c.l.b16 %v411
    %v1879 = vunpack.c.h.b16 %v411
    %v1880 = vunpack.c.l.b16 %v412
    %v1881 = vunpack.c.h.b16 %v412
    %v1882 = vunpack.c.l.b16 %v413
    %v1883 = vunpack.c.h.b16 %v413
    %v1884 = vunpack.c.l.b16 %v414
    %v1885 = vunpack.c.h.b16 %v414
    %v1886 = vunpack.c.l.b16 %v415
    %v1887 = vunpack.c.l.b16 %v416
    %v1888 = vunpack.c.h.b16 %v416
    %v1889 = vunpack.c.l.b16 %v417
    %v1890 = vunpack.c.h.b16 %v417
    %v1891 = vunpack.c.l.b16 %v418
    %v1892 = vunpack.c.h.b16 %v418
    %v1893 = vunpack.c.l.b16 %v419
    %v1894 = vunpack.c.h.b16 %v419
    %v1895 = vunpack.c.l.b16 %v420
    %v1896 = vunpack.c.h.b16 %v420
    %v1897 = vunpack.c.l.b16 %v421
    %v1898 = vunpack.c.l.b16 %v422
    %v1899 = vunpack.c.h.b16 %v422
    %v1900 = vunpack.c.l.b16 %v423
    %v1901 = vunpack.c.h.b16 %v423
    %v1902 = vunpack.c.l.b16 %v424
    %v1903 = vunpack.c.h.b16 %v424
    %v1904 = vunpack.c.l.b16 %v425
    %v1905 = vunpack.c.h.b16 %v425
    %v1906 = vunpack.c.l.b16 %v426
    %v1907 = vunpack.c.h.b16 %v426
    %v1908 = vunpack.c.l.b16 %v427
    %v1909 = vunpack.c.l.b16 %v428
    %v1910 = vunpack.c.h.b16 %v428
    %v1911 = vunpack.c.l.b16 %v429
    %v1912 = vunpack.c.h.b16 %v429
    %v1913 = vunpack.c.l.b16 %v430
    %v1914 = vunpack.c.h.b16 %v430
    %v1915 = vunpack.c.l.b16 %v431
    %v1916 = vunpack.c.h.b16 %v431
    %v1917 = vunpack.c.l.b16 %v432
    %v1918 = vunpack.c.h.b16 %v432
    %v1919 = vunpack.c.l.b16 %v433
    %v1920 = vunpack.c.l.b16 %v434
    %v1921 = vunpack.c.h.b16 %v434
    %v1922 = vunpack.c.l.b16 %v435
    %v1923 = vunpack.c.h.b16 %v435
    %v1924 = vunpack.c.l.b16 %v436
    %v1925 = vunpack.c.h.b16 %v436
    %v1926 = vunpack.c.l.b16 %v437
    %v1927 = vunpack.c.h.b16 %v437
    %v1928 = vunpack.c.l.b16 %v438
    %v1929 = vunpack.c.h.b16 %v438
    %v1930 = vunpack.c.l.b16 %v439
    %v1931 = vunpack.c.l.b16 %v440
    %v1932 = vunpack.c.h.b16 %v440
    %v1933 = vunpack.c.l.b16 %v441
    %v1934 = vunpack.c.h.b16 %v441
    %v1935 = vunpack.c.l.b16 %v442
    %v1936 = vunpack.c.h.b16 %v442
    %v1937 = vunpack.c.l.b16 %v443
    %v1938 = vunpack.c.h.b16 %v443
    %v1939 = vunpack.c.l.b16 %v444
    %v1940 = vunpack.c.h.b16 %v444
    %v1941 = vunpack.c.l.b16 %v445
    %v1942 = vunpack.c.l.b16 %v446
    %v1943 = vunpack.c.h.b16 %v446
    %v1944 = vunpack.c.l.b16 %v447
    %v1945 = vunpack.c.h.b16 %v447
    %v1946 = vunpack.c.l.b16 %v448
    %v1947 = vunpack.c.h.b16 %v448
    %v1948 = vunpack.c.l.b16 %v449
    %v1949 = vunpack.c.h.b16 %v449
    %v1950 = vunpack.c.l.b16 %v450
    %v1951 = vunpack.c.h.b16 %v450
    %v1952 = vunpack.c.l.b16 %v451
    %v1953 = vunpack.c.l.b16 %v452
    %v1954 = vunpack.c.h.b16 %v452
    %v1955 = vunpack.c.l.b16 %v453
    %v1956 = vunpack.c.h.b16 %v453
    %v1957 = vunpack.c.l.b16 %v454
    %v1958 = vunpack.c.h.b16 %v454
    %v1959 = vunpack.c.l.b16 %v455
    %v1960 = vunpack.c.h.b16 %v455
    %v1961 = vunpack.c.l.b16 %v456
    %v1962 = vunpack.c.h.b16 %v456
    %v1963 = vunpack.c.l.b16 %v457
    %v1964 = vunpack.c.l.b16 %v458
    %v1965 = vunpack.c.h.b16 %v458
    %v1966 = vunpack.c.l.b16 %v459
    %v1967 = vunpack.c.h.b16 %v459
    %v1968 = vunpack.c.l.b16 %v460
    %v1969 = vunpack.c.h.b16 %v460
    %v1970 = vunpack.c.l.b16 %v461
    %v1971 = vunpack.c.h.b16 %v461
    %v1972 = vunpack.c.l.b16 %v462
    %v1973 = vunpack.c.h.b16 %v462
    %v1974 = vunpack.c.l.b16 %v463
    %v1975 = vunpack.c.l.b16 %v464
    %v1976 = vunpack.c.h.b16 %v464
    %v1977 = vunpack.c.l.b16 %v465
    %v1978 = vunpack.c.h.b16 %v465
    %v1979 = vunpack.c.l.b16 %v466
    %v1980 = vunpack.c.h.b16 %v466
    %v1981 = vunpack.c.l.b16 %v467
    %v1982 = vunpack.c.h.b16 %v467
    %v1983 = vunpack.c.l.b16 %v468
    %v1984 = vunpack.c.h.b16 %v468
    %v1985 = vunpack.c.l.b16 %v469
    %v1986 = vunpack.c.l.b16 %v470
    %v1987 = vunpack.c.h.b16 %v470
    %v1988 = vunpack.c.l.b16 %v471
    %v1989 = vunpack.c.h.b16 %v471
    %v1990 = vunpack.c.l.b16 %v472
    %v1991 = vunpack.c.h.b16 %v472
    %v1992 = vunpack.c.l.b16 %v473
    %v1993 = vunpack.c.h.b16 %v473
    %v1994 = vunpack.c.l.b16 %v474
    %v1995 = vunpack.c.h.b16 %v474
    %v1996 = vunpack.c.l.b16 %v475
    %v1997 = vunpack.c.l.b16 %v476
    %v1998 = vunpack.c.h.b16 %v476
    %v1999 = vunpack.c.l.b16 %v477
    %v2000 = vunpack.c.h.b16 %v477
    %v2001 = vunpack.c.l.b16 %v478
    %v2002 = vunpack.c.h.b16 %v478
    %v2003 = vunpack.c.l.b16 %v479
    %v2004 = vunpack.c.h.b16 %v479
    %v2005 = vunpack.c.l.b16 %v480
    %v2006 = vunpack.c.h.b16 %v480
    %v2007 = vunpack.c.l.b16 %v481
    %v2008 = vunpack.c.l.b16 %v482
    %v2009 = vunpack.c.h.b16 %v482
    %v2010 = vunpack.c.l.b16 %v483
    %v2011 = vunpack.c.h.b16 %v483
    %v2012 = vunpack.c.l.b16 %v484
    %v2013 = vunpack.c.h.b16 %v484
    %v2014 = vunpack.c.l.b16 %v485
    %v2015 = vunpack.c.h.b16 %v485
    %v2016 = vunpack.c.l.b16 %v486
    %v2017 = vunpack.c.h.b16 %v486
    %v2018 = vunpack.c.l.b16 %v487
    %v2019 = vunpack.c.l.b16 %v488
    %v2020 = vunpack.c.h.b16 %v488
    %v2021 = vunpack.c.l.b16 %v489
    %v2022 = vunpack.c.h.b16 %v489
    %v2023 = vunpack.c.l.b16 %v490
    %v2024 = vunpack.c.h.b16 %v490
    %v2025 = vunpack.c.l.b16 %v491
    %v2026 = vunpack.c.h.b16 %v491
    %v2027 = vunpack.c.l.b16 %v492
    %v2028 = vunpack.c.h.b16 %v492
    %v2029 = vunpack.c.l.b16 %v493
    %v2030 = vunpack.c.l.b16 %v494
    %v2031 = vunpack.c.h.b16 %v494
    %v2032 = vunpack.c.l.b16 %v495
    %v2033 = vunpack.c.h.b16 %v495
    %v2034 = vunpack.c.l.b16 %v496
    %v2035 = vunpack.c.h.b16 %v496
    %v2036 = vunpack.c.l.b16 %v497
    %v2037 = vunpack.c.h.b16 %v497
    %v2038 = vunpack.c.l.b16 %v498
    %v2039 = vunpack.c.h.b16 %v498
    %v2040 = vunpack.c.l.b16 %v499
    %v2041 = vunpack.c.l.b16 %v500
    %v2042 = vunpack.c.h.b16 %v500
    %v2043 = vunpack.c.l.b16 %v501
    %v2044 = vunpack.c.h.b16 %v501
    %v2045 = vunpack.c.l.b16 %v502
    %v2046 = vunpack.c.h.b16 %v502
    %v2047 = vunpack.c.l.b16 %v503
    %v2048 = vunpack.c.h.b16 %v503
    %v2049 = vunpack.c.l.b16 %v504
    %v2050 = vunpack.c.h.b16 %v504
    %v2051 = vunpack.c.l.b16 %v505
    %v2052 = vunpack.c.l.b16 %v506
    %v2053 = vunpack.c.h.b16 %v506
    %v2054 = vunpack.c.l.b16 %v507
    %v2055 = vunpack.c.h.b16 %v507
    %v2056 = vunpack.c.l.b16 %v508
    %v2057 = vunpack.c.h.b16 %v508
    %v2058 = vunpack.c.l.b16 %v509
    %v2059 = vunpack.c.h.b16 %v509
    %v2060 = vunpack.c.l.b16 %v510
    %v2061 = vunpack.c.h.b16 %v510
    %v2062 = vunpack.c.l.b16 %v511
    %v2063 = vunpack.c.l.b16 %v512
    %v2064 = vunpack.c.h.b16 %v512
    %v2065 = vunpack.c.l.b16 %v513
    %v2066 = vunpack.c.h.b16 %v513
    %v2067 = vunpack.c.l.b16 %v514
    %v2068 = vunpack.c.h.b16 %v514
    %v2069 = vunpack.c.l.b16 %v515
    %v2070 = vunpack.c.h.b16 %v515
    %v2071 = vunpack.c.l.b16 %v516
    %v2072 = vunpack.c.h.b16 %v516
    %v2073 = vunpack.c.l.b16 %v517
    %v2074 = vunpack.c.l.b16 %v518
    %v2075 = vunpack.c.h.b16 %v518
    %v2076 = vunpack.c.l.b16 %v519
    %v2077 = vunpack.c.h.b16 %v519
    %v2078 = vunpack.c.l.b16 %v520
    %v2079 = vunpack.c.h.b16 %v520
    %v2080 = vunpack.c.l.b16 %v521
    %v2081 = vunpack.c.h.b16 %v521
    %v2082 = vunpack.c.l.b16 %v522
    %v2083 = vunpack.c.h.b16 %v522
    %v2084 = vunpack.c.l.b16 %v523
    %v2085 = vunpack.c.l.b16 %v524
    %v2086 = vunpack.c.h.b16 %v524
    %v2087 = vunpack.c.l.b16 %v525
    %v2088 = vunpack.c.h.b16 %v525
    %v2089 = vunpack.c.l.b16 %v526
    %v2090 = vunpack.c.h.b16 %v526
    %v2091 = vunpack.c.l.b16 %v527
    %v2092 = vunpack.c.h.b16 %v527
    %v2093 = vunpack.c.l.b16 %v528
    %v2094 = vunpack.c.h.b16 %v528
    %v2095 = vunpack.c.l.b16 %v529
    %v2096 = vunpack.c.l.b16 %v530
    %v2097 = vunpack.c.h.b16 %v530
    %v2098 = vunpack.c.l.b16 %v531
    %v2099 = vunpack.c.h.b16 %v531
    %v2100 = vunpack.c.l.b16 %v532
    %v2101 = vunpack.c.h.b16 %v532
    %v2102 = vunpack.c.l.b16 %v533
    %v2103 = vunpack.c.h.b16 %v533
    %v2104 = vunpack.c.l.b16 %v534
    %v2105 = vunpack.c.h.b16 %v534
    %v2106 = vunpack.c.l.b16 %v535
    %v2107 = vunpack.c.l.b16 %v536
    %v2108 = vunpack.c.h.b16 %v536
    %v2109 = vunpack.c.l.b16 %v537
    %v2110 = vunpack.c.h.b16 %v537
    %v2111 = vunpack.c.l.b16 %v538
    %v2112 = vunpack.c.h.b16 %v538
    %v2113 = vunpack.c.l.b16 %v539
    %v2114 = vunpack.c.h.b16 %v539
    %v2115 = vunpack.c.l.b16 %v540
    %v2116 = vunpack.c.h.b16 %v540
    %v2117 = vunpack.c.l.b16 %v541
    %v2118 = vunpack.c.l.b16 %v542
    %v2119 = vunpack.c.h.b16 %v542
    %v2120 = vunpack.c.l.b16 %v543
    %v2121 = vunpack.c.h.b16 %v543
    %v2122 = vunpack.c.l.b16 %v544
    %v2123 = vunpack.c.h.b16 %v544
    %v2124 = vunpack.c.l.b16 %v545
    %v2125 = vunpack.c.h.b16 %v545
    %v2126 = vunpack.c.l.b16 %v546
    %v2127 = vunpack.c.h.b16 %v546
    %v2128 = vunpack.c.l.b16 %v547
    %v2129 = vunpack.c.l.b16 %v548
    %v2130 = vunpack.c.h.b16 %v548
    %v2131 = vunpack.c.l.b16 %v549
    %v2132 = vunpack.c.h.b16 %v549
    %v2133 = vunpack.c.l.b16 %v550
    %v2134 = vunpack.c.h.b16 %v550
    %v2135 = vunpack.c.l.b16 %v551
    %v2136 = vunpack.c.h.b16 %v551
    %v2137 = vunpack.c.l.b16 %v552
    %v2138 = vunpack.c.h.b16 %v552
    %v2139 = vunpack.c.l.b16 %v553
    %v2140 = vunpack.c.l.b16 %v554
    %v2141 = vunpack.c.h.b16 %v554
    %v2142 = vunpack.c.l.b16 %v555
    %v2143 = vunpack.c.h.b16 %v555
    %v2144 = vunpack.c.l.b16 %v556
    %v2145 = vunpack.c.h.b16 %v556
    %v2146 = vunpack.c.l.b16 %v557
    %v2147 = vunpack.c.h.b16 %v557
    %v2148 = vunpack.c.l.b16 %v558
    %v2149 = vunpack.c.h.b16 %v558
    %v2150 = vunpack.c.l.b16 %v559
    %v2151 = vunpack.c.l.b16 %v560
    %v2152 = vunpack.c.h.b16 %v560
    %v2153 = vunpack.c.l.b16 %v561
    %v2154 = vunpack.c.h.b16 %v561
    %v2155 = vunpack.c.l.b16 %v562
    %v2156 = vunpack.c.h.b16 %v562
    %v2157 = vunpack.c.l.b16 %v563
    %v2158 = vunpack.c.h.b16 %v563
    %v2159 = vunpack.c.l.b16 %v564
    %v2160 = vunpack.c.h.b16 %v564
    %v2161 = vunpack.c.l.b16 %v565
    %v2162 = vunpack.c.l.b16 %v566
    %v2163 = vunpack.c.h.b16 %v566
    %v2164 = vunpack.c.l.b16 %v567
    %v2165 = vunpack.c.h.b16 %v567
    %v2166 = vunpack.c.l.b16 %v568
    %v2167 = vunpack.c.h.b16 %v568
    %v2168 = vunpack.c.l.b16 %v569
    %v2169 = vunpack.c.h.b16 %v569
    %v2170 = vunpack.c.l.b16 %v570
    %v2171 = vunpack.c.h.b16 %v570
    %v2172 = vunpack.c.l.b16 %v571
    %v2173 = vunpack.c.l.b16 %v572
    %v2174 = vunpack.c.h.b16 %v572
    %v2175 = vunpack.c.l.b16 %v573
    %v2176 = vunpack.c.h.b16 %v573
    %v2177 = vunpack.c.l.b16 %v574
    %v2178 = vunpack.c.h.b16 %v574
    %v2179 = vunpack.c.l.b16 %v575
    %v2180 = vunpack.c.h.b16 %v575
    %v2181 = vunpack.c.l.b16 %v576
    %v2182 = vunpack.c.h.b16 %v576
    %v2183 = vunpack.c.l.b16 %v577
    %v2184 = vunpack.c.l.b16 %v578
    %v2185 = vunpack.c.h.b16 %v578
    %v2186 = vunpack.c.l.b16 %v579
    %v2187 = vunpack.c.h.b16 %v579
    %v2188 = vunpack.c.l.b16 %v580
    %v2189 = vunpack.c.h.b16 %v580
    %v2190 = vunpack.c.l.b16 %v581
    %v2191 = vunpack.c.h.b16 %v581
    %v2192 = vunpack.c.l.b16 %v582
    %v2193 = vunpack.c.h.b16 %v582
    %v2194 = vunpack.c.l.b16 %v583
    %v2195 = vunpack.c.l.b16 %v584
    %v2196 = vunpack.c.h.b16 %v584
    %v2197 = vunpack.c.l.b16 %v585
    %v2198 = vunpack.c.h.b16 %v585
    %v2199 = vunpack.c.l.b16 %v586
    %v2200 = vunpack.c.h.b16 %v586
    %v2201 = vunpack.c.l.b16 %v587
    %v2202 = vunpack.c.h.b16 %v587
    %v2203 = vunpack.c.l.b16 %v588
    %v2204 = vunpack.c.h.b16 %v588
    %v2205 = vunpack.c.l.b16 %v589
    %v2206 = vunpack.c.l.b16 %v590
    %v2207 = vunpack.c.h.b16 %v590
    %v2208 = vunpack.c.l.b16 %v591
    %v2209 = vunpack.c.h.b16 %v591
    %v2210 = vunpack.c.l.b16 %v592
    %v2211 = vunpack.c.h.b16 %v592
    %v2212 = vunpack.c.l.b16 %v593
    %v2213 = vunpack.c.h.b16 %v593
    %v2214 = vunpack.c.l.b16 %v594
    %v2215 = vunpack.c.h.b16 %v594
    %v2216 = vunpack.c.l.b16 %v595
    %v2217 = vunpack.c.l.b16 %v596
    %v2218 = vunpack.c.h.b16 %v596
    %v2219 = vunpack.c.l.b16 %v597
    %v2220 = vunpack.c.h.b16 %v597
    %v2221 = vunpack.c.l.b16 %v598
    %v2222 = vunpack.c.h.b16 %v598
    %v2223 = vunpack.c.l.b16 %v599
    %v2224 = vunpack.c.h.b16 %v599
    %v2225 = vunpack.c.l.b16 %v600
    %v2226 = vunpack.c.h.b16 %v600
    %v2227 = vunpack.c.l.b16 %v601
    %v2228 = vunpack.c.l.b16 %v602
    %v2229 = vunpack.c.h.b16 %v602
    %v2230 = vunpack.c.l.b16 %v603
    %v2231 = vunpack.c.h.b16 %v603
    %v2232 = vunpack.c.l.b16 %v604
    %v2233 = vunpack.c.h.b16 %v604
    %v2234 = vunpack.c.l.b16 %v605
    %v2235 = vunpack.c.h.b16 %v605
    %v2236 = vunpack.c.l.b16 %v606
    %v2237 = vunpack.c.h.b16 %v606
    %v2238 = vunpack.c.l.b16 %v607
    %v2239 = vunpack.c.l.b16 %v608
    %v2240 = vunpack.c.h.b16 %v608
    %v2241 = vunpack.c.l.b16 %v609
    %v2242 = vunpack.c.h.b16 %v609
    %v2243 = vunpack.c.l.b16 %v610
    %v2244 = vunpack.c.h.b16 %v610
    %v2245 = vunpack.c.l.b16 %v611
    %v2246 = vunpack.c.h.b16 %v611
    %v2247 = vunpack.c.l.b16 %v612
    %v2248 = vunpack.c.h.b16 %v612
    %v2249 = vunpack.c.l.b16 %v613
    %v2250 = vunpack.c.l.b16 %v614
    %v2251 = vunpack.c.h.b16 %v614
    %v2252 = vunpack.c.l.b16 %v615
    %v2253 = vunpack.c.h.b16 %v615
    %v2254 = vunpack.c.l.b16 %v616
    %v2255 = vunpack.c.h.b16 %v616
    %v2256 = vunpack.c.l.b16 %v617
    %v2257 = vunpack.c.h.b16 %v617
    %v2258 = vunpack.c.l.b16 %v618
    %v2259 = vunpack.c.h.b16 %v618
    %v2260 = vunpack.c.l.b16 %v619
    %v2261 = vunpack.c.l.b16 %v620
    %v2262 = vunpack.c.h.b16 %v620
    %v2263 = vunpack.c.l.b16 %v621
    %v2264 = vunpack.c.h.b16 %v621
    %v2265 = vunpack.c.l.b16 %v622
    %v2266 = vunpack.c.h.b16 %v622
    %v2267 = vunpack.c.l.b16 %v623
    %v2268 = vunpack.c.h.b16 %v623
    %v2269 = vunpack.c.l.b16 %v624
    %v2270 = vunpack.c.h.b16 %v624
    %v2271 = vunpack.c.l.b16 %v625
    %v2272 = vunpack.c.l.b16 %v626
    %v2273 = vunpack.c.h.b16 %v626
    %v2274 = vunpack.c.l.b16 %v627
    %v2275 = vunpack.c.h.b16 %v627
    %v2276 = vunpack.c.l.b16 %v628
    %v2277 = vunpack.c.h.b16 %v628
    %v2278 = vunpack.c.l.b16 %v629
    %v2279 = vunpack.c.h.b16 %v629
    %v2280 = vunpack.c.l.b16 %v630
    %v2281 = vunpack.c.h.b16 %v630
    %v2282 = vunpack.c.l.b16 %v631
    %v2283 = vunpack.c.l.b16 %v632
    %v2284 = vunpack.c.h.b16 %v632
    %v2285 = vunpack.c.l.b16 %v633
    %v2286 = vunpack.c.h.b16 %v633
    %v2287 = vunpack.c.l.b16 %v634
    %v2288 = vunpack.c.h.b16 %v634
    %v2289 = vunpack.c.l.b16 %v635
    %v2290 = vunpack.c.h.b16 %v635
    %v2291 = vunpack.c.l.b16 %v636
    %v2292 = vunpack.c.h.b16 %v636
    %v2293 = vunpack.c.l.b16 %v637
    %v2294 = vunpack.c.l.b16 %v638
    %v2295 = vunpack.c.h.b16 %v638
    %v2296 = vunpack.c.l.b16 %v639
    %v2297 = vunpack.c.h.b16 %v639
    %v2298 = vunpack.c.l.b16 %v640
    %v2299 = vunpack.c.h.b16 %v640
    %v2300 = vunpack.c.l.b16 %v641
    %v2301 = vunpack.c.h.b16 %v641
    %v2302 = vunpack.c.l.b16 %v642
    %v2303 = vunpack.c.h.b16 %v642
    %v2304 = vunpack.c.l.b16 %v643
    %v2305 = vunpack.c.l.b16 %v644
    %v2306 = vunpack.c.h.b16 %v644
    %v2307 = vunpack.c.l.b16 %v645
    %v2308 = vunpack.c.h.b16 %v645
    %v2309 = vunpack.c.l.b16 %v646
    %v2310 = vunpack.c.h.b16 %v646
    %v2311 = vunpack.c.l.b16 %v647
    %v2312 = vunpack.c.h.b16 %v647
    %v2313 = vunpack.c.l.b16 %v648
    %v2314 = vunpack.c.h.b16 %v648
    %v2315 = vunpack.c.l.b16 %v649
    %v2316 = vunpack.c.l.b16 %v650
    %v2317 = vunpack.c.h.b16 %v650
    %v2318 = vunpack.c.l.b16 %v651
    %v2319 = vunpack.c.h.b16 %v651
    %v2320 = vunpack.c.l.b16 %v652
    %v2321 = vunpack.c.h.b16 %v652
    %v2322 = vunpack.c.l.b16 %v653
    %v2323 = vunpack.c.h.b16 %v653
    %v2324 = vunpack.c.l.b16 %v654
    %v2325 = vunpack.c.h.b16 %v654
    %v2326 = vunpack.c.l.b16 %v655
    %v2327 = vunpack.c.l.b16 %v656
    %v2328 = vunpack.c.h.b16 %v656
    %v2329 = vunpack.c.l.b16 %v657
    %v2330 = vunpack.c.h.b16 %v657
    %v2331 = vunpack.c.l.b16 %v658
    %v2332 = vunpack.c.h.b16 %v658
    %v2333 = vunpack.c.l.b16 %v659
    %v2334 = vunpack.c.h.b16 %v659
    %v2335 = vunpack.c.l.b16 %v660
    %v2336 = vunpack.c.h.b16 %v660
    %v2337 = vunpack.c.l.b16 %v661
    %v2338 = vunpack.c.l.b16 %v662
    %v2339 = vunpack.c.h.b16 %v662
    %v2340 = vunpack.c.l.b16 %v663
    %v2341 = vunpack.c.h.b16 %v663
    %v2342 = vunpack.c.l.b16 %v664
    %v2343 = vunpack.c.h.b16 %v664
    %v2344 = vunpack.c.l.b16 %v665
    %v2345 = vunpack.c.h.b16 %v665
    %v2346 = vunpack.c.l.b16 %v666
    %v2347 = vunpack.c.h.b16 %v666
    %v2348 = vunpack.c.l.b16 %v667
    %v2349 = vunpack.c.l.b16 %v668
    %v2350 = vunpack.c.h.b16 %v668
    %v2351 = vunpack.c.l.b16 %v669
    %v2352 = vunpack.c.h.b16 %v669
    %v2353 = vunpack.c.l.b16 %v670
    %v2354 = vunpack.c.h.b16 %v670
    %v2355 = vunpack.c.l.b16 %v671
    %v2356 = vunpack.c.h.b16 %v671
    %v2357 = vunpack.c.l.b16 %v672
    %v2358 = vunpack.c.h.b16 %v672
    %v2359 = vunpack.c.l.b16 %v673
    %v2360 = vunpack.c.l.b16 %v674
    %v2361 = vunpack.c.h.b16 %v674
    %v2362 = vunpack.c.l.b16 %v675
    %v2363 = vunpack.c.h.b16 %v675
    %v2364 = vunpack.c.l.b16 %v676
    %v2365 = vunpack.c.h.b16 %v676
    %v2366 = vunpack.c.l.b16 %v677
    %v2367 = vunpack.c.h.b16 %v677
    %v2368 = vunpack.c.l.b16 %v678
    %v2369 = vunpack.c.h.b16 %v678
    %v2370 = vunpack.c.l.b16 %v679
    %v2371 = vpack.c.b16 %v1326, %v1315
    %v2372 = vpack.c.b16 %v1327, %v1316
    %v2373 = vpack.c.b16 %v1328, %v1317
    %v2374 = vpack.c.b16 %v1329, %v1318
    %v2375 = vpack.c.b16 %v1330, %v1319
    %v2376 = vpack.c.b16 %v1331, %v1320
    %v2377 = vpack.c.b16 %v1332, %v1321
    %v2378 = vpack.c.b16 %v1333, %v1322
    %v2379 = vpack.c.b16 %v1334, %v1323
    %v2380 = vpack.c.b16 %v1335, %v1324
    %v2381 = vpack.c.b16 %v1336, %v1325
    %v2382 = vpack.c.b16 %v1348, %v1337
    %v2383 = vpack.c.b16 %v1349, %v1338
    %v2384 = vpack.c.b16 %v1350, %v1339
    %v2385 = vpack.c.b16 %v1351, %v1340
    %v2386 = vpack.c.b16 %v1352, %v1341
    %v2387 = vpack.c.b16 %v1353, %v1342
    %v2388 = vpack.c.b16 %v1354, %v1343
    %v2389 = vpack.c.b16 %v1355, %v1344
    %v2390 = vpack.c.b16 %v1356, %v1345
    %v2391 = vpack.c.b16 %v1357, %v1346
    %v2392 = vpack.c.b16 %v1358, %v1347
    %v2393 = vpack.c.b16 %v1370, %v1359
    %v2394 = vpack.c.b16 %v1371, %v1360
    %v2395 = vpack.c.b16 %v1372, %v1361
    %v2396 = vpack.c.b16 %v1373, %v1362
    %v2397 = vpack.c.b16 %v1374, %v1363
    %v2398 = vpack.c.b16 %v1375, %v1364
    %v2399 = vpack.c.b16 %v1376, %v1365
    %v2400 = vpack.c.b16 %v1377, %v1366
    %v2401 = vpack.c.b16 %v1378, %v1367
    %v2402 = vpack.c.b16 %v1379, %v1368
    %v2403 = vpack.c.b16 %v1380, %v1369
    %v2404 = vpack.c.b16 %v1392, %v1381
    %v2405 = vpack.c.b16 %v1393, %v1382
    %v2406 = vpack.c.b16 %v1394, %v1383
    %v2407 = vpack.c.b16 %v1395, %v1384
    %v2408 = vpack.c.b16 %v1396, %v1385
    %v2409 = vpack.c.b16 %v1397, %v1386
    %v2410 = vpack.c.b16 %v1398, %v1387
    %v2411 = vpack.c.b16 %v1399, %v1388
    %v2412 = vpack.c.b16 %v1400, %v1389
    %v2413 = vpack.c.b16 %v1401, %v1390
    %v2414 = vpack.c.b16 %v1402, %v1391
    %v2415 = vpack.c.b16 %v1414, %v1403
    %v2416 = vpack.c.b16 %v1415, %v1404
    %v2417 = vpack.c.b16 %v1416, %v1405
    %v2418 = vpack.c.b16 %v1417, %v1406
    %v2419 = vpack.c.b16 %v1418, %v1407
    %v2420 = vpack.c.b16 %v1419, %v1408
    %v2421 = vpack.c.b16 %v1420, %v1409
    %v2422 = vpack.c.b16 %v1421, %v1410
    %v2423 = vpack.c.b16 %v1422, %v1411
    %v2424 = vpack.c.b16 %v1423, %v1412
    %v2425 = vpack.c.b16 %v1424, %v1413
    %v2426 = vpack.c.b16 %v1436, %v1425
    %v2427 = vpack.c.b16 %v1437, %v1426
    %v2428 = vpack.c.b16 %v1438, %v1427
    %v2429 = vpack.c.b16 %v1439, %v1428
    %v2430 = vpack.c.b16 %v1440, %v1429
    %v2431 = vpack.c.b16 %v1441, %v1430
    %v2432 = vpack.c.b16 %v1442, %v1431
    %v2433 = vpack.c.b16 %v1443, %v1432
    %v2434 = vpack.c.b16 %v1444, %v1433
    %v2435 = vpack.c.b16 %v1445, %v1434
    %v2436 = vpack.c.b16 %v1446, %v1435
    %v2437 = vpack.c.b16 %v1458, %v1447
    %v2438 = vpack.c.b16 %v1459, %v1448
    %v2439 = vpack.c.b16 %v1460, %v1449
    %v2440 = vpack.c.b16 %v1461, %v1450
    %v2441 = vpack.c.b16 %v1462, %v1451
    %v2442 = vpack.c.b16 %v1463, %v1452
    %v2443 = vpack.c.b16 %v1464, %v1453
    %v2444 = vpack.c.b16 %v1465, %v1454
    %v2445 = vpack.c.b16 %v1466, %v1455
    %v2446 = vpack.c.b16 %v1467, %v1456
    %v2447 = vpack.c.b16 %v1468, %v1457
    %v2448 = vpack.c.b16 %v1480, %v1469
    %v2449 = vpack.c.b16 %v1481, %v1470
    %v2450 = vpack.c.b16 %v1482, %v1471
    %v2451 = vpack.c.b16 %v1483, %v1472
    %v2452 = vpack.c.b16 %v1484, %v1473
    %v2453 = vpack.c.b16 %v1485, %v1474
    %v2454 = vpack.c.b16 %v1486, %v1475
    %v2455 = vpack.c.b16 %v1487, %v1476
    %v2456 = vpack.c.b16 %v1488, %v1477
    %v2457 = vpack.c.b16 %v1489, %v1478
    %v2458 = vpack.c.b16 %v1490, %v1479
    %v2459 = vpack.c.b16 %v1502, %v1491
    %v2460 = vpack.c.b16 %v1503, %v1492
    %v2461 = vpack.c.b16 %v1504, %v1493
    %v2462 = vpack.c.b16 %v1505, %v1494
    %v2463 = vpack.c.b16 %v1506, %v1495
    %v2464 = vpack.c.b16 %v1507, %v1496
    %v2465 = vpack.c.b16 %v1508, %v1497
    %v2466 = vpack.c.b16 %v1509, %v1498
    %v2467 = vpack.c.b16 %v1510, %v1499
    %v2468 = vpack.c.b16 %v1511, %v1500
    %v2469 = vpack.c.b16 %v1512, %v1501
    %v2470 = vpack.c.b16 %v1524, %v1513
    %v2471 = vpack.c.b16 %v1525, %v1514
    %v2472 = vpack.c.b16 %v1526, %v1515
    %v2473 = vpack.c.b16 %v1527, %v1516
    %v2474 = vpack.c.b16 %v1528, %v1517
    %v2475 = vpack.c.b16 %v1529, %v1518
    %v2476 = vpack.c.b16 %v1530, %v1519
    %v2477 = vpack.c.b16 %v1531, %v1520
    %v2478 = vpack.c.b16 %v1532, %v1521
    %v2479 = vpack.c.b16 %v1533, %v1522
    %v2480 = vpack.c.b16 %v1534, %v1523
    %v2481 = vpack.c.b16 %v1546, %v1535
    %v2482 = vpack.c.b16 %v1547, %v1536
    %v2483 = vpack.c.b16 %v1548, %v1537
    %v2484 = vpack.c.b16 %v1549, %v1538
    %v2485 = vpack.c.b16 %v1550, %v1539
    %v2486 = vpack.c.b16 %v1551, %v1540
    %v2487 = vpack.c.b16 %v1552, %v1541
    %v2488 = vpack.c.b16 %v1553, %v1542
    %v2489 = vpack.c.b16 %v1554, %v1543
    %v2490 = vpack.c.b16 %v1555, %v1544
    %v2491 = vpack.c.b16 %v1556, %v1545
    %v2492 = vpack.c.b16 %v1568, %v1557
    %v2493 = vpack.c.b16 %v1569, %v1558
    %v2494 = vpack.c.b16 %v1570, %v1559
    %v2495 = vpack.c.b16 %v1571, %v1560
    %v2496 = vpack.c.b16 %v1572, %v1561
    %v2497 = vpack.c.b16 %v1573, %v1562
    %v2498 = vpack.c.b16 %v1574, %v1563
    %v2499 = vpack.c.b16 %v1575, %v1564
    %v2500 = vpack.c.b16 %v1576, %v1565
    %v2501 = vpack.c.b16 %v1577, %v1566
    %v2502 = vpack.c.b16 %v1578, %v1567
    %v2503 = vpack.c.b16 %v1590, %v1579
    %v2504 = vpack.c.b16 %v1591, %v1580
    %v2505 = vpack.c.b16 %v1592, %v1581
    %v2506 = vpack.c.b16 %v1593, %v1582
    %v2507 = vpack.c.b16 %v1594, %v1583
    %v2508 = vpack.c.b16 %v1595, %v1584
    %v2509 = vpack.c.b16 %v1596, %v1585
    %v2510 = vpack.c.b16 %v1597, %v1586
    %v2511 = vpack.c.b16 %v1598, %v1587
    %v2512 = vpack.c.b16 %v1599, %v1588
    %v2513 = vpack.c.b16 %v1600, %v1589
    %v2514 = vpack.c.b16 %v1612, %v1601
    %v2515 = vpack.c.b16 %v1613, %v1602
    %v2516 = vpack.c.b16 %v1614, %v1603
    %v2517 = vpack.c.b16 %v1615, %v1604
    %v2518 = vpack.c.b16 %v1616, %v1605
    %v2519 = vpack.c.b16 %v1617, %v1606
    %v2520 = vpack.c.b16 %v1618, %v1607
    %v2521 = vpack.c.b16 %v1619, %v1608
    %v2522 = vpack.c.b16 %v1620, %v1609
    %v2523 = vpack.c.b16 %v1621, %v1610
    %v2524 = vpack.c.b16 %v1622, %v1611
    %v2525 = vpack.c.b16 %v1634, %v1623
    %v2526 = vpack.c.b16 %v1635, %v1624
    %v2527 = vpack.c.b16 %v1636, %v1625
    %v2528 = vpack.c.b16 %v1637, %v1626
    %v2529 = vpack.c.b16 %v1638, %v1627
    %v2530 = vpack.c.b16 %v1639, %v1628
    %v2531 = vpack.c.b16 %v1640, %v1629
    %v2532 = vpack.c.b16 %v1641, %v1630
    %v2533 = vpack.c.b16 %v1642, %v1631
    %v2534 = vpack.c.b16 %v1643, %v1632
    %v2535 = vpack.c.b16 %v1644, %v1633
    %v2536 = vpack.c.b16 %v1656, %v1645
    %v2537 = vpack.c.b16 %v1657, %v1646
    %v2538 = vpack.c.b16 %v1658, %v1647
    %v2539 = vpack.c.b16 %v1659, %v1648
    %v2540 = vpack.c.b16 %v1660, %v1649
    %v2541 = vpack.c.b16 %v1661, %v1650
    %v2542 = vpack.c.b16 %v1662, %v1651
    %v2543 = vpack.c.b16 %v1663, %v1652
    %v2544 = vpack.c.b16 %v1664, %v1653
    %v2545 = vpack.c.b16 %v1665, %v1654
    %v2546 = vpack.c.b16 %v1666, %v1655
    %v2547 = vpack.c.b16 %v1678, %v1667
    %v2548 = vpack.c.b16 %v1679, %v1668
    %v2549 = vpack.c.b16 %v1680, %v1669
    %v2550 = vpack.c.b16 %v1681, %v1670
    %v2551 = vpack.c.b16 %v1682, %v1671
    %v2552 = vpack.c.b16 %v1683, %v1672
    %v2553 = vpack.c.b16 %v1684, %v1673
    %v2554 = vpack.c.b16 %v1685, %v1674
    %v2555 = vpack.c.b16 %v1686, %v1675
    %v2556 = vpack.c.b16 %v1687, %v1676
    %v2557 = vpack.c.b16 %v1688, %v1677
    %v2558 = vpack.c.b16 %v1700, %v1689
    %v2559 = vpack.c.b16 %v1701, %v1690
    %v2560 = vpack.c.b16 %v1702, %v1691
    %v2561 = vpack.c.b16 %v1703, %v1692
    %v2562 = vpack.c.b16 %v1704, %v1693
    %v2563 = vpack.c.b16 %v1705, %v1694
    %v2564 = vpack.c.b16 %v1706, %v1695
    %v2565 = vpack.c.b16 %v1707, %v1696
    %v2566 = vpack.c.b16 %v1708, %v1697
    %v2567 = vpack.c.b16 %v1709, %v1698
    %v2568 = vpack.c.b16 %v1710, %v1699
    %v2569 = vpack.c.b16 %v1722, %v1711
    %v2570 = vpack.c.b16 %v1723, %v1712
    %v2571 = vpack.c.b16 %v1724, %v1713
    %v2572 = vpack.c.b16 %v1725, %v1714
    %v2573 = vpack.c.b16 %v1726, %v1715
    %v2574 = vpack.c.b16 %v1727, %v1716
    %v2575 = vpack.c.b16 %v1728, %v1717
    %v2576 = vpack.c.b16 %v1729, %v1718
    %v2577 = vpack.c.b16 %v1730, %v1719
    %v2578 = vpack.c.b16 %v1731, %v1720
    %v2579 = vpack.c.b16 %v1732, %v1721
    %v2580 = vpack.c.b16 %v1744, %v1733
    %v2581 = vpack.c.b16 %v1745, %v1734
    %v2582 = vpack.c.b16 %v1746, %v1735
    %v2583 = vpack.c.b16 %v1747, %v1736
    %v2584 = vpack.c.b16 %v1748, %v1737
    %v2585 = vpack.c.b16 %v1749, %v1738
    %v2586 = vpack.c.b16 %v1750, %v1739
    %v2587 = vpack.c.b16 %v1751, %v1740
    %v2588 = vpack.c.b16 %v1752, %v1741
    %v2589 = vpack.c.b16 %v1753, %v1742
    %v2590 = vpack.c.b16 %v1754, %v1743
    %v2591 = vpack.c.b16 %v1766, %v1755
    %v2592 = vpack.c.b16 %v1767, %v1756
    %v2593 = vpack.c.b16 %v1768, %v1757
    %v2594 = vpack.c.b16 %v1769, %v1758
    %v2595 = vpack.c.b16 %v1770, %v1759
    %v2596 = vpack.c.b16 %v1771, %v1760
    %v2597 = vpack.c.b16 %v1772, %v1761
    %v2598 = vpack.c.b16 %v1773, %v1762
    %v2599 = vpack.c.b16 %v1774, %v1763
    %v2600 = vpack.c.b16 %v1775, %v1764
    %v2601 = vpack.c.b16 %v1776, %v1765
    %v2602 = vpack.c.b16 %v1788, %v1777
    %v2603 = vpack.c.b16 %v1789, %v1778
    %v2604 = vpack.c.b16 %v1790, %v1779
    %v2605 = vpack.c.b16 %v1791, %v1780
    %v2606 = vpack.c.b16 %v1792, %v1781
    %v2607 = vpack.c.b16 %v1793, %v1782
    %v2608 = vpack.c.b16 %v1794, %v1783
    %v2609 = vpack.c.b16 %v1795, %v1784
    %v2610 = vpack.c.b16 %v1796, %v1785
    %v2611 = vpack.c.b16 %v1797, %v1786
    %v2612 = vpack.c.b16 %v1798, %v1787
    %v2613 = vpack.c.b16 %v1810, %v1799
    %v2614 = vpack.c.b16 %v1811, %v1800
    %v2615 = vpack.c.b16 %v1812, %v1801
    %v2616 = vpack.c.b16 %v1813, %v1802
    %v2617 = vpack.c.b16 %v1814, %v1803
    %v2618 = vpack.c.b16 %v1815, %v1804
    %v2619 = vpack.c.b16 %v1816, %v1805
    %v2620 = vpack.c.b16 %v1817, %v1806
    %v2621 = vpack.c.b16 %v1818, %v1807
    %v2622 = vpack.c.b16 %v1819, %v1808
    %v2623 = vpack.c.b16 %v1820, %v1809
    %v2624 = vpack.c.b16 %v1832, %v1821
    %v2625 = vpack.c.b16 %v1833, %v1822
    %v2626 = vpack.c.b16 %v1834, %v1823
    %v2627 = vpack.c.b16 %v1835, %v1824
    %v2628 = vpack.c.b16 %v1836, %v1825
    %v2629 = vpack.c.b16 %v1837, %v1826
    %v2630 = vpack.c.b16 %v1838, %v1827
    %v2631 = vpack.c.b16 %v1839, %v1828
    %v2632 = vpack.c.b16 %v1840, %v1829
    %v2633 = vpack.c.b16 %v1841, %v1830
    %v2634 = vpack.c.b16 %v1842, %v1831
    %v2635 = vpack.c.b16 %v1854, %v1843
    %v2636 = vpack.c.b16 %v1855, %v1844
    %v2637 = vpack.c.b16 %v1856, %v1845
    %v2638 = vpack.c.b16 %v1857, %v1846
    %v2639 = vpack.c.b16 %v1858, %v1847
    %v2640 = vpack.c.b16 %v1859, %v1848
    %v2641 = vpack.c.b16 %v1860, %v1849
    %v2642 = vpack.c.b16 %v1861, %v1850
    %v2643 = vpack.c.b16 %v1862, %v1851
    %v2644 = vpack.c.b16 %v1863, %v1852
    %v2645 = vpack.c.b16 %v1864, %v1853
    %v2646 = vpack.c.b16 %v1876, %v1865
    %v2647 = vpack.c.b16 %v1877, %v1866
    %v2648 = vpack.c.b16 %v1878, %v1867
    %v2649 = vpack.c.b16 %v1879, %v1868
    %v2650 = vpack.c.b16 %v1880, %v1869
    %v2651 = vpack.c.b16 %v1881, %v1870
    %v2652 = vpack.c.b16 %v1882, %v1871
    %v2653 = vpack.c.b16 %v1883, %v1872
    %v2654 = vpack.c.b16 %v1884, %v1873
    %v2655 = vpack.c.b16 %v1885, %v1874
    %v2656 = vpack.c.b16 %v1886, %v1875
    %v2657 = vpack.c.b16 %v1898, %v1887
    %v2658 = vpack.c.b16 %v1899, %v1888
    %v2659 = vpack.c.b16 %v1900, %v1889
    %v2660 = vpack.c.b16 %v1901, %v1890
    %v2661 = vpack.c.b16 %v1902, %v1891
    %v2662 = vpack.c.b16 %v1903, %v1892
    %v2663 = vpack.c.b16 %v1904, %v1893
    %v2664 = vpack.c.b16 %v1905, %v1894
    %v2665 = vpack.c.b16 %v1906, %v1895
    %v2666 = vpack.c.b16 %v1907, %v1896
    %v2667 = vpack.c.b16 %v1908, %v1897
    %v2668 = vpack.c.b16 %v1920, %v1909
    %v2669 = vpack.c.b16 %v1921, %v1910
    %v2670 = vpack.c.b16 %v1922, %v1911
    %v2671 = vpack.c.b16 %v1923, %v1912
    %v2672 = vpack.c.b16 %v1924, %v1913
    %v2673 = vpack.c.b16 %v1925, %v1914
    %v2674 = vpack.c.b16 %v1926, %v1915
    %v2675 = vpack.c.b16 %v1927, %v1916
    %v2676 = vpack.c.b16 %v1928, %v1917
    %v2677 = vpack.c.b16 %v1929, %v1918
    %v2678 = vpack.c.b16 %v1930, %v1919
    %v2679 = vpack.c.b16 %v1942, %v1931
    %v2680 = vpack.c.b16 %v1943, %v1932
    %v2681 = vpack.c.b16 %v1944, %v1933
    %v2682 = vpack.c.b16 %v1945, %v1934
    %v2683 = vpack.c.b16 %v1946, %v1935
    %v2684 = vpack.c.b16 %v1947, %v1936
    %v2685 = vpack.c.b16 %v1948, %v1937
    %v2686 = vpack.c.b16 %v1949, %v1938
    %v2687 = vpack.c.b16 %v1950, %v1939
    %v2688 = vpack.c.b16 %v1951, %v1940
    %v2689 = vpack.c.b16 %v1952, %v1941
    %v2690 = vpack.c.b16 %v1964, %v1953
    %v2691 = vpack.c.b16 %v1965, %v1954
    %v2692 = vpack.c.b16 %v1966, %v1955
    %v2693 = vpack.c.b16 %v1967, %v1956
    %v2694 = vpack.c.b16 %v1968, %v1957
    %v2695 = vpack.c.b16 %v1969, %v1958
    %v2696 = vpack.c.b16 %v1970, %v1959
    %v2697 = vpack.c.b16 %v1971, %v1960
    %v2698 = vpack.c.b16 %v1972, %v1961
    %v2699 = vpack.c.b16 %v1973, %v1962
    %v2700 = vpack.c.b16 %v1974, %v1963
    %v2701 = vpack.c.b16 %v1986, %v1975
    %v2702 = vpack.c.b16 %v1987, %v1976
    %v2703 = vpack.c.b16 %v1988, %v1977
    %v2704 = vpack.c.b16 %v1989, %v1978
    %v2705 = vpack.c.b16 %v1990, %v1979
    %v2706 = vpack.c.b16 %v1991, %v1980
    %v2707 = vpack.c.b16 %v1992, %v1981
    %v2708 = vpack.c.b16 %v1993, %v1982
    %v2709 = vpack.c.b16 %v1994, %v1983
    %v2710 = vpack.c.b16 %v1995, %v1984
    %v2711 = vpack.c.b16 %v1996, %v1985
    %v2712 = vpack.c.b16 %v2008, %v1997
    %v2713 = vpack.c.b16 %v2009, %v1998
    %v2714 = vpack.c.b16 %v2010, %v1999
    %v2715 = vpack.c.b16 %v2011, %v2000
    %v2716 = vpack.c.b16 %v2012, %v2001
    %v2717 = vpack.c.b16 %v2013, %v2002
    %v2718 = vpack.c.b16 %v2014, %v2003
    %v2719 = vpack.c.b16 %v2015, %v2004
    %v2720 = vpack.c.b16 %v2016, %v2005
    %v2721 = vpack.c.b16 %v2017, %v2006
    %v2722 = vpack.c.b16 %v2018, %v2007
    %v2723 = vpack.c.b16 %v2030, %v2019
    %v2724 = vpack.c.b16 %v2031, %v2020
    %v2725 = vpack.c.b16 %v2032, %v2021
    %v2726 = vpack.c.b16 %v2033, %v2022
    %v2727 = vpack.c.b16 %v2034, %v2023
    %v2728 = vpack.c.b16 %v2035, %v2024
    %v2729 = vpack.c.b16 %v2036, %v2025
    %v2730 = vpack.c.b16 %v2037, %v2026
    %v2731 = vpack.c.b16 %v2038, %v2027
    %v2732 = vpack.c.b16 %v2039, %v2028
    %v2733 = vpack.c.b16 %v2040, %v2029
    %v2734 = vpack.c.b16 %v2052, %v2041
    %v2735 = vpack.c.b16 %v2053, %v2042
    %v2736 = vpack.c.b16 %v2054, %v2043
    %v2737 = vpack.c.b16 %v2055, %v2044
    %v2738 = vpack.c.b16 %v2056, %v2045
    %v2739 = vpack.c.b16 %v2057, %v2046
    %v2740 = vpack.c.b16 %v2058, %v2047
    %v2741 = vpack.c.b16 %v2059, %v2048
    %v2742 = vpack.c.b16 %v2060, %v2049
    %v2743 = vpack.c.b16 %v2061, %v2050
    %v2744 = vpack.c.b16 %v2062, %v2051
    %v2745 = vpack.c.b16 %v2074, %v2063
    %v2746 = vpack.c.b16 %v2075, %v2064
    %v2747 = vpack.c.b16 %v2076, %v2065
    %v2748 = vpack.c.b16 %v2077, %v2066
    %v2749 = vpack.c.b16 %v2078, %v2067
    %v2750 = vpack.c.b16 %v2079, %v2068
    %v2751 = vpack.c.b16 %v2080, %v2069
    %v2752 = vpack.c.b16 %v2081, %v2070
    %v2753 = vpack.c.b16 %v2082, %v2071
    %v2754 = vpack.c.b16 %v2083, %v2072
    %v2755 = vpack.c.b16 %v2084, %v2073
    %v2756 = vpack.c.b16 %v2096, %v2085
    %v2757 = vpack.c.b16 %v2097, %v2086
    %v2758 = vpack.c.b16 %v2098, %v2087
    %v2759 = vpack.c.b16 %v2099, %v2088
    %v2760 = vpack.c.b16 %v2100, %v2089
    %v2761 = vpack.c.b16 %v2101, %v2090
    %v2762 = vpack.c.b16 %v2102, %v2091
    %v2763 = vpack.c.b16 %v2103, %v2092
    %v2764 = vpack.c.b16 %v2104, %v2093
    %v2765 = vpack.c.b16 %v2105, %v2094
    %v2766 = vpack.c.b16 %v2106, %v2095
    %v2767 = vpack.c.b16 %v2118, %v2107
    %v2768 = vpack.c.b16 %v2119, %v2108
    %v2769 = vpack.c.b16 %v2120, %v2109
    %v2770 = vpack.c.b16 %v2121, %v2110
    %v2771 = vpack.c.b16 %v2122, %v2111
    %v2772 = vpack.c.b16 %v2123, %v2112
    %v2773 = vpack.c.b16 %v2124, %v2113
    %v2774 = vpack.c.b16 %v2125, %v2114
    %v2775 = vpack.c.b16 %v2126, %v2115
    %v2776 = vpack.c.b16 %v2127, %v2116
    %v2777 = vpack.c.b16 %v2128, %v2117
    %v2778 = vpack.c.b16 %v2140, %v2129
    %v2779 = vpack.c.b16 %v2141, %v2130
    %v2780 = vpack.c.b16 %v2142, %v2131
    %v2781 = vpack.c.b16 %v2143, %v2132
    %v2782 = vpack.c.b16 %v2144, %v2133
    %v2783 = vpack.c.b16 %v2145, %v2134
    %v2784 = vpack.c.b16 %v2146, %v2135
    %v2785 = vpack.c.b16 %v2147, %v2136
    %v2786 = vpack.c.b16 %v2148, %v2137
    %v2787 = vpack.c.b16 %v2149, %v2138
    %v2788 = vpack.c.b16 %v2150, %v2139
    %v2789 = vpack.c.b16 %v2162, %v2151
    %v2790 = vpack.c.b16 %v2163, %v2152
    %v2791 = vpack.c.b16 %v2164, %v2153
    %v2792 = vpack.c.b16 %v2165, %v2154
    %v2793 = vpack.c.b16 %v2166, %v2155
    %v2794 = vpack.c.b16 %v2167, %v2156
    %v2795 = vpack.c.b16 %v2168, %v2157
    %v2796 = vpack.c.b16 %v2169, %v2158
    %v2797 = vpack.c.b16 %v2170, %v2159
    %v2798 = vpack.c.b16 %v2171, %v2160
    %v2799 = vpack.c.b16 %v2172, %v2161
    %v2800 = vpack.c.b16 %v2184, %v2173
    %v2801 = vpack.c.b16 %v2185, %v2174
    %v2802 = vpack.c.b16 %v2186, %v2175
    %v2803 = vpack.c.b16 %v2187, %v2176
    %v2804 = vpack.c.b16 %v2188, %v2177
    %v2805 = vpack.c.b16 %v2189, %v2178
    %v2806 = vpack.c.b16 %v2190, %v2179
    %v2807 = vpack.c.b16 %v2191, %v2180
    %v2808 = vpack.c.b16 %v2192, %v2181
    %v2809 = vpack.c.b16 %v2193, %v2182
    %v2810 = vpack.c.b16 %v2194, %v2183
    %v2811 = vpack.c.b16 %v2206, %v2195
    %v2812 = vpack.c.b16 %v2207, %v2196
    %v2813 = vpack.c.b16 %v2208, %v2197
    %v2814 = vpack.c.b16 %v2209, %v2198
    %v2815 = vpack.c.b16 %v2210, %v2199
    %v2816 = vpack.c.b16 %v2211, %v2200
    %v2817 = vpack.c.b16 %v2212, %v2201
    %v2818 = vpack.c.b16 %v2213, %v2202
    %v2819 = vpack.c.b16 %v2214, %v2203
    %v2820 = vpack.c.b16 %v2215, %v2204
    %v2821 = vpack.c.b16 %v2216, %v2205
    %v2822 = vpack.c.b16 %v2228, %v2217
    %v2823 = vpack.c.b16 %v2229, %v2218
    %v2824 = vpack.c.b16 %v2230, %v2219
    %v2825 = vpack.c.b16 %v2231, %v2220
    %v2826 = vpack.c.b16 %v2232, %v2221
    %v2827 = vpack.c.b16 %v2233, %v2222
    %v2828 = vpack.c.b16 %v2234, %v2223
    %v2829 = vpack.c.b16 %v2235, %v2224
    %v2830 = vpack.c.b16 %v2236, %v2225
    %v2831 = vpack.c.b16 %v2237, %v2226
    %v2832 = vpack.c.b16 %v2238, %v2227
    %v2833 = vpack.c.b16 %v2250, %v2239
    %v2834 = vpack.c.b16 %v2251, %v2240
    %v2835 = vpack.c.b16 %v2252, %v2241
    %v2836 = vpack.c.b16 %v2253, %v2242
    %v2837 = vpack.c.b16 %v2254, %v2243
    %v2838 = vpack.c.b16 %v2255, %v2244
    %v2839 = vpack.c.b16 %v2256, %v2245
    %v2840 = vpack.c.b16 %v2257, %v2246
    %v2841 = vpack.c.b16 %v2258, %v2247
    %v2842 = vpack.c.b16 %v2259, %v2248
    %v2843 = vpack.c.b16 %v2260, %v2249
    %v2844 = vpack.c.b16 %v2272, %v2261
    %v2845 = vpack.c.b16 %v2273, %v2262
    %v2846 = vpack.c.b16 %v2274, %v2263
    %v2847 = vpack.c.b16 %v2275, %v2264
    %v2848 = vpack.c.b16 %v2276, %v2265
    %v2849 = vpack.c.b16 %v2277, %v2266
    %v2850 = vpack.c.b16 %v2278, %v2267
    %v2851 = vpack.c.b16 %v2279, %v2268
    %v2852 = vpack.c.b16 %v2280, %v2269
    %v2853 = vpack.c.b16 %v2281, %v2270
    %v2854 = vpack.c.b16 %v2282, %v2271
    %v2855 = vpack.c.b16 %v2294, %v2283
    %v2856 = vpack.c.b16 %v2295, %v2284
    %v2857 = vpack.c.b16 %v2296, %v2285
    %v2858 = vpack.c.b16 %v2297, %v2286
    %v2859 = vpack.c.b16 %v2298, %v2287
    %v2860 = vpack.c.b16 %v2299, %v2288
    %v2861 = vpack.c.b16 %v2300, %v2289
    %v2862 = vpack.c.b16 %v2301, %v2290
    %v2863 = vpack.c.b16 %v2302, %v2291
    %v2864 = vpack.c.b16 %v2303, %v2292
    %v2865 = vpack.c.b16 %v2304, %v2293
    %v2866 = vpack.c.b16 %v2316, %v2305
    %v2867 = vpack.c.b16 %v2317, %v2306
    %v2868 = vpack.c.b16 %v2318, %v2307
    %v2869 = vpack.c.b16 %v2319, %v2308
    %v2870 = vpack.c.b16 %v2320, %v2309
    %v2871 = vpack.c.b16 %v2321, %v2310
    %v2872 = vpack.c.b16 %v2322, %v2311
    %v2873 = vpack.c.b16 %v2323, %v2312
    %v2874 = vpack.c.b16 %v2324, %v2313
    %v2875 = vpack.c.b16 %v2325, %v2314
    %v2876 = vpack.c.b16 %v2326, %v2315
    %v2877 = vpack.c.b16 %v2338, %v2327
    %v2878 = vpack.c.b16 %v2339, %v2328
    %v2879 = vpack.c.b16 %v2340, %v2329
    %v2880 = vpack.c.b16 %v2341, %v2330
    %v2881 = vpack.c.b16 %v2342, %v2331
    %v2882 = vpack.c.b16 %v2343, %v2332
    %v2883 = vpack.c.b16 %v2344, %v2333
    %v2884 = vpack.c.b16 %v2345, %v2334
    %v2885 = vpack.c.b16 %v2346, %v2335
    %v2886 = vpack.c.b16 %v2347, %v2336
    %v2887 = vpack.c.b16 %v2348, %v2337
    %v2888 = vpack.c.b16 %v2360, %v2349
    %v2889 = vpack.c.b16 %v2361, %v2350
    %v2890 = vpack.c.b16 %v2362, %v2351
    %v2891 = vpack.c.b16 %v2363, %v2352
    %v2892 = vpack.c.b16 %v2364, %v2353
    %v2893 = vpack.c.b16 %v2365, %v2354
    %v2894 = vpack.c.b16 %v2366, %v2355
    %v2895 = vpack.c.b16 %v2367, %v2356
    %v2896 = vpack.c.b16 %v2368, %v2357
    %v2897 = vpack.c.b16 %v2369, %v2358
    %v2898 = vpack.c.b16 %v2370, %v2359
    %3427 = vmatprep.subr.bf16.mxu0 %v2449
    %3428 = vmatpush1.bf16.msra.mxu0 %v2448
    %3429 = vmatprep.subr.bf16.mxu0 %v2438
    %3430 = vmatpush1.bf16.msra.mxu0 %v2437
    %3431 = vmatprep.subr.bf16.mxu0 %v2427
    %3432 = vmatpush1.bf16.msra.mxu0 %v2426
    %3433 = vmatprep.subr.bf16.mxu0 %v2416
    %3434 = vmatpush1.bf16.msra.mxu0 %v2415
    %3435 = vmatprep.subr.bf16.mxu0 %v2405
    %3436 = vmatpush1.bf16.msra.mxu0 %v2404
    %3437 = vmatprep.subr.bf16.mxu0 %v2394
    %3438 = vmatpush1.bf16.msra.mxu0 %v2393
    %3439 = vmatprep.subr.bf16.mxu0 %v2383
    %3440 = vmatpush1.bf16.msra.mxu0 %v2382
    %3441 = vmatprep.subr.bf16.mxu0 %v2372
    %3442 = vmatpush1.bf16.msra.mxu0 %v2371
    %3443 = vmatprep.subr.bf16.mxu0 %v2537
    %3444 = vmatpush2.bf16.msra.mxu0 %v2536
    %3445 = vmatprep.subr.bf16.mxu0 %v2526
    %3446 = vmatpush2.bf16.msra.mxu0 %v2525
    %3447 = vmatprep.subr.bf16.mxu0 %v2515
    %3448 = vmatpush2.bf16.msra.mxu0 %v2514
    %3449 = vmatprep.subr.bf16.mxu0 %v2504
    %3450 = vmatpush2.bf16.msra.mxu0 %v2503
    %3451 = vmatprep.subr.bf16.mxu0 %v2493
    %3452 = vmatpush2.bf16.msra.mxu0 %v2492
    %3453 = vmatprep.subr.bf16.mxu0 %v2482
    %3454 = vmatpush2.bf16.msra.mxu0 %v2481
    %3455 = vmatprep.subr.bf16.mxu0 %v2471
    %3456 = vmatpush2.bf16.msra.mxu0 %v2470
    %3457 = vmatprep.subr.bf16.mxu0 %v2460
    %3458 = vmatpush2.bf16.msra.mxu0 %v2459
    %3459 = vmatprep.mubr.bf16.mxu0 %v99
    %3460 = vmatmul.mubr.bf16.gmra.mxu0 %v98
    %v3461 = vpop.f32.mrf.mxu0
    %v3462 = vadd.f32 %v687, %v3461
    %v3463 = vpop.f32.mrf.mxu0
    %v3464 = vadd.f32 %v691, %v3463
    %v3465 = vpop.f32.mrf.mxu0
    %v3466 = vadd.f32 %v687, %v3465
    %v3467 = vpop.f32.mrf.mxu0
    %v3468 = vadd.f32 %v691, %v3467
    %3469 = vdwg.mxu0
    %3470 = vmatprep.subr.bf16.mxu0 %v2625
    %3471 = vmatpush1.bf16.msra.mxu0 %v2624
    %3472 = vmatprep.subr.bf16.mxu0 %v2614
    %3473 = vmatpush1.bf16.msra.mxu0 %v2613
    %3474 = vmatprep.subr.bf16.mxu0 %v2603
    %3475 = vmatpush1.bf16.msra.mxu0 %v2602
    %3476 = vmatprep.subr.bf16.mxu0 %v2592
    %3477 = vmatpush1.bf16.msra.mxu0 %v2591
    %3478 = vmatprep.subr.bf16.mxu0 %v2581
    %3479 = vmatpush1.bf16.msra.mxu0 %v2580
    %3480 = vmatprep.subr.bf16.mxu0 %v2570
    %3481 = vmatpush1.bf16.msra.mxu0 %v2569
    %3482 = vmatprep.subr.bf16.mxu0 %v2559
    %3483 = vmatpush1.bf16.msra.mxu0 %v2558
    %3484 = vmatprep.subr.bf16.mxu0 %v2548
    %3485 = vmatpush1.bf16.msra.mxu0 %v2547
    %3486 = vmatprep.subr.bf16.mxu0 %v2713
    %3487 = vmatpush2.bf16.msra.mxu0 %v2712
    %3488 = vmatprep.subr.bf16.mxu0 %v2702
    %3489 = vmatpush2.bf16.msra.mxu0 %v2701
    %3490 = vmatprep.subr.bf16.mxu0 %v2691
    %3491 = vmatpush2.bf16.msra.mxu0 %v2690
    %3492 = vmatprep.subr.bf16.mxu0 %v2680
    %3493 = vmatpush2.bf16.msra.mxu0 %v2679
    %3494 = vmatprep.subr.bf16.mxu0 %v2669
    %3495 = vmatpush2.bf16.msra.mxu0 %v2668
    %3496 = vmatprep.subr.bf16.mxu0 %v2658
    %3497 = vmatpush2.bf16.msra.mxu0 %v2657
    %3498 = vmatprep.subr.bf16.mxu0 %v2647
    %3499 = vmatpush2.bf16.msra.mxu0 %v2646
    %3500 = vmatprep.subr.bf16.mxu0 %v2636
    %3501 = vmatpush2.bf16.msra.mxu0 %v2635
    %3502 = vmatprep.mubr.bf16.mxu0 %v101
    %3503 = vmatmul.mubr.bf16.gmra.mxu0 %v100
    %v3504 = vpop.f32.mrf.mxu0
    %v3505 = vadd.f32 %v3462, %v3504
    %v3506 = vpop.f32.mrf.mxu0
    %v3507 = vadd.f32 %v3464, %v3506
    %v3508 = vpop.f32.mrf.mxu0
    %v3509 = vadd.f32 %v3466, %v3508
    %v3510 = vpop.f32.mrf.mxu0
    %v3511 = vadd.f32 %v3468, %v3510
    %3512 = vdwg.mxu0
    %3513 = vmatprep.subr.bf16.mxu0 %v2801
    %3514 = vmatpush1.bf16.msra.mxu0 %v2800
    %3515 = vmatprep.subr.bf16.mxu0 %v2790
    %3516 = vmatpush1.bf16.msra.mxu0 %v2789
    %3517 = vmatprep.subr.bf16.mxu0 %v2779
    %3518 = vmatpush1.bf16.msra.mxu0 %v2778
    %3519 = vmatprep.subr.bf16.mxu0 %v2768
    %3520 = vmatpush1.bf16.msra.mxu0 %v2767
    %3521 = vmatprep.subr.bf16.mxu0 %v2757
    %3522 = vmatpush1.bf16.msra.mxu0 %v2756
    %3523 = vmatprep.subr.bf16.mxu0 %v2746
    %3524 = vmatpush1.bf16.msra.mxu0 %v2745
    %3525 = vmatprep.subr.bf16.mxu0 %v2735
    %3526 = vmatpush1.bf16.msra.mxu0 %v2734
    %3527 = vmatprep.subr.bf16.mxu0 %v2724
    %3528 = vmatpush1.bf16.msra.mxu0 %v2723
    %3529 = vmatprep.subr.bf16.mxu0 %v2889
    %3530 = vmatpush2.bf16.msra.mxu0 %v2888
    %3531 = vmatprep.subr.bf16.mxu0 %v2878
    %3532 = vmatpush2.bf16.msra.mxu0 %v2877
    %3533 = vmatprep.subr.bf16.mxu0 %v2867
    %3534 = vmatpush2.bf16.msra.mxu0 %v2866
    %3535 = vmatprep.subr.bf16.mxu0 %v2856
    %3536 = vmatpush2.bf16.msra.mxu0 %v2855
    %3537 = vmatprep.subr.bf16.mxu0 %v2845
    %3538 = vmatpush2.bf16.msra.mxu0 %v2844
    %3539 = vmatprep.subr.bf16.mxu0 %v2834
    %3540 = vmatpush2.bf16.msra.mxu0 %v2833
    %3541 = vmatprep.subr.bf16.mxu0 %v2823
    %3542 = vmatpush2.bf16.msra.mxu0 %v2822
    %3543 = vmatprep.subr.bf16.mxu0 %v2812
    %3544 = vmatpush2.bf16.msra.mxu0 %v2811
    %3545 = vmatprep.mubr.bf16.mxu0 %v103
    %3546 = vmatmul.mubr.bf16.gmra.mxu0 %v102
    %v3547 = vpop.f32.mrf.mxu0
    %v3548 = vadd.f32 %v3505, %v3547
    %v3549 = vpop.f32.mrf.mxu0
    %v3550 = vadd.f32 %v3507, %v3549
    %v3551 = vpop.f32.mrf.mxu0
    %v3552 = vadd.f32 %v3509, %v3551
    %v3553 = vpop.f32.mrf.mxu0
    %v3554 = vadd.f32 %v3511, %v3553
    %3555 = vdwg.mxu0
    %3556 = vmatprep.subr.bf16.mxu0 %v2451
    %3557 = vmatpush1.bf16.msra.mxu0 %v2450
    %3558 = vmatprep.subr.bf16.mxu0 %v2440
    %3559 = vmatpush1.bf16.msra.mxu0 %v2439
    %3560 = vmatprep.subr.bf16.mxu0 %v2429
    %3561 = vmatpush1.bf16.msra.mxu0 %v2428
    %3562 = vmatprep.subr.bf16.mxu0 %v2418
    %3563 = vmatpush1.bf16.msra.mxu0 %v2417
    %3564 = vmatprep.subr.bf16.mxu0 %v2407
    %3565 = vmatpush1.bf16.msra.mxu0 %v2406
    %3566 = vmatprep.subr.bf16.mxu0 %v2396
    %3567 = vmatpush1.bf16.msra.mxu0 %v2395
    %3568 = vmatprep.subr.bf16.mxu0 %v2385
    %3569 = vmatpush1.bf16.msra.mxu0 %v2384
    %3570 = vmatprep.subr.bf16.mxu0 %v2374
    %3571 = vmatpush1.bf16.msra.mxu0 %v2373
    %3572 = vmatprep.subr.bf16.mxu0 %v2539
    %3573 = vmatpush2.bf16.msra.mxu0 %v2538
    %3574 = vmatprep.subr.bf16.mxu0 %v2528
    %3575 = vmatpush2.bf16.msra.mxu0 %v2527
    %3576 = vmatprep.subr.bf16.mxu0 %v2517
    %3577 = vmatpush2.bf16.msra.mxu0 %v2516
    %3578 = vmatprep.subr.bf16.mxu0 %v2506
    %3579 = vmatpush2.bf16.msra.mxu0 %v2505
    %3580 = vmatprep.subr.bf16.mxu0 %v2495
    %3581 = vmatpush2.bf16.msra.mxu0 %v2494
    %3582 = vmatprep.subr.bf16.mxu0 %v2484
    %3583 = vmatpush2.bf16.msra.mxu0 %v2483
    %3584 = vmatprep.subr.bf16.mxu0 %v2473
    %3585 = vmatpush2.bf16.msra.mxu0 %v2472
    %3586 = vmatprep.subr.bf16.mxu0 %v2462
    %3587 = vmatpush2.bf16.msra.mxu0 %v2461
    %3588 = vmatprep.mubr.bf16.mxu0 %v99
    %3589 = vmatmul.mubr.bf16.gmra.mxu0 %v98
    %v3590 = vpop.f32.mrf.mxu0
    %v3591 = vadd.f32 %v695, %v3590
    %v3592 = vpop.f32.mrf.mxu0
    %v3593 = vadd.f32 %v699, %v3592
    %v3594 = vpop.f32.mrf.mxu0
    %v3595 = vadd.f32 %v695, %v3594
    %v3596 = vpop.f32.mrf.mxu0
    %v3597 = vadd.f32 %v699, %v3596
    %3598 = vdwg.mxu0
    %3599 = vmatprep.subr.bf16.mxu0 %v2627
    %3600 = vmatpush1.bf16.msra.mxu0 %v2626
    %3601 = vmatprep.subr.bf16.mxu0 %v2616
    %3602 = vmatpush1.bf16.msra.mxu0 %v2615
    %3603 = vmatprep.subr.bf16.mxu0 %v2605
    %3604 = vmatpush1.bf16.msra.mxu0 %v2604
    %3605 = vmatprep.subr.bf16.mxu0 %v2594
    %3606 = vmatpush1.bf16.msra.mxu0 %v2593
    %3607 = vmatprep.subr.bf16.mxu0 %v2583
    %3608 = vmatpush1.bf16.msra.mxu0 %v2582
    %3609 = vmatprep.subr.bf16.mxu0 %v2572
    %3610 = vmatpush1.bf16.msra.mxu0 %v2571
    %3611 = vmatprep.subr.bf16.mxu0 %v2561
    %3612 = vmatpush1.bf16.msra.mxu0 %v2560
    %3613 = vmatprep.subr.bf16.mxu0 %v2550
    %3614 = vmatpush1.bf16.msra.mxu0 %v2549
    %3615 = vmatprep.subr.bf16.mxu0 %v2715
    %3616 = vmatpush2.bf16.msra.mxu0 %v2714
    %3617 = vmatprep.subr.bf16.mxu0 %v2704
    %3618 = vmatpush2.bf16.msra.mxu0 %v2703
    %3619 = vmatprep.subr.bf16.mxu0 %v2693
    %3620 = vmatpush2.bf16.msra.mxu0 %v2692
    %3621 = vmatprep.subr.bf16.mxu0 %v2682
    %3622 = vmatpush2.bf16.msra.mxu0 %v2681
    %3623 = vmatprep.subr.bf16.mxu0 %v2671
    %3624 = vmatpush2.bf16.msra.mxu0 %v2670
    %3625 = vmatprep.subr.bf16.mxu0 %v2660
    %3626 = vmatpush2.bf16.msra.mxu0 %v2659
    %3627 = vmatprep.subr.bf16.mxu0 %v2649
    %3628 = vmatpush2.bf16.msra.mxu0 %v2648
    %3629 = vmatprep.subr.bf16.mxu0 %v2638
    %3630 = vmatpush2.bf16.msra.mxu0 %v2637
    %3631 = vmatprep.mubr.bf16.mxu0 %v101
    %3632 = vmatmul.mubr.bf16.gmra.mxu0 %v100
    %v3633 = vpop.f32.mrf.mxu0
    %v3634 = vadd.f32 %v3591, %v3633
    %v3635 = vpop.f32.mrf.mxu0
    %v3636 = vadd.f32 %v3593, %v3635
    %v3637 = vpop.f32.mrf.mxu0
    %v3638 = vadd.f32 %v3595, %v3637
    %v3639 = vpop.f32.mrf.mxu0
    %v3640 = vadd.f32 %v3597, %v3639
    %3641 = vdwg.mxu0
    %3642 = vmatprep.subr.bf16.mxu0 %v2803
    %3643 = vmatpush1.bf16.msra.mxu0 %v2802
    %3644 = vmatprep.subr.bf16.mxu0 %v2792
    %3645 = vmatpush1.bf16.msra.mxu0 %v2791
    %3646 = vmatprep.subr.bf16.mxu0 %v2781
    %3647 = vmatpush1.bf16.msra.mxu0 %v2780
    %3648 = vmatprep.subr.bf16.mxu0 %v2770
    %3649 = vmatpush1.bf16.msra.mxu0 %v2769
    %3650 = vmatprep.subr.bf16.mxu0 %v2759
    %3651 = vmatpush1.bf16.msra.mxu0 %v2758
    %3652 = vmatprep.subr.bf16.mxu0 %v2748
    %3653 = vmatpush1.bf16.msra.mxu0 %v2747
    %3654 = vmatprep.subr.bf16.mxu0 %v2737
    %3655 = vmatpush1.bf16.msra.mxu0 %v2736
    %3656 = vmatprep.subr.bf16.mxu0 %v2726
    %3657 = vmatpush1.bf16.msra.mxu0 %v2725
    %3658 = vmatprep.subr.bf16.mxu0 %v2891
    %3659 = vmatpush2.bf16.msra.mxu0 %v2890
    %3660 = vmatprep.subr.bf16.mxu0 %v2880
    %3661 = vmatpush2.bf16.msra.mxu0 %v2879
    %3662 = vmatprep.subr.bf16.mxu0 %v2869
    %3663 = vmatpush2.bf16.msra.mxu0 %v2868
    %3664 = vmatprep.subr.bf16.mxu0 %v2858
    %3665 = vmatpush2.bf16.msra.mxu0 %v2857
    %3666 = vmatprep.subr.bf16.mxu0 %v2847
    %3667 = vmatpush2.bf16.msra.mxu0 %v2846
    %3668 = vmatprep.subr.bf16.mxu0 %v2836
    %3669 = vmatpush2.bf16.msra.mxu0 %v2835
    %3670 = vmatprep.subr.bf16.mxu0 %v2825
    %3671 = vmatpush2.bf16.msra.mxu0 %v2824
    %3672 = vmatprep.subr.bf16.mxu0 %v2814
    %3673 = vmatpush2.bf16.msra.mxu0 %v2813
    %3674 = vmatprep.mubr.bf16.mxu0 %v103
    %3675 = vmatmul.mubr.bf16.gmra.mxu0 %v102
    %v3676 = vpop.f32.mrf.mxu0
    %v3677 = vadd.f32 %v3634, %v3676
    %v3678 = vpop.f32.mrf.mxu0
    %v3679 = vadd.f32 %v3636, %v3678
    %v3680 = vpop.f32.mrf.mxu0
    %v3681 = vadd.f32 %v3638, %v3680
    %v3682 = vpop.f32.mrf.mxu0
    %v3683 = vadd.f32 %v3640, %v3682
    %3684 = vdwg.mxu0
    %3685 = vmatprep.subr.bf16.mxu0 %v2453
    %3686 = vmatpush1.bf16.msra.mxu0 %v2452
    %3687 = vmatprep.subr.bf16.mxu0 %v2442
    %3688 = vmatpush1.bf16.msra.mxu0 %v2441
    %3689 = vmatprep.subr.bf16.mxu0 %v2431
    %3690 = vmatpush1.bf16.msra.mxu0 %v2430
    %3691 = vmatprep.subr.bf16.mxu0 %v2420
    %3692 = vmatpush1.bf16.msra.mxu0 %v2419
    %3693 = vmatprep.subr.bf16.mxu0 %v2409
    %3694 = vmatpush1.bf16.msra.mxu0 %v2408
    %3695 = vmatprep.subr.bf16.mxu0 %v2398
    %3696 = vmatpush1.bf16.msra.mxu0 %v2397
    %3697 = vmatprep.subr.bf16.mxu0 %v2387
    %3698 = vmatpush1.bf16.msra.mxu0 %v2386
    %3699 = vmatprep.subr.bf16.mxu0 %v2376
    %3700 = vmatpush1.bf16.msra.mxu0 %v2375
    %3701 = vmatprep.subr.bf16.mxu0 %v2541
    %3702 = vmatpush2.bf16.msra.mxu0 %v2540
    %3703 = vmatprep.subr.bf16.mxu0 %v2530
    %3704 = vmatpush2.bf16.msra.mxu0 %v2529
    %3705 = vmatprep.subr.bf16.mxu0 %v2519
    %3706 = vmatpush2.bf16.msra.mxu0 %v2518
    %3707 = vmatprep.subr.bf16.mxu0 %v2508
    %3708 = vmatpush2.bf16.msra.mxu0 %v2507
    %3709 = vmatprep.subr.bf16.mxu0 %v2497
    %3710 = vmatpush2.bf16.msra.mxu0 %v2496
    %3711 = vmatprep.subr.bf16.mxu0 %v2486
    %3712 = vmatpush2.bf16.msra.mxu0 %v2485
    %3713 = vmatprep.subr.bf16.mxu0 %v2475
    %3714 = vmatpush2.bf16.msra.mxu0 %v2474
    %3715 = vmatprep.subr.bf16.mxu0 %v2464
    %3716 = vmatpush2.bf16.msra.mxu0 %v2463
    %3717 = vmatprep.mubr.bf16.mxu0 %v99
    %3718 = vmatmul.mubr.bf16.gmra.mxu0 %v98
    %v3719 = vpop.f32.mrf.mxu0
    %v3720 = vadd.f32 %v703, %v3719
    %v3721 = vpop.f32.mrf.mxu0
    %v3722 = vadd.f32 %v707, %v3721
    %v3723 = vpop.f32.mrf.mxu0
    %v3724 = vadd.f32 %v703, %v3723
    %v3725 = vpop.f32.mrf.mxu0
    %v3726 = vadd.f32 %v707, %v3725
    %3727 = vdwg.mxu0
    %3728 = vmatprep.subr.bf16.mxu0 %v2629
    %3729 = vmatpush1.bf16.msra.mxu0 %v2628
    %3730 = vmatprep.subr.bf16.mxu0 %v2618
    %3731 = vmatpush1.bf16.msra.mxu0 %v2617
    %3732 = vmatprep.subr.bf16.mxu0 %v2607
    %3733 = vmatpush1.bf16.msra.mxu0 %v2606
    %3734 = vmatprep.subr.bf16.mxu0 %v2596
    %3735 = vmatpush1.bf16.msra.mxu0 %v2595
    %3736 = vmatprep.subr.bf16.mxu0 %v2585
    %3737 = vmatpush1.bf16.msra.mxu0 %v2584
    %3738 = vmatprep.subr.bf16.mxu0 %v2574
    %3739 = vmatpush1.bf16.msra.mxu0 %v2573
    %3740 = vmatprep.subr.bf16.mxu0 %v2563
    %3741 = vmatpush1.bf16.msra.mxu0 %v2562
    %3742 = vmatprep.subr.bf16.mxu0 %v2552
    %3743 = vmatpush1.bf16.msra.mxu0 %v2551
    %3744 = vmatprep.subr.bf16.mxu0 %v2717
    %3745 = vmatpush2.bf16.msra.mxu0 %v2716
    %3746 = vmatprep.subr.bf16.mxu0 %v2706
    %3747 = vmatpush2.bf16.msra.mxu0 %v2705
    %3748 = vmatprep.subr.bf16.mxu0 %v2695
    %3749 = vmatpush2.bf16.msra.mxu0 %v2694
    %3750 = vmatprep.subr.bf16.mxu0 %v2684
    %3751 = vmatpush2.bf16.msra.mxu0 %v2683
    %3752 = vmatprep.subr.bf16.mxu0 %v2673
    %3753 = vmatpush2.bf16.msra.mxu0 %v2672
    %3754 = vmatprep.subr.bf16.mxu0 %v2662
    %3755 = vmatpush2.bf16.msra.mxu0 %v2661
    %3756 = vmatprep.subr.bf16.mxu0 %v2651
    %3757 = vmatpush2.bf16.msra.mxu0 %v2650
    %3758 = vmatprep.subr.bf16.mxu0 %v2640
    %3759 = vmatpush2.bf16.msra.mxu0 %v2639
    %3760 = vmatprep.mubr.bf16.mxu0 %v101
    %3761 = vmatmul.mubr.bf16.gmra.mxu0 %v100
    %v3762 = vpop.f32.mrf.mxu0
    %v3763 = vadd.f32 %v3720, %v3762
    %v3764 = vpop.f32.mrf.mxu0
    %v3765 = vadd.f32 %v3722, %v3764
    %v3766 = vpop.f32.mrf.mxu0
    %v3767 = vadd.f32 %v3724, %v3766
    %v3768 = vpop.f32.mrf.mxu0
    %v3769 = vadd.f32 %v3726, %v3768
    %3770 = vdwg.mxu0
    %3771 = vmatprep.subr.bf16.mxu0 %v2805
    %3772 = vmatpush1.bf16.msra.mxu0 %v2804
    %3773 = vmatprep.subr.bf16.mxu0 %v2794
    %3774 = vmatpush1.bf16.msra.mxu0 %v2793
    %3775 = vmatprep.subr.bf16.mxu0 %v2783
    %3776 = vmatpush1.bf16.msra.mxu0 %v2782
    %3777 = vmatprep.subr.bf16.mxu0 %v2772
    %3778 = vmatpush1.bf16.msra.mxu0 %v2771
    %3779 = vmatprep.subr.bf16.mxu0 %v2761
    %3780 = vmatpush1.bf16.msra.mxu0 %v2760
    %3781 = vmatprep.subr.bf16.mxu0 %v2750
    %3782 = vmatpush1.bf16.msra.mxu0 %v2749
    %3783 = vmatprep.subr.bf16.mxu0 %v2739
    %3784 = vmatpush1.bf16.msra.mxu0 %v2738
    %3785 = vmatprep.subr.bf16.mxu0 %v2728
    %3786 = vmatpush1.bf16.msra.mxu0 %v2727
    %3787 = vmatprep.subr.bf16.mxu0 %v2893
    %3788 = vmatpush2.bf16.msra.mxu0 %v2892
    %3789 = vmatprep.subr.bf16.mxu0 %v2882
    %3790 = vmatpush2.bf16.msra.mxu0 %v2881
    %3791 = vmatprep.subr.bf16.mxu0 %v2871
    %3792 = vmatpush2.bf16.msra.mxu0 %v2870
    %3793 = vmatprep.subr.bf16.mxu0 %v2860
    %3794 = vmatpush2.bf16.msra.mxu0 %v2859
    %3795 = vmatprep.subr.bf16.mxu0 %v2849
    %3796 = vmatpush2.bf16.msra.mxu0 %v2848
    %3797 = vmatprep.subr.bf16.mxu0 %v2838
    %3798 = vmatpush2.bf16.msra.mxu0 %v2837
    %3799 = vmatprep.subr.bf16.mxu0 %v2827
    %3800 = vmatpush2.bf16.msra.mxu0 %v2826
    %3801 = vmatprep.subr.bf16.mxu0 %v2816
    %3802 = vmatpush2.bf16.msra.mxu0 %v2815
    %3803 = vmatprep.mubr.bf16.mxu0 %v103
    %3804 = vmatmul.mubr.bf16.gmra.mxu0 %v102
    %v3805 = vpop.f32.mrf.mxu0
    %v3806 = vadd.f32 %v3763, %v3805
    %v3807 = vpop.f32.mrf.mxu0
    %v3808 = vadd.f32 %v3765, %v3807
    %v3809 = vpop.f32.mrf.mxu0
    %v3810 = vadd.f32 %v3767, %v3809
    %v3811 = vpop.f32.mrf.mxu0
    %v3812 = vadd.f32 %v3769, %v3811
    %3813 = vdwg.mxu0
    %3814 = vmatprep.subr.bf16.mxu0 %v2455
    %3815 = vmatpush1.bf16.msra.mxu0 %v2454
    %3816 = vmatprep.subr.bf16.mxu0 %v2444
    %3817 = vmatpush1.bf16.msra.mxu0 %v2443
    %3818 = vmatprep.subr.bf16.mxu0 %v2433
    %3819 = vmatpush1.bf16.msra.mxu0 %v2432
    %3820 = vmatprep.subr.bf16.mxu0 %v2422
    %3821 = vmatpush1.bf16.msra.mxu0 %v2421
    %3822 = vmatprep.subr.bf16.mxu0 %v2411
    %3823 = vmatpush1.bf16.msra.mxu0 %v2410
    %3824 = vmatprep.subr.bf16.mxu0 %v2400
    %3825 = vmatpush1.bf16.msra.mxu0 %v2399
    %3826 = vmatprep.subr.bf16.mxu0 %v2389
    %3827 = vmatpush1.bf16.msra.mxu0 %v2388
    %3828 = vmatprep.subr.bf16.mxu0 %v2378
    %3829 = vmatpush1.bf16.msra.mxu0 %v2377
    %3830 = vmatprep.subr.bf16.mxu0 %v2543
    %3831 = vmatpush2.bf16.msra.mxu0 %v2542
    %3832 = vmatprep.subr.bf16.mxu0 %v2532
    %3833 = vmatpush2.bf16.msra.mxu0 %v2531
    %3834 = vmatprep.subr.bf16.mxu0 %v2521
    %3835 = vmatpush2.bf16.msra.mxu0 %v2520
    %3836 = vmatprep.subr.bf16.mxu0 %v2510
    %3837 = vmatpush2.bf16.msra.mxu0 %v2509
    %3838 = vmatprep.subr.bf16.mxu0 %v2499
    %3839 = vmatpush2.bf16.msra.mxu0 %v2498
    %3840 = vmatprep.subr.bf16.mxu0 %v2488
    %3841 = vmatpush2.bf16.msra.mxu0 %v2487
    %3842 = vmatprep.subr.bf16.mxu0 %v2477
    %3843 = vmatpush2.bf16.msra.mxu0 %v2476
    %3844 = vmatprep.subr.bf16.mxu0 %v2466
    %3845 = vmatpush2.bf16.msra.mxu0 %v2465
    %3846 = vmatprep.mubr.bf16.mxu0 %v99
    %3847 = vmatmul.mubr.bf16.gmra.mxu0 %v98
    %v3848 = vpop.f32.mrf.mxu0
    %v3849 = vadd.f32 %v711, %v3848
    %v3850 = vpop.f32.mrf.mxu0
    %v3851 = vadd.f32 %v715, %v3850
    %v3852 = vpop.f32.mrf.mxu0
    %v3853 = vadd.f32 %v711, %v3852
    %v3854 = vpop.f32.mrf.mxu0
    %v3855 = vadd.f32 %v715, %v3854
    %3856 = vdwg.mxu0
    %3857 = vmatprep.subr.bf16.mxu0 %v2631
    %3858 = vmatpush1.bf16.msra.mxu0 %v2630
    %3859 = vmatprep.subr.bf16.mxu0 %v2620
    %3860 = vmatpush1.bf16.msra.mxu0 %v2619
    %3861 = vmatprep.subr.bf16.mxu0 %v2609
    %3862 = vmatpush1.bf16.msra.mxu0 %v2608
    %3863 = vmatprep.subr.bf16.mxu0 %v2598
    %3864 = vmatpush1.bf16.msra.mxu0 %v2597
    %3865 = vmatprep.subr.bf16.mxu0 %v2587
    %3866 = vmatpush1.bf16.msra.mxu0 %v2586
    %3867 = vmatprep.subr.bf16.mxu0 %v2576
    %3868 = vmatpush1.bf16.msra.mxu0 %v2575
    %3869 = vmatprep.subr.bf16.mxu0 %v2565
    %3870 = vmatpush1.bf16.msra.mxu0 %v2564
    %3871 = vmatprep.subr.bf16.mxu0 %v2554
    %3872 = vmatpush1.bf16.msra.mxu0 %v2553
    %3873 = vmatprep.subr.bf16.mxu0 %v2719
    %3874 = vmatpush2.bf16.msra.mxu0 %v2718
    %3875 = vmatprep.subr.bf16.mxu0 %v2708
    %3876 = vmatpush2.bf16.msra.mxu0 %v2707
    %3877 = vmatprep.subr.bf16.mxu0 %v2697
    %3878 = vmatpush2.bf16.msra.mxu0 %v2696
    %3879 = vmatprep.subr.bf16.mxu0 %v2686
    %3880 = vmatpush2.bf16.msra.mxu0 %v2685
    %3881 = vmatprep.subr.bf16.mxu0 %v2675
    %3882 = vmatpush2.bf16.msra.mxu0 %v2674
    %3883 = vmatprep.subr.bf16.mxu0 %v2664
    %3884 = vmatpush2.bf16.msra.mxu0 %v2663
    %3885 = vmatprep.subr.bf16.mxu0 %v2653
    %3886 = vmatpush2.bf16.msra.mxu0 %v2652
    %3887 = vmatprep.subr.bf16.mxu0 %v2642
    %3888 = vmatpush2.bf16.msra.mxu0 %v2641
    %3889 = vmatprep.mubr.bf16.mxu0 %v101
    %3890 = vmatmul.mubr.bf16.gmra.mxu0 %v100
    %v3891 = vpop.f32.mrf.mxu0
    %v3892 = vadd.f32 %v3849, %v3891
    %v3893 = vpop.f32.mrf.mxu0
    %v3894 = vadd.f32 %v3851, %v3893
    %v3895 = vpop.f32.mrf.mxu0
    %v3896 = vadd.f32 %v3853, %v3895
    %v3897 = vpop.f32.mrf.mxu0
    %v3898 = vadd.f32 %v3855, %v3897
    %3899 = vdwg.mxu0
    %3900 = vmatprep.subr.bf16.mxu0 %v2807
    %3901 = vmatpush1.bf16.msra.mxu0 %v2806
    %3902 = vmatprep.subr.bf16.mxu0 %v2796
    %3903 = vmatpush1.bf16.msra.mxu0 %v2795
    %3904 = vmatprep.subr.bf16.mxu0 %v2785
    %3905 = vmatpush1.bf16.msra.mxu0 %v2784
    %3906 = vmatprep.subr.bf16.mxu0 %v2774
    %3907 = vmatpush1.bf16.msra.mxu0 %v2773
    %3908 = vmatprep.subr.bf16.mxu0 %v2763
    %3909 = vmatpush1.bf16.msra.mxu0 %v2762
    %3910 = vmatprep.subr.bf16.mxu0 %v2752
    %3911 = vmatpush1.bf16.msra.mxu0 %v2751
    %3912 = vmatprep.subr.bf16.mxu0 %v2741
    %3913 = vmatpush1.bf16.msra.mxu0 %v2740
    %3914 = vmatprep.subr.bf16.mxu0 %v2730
    %3915 = vmatpush1.bf16.msra.mxu0 %v2729
    %3916 = vmatprep.subr.bf16.mxu0 %v2895
    %3917 = vmatpush2.bf16.msra.mxu0 %v2894
    %3918 = vmatprep.subr.bf16.mxu0 %v2884
    %3919 = vmatpush2.bf16.msra.mxu0 %v2883
    %3920 = vmatprep.subr.bf16.mxu0 %v2873
    %3921 = vmatpush2.bf16.msra.mxu0 %v2872
    %3922 = vmatprep.subr.bf16.mxu0 %v2862
    %3923 = vmatpush2.bf16.msra.mxu0 %v2861
    %3924 = vmatprep.subr.bf16.mxu0 %v2851
    %3925 = vmatpush2.bf16.msra.mxu0 %v2850
    %3926 = vmatprep.subr.bf16.mxu0 %v2840
    %3927 = vmatpush2.bf16.msra.mxu0 %v2839
    %3928 = vmatprep.subr.bf16.mxu0 %v2829
    %3929 = vmatpush2.bf16.msra.mxu0 %v2828
    %3930 = vmatprep.subr.bf16.mxu0 %v2818
    %3931 = vmatpush2.bf16.msra.mxu0 %v2817
    %3932 = vmatprep.mubr.bf16.mxu0 %v103
    %3933 = vmatmul.mubr.bf16.gmra.mxu0 %v102
    %v3934 = vpop.f32.mrf.mxu0
    %v3935 = vadd.f32 %v3892, %v3934
    %v3936 = vpop.f32.mrf.mxu0
    %v3937 = vadd.f32 %v3894, %v3936
    %v3938 = vpop.f32.mrf.mxu0
    %v3939 = vadd.f32 %v3896, %v3938
    %v3940 = vpop.f32.mrf.mxu0
    %v3941 = vadd.f32 %v3898, %v3940
    %3942 = vdwg.mxu0
    %3943 = vmatprep.subr.bf16.mxu0 %v2457
    %3944 = vmatpush1.bf16.msra.mxu0 %v2456
    %3945 = vmatprep.subr.bf16.mxu0 %v2446
    %3946 = vmatpush1.bf16.msra.mxu0 %v2445
    %3947 = vmatprep.subr.bf16.mxu0 %v2435
    %3948 = vmatpush1.bf16.msra.mxu0 %v2434
    %3949 = vmatprep.subr.bf16.mxu0 %v2424
    %3950 = vmatpush1.bf16.msra.mxu0 %v2423
    %3951 = vmatprep.subr.bf16.mxu0 %v2413
    %3952 = vmatpush1.bf16.msra.mxu0 %v2412
    %3953 = vmatprep.subr.bf16.mxu0 %v2402
    %3954 = vmatpush1.bf16.msra.mxu0 %v2401
    %3955 = vmatprep.subr.bf16.mxu0 %v2391
    %3956 = vmatpush1.bf16.msra.mxu0 %v2390
    %3957 = vmatprep.subr.bf16.mxu0 %v2380
    %3958 = vmatpush1.bf16.msra.mxu0 %v2379
    %3959 = vmatprep.subr.bf16.mxu0 %v2545
    %3960 = vmatpush2.bf16.msra.mxu0 %v2544
    %3961 = vmatprep.subr.bf16.mxu0 %v2534
    %3962 = vmatpush2.bf16.msra.mxu0 %v2533
    %3963 = vmatprep.subr.bf16.mxu0 %v2523
    %3964 = vmatpush2.bf16.msra.mxu0 %v2522
    %3965 = vmatprep.subr.bf16.mxu0 %v2512
    %3966 = vmatpush2.bf16.msra.mxu0 %v2511
    %3967 = vmatprep.subr.bf16.mxu0 %v2501
    %3968 = vmatpush2.bf16.msra.mxu0 %v2500
    %3969 = vmatprep.subr.bf16.mxu0 %v2490
    %3970 = vmatpush2.bf16.msra.mxu0 %v2489
    %3971 = vmatprep.subr.bf16.mxu0 %v2479
    %3972 = vmatpush2.bf16.msra.mxu0 %v2478
    %3973 = vmatprep.subr.bf16.mxu0 %v2468
    %3974 = vmatpush2.bf16.msra.mxu0 %v2467
    %3975 = vmatprep.mubr.bf16.mxu0 %v99
    %3976 = vmatmul.mubr.bf16.gmra.mxu0 %v98
    %v3977 = vpop.f32.mrf.mxu0
    %v3978 = vadd.f32 %v719, %v3977
    %v3979 = vpop.f32.mrf.mxu0
    %v3980 = vadd.f32 %v723, %v3979
    %v3981 = vpop.f32.mrf.mxu0
    %v3982 = vadd.f32 %v719, %v3981
    %v3983 = vpop.f32.mrf.mxu0
    %v3984 = vadd.f32 %v723, %v3983
    %3985 = vdwg.mxu0
    %3986 = vmatprep.subr.bf16.mxu0 %v2633
    %3987 = vmatpush1.bf16.msra.mxu0 %v2632
    %3988 = vmatprep.subr.bf16.mxu0 %v2622
    %3989 = vmatpush1.bf16.msra.mxu0 %v2621
    %3990 = vmatprep.subr.bf16.mxu0 %v2611
    %3991 = vmatpush1.bf16.msra.mxu0 %v2610
    %3992 = vmatprep.subr.bf16.mxu0 %v2600
    %3993 = vmatpush1.bf16.msra.mxu0 %v2599
    %3994 = vmatprep.subr.bf16.mxu0 %v2589
    %3995 = vmatpush1.bf16.msra.mxu0 %v2588
    %3996 = vmatprep.subr.bf16.mxu0 %v2578
    %3997 = vmatpush1.bf16.msra.mxu0 %v2577
    %3998 = vmatprep.subr.bf16.mxu0 %v2567
    %3999 = vmatpush1.bf16.msra.mxu0 %v2566
    %4000 = vmatprep.subr.bf16.mxu0 %v2556
    %4001 = vmatpush1.bf16.msra.mxu0 %v2555
    %4002 = vmatprep.subr.bf16.mxu0 %v2721
    %4003 = vmatpush2.bf16.msra.mxu0 %v2720
    %4004 = vmatprep.subr.bf16.mxu0 %v2710
    %4005 = vmatpush2.bf16.msra.mxu0 %v2709
    %4006 = vmatprep.subr.bf16.mxu0 %v2699
    %4007 = vmatpush2.bf16.msra.mxu0 %v2698
    %4008 = vmatprep.subr.bf16.mxu0 %v2688
    %4009 = vmatpush2.bf16.msra.mxu0 %v2687
    %4010 = vmatprep.subr.bf16.mxu0 %v2677
    %4011 = vmatpush2.bf16.msra.mxu0 %v2676
    %4012 = vmatprep.subr.bf16.mxu0 %v2666
    %4013 = vmatpush2.bf16.msra.mxu0 %v2665
    %4014 = vmatprep.subr.bf16.mxu0 %v2655
    %4015 = vmatpush2.bf16.msra.mxu0 %v2654
    %4016 = vmatprep.subr.bf16.mxu0 %v2644
    %4017 = vmatpush2.bf16.msra.mxu0 %v2643
    %4018 = vmatprep.mubr.bf16.mxu0 %v101
    %4019 = vmatmul.mubr.bf16.gmra.mxu0 %v100
    %v4020 = vpop.f32.mrf.mxu0
    %v4021 = vadd.f32 %v3978, %v4020
    %v4022 = vpop.f32.mrf.mxu0
    %v4023 = vadd.f32 %v3980, %v4022
    %v4024 = vpop.f32.mrf.mxu0
    %v4025 = vadd.f32 %v3982, %v4024
    %v4026 = vpop.f32.mrf.mxu0
    %v4027 = vadd.f32 %v3984, %v4026
    %4028 = vdwg.mxu0
    %4029 = vmatprep.subr.bf16.mxu0 %v2809
    %4030 = vmatpush1.bf16.msra.mxu0 %v2808
    %4031 = vmatprep.subr.bf16.mxu0 %v2798
    %4032 = vmatpush1.bf16.msra.mxu0 %v2797
    %4033 = vmatprep.subr.bf16.mxu0 %v2787
    %4034 = vmatpush1.bf16.msra.mxu0 %v2786
    %4035 = vmatprep.subr.bf16.mxu0 %v2776
    %4036 = vmatpush1.bf16.msra.mxu0 %v2775
    %4037 = vmatprep.subr.bf16.mxu0 %v2765
    %4038 = vmatpush1.bf16.msra.mxu0 %v2764
    %4039 = vmatprep.subr.bf16.mxu0 %v2754
    %4040 = vmatpush1.bf16.msra.mxu0 %v2753
    %4041 = vmatprep.subr.bf16.mxu0 %v2743
    %4042 = vmatpush1.bf16.msra.mxu0 %v2742
    %4043 = vmatprep.subr.bf16.mxu0 %v2732
    %4044 = vmatpush1.bf16.msra.mxu0 %v2731
    %4045 = vmatprep.subr.bf16.mxu0 %v2897
    %4046 = vmatpush2.bf16.msra.mxu0 %v2896
    %4047 = vmatprep.subr.bf16.mxu0 %v2886
    %4048 = vmatpush2.bf16.msra.mxu0 %v2885
    %4049 = vmatprep.subr.bf16.mxu0 %v2875
    %4050 = vmatpush2.bf16.msra.mxu0 %v2874
    %4051 = vmatprep.subr.bf16.mxu0 %v2864
    %4052 = vmatpush2.bf16.msra.mxu0 %v2863
    %4053 = vmatprep.subr.bf16.mxu0 %v2853
    %4054 = vmatpush2.bf16.msra.mxu0 %v2852
    %4055 = vmatprep.subr.bf16.mxu0 %v2842
    %4056 = vmatpush2.bf16.msra.mxu0 %v2841
    %4057 = vmatprep.subr.bf16.mxu0 %v2831
    %4058 = vmatpush2.bf16.msra.mxu0 %v2830
    %4059 = vmatprep.subr.bf16.mxu0 %v2820
    %4060 = vmatpush2.bf16.msra.mxu0 %v2819
    %4061 = vmatprep.mubr.bf16.mxu0 %v103
    %4062 = vmatmul.mubr.bf16.gmra.mxu0 %v102
    %v4063 = vpop.f32.mrf.mxu0
    %v4064 = vadd.f32 %v4021, %v4063
    %v4065 = vpop.f32.mrf.mxu0
    %v4066 = vadd.f32 %v4023, %v4065
    %v4067 = vpop.f32.mrf.mxu0
    %v4068 = vadd.f32 %v4025, %v4067
    %v4069 = vpop.f32.mrf.mxu0
    %v4070 = vadd.f32 %v4027, %v4069
    %4071 = vdwg.mxu0
    %4072 = vmatprep.subr.bf16.mxu0 0
    %4073 = vmatpush1.bf16.msra.mxu0 %v2458
    %4074 = vmatprep.subr.bf16.mxu0 0
    %4075 = vmatpush1.bf16.msra.mxu0 %v2447
    %4076 = vmatprep.subr.bf16.mxu0 0
    %4077 = vmatpush1.bf16.msra.mxu0 %v2436
    %4078 = vmatprep.subr.bf16.mxu0 0
    %4079 = vmatpush1.bf16.msra.mxu0 %v2425
    %4080 = vmatprep.subr.bf16.mxu0 0
    %4081 = vmatpush1.bf16.msra.mxu0 %v2414
    %4082 = vmatprep.subr.bf16.mxu0 0
    %4083 = vmatpush1.bf16.msra.mxu0 %v2403
    %4084 = vmatprep.subr.bf16.mxu0 0
    %4085 = vmatpush1.bf16.msra.mxu0 %v2392
    %4086 = vmatprep.subr.bf16.mxu0 0
    %4087 = vmatpush1.bf16.msra.mxu0 %v2381
    %4088 = vmatprep.subr.bf16.mxu0 0
    %4089 = vmatpush2.bf16.msra.mxu0 %v2546
    %4090 = vmatprep.subr.bf16.mxu0 0
    %4091 = vmatpush2.bf16.msra.mxu0 %v2535
    %4092 = vmatprep.subr.bf16.mxu0 0
    %4093 = vmatpush2.bf16.msra.mxu0 %v2524
    %4094 = vmatprep.subr.bf16.mxu0 0
    %4095 = vmatpush2.bf16.msra.mxu0 %v2513
    %4096 = vmatprep.subr.bf16.mxu0 0
    %4097 = vmatpush2.bf16.msra.mxu0 %v2502
    %4098 = vmatprep.subr.bf16.mxu0 0
    %4099 = vmatpush2.bf16.msra.mxu0 %v2491
    %4100 = vmatprep.subr.bf16.mxu0 0
    %4101 = vmatpush2.bf16.msra.mxu0 %v2480
    %4102 = vmatprep.subr.bf16.mxu0 0
    %4103 = vmatpush2.bf16.msra.mxu0 %v2469
    %4104 = vmatprep.mubr.bf16.mxu0 %v99
    %4105 = vmatmul.mubr.bf16.gmra.mxu0 %v98
    %v4106 = vpop.f32.mrf.mxu0
    %v4107 = vadd.f32 %v727, %v4106
    %v4108 = vpop.f32.mrf.mxu0
    %v4109 = vpop.f32.mrf.mxu0
    %v4110 = vadd.f32 %v727, %v4109
    %v4111 = vpop.f32.mrf.mxu0
    %4112 = vdwg.mxu0
    %4113 = vmatprep.subr.bf16.mxu0 0
    %4114 = vmatpush1.bf16.msra.mxu0 %v2634
    %4115 = vmatprep.subr.bf16.mxu0 0
    %4116 = vmatpush1.bf16.msra.mxu0 %v2623
    %4117 = vmatprep.subr.bf16.mxu0 0
    %4118 = vmatpush1.bf16.msra.mxu0 %v2612
    %4119 = vmatprep.subr.bf16.mxu0 0
    %4120 = vmatpush1.bf16.msra.mxu0 %v2601
    %4121 = vmatprep.subr.bf16.mxu0 0
    %4122 = vmatpush1.bf16.msra.mxu0 %v2590
    %4123 = vmatprep.subr.bf16.mxu0 0
    %4124 = vmatpush1.bf16.msra.mxu0 %v2579
    %4125 = vmatprep.subr.bf16.mxu0 0
    %4126 = vmatpush1.bf16.msra.mxu0 %v2568
    %4127 = vmatprep.subr.bf16.mxu0 0
    %4128 = vmatpush1.bf16.msra.mxu0 %v2557
    %4129 = vmatprep.subr.bf16.mxu0 0
    %4130 = vmatpush2.bf16.msra.mxu0 %v2722
    %4131 = vmatprep.subr.bf16.mxu0 0
    %4132 = vmatpush2.bf16.msra.mxu0 %v2711
    %4133 = vmatprep.subr.bf16.mxu0 0
    %4134 = vmatpush2.bf16.msra.mxu0 %v2700
    %4135 = vmatprep.subr.bf16.mxu0 0
    %4136 = vmatpush2.bf16.msra.mxu0 %v2689
    %4137 = vmatprep.subr.bf16.mxu0 0
    %4138 = vmatpush2.bf16.msra.mxu0 %v2678
    %4139 = vmatprep.subr.bf16.mxu0 0
    %4140 = vmatpush2.bf16.msra.mxu0 %v2667
    %4141 = vmatprep.subr.bf16.mxu0 0
    %4142 = vmatpush2.bf16.msra.mxu0 %v2656
    %4143 = vmatprep.subr.bf16.mxu0 0
    %4144 = vmatpush2.bf16.msra.mxu0 %v2645
    %4145 = vmatprep.mubr.bf16.mxu0 %v101
    %4146 = vmatmul.mubr.bf16.gmra.mxu0 %v100
    %v4147 = vpop.f32.mrf.mxu0
    %v4148 = vadd.f32 %v4107, %v4147
    %v4149 = vpop.f32.mrf.mxu0
    %v4150 = vpop.f32.mrf.mxu0
    %v4151 = vadd.f32 %v4110, %v4150
    %v4152 = vpop.f32.mrf.mxu0
    %4153 = vdwg.mxu0
    %4154 = vmatprep.subr.bf16.mxu0 0
    %4155 = vmatpush1.bf16.msra.mxu0 %v2810
    %4156 = vmatprep.subr.bf16.mxu0 0
    %4157 = vmatpush1.bf16.msra.mxu0 %v2799
    %4158 = vmatprep.subr.bf16.mxu0 0
    %4159 = vmatpush1.bf16.msra.mxu0 %v2788
    %4160 = vmatprep.subr.bf16.mxu0 0
    %4161 = vmatpush1.bf16.msra.mxu0 %v2777
    %4162 = vmatprep.subr.bf16.mxu0 0
    %4163 = vmatpush1.bf16.msra.mxu0 %v2766
    %4164 = vmatprep.subr.bf16.mxu0 0
    %4165 = vmatpush1.bf16.msra.mxu0 %v2755
    %4166 = vmatprep.subr.bf16.mxu0 0
    %4167 = vmatpush1.bf16.msra.mxu0 %v2744
    %4168 = vmatprep.subr.bf16.mxu0 0
    %4169 = vmatpush1.bf16.msra.mxu0 %v2733
    %4170 = vmatprep.subr.bf16.mxu0 0
    %4171 = vmatpush2.bf16.msra.mxu0 %v2898
    %4172 = vmatprep.subr.bf16.mxu0 0
    %4173 = vmatpush2.bf16.msra.mxu0 %v2887
    %4174 = vmatprep.subr.bf16.mxu0 0
    %4175 = vmatpush2.bf16.msra.mxu0 %v2876
    %4176 = vmatprep.subr.bf16.mxu0 0
    %4177 = vmatpush2.bf16.msra.mxu0 %v2865
    %4178 = vmatprep.subr.bf16.mxu0 0
    %4179 = vmatpush2.bf16.msra.mxu0 %v2854
    %4180 = vmatprep.subr.bf16.mxu0 0
    %4181 = vmatpush2.bf16.msra.mxu0 %v2843
    %4182 = vmatprep.subr.bf16.mxu0 0
    %4183 = vmatpush2.bf16.msra.mxu0 %v2832
    %4184 = vmatprep.subr.bf16.mxu0 0
    %4185 = vmatpush2.bf16.msra.mxu0 %v2821
    %4186 = vmatprep.mubr.bf16.mxu0 %v103
    %4187 = vmatmul.mubr.bf16.gmra.mxu0 %v102
    %v4188 = vpop.f32.mrf.mxu0
    %v4189 = vadd.f32 %v4148, %v4188
    %v4190 = vpop.f32.mrf.mxu0
    %v4191 = vpop.f32.mrf.mxu0
    %v4192 = vadd.f32 %v4151, %v4191
    %v4193 = vpop.f32.mrf.mxu0
    %4194 = vdwg.mxu0
    %v4195 = vmax.f32 %v3548, 0.0
    %v4196 = vmax.f32 %v3550, 0.0
    %v4197 = vmax.f32 %v3677, 0.0
    %v4198 = vmax.f32 %v3679, 0.0
    %v4199 = vmax.f32 %v3806, 0.0
    %v4200 = vmax.f32 %v3808, 0.0
    %v4201 = vmax.f32 %v3935, 0.0
    %v4202 = vmax.f32 %v3937, 0.0
    %v4203 = vmax.f32 %v4064, 0.0
    %v4204 = vmax.f32 %v4066, 0.0
    %v4205 = vmax.f32 %v4189, 0.0
    %v4206 = vmax.f32 %v3552, 0.0
    %v4207 = vmax.f32 %v3554, 0.0
    %v4208 = vmax.f32 %v3681, 0.0
    %v4209 = vmax.f32 %v3683, 0.0
    %v4210 = vmax.f32 %v3810, 0.0
    %v4211 = vmax.f32 %v3812, 0.0
    %v4212 = vmax.f32 %v3939, 0.0
    %v4213 = vmax.f32 %v3941, 0.0
    %v4214 = vmax.f32 %v4068, 0.0
    %v4215 = vmax.f32 %v4070, 0.0
    %v4216 = vmax.f32 %v4192, 0.0
    %v4217 = vpack.c.bf16 %v4206, %v4195
    %v4218 = vpack.c.bf16 %v4207, %v4196
    %v4219 = vpack.c.bf16 %v4208, %v4197
    %v4220 = vpack.c.bf16 %v4209, %v4198
    %v4221 = vpack.c.bf16 %v4210, %v4199
    %v4222 = vpack.c.bf16 %v4211, %v4200
    %v4223 = vpack.c.bf16 %v4212, %v4201
    %v4224 = vpack.c.bf16 %v4213, %v4202
    %v4225 = vpack.c.bf16 %v4214, %v4203
    %v4226 = vpack.c.bf16 %v4215, %v4204
    %v4227 = vpack.c.bf16 %v4216, %v4205
    %v4228 = vld [vmem:[#allocation8] sm:$0xff]
    %v4229 = vld [vmem:[#allocation8 + $0x8] sm:$0xff]
    %v4230 = vld [vmem:[#allocation8 + $0x10] sm:$0xff]
    %v4231 = vld [vmem:[#allocation8 + $0x18] sm:$0xff]
    %v4232 = vld [vmem:[#allocation8 + $0x20] sm:$0xff]
    %v4233 = vld [vmem:[#allocation8 + $0x28] sm:$0xff]
    %v4234 = vld [vmem:[#allocation8 + $0x30] sm:$0xff]
    %v4235 = vld [vmem:[#allocation8 + $0x38] sm:$0xff]
    %v4236 = vld [vmem:[#allocation8 + $0x40] sm:$0xff]
    %v4237 = vld [vmem:[#allocation8 + $0x48] sm:$0xff]
    %v4238 = vld [vmem:[#allocation8 + $0x50] sm:$0xff]
    %v4239 = vld [vmem:[#allocation8 + $0x58] sm:$0xff]
    %v4240 = vld [vmem:[#allocation8 + $0x60] sm:$0xff]
    %v4241 = vld [vmem:[#allocation8 + $0x68] sm:$0xff]
    %v4242 = vld [vmem:[#allocation8 + $0x70] sm:$0xff]
    %v4243 = vld [vmem:[#allocation8 + $0x78] sm:$0xff]
    %v4244 = vld [vmem:[#allocation8 + $0x80] sm:$0xff]
    %v4245 = vld [vmem:[#allocation8 + $0x88] sm:$0xff]
    %v4246 = vld [vmem:[#allocation8 + $0x90] sm:$0xff]
    %v4247 = vld [vmem:[#allocation8 + $0x98] sm:$0xff]
    %v4248 = vld [vmem:[#allocation8 + $0xa0] sm:$0xff]
    %v4249 = vld [vmem:[#allocation8 + $0xa8] sm:$0xff]
    %v4250 = vld [vmem:[#allocation8 + $0xb0] sm:$0xff]
    %v4251 = vld [vmem:[#allocation8 + $0xb8] sm:$0xff]
    %v4252 = vld [vmem:[#allocation8 + $0xc0] sm:$0xff]
    %v4253 = vld [vmem:[#allocation8 + $0xc8] sm:$0xff]
    %v4254 = vld [vmem:[#allocation8 + $0xd0] sm:$0xff]
    %v4255 = vld [vmem:[#allocation8 + $0xd8] sm:$0xff]
    %v4256 = vld [vmem:[#allocation8 + $0xe0] sm:$0xff]
    %v4257 = vld [vmem:[#allocation8 + $0xe8] sm:$0xff]
    %v4258 = vld [vmem:[#allocation8 + $0xf0] sm:$0xff]
    %v4259 = vld [vmem:[#allocation8 + $0xf8] sm:$0xff]
    %v4260 = vld [vmem:[#allocation8 + $0x100] sm:$0xff]
    %v4261 = vld [vmem:[#allocation8 + $0x108] sm:$0xff]
    %v4262 = vld [vmem:[#allocation8 + $0x110] sm:$0xff]
    %v4263 = vld [vmem:[#allocation8 + $0x118] sm:$0xff]
    %v4264 = vld [vmem:[#allocation8 + $0x120] sm:$0xff]
    %v4265 = vld [vmem:[#allocation8 + $0x128] sm:$0xff]
    %v4266 = vld [vmem:[#allocation8 + $0x130] sm:$0xff]
    %v4267 = vld [vmem:[#allocation8 + $0x138] sm:$0xff]
    %v4268 = vld [vmem:[#allocation8 + $0x140] sm:$0xff]
    %v4269 = vld [vmem:[#allocation8 + $0x148] sm:$0xff]
    %v4270 = vld [vmem:[#allocation8 + $0x150] sm:$0xff]
    %v4271 = vld [vmem:[#allocation8 + $0x158] sm:$0xff]
    %v4272 = vld [vmem:[#allocation8 + $0x160] sm:$0xff]
    %v4273 = vld [vmem:[#allocation8 + $0x168] sm:$0xff]
    %v4274 = vld [vmem:[#allocation8 + $0x170] sm:$0xff]
    %v4275 = vld [vmem:[#allocation8 + $0x178] sm:$0xff]
    %v4276 = vld [vmem:[#allocation8 + $0x180] sm:$0xff]
    %v4277 = vld [vmem:[#allocation8 + $0x188] sm:$0xff]
    %v4278 = vld [vmem:[#allocation8 + $0x190] sm:$0xff]
    %v4279 = vld [vmem:[#allocation8 + $0x198] sm:$0xff]
    %v4280 = vld [vmem:[#allocation8 + $0x1a0] sm:$0xff]
    %v4281 = vld [vmem:[#allocation8 + $0x1a8] sm:$0xff]
    %v4282 = vld [vmem:[#allocation8 + $0x1b0] sm:$0xff]
    %v4283 = vld [vmem:[#allocation8 + $0x1b8] sm:$0xff]
    %v4284 = vld [vmem:[#allocation8 + $0x1c0] sm:$0xff]
    %v4285 = vld [vmem:[#allocation8 + $0x1c8] sm:$0xff]
    %v4286 = vld [vmem:[#allocation8 + $0x1d0] sm:$0xff]
    %v4287 = vld [vmem:[#allocation8 + $0x1d8] sm:$0xff]
    %v4288 = vld [vmem:[#allocation8 + $0x1e0] sm:$0xff]
    %v4289 = vld [vmem:[#allocation8 + $0x1e8] sm:$0xff]
    %v4290 = vld [vmem:[#allocation8 + $0x1f0] sm:$0xff]
    %v4291 = vld [vmem:[#allocation8 + $0x1f8] sm:$0xff]
    %v4292 = vld [vmem:[#allocation8 + $0x200] sm:$0xff]
    %v4293 = vld [vmem:[#allocation8 + $0x208] sm:$0xff]
    %v4294 = vld [vmem:[#allocation8 + $0x210] sm:$0xff]
    %v4295 = vld [vmem:[#allocation8 + $0x218] sm:$0xff]
    %v4296 = vld [vmem:[#allocation8 + $0x220] sm:$0xff]
    %v4297 = vld [vmem:[#allocation8 + $0x228] sm:$0xff]
    %v4298 = vld [vmem:[#allocation8 + $0x230] sm:$0xff]
    %v4299 = vld [vmem:[#allocation8 + $0x238] sm:$0xff]
    %v4300 = vld [vmem:[#allocation8 + $0x240] sm:$0xff]
    %v4301 = vld [vmem:[#allocation8 + $0x248] sm:$0xff]
    %v4302 = vld [vmem:[#allocation8 + $0x250] sm:$0xff]
    %v4303 = vld [vmem:[#allocation8 + $0x258] sm:$0xff]
    %v4304 = vld [vmem:[#allocation8 + $0x260] sm:$0xff]
    %v4305 = vld [vmem:[#allocation8 + $0x268] sm:$0xff]
    %v4306 = vld [vmem:[#allocation8 + $0x270] sm:$0xff]
    %v4307 = vld [vmem:[#allocation8 + $0x278] sm:$0xff]
    %v4308 = vld [vmem:[#allocation8 + $0x280] sm:$0xff]
    %v4309 = vld [vmem:[#allocation8 + $0x288] sm:$0xff]
    %v4310 = vld [vmem:[#allocation8 + $0x290] sm:$0xff]
    %v4311 = vld [vmem:[#allocation8 + $0x298] sm:$0xff]
    %v4312 = vld [vmem:[#allocation8 + $0x2a0] sm:$0xff]
    %v4313 = vld [vmem:[#allocation8 + $0x2a8] sm:$0xff]
    %v4314 = vld [vmem:[#allocation8 + $0x2b0] sm:$0xff]
    %v4315 = vld [vmem:[#allocation8 + $0x2b8] sm:$0xff]
    %v4316 = vld [vmem:[#allocation8 + $0x2c0] sm:$0xff]
    %v4317 = vld [vmem:[#allocation8 + $0x2c8] sm:$0xff]
    %v4318 = vld [vmem:[#allocation8 + $0x2d0] sm:$0xff]
    %v4319 = vld [vmem:[#allocation8 + $0x2d8] sm:$0xff]
    %v4320 = vld [vmem:[#allocation8 + $0x2e0] sm:$0xff]
    %v4321 = vld [vmem:[#allocation8 + $0x2e8] sm:$0xff]
    %v4322 = vld [vmem:[#allocation8 + $0x2f0] sm:$0xff]
    %v4323 = vld [vmem:[#allocation8 + $0x2f8] sm:$0xff]
    %v4324 = vld [vmem:[#allocation8 + $0x300] sm:$0xff]
    %v4325 = vld [vmem:[#allocation8 + $0x308] sm:$0xff]
    %v4326 = vld [vmem:[#allocation8 + $0x310] sm:$0xff]
    %v4327 = vld [vmem:[#allocation8 + $0x318] sm:$0xff]
    %v4328 = vld [vmem:[#allocation8 + $0x320] sm:$0xff]
    %v4329 = vld [vmem:[#allocation8 + $0x328] sm:$0xff]
    %v4330 = vld [vmem:[#allocation8 + $0x330] sm:$0xff]
    %v4331 = vld [vmem:[#allocation8 + $0x338] sm:$0xff]
    %v4332 = vld [vmem:[#allocation8 + $0x340] sm:$0xff]
    %v4333 = vld [vmem:[#allocation8 + $0x348] sm:$0xff]
    %v4334 = vld [vmem:[#allocation8 + $0x350] sm:$0xff]
    %v4335 = vld [vmem:[#allocation8 + $0x358] sm:$0xff]
    %v4336 = vld [vmem:[#allocation8 + $0x360] sm:$0xff]
    %v4337 = vld [vmem:[#allocation8 + $0x368] sm:$0xff]
    %v4338 = vld [vmem:[#allocation8 + $0x370] sm:$0xff]
    %v4339 = vld [vmem:[#allocation8 + $0x378] sm:$0xff]
    %v4340 = vld [vmem:[#allocation8 + $0x380] sm:$0xff]
    %v4341 = vld [vmem:[#allocation8 + $0x388] sm:$0xff]
    %v4342 = vld [vmem:[#allocation8 + $0x390] sm:$0xff]
    %v4343 = vld [vmem:[#allocation8 + $0x398] sm:$0xff]
    %v4344 = vld [vmem:[#allocation8 + $0x3a0] sm:$0xff]
    %v4345 = vld [vmem:[#allocation8 + $0x3a8] sm:$0xff]
    %v4346 = vld [vmem:[#allocation8 + $0x3b0] sm:$0xff]
    %v4347 = vld [vmem:[#allocation8 + $0x3b8] sm:$0xff]
    %v4348 = vld [vmem:[#allocation8 + $0x3c0] sm:$0xff]
    %v4349 = vld [vmem:[#allocation8 + $0x3c8] sm:$0xff]
    %v4350 = vld [vmem:[#allocation8 + $0x3d0] sm:$0xff]
    %v4351 = vld [vmem:[#allocation8 + $0x3d8] sm:$0xff]
    %v4352 = vld [vmem:[#allocation8 + $0x3e0] sm:$0xff]
    %v4353 = vld [vmem:[#allocation8 + $0x3e8] sm:$0xff]
    %v4354 = vld [vmem:[#allocation8 + $0x3f0] sm:$0xff]
    %v4355 = vld [vmem:[#allocation8 + $0x3f8] sm:$0xff]
    %v4356 = vld [vmem:[#allocation8 + $0x400] sm:$0xff]
    %v4357 = vld [vmem:[#allocation8 + $0x408] sm:$0xff]
    %v4358 = vld [vmem:[#allocation8 + $0x410] sm:$0xff]
    %v4359 = vld [vmem:[#allocation8 + $0x418] sm:$0xff]
    %v4360 = vld [vmem:[#allocation8 + $0x420] sm:$0xff]
    %v4361 = vld [vmem:[#allocation8 + $0x428] sm:$0xff]
    %v4362 = vld [vmem:[#allocation8 + $0x430] sm:$0xff]
    %v4363 = vld [vmem:[#allocation8 + $0x438] sm:$0xff]
    %v4364 = vld [vmem:[#allocation8 + $0x440] sm:$0xff]
    %v4365 = vld [vmem:[#allocation8 + $0x448] sm:$0xff]
    %v4366 = vld [vmem:[#allocation8 + $0x450] sm:$0xff]
    %v4367 = vld [vmem:[#allocation8 + $0x458] sm:$0xff]
    %v4368 = vld [vmem:[#allocation8 + $0x460] sm:$0xff]
    %v4369 = vld [vmem:[#allocation8 + $0x468] sm:$0xff]
    %v4370 = vld [vmem:[#allocation8 + $0x470] sm:$0xff]
    %v4371 = vld [vmem:[#allocation8 + $0x478] sm:$0xff]
    %v4372 = vld [vmem:[#allocation8 + $0x480] sm:$0xff]
    %v4373 = vld [vmem:[#allocation8 + $0x488] sm:$0xff]
    %v4374 = vld [vmem:[#allocation8 + $0x490] sm:$0xff]
    %v4375 = vld [vmem:[#allocation8 + $0x498] sm:$0xff]
    %v4376 = vld [vmem:[#allocation8 + $0x4a0] sm:$0xff]
    %v4377 = vld [vmem:[#allocation8 + $0x4a8] sm:$0xff]
    %v4378 = vld [vmem:[#allocation8 + $0x4b0] sm:$0xff]
    %v4379 = vld [vmem:[#allocation8 + $0x4b8] sm:$0xff]
    %v4380 = vld [vmem:[#allocation8 + $0x4c0] sm:$0xff]
    %v4381 = vld [vmem:[#allocation8 + $0x4c8] sm:$0xff]
    %v4382 = vld [vmem:[#allocation8 + $0x4d0] sm:$0xff]
    %v4383 = vld [vmem:[#allocation8 + $0x4d8] sm:$0xff]
    %v4384 = vld [vmem:[#allocation8 + $0x4e0] sm:$0xff]
    %v4385 = vld [vmem:[#allocation8 + $0x4e8] sm:$0xff]
    %v4386 = vld [vmem:[#allocation8 + $0x4f0] sm:$0xff]
    %v4387 = vld [vmem:[#allocation8 + $0x4f8] sm:$0xff]
    %v4388 = vld [vmem:[#allocation8 + $0x500] sm:$0xff]
    %v4389 = vld [vmem:[#allocation8 + $0x508] sm:$0xff]
    %v4390 = vld [vmem:[#allocation8 + $0x510] sm:$0xff]
    %v4391 = vld [vmem:[#allocation8 + $0x518] sm:$0xff]
    %v4392 = vld [vmem:[#allocation8 + $0x520] sm:$0xff]
    %v4393 = vld [vmem:[#allocation8 + $0x528] sm:$0xff]
    %v4394 = vld [vmem:[#allocation8 + $0x530] sm:$0xff]
    %v4395 = vld [vmem:[#allocation8 + $0x538] sm:$0xff]
    %v4396 = vld [vmem:[#allocation8 + $0x540] sm:$0xff]
    %v4397 = vld [vmem:[#allocation8 + $0x548] sm:$0xff]
    %v4398 = vld [vmem:[#allocation8 + $0x550] sm:$0xff]
    %v4399 = vld [vmem:[#allocation8 + $0x558] sm:$0xff]
    %v4400 = vld [vmem:[#allocation8 + $0x560] sm:$0xff]
    %v4401 = vld [vmem:[#allocation8 + $0x568] sm:$0xff]
    %v4402 = vld [vmem:[#allocation8 + $0x570] sm:$0xff]
    %v4403 = vld [vmem:[#allocation8 + $0x578] sm:$0xff]
    %v4404 = vld [vmem:[#allocation8 + $0x580] sm:$0xff]
    %v4405 = vld [vmem:[#allocation8 + $0x588] sm:$0xff]
    %v4406 = vld [vmem:[#allocation8 + $0x590] sm:$0xff]
    %v4407 = vld [vmem:[#allocation8 + $0x598] sm:$0xff]
    %v4408 = vld [vmem:[#allocation8 + $0x5a0] sm:$0xff]
    %v4409 = vld [vmem:[#allocation8 + $0x5a8] sm:$0xff]
    %v4410 = vld [vmem:[#allocation8 + $0x5b0] sm:$0xff]
    %v4411 = vld [vmem:[#allocation8 + $0x5b8] sm:$0xff]
    %v4412 = vld [vmem:[#allocation8 + $0x5c0] sm:$0xff]
    %v4413 = vld [vmem:[#allocation8 + $0x5c8] sm:$0xff]
    %v4414 = vld [vmem:[#allocation8 + $0x5d0] sm:$0xff]
    %v4415 = vld [vmem:[#allocation8 + $0x5d8] sm:$0xff]
    %v4416 = vld [vmem:[#allocation8 + $0x5e0] sm:$0xff]
    %v4417 = vld [vmem:[#allocation8 + $0x5e8] sm:$0xff]
    %v4418 = vld [vmem:[#allocation8 + $0x5f0] sm:$0xff]
    %v4419 = vld [vmem:[#allocation8 + $0x5f8] sm:$0xff]
    %v4420 = vld [vmem:[#allocation8 + $0x600] sm:$0xff]
    %v4421 = vld [vmem:[#allocation8 + $0x608] sm:$0xff]
    %v4422 = vld [vmem:[#allocation8 + $0x610] sm:$0xff]
    %v4423 = vld [vmem:[#allocation8 + $0x618] sm:$0xff]
    %v4424 = vld [vmem:[#allocation8 + $0x620] sm:$0xff]
    %v4425 = vld [vmem:[#allocation8 + $0x628] sm:$0xff]
    %v4426 = vld [vmem:[#allocation8 + $0x630] sm:$0xff]
    %v4427 = vld [vmem:[#allocation8 + $0x638] sm:$0xff]
    %v4428 = vld [vmem:[#allocation8 + $0x640] sm:$0xff]
    %v4429 = vld [vmem:[#allocation8 + $0x648] sm:$0xff]
    %v4430 = vld [vmem:[#allocation8 + $0x650] sm:$0xff]
    %v4431 = vld [vmem:[#allocation8 + $0x658] sm:$0xff]
    %v4432 = vld [vmem:[#allocation8 + $0x660] sm:$0xff]
    %v4433 = vld [vmem:[#allocation8 + $0x668] sm:$0xff]
    %v4434 = vld [vmem:[#allocation8 + $0x670] sm:$0xff]
    %v4435 = vld [vmem:[#allocation8 + $0x678] sm:$0xff]
    %v4436 = vld [vmem:[#allocation8 + $0x680] sm:$0xff]
    %v4437 = vld [vmem:[#allocation8 + $0x688] sm:$0xff]
    %v4438 = vld [vmem:[#allocation8 + $0x690] sm:$0xff]
    %v4439 = vld [vmem:[#allocation8 + $0x698] sm:$0xff]
    %v4440 = vld [vmem:[#allocation8 + $0x6a0] sm:$0xff]
    %v4441 = vld [vmem:[#allocation8 + $0x6a8] sm:$0xff]
    %v4442 = vld [vmem:[#allocation8 + $0x6b0] sm:$0xff]
    %v4443 = vld [vmem:[#allocation8 + $0x6b8] sm:$0xff]
    %v4444 = vld [vmem:[#allocation8 + $0x6c0] sm:$0xff]
    %v4445 = vld [vmem:[#allocation8 + $0x6c8] sm:$0xff]
    %v4446 = vld [vmem:[#allocation8 + $0x6d0] sm:$0xff]
    %v4447 = vld [vmem:[#allocation8 + $0x6d8] sm:$0xff]
    %v4448 = vld [vmem:[#allocation8 + $0x6e0] sm:$0xff]
    %v4449 = vld [vmem:[#allocation8 + $0x6e8] sm:$0xff]
    %v4450 = vld [vmem:[#allocation8 + $0x6f0] sm:$0xff]
    %v4451 = vld [vmem:[#allocation8 + $0x6f8] sm:$0xff]
    %v4452 = vld [vmem:[#allocation8 + $0x700] sm:$0xff]
    %v4453 = vld [vmem:[#allocation8 + $0x708] sm:$0xff]
    %v4454 = vld [vmem:[#allocation8 + $0x710] sm:$0xff]
    %v4455 = vld [vmem:[#allocation8 + $0x718] sm:$0xff]
    %v4456 = vld [vmem:[#allocation8 + $0x720] sm:$0xff]
    %v4457 = vld [vmem:[#allocation8 + $0x728] sm:$0xff]
    %v4458 = vld [vmem:[#allocation8 + $0x730] sm:$0xff]
    %v4459 = vld [vmem:[#allocation8 + $0x738] sm:$0xff]
    %v4460 = vld [vmem:[#allocation8 + $0x740] sm:$0xff]
    %v4461 = vld [vmem:[#allocation8 + $0x748] sm:$0xff]
    %v4462 = vld [vmem:[#allocation8 + $0x750] sm:$0xff]
    %v4463 = vld [vmem:[#allocation8 + $0x758] sm:$0xff]
    %v4464 = vld [vmem:[#allocation8 + $0x760] sm:$0xff]
    %v4465 = vld [vmem:[#allocation8 + $0x768] sm:$0xff]
    %v4466 = vld [vmem:[#allocation8 + $0x770] sm:$0xff]
    %v4467 = vld [vmem:[#allocation8 + $0x778] sm:$0xff]
    %v4468 = vld [vmem:[#allocation8 + $0x780] sm:$0xff]
    %v4469 = vld [vmem:[#allocation8 + $0x788] sm:$0xff]
    %v4470 = vld [vmem:[#allocation8 + $0x790] sm:$0xff]
    %v4471 = vld [vmem:[#allocation8 + $0x798] sm:$0xff]
    %v4472 = vld [vmem:[#allocation8 + $0x7a0] sm:$0xff]
    %v4473 = vld [vmem:[#allocation8 + $0x7a8] sm:$0xff]
    %v4474 = vld [vmem:[#allocation8 + $0x7b0] sm:$0xff]
    %v4475 = vld [vmem:[#allocation8 + $0x7b8] sm:$0xff]
    %v4476 = vld [vmem:[#allocation8 + $0x7c0] sm:$0xff]
    %v4477 = vld [vmem:[#allocation8 + $0x7c8] sm:$0xff]
    %v4478 = vld [vmem:[#allocation8 + $0x7d0] sm:$0xff]
    %v4479 = vld [vmem:[#allocation8 + $0x7d8] sm:$0xff]
    %v4480 = vld [vmem:[#allocation8 + $0x7e0] sm:$0xff]
    %v4481 = vld [vmem:[#allocation8 + $0x7e8] sm:$0xff]
    %v4482 = vld [vmem:[#allocation8 + $0x7f0] sm:$0xff]
    %v4483 = vld [vmem:[#allocation8 + $0x7f8] sm:$0xff]
    %v4484 = vld [vmem:[#allocation8 + $0x800] sm:$0xff]
    %v4485 = vld [vmem:[#allocation8 + $0x808] sm:$0xff]
    %v4486 = vld [vmem:[#allocation8 + $0x810] sm:$0xff]
    %v4487 = vld [vmem:[#allocation8 + $0x818] sm:$0xff]
    %v4488 = vld [vmem:[#allocation8 + $0x820] sm:$0xff]
    %v4489 = vld [vmem:[#allocation8 + $0x828] sm:$0xff]
    %v4490 = vld [vmem:[#allocation8 + $0x830] sm:$0xff]
    %v4491 = vld [vmem:[#allocation8 + $0x838] sm:$0xff]
    %v4492 = vld [vmem:[#allocation8 + $0x840] sm:$0xff]
    %v4493 = vld [vmem:[#allocation8 + $0x848] sm:$0xff]
    %v4494 = vld [vmem:[#allocation8 + $0x850] sm:$0xff]
    %v4495 = vld [vmem:[#allocation8 + $0x858] sm:$0xff]
    %v4496 = vld [vmem:[#allocation8 + $0x860] sm:$0xff]
    %v4497 = vld [vmem:[#allocation8 + $0x868] sm:$0xff]
    %v4498 = vld [vmem:[#allocation8 + $0x870] sm:$0xff]
    %v4499 = vld [vmem:[#allocation8 + $0x878] sm:$0xff]
    %v4500 = vld [vmem:[#allocation8 + $0x880] sm:$0xff]
    %v4501 = vld [vmem:[#allocation8 + $0x888] sm:$0xff]
    %v4502 = vld [vmem:[#allocation8 + $0x890] sm:$0xff]
    %v4503 = vld [vmem:[#allocation8 + $0x898] sm:$0xff]
    %v4504 = vld [vmem:[#allocation8 + $0x8a0] sm:$0xff]
    %v4505 = vld [vmem:[#allocation8 + $0x8a8] sm:$0xff]
    %v4506 = vld [vmem:[#allocation8 + $0x8b0] sm:$0xff]
    %v4507 = vld [vmem:[#allocation8 + $0x8b8] sm:$0xff]
    %v4508 = vld [vmem:[#allocation8 + $0x8c0] sm:$0xff]
    %v4509 = vld [vmem:[#allocation8 + $0x8c8] sm:$0xff]
    %v4510 = vld [vmem:[#allocation8 + $0x8d0] sm:$0xff]
    %v4511 = vld [vmem:[#allocation8 + $0x8d8] sm:$0xff]
    %v4512 = vld [vmem:[#allocation8 + $0x8e0] sm:$0xff]
    %v4513 = vld [vmem:[#allocation8 + $0x8e8] sm:$0xff]
    %v4514 = vld [vmem:[#allocation8 + $0x8f0] sm:$0xff]
    %v4515 = vld [vmem:[#allocation8 + $0x8f8] sm:$0xff]
    %v4516 = vld [vmem:[#allocation8 + $0x900] sm:$0xff]
    %v4517 = vld [vmem:[#allocation8 + $0x908] sm:$0xff]
    %v4518 = vld [vmem:[#allocation8 + $0x910] sm:$0xff]
    %v4519 = vld [vmem:[#allocation8 + $0x918] sm:$0xff]
    %v4520 = vld [vmem:[#allocation8 + $0x920] sm:$0xff]
    %v4521 = vld [vmem:[#allocation8 + $0x928] sm:$0xff]
    %v4522 = vld [vmem:[#allocation8 + $0x930] sm:$0xff]
    %v4523 = vld [vmem:[#allocation8 + $0x938] sm:$0xff]
    %v4524 = vld [vmem:[#allocation8 + $0x940] sm:$0xff]
    %v4525 = vld [vmem:[#allocation8 + $0x948] sm:$0xff]
    %v4526 = vld [vmem:[#allocation8 + $0x950] sm:$0xff]
    %v4527 = vld [vmem:[#allocation8 + $0x958] sm:$0xff]
    %v4528 = vld [vmem:[#allocation8 + $0x960] sm:$0xff]
    %v4529 = vld [vmem:[#allocation8 + $0x968] sm:$0xff]
    %v4530 = vld [vmem:[#allocation8 + $0x970] sm:$0xff]
    %v4531 = vld [vmem:[#allocation8 + $0x978] sm:$0xff]
    %v4532 = vld [vmem:[#allocation8 + $0x980] sm:$0xff]
    %v4533 = vld [vmem:[#allocation8 + $0x988] sm:$0xff]
    %v4534 = vld [vmem:[#allocation8 + $0x990] sm:$0xff]
    %v4535 = vld [vmem:[#allocation8 + $0x998] sm:$0xff]
    %v4536 = vld [vmem:[#allocation8 + $0x9a0] sm:$0xff]
    %v4537 = vld [vmem:[#allocation8 + $0x9a8] sm:$0xff]
    %v4538 = vld [vmem:[#allocation8 + $0x9b0] sm:$0xff]
    %v4539 = vld [vmem:[#allocation8 + $0x9b8] sm:$0xff]
    %v4540 = vld [vmem:[#allocation8 + $0x9c0] sm:$0xff]
    %v4541 = vld [vmem:[#allocation8 + $0x9c8] sm:$0xff]
    %v4542 = vld [vmem:[#allocation8 + $0x9d0] sm:$0xff]
    %v4543 = vld [vmem:[#allocation8 + $0x9d8] sm:$0xff]
    %v4544 = vld [vmem:[#allocation8 + $0x9e0] sm:$0xff]
    %v4545 = vld [vmem:[#allocation8 + $0x9e8] sm:$0xff]
    %v4546 = vld [vmem:[#allocation8 + $0x9f0] sm:$0xff]
    %v4547 = vld [vmem:[#allocation8 + $0x9f8] sm:$0xff]
    %v4548 = vld [vmem:[#allocation8 + $0xa00] sm:$0xff]
    %v4549 = vld [vmem:[#allocation8 + $0xa08] sm:$0xff]
    %v4550 = vld [vmem:[#allocation8 + $0xa10] sm:$0xff]
    %v4551 = vld [vmem:[#allocation8 + $0xa18] sm:$0xff]
    %v4552 = vld [vmem:[#allocation8 + $0xa20] sm:$0xff]
    %v4553 = vld [vmem:[#allocation8 + $0xa28] sm:$0xff]
    %v4554 = vld [vmem:[#allocation8 + $0xa30] sm:$0xff]
    %v4555 = vld [vmem:[#allocation8 + $0xa38] sm:$0xff]
    %v4556 = vld [vmem:[#allocation8 + $0xa40] sm:$0xff]
    %v4557 = vld [vmem:[#allocation8 + $0xa48] sm:$0xff]
    %v4558 = vld [vmem:[#allocation8 + $0xa50] sm:$0xff]
    %v4559 = vld [vmem:[#allocation8 + $0xa58] sm:$0xff]
    %v4560 = vld [vmem:[#allocation8 + $0xa60] sm:$0xff]
    %v4561 = vld [vmem:[#allocation8 + $0xa68] sm:$0xff]
    %v4562 = vld [vmem:[#allocation8 + $0xa70] sm:$0xff]
    %v4563 = vld [vmem:[#allocation8 + $0xa78] sm:$0xff]
    %v4564 = vld [vmem:[#allocation8 + $0xa80] sm:$0xff]
    %v4565 = vld [vmem:[#allocation8 + $0xa88] sm:$0xff]
    %v4566 = vld [vmem:[#allocation8 + $0xa90] sm:$0xff]
    %v4567 = vld [vmem:[#allocation8 + $0xa98] sm:$0xff]
    %v4568 = vld [vmem:[#allocation8 + $0xaa0] sm:$0xff]
    %v4569 = vld [vmem:[#allocation8 + $0xaa8] sm:$0xff]
    %v4570 = vld [vmem:[#allocation8 + $0xab0] sm:$0xff]
    %v4571 = vld [vmem:[#allocation8 + $0xab8] sm:$0xff]
    %v4572 = vld [vmem:[#allocation8 + $0xac0] sm:$0xff]
    %v4573 = vld [vmem:[#allocation8 + $0xac8] sm:$0xff]
    %v4574 = vld [vmem:[#allocation8 + $0xad0] sm:$0xff]
    %v4575 = vld [vmem:[#allocation8 + $0xad8] sm:$0xff]
    %v4576 = vld [vmem:[#allocation8 + $0xae0] sm:$0xff]
    %v4577 = vld [vmem:[#allocation8 + $0xae8] sm:$0xff]
    %v4578 = vld [vmem:[#allocation8 + $0xaf0] sm:$0xff]
    %v4579 = vld [vmem:[#allocation8 + $0xaf8] sm:$0xff]
    %v4580 = vld [vmem:[#allocation8 + $0xb00] sm:$0xff]
    %v4581 = vld [vmem:[#allocation8 + $0xb08] sm:$0xff]
    %v4582 = vld [vmem:[#allocation8 + $0xb10] sm:$0xff]
    %v4583 = vld [vmem:[#allocation8 + $0xb18] sm:$0xff]
    %v4584 = vld [vmem:[#allocation8 + $0xb20] sm:$0xff]
    %v4585 = vld [vmem:[#allocation8 + $0xb28] sm:$0xff]
    %v4586 = vld [vmem:[#allocation8 + $0xb30] sm:$0xff]
    %v4587 = vld [vmem:[#allocation8 + $0xb38] sm:$0xff]
    %v4588 = vld [vmem:[#allocation8 + $0xb40] sm:$0xff]
    %v4589 = vld [vmem:[#allocation8 + $0xb48] sm:$0xff]
    %v4590 = vld [vmem:[#allocation8 + $0xb50] sm:$0xff]
    %v4591 = vld [vmem:[#allocation8 + $0xb58] sm:$0xff]
    %v4592 = vld [vmem:[#allocation8 + $0xb60] sm:$0xff]
    %v4593 = vld [vmem:[#allocation8 + $0xb68] sm:$0xff]
    %v4594 = vld [vmem:[#allocation8 + $0xb70] sm:$0xff]
    %v4595 = vld [vmem:[#allocation8 + $0xb78] sm:$0xff]
    %v4596 = vld [vmem:[#allocation8 + $0xb80] sm:$0xff]
    %v4597 = vld [vmem:[#allocation8 + $0xb88] sm:$0xff]
    %v4598 = vld [vmem:[#allocation8 + $0xb90] sm:$0xff]
    %v4599 = vld [vmem:[#allocation8 + $0xb98] sm:$0xff]
    %v4600 = vld [vmem:[#allocation8 + $0xba0] sm:$0xff]
    %v4601 = vld [vmem:[#allocation8 + $0xba8] sm:$0xff]
    %v4602 = vld [vmem:[#allocation8 + $0xbb0] sm:$0xff]
    %v4603 = vld [vmem:[#allocation8 + $0xbb8] sm:$0xff]
    %v4604 = vld [vmem:[#allocation8 + $0xbc0] sm:$0xff]
    %v4605 = vld [vmem:[#allocation8 + $0xbc8] sm:$0xff]
    %v4606 = vld [vmem:[#allocation8 + $0xbd0] sm:$0xff]
    %v4607 = vld [vmem:[#allocation8 + $0xbd8] sm:$0xff]
    %v4608 = vld [vmem:[#allocation8 + $0xbe0] sm:$0xff]
    %v4609 = vld [vmem:[#allocation8 + $0xbe8] sm:$0xff]
    %v4610 = vld [vmem:[#allocation8 + $0xbf0] sm:$0xff]
    %v4611 = vld [vmem:[#allocation8 + $0xbf8] sm:$0xff]
    %v4612 = vld [vmem:[#allocation8 + $0xc00] sm:$0xff]
    %v4613 = vld [vmem:[#allocation8 + $0xc08] sm:$0xff]
    %v4614 = vld [vmem:[#allocation8 + $0xc10] sm:$0xff]
    %v4615 = vld [vmem:[#allocation8 + $0xc18] sm:$0xff]
    %v4616 = vld [vmem:[#allocation8 + $0xc20] sm:$0xff]
    %v4617 = vld [vmem:[#allocation8 + $0xc28] sm:$0xff]
    %v4618 = vld [vmem:[#allocation8 + $0xc30] sm:$0xff]
    %v4619 = vld [vmem:[#allocation8 + $0xc38] sm:$0xff]
    %v4620 = vld [vmem:[#allocation8 + $0xc40] sm:$0xff]
    %v4621 = vld [vmem:[#allocation8 + $0xc48] sm:$0xff]
    %v4622 = vld [vmem:[#allocation8 + $0xc50] sm:$0xff]
    %v4623 = vld [vmem:[#allocation8 + $0xc58] sm:$0xff]
    %v4624 = vld [vmem:[#allocation8 + $0xc60] sm:$0xff]
    %v4625 = vld [vmem:[#allocation8 + $0xc68] sm:$0xff]
    %v4626 = vld [vmem:[#allocation8 + $0xc70] sm:$0xff]
    %v4627 = vld [vmem:[#allocation8 + $0xc78] sm:$0xff]
    %v4628 = vld [vmem:[#allocation8 + $0xc80] sm:$0xff]
    %v4629 = vld [vmem:[#allocation8 + $0xc88] sm:$0xff]
    %v4630 = vld [vmem:[#allocation8 + $0xc90] sm:$0xff]
    %v4631 = vld [vmem:[#allocation8 + $0xc98] sm:$0xff]
    %v4632 = vld [vmem:[#allocation8 + $0xca0] sm:$0xff]
    %v4633 = vld [vmem:[#allocation8 + $0xca8] sm:$0xff]
    %v4634 = vld [vmem:[#allocation8 + $0xcb0] sm:$0xff]
    %v4635 = vld [vmem:[#allocation8 + $0xcb8] sm:$0xff]
    %v4636 = vld [vmem:[#allocation8 + $0xcc0] sm:$0xff]
    %v4637 = vld [vmem:[#allocation8 + $0xcc8] sm:$0xff]
    %v4638 = vld [vmem:[#allocation8 + $0xcd0] sm:$0xff]
    %v4639 = vld [vmem:[#allocation8 + $0xcd8] sm:$0xff]
    %v4640 = vld [vmem:[#allocation8 + $0xce0] sm:$0xff]
    %v4641 = vld [vmem:[#allocation8 + $0xce8] sm:$0xff]
    %v4642 = vld [vmem:[#allocation8 + $0xcf0] sm:$0xff]
    %v4643 = vld [vmem:[#allocation8 + $0xcf8] sm:$0xff]
    %v4644 = vld [vmem:[#allocation8 + $0xd00] sm:$0xff]
    %v4645 = vld [vmem:[#allocation8 + $0xd08] sm:$0xff]
    %v4646 = vld [vmem:[#allocation8 + $0xd10] sm:$0xff]
    %v4647 = vld [vmem:[#allocation8 + $0xd18] sm:$0xff]
    %v4648 = vld [vmem:[#allocation8 + $0xd20] sm:$0xff]
    %v4649 = vld [vmem:[#allocation8 + $0xd28] sm:$0xff]
    %v4650 = vld [vmem:[#allocation8 + $0xd30] sm:$0xff]
    %v4651 = vld [vmem:[#allocation8 + $0xd38] sm:$0xff]
    %v4652 = vld [vmem:[#allocation8 + $0xd40] sm:$0xff]
    %v4653 = vld [vmem:[#allocation8 + $0xd48] sm:$0xff]
    %v4654 = vld [vmem:[#allocation8 + $0xd50] sm:$0xff]
    %v4655 = vld [vmem:[#allocation8 + $0xd58] sm:$0xff]
    %v4656 = vld [vmem:[#allocation8 + $0xd60] sm:$0xff]
    %v4657 = vld [vmem:[#allocation8 + $0xd68] sm:$0xff]
    %v4658 = vld [vmem:[#allocation8 + $0xd70] sm:$0xff]
    %v4659 = vld [vmem:[#allocation8 + $0xd78] sm:$0xff]
    %v4660 = vld [vmem:[#allocation8 + $0xd80] sm:$0xff]
    %v4661 = vld [vmem:[#allocation8 + $0xd88] sm:$0xff]
    %v4662 = vld [vmem:[#allocation8 + $0xd90] sm:$0xff]
    %v4663 = vld [vmem:[#allocation8 + $0xd98] sm:$0xff]
    %v4664 = vld [vmem:[#allocation8 + $0xda0] sm:$0xff]
    %v4665 = vld [vmem:[#allocation8 + $0xda8] sm:$0xff]
    %v4666 = vld [vmem:[#allocation8 + $0xdb0] sm:$0xff]
    %v4667 = vld [vmem:[#allocation8 + $0xdb8] sm:$0xff]
    %v4668 = vld [vmem:[#allocation8 + $0xdc0] sm:$0xff]
    %v4669 = vld [vmem:[#allocation8 + $0xdc8] sm:$0xff]
    %v4670 = vld [vmem:[#allocation8 + $0xdd0] sm:$0xff]
    %v4671 = vld [vmem:[#allocation8 + $0xdd8] sm:$0xff]
    %v4672 = vld [vmem:[#allocation8 + $0xde0] sm:$0xff]
    %v4673 = vld [vmem:[#allocation8 + $0xde8] sm:$0xff]
    %v4674 = vld [vmem:[#allocation8 + $0xdf0] sm:$0xff]
    %v4675 = vld [vmem:[#allocation8 + $0xdf8] sm:$0xff]
    %v4676 = vld [vmem:[#allocation8 + $0xe00] sm:$0xff]
    %v4677 = vld [vmem:[#allocation8 + $0xe08] sm:$0xff]
    %v4678 = vld [vmem:[#allocation8 + $0xe10] sm:$0xff]
    %v4679 = vld [vmem:[#allocation8 + $0xe18] sm:$0xff]
    %v4680 = vld [vmem:[#allocation8 + $0xe20] sm:$0xff]
    %v4681 = vld [vmem:[#allocation8 + $0xe28] sm:$0xff]
    %v4682 = vld [vmem:[#allocation8 + $0xe30] sm:$0xff]
    %v4683 = vld [vmem:[#allocation8 + $0xe38] sm:$0xff]
    %v4684 = vld [vmem:[#allocation8 + $0xe40] sm:$0xff]
    %v4685 = vld [vmem:[#allocation8 + $0xe48] sm:$0xff]
    %v4686 = vld [vmem:[#allocation8 + $0xe50] sm:$0xff]
    %v4687 = vld [vmem:[#allocation8 + $0xe58] sm:$0xff]
    %v4688 = vld [vmem:[#allocation8 + $0xe60] sm:$0xff]
    %v4689 = vld [vmem:[#allocation8 + $0xe68] sm:$0xff]
    %v4690 = vld [vmem:[#allocation8 + $0xe70] sm:$0xff]
    %v4691 = vld [vmem:[#allocation8 + $0xe78] sm:$0xff]
    %v4692 = vld [vmem:[#allocation8 + $0xe80] sm:$0xff]
    %v4693 = vld [vmem:[#allocation8 + $0xe88] sm:$0xff]
    %v4694 = vld [vmem:[#allocation8 + $0xe90] sm:$0xff]
    %v4695 = vld [vmem:[#allocation8 + $0xe98] sm:$0xff]
    %v4696 = vld [vmem:[#allocation8 + $0xea0] sm:$0xff]
    %v4697 = vld [vmem:[#allocation8 + $0xea8] sm:$0xff]
    %v4698 = vld [vmem:[#allocation8 + $0xeb0] sm:$0xff]
    %v4699 = vld [vmem:[#allocation8 + $0xeb8] sm:$0xff]
    %v4700 = vld [vmem:[#allocation8 + $0xec0] sm:$0xff]
    %v4701 = vld [vmem:[#allocation8 + $0xec8] sm:$0xff]
    %v4702 = vld [vmem:[#allocation8 + $0xed0] sm:$0xff]
    %v4703 = vld [vmem:[#allocation8 + $0xed8] sm:$0xff]
    %v4704 = vld [vmem:[#allocation8 + $0xee0] sm:$0xff]
    %v4705 = vld [vmem:[#allocation8 + $0xee8] sm:$0xff]
    %v4706 = vld [vmem:[#allocation8 + $0xef0] sm:$0xff]
    %v4707 = vld [vmem:[#allocation8 + $0xef8] sm:$0xff]
    %v4708 = vld [vmem:[#allocation8 + $0xf00] sm:$0xff]
    %v4709 = vld [vmem:[#allocation8 + $0xf08] sm:$0xff]
    %v4710 = vld [vmem:[#allocation8 + $0xf10] sm:$0xff]
    %v4711 = vld [vmem:[#allocation8 + $0xf18] sm:$0xff]
    %v4712 = vld [vmem:[#allocation8 + $0xf20] sm:$0xff]
    %v4713 = vld [vmem:[#allocation8 + $0xf28] sm:$0xff]
    %v4714 = vld [vmem:[#allocation8 + $0xf30] sm:$0xff]
    %v4715 = vld [vmem:[#allocation8 + $0xf38] sm:$0xff]
    %v4716 = vld [vmem:[#allocation8 + $0xf40] sm:$0xff]
    %v4717 = vld [vmem:[#allocation8 + $0xf48] sm:$0xff]
    %v4718 = vld [vmem:[#allocation8 + $0xf50] sm:$0xff]
    %v4719 = vld [vmem:[#allocation8 + $0xf58] sm:$0xff]
    %v4720 = vld [vmem:[#allocation8 + $0xf60] sm:$0xff]
    %v4721 = vld [vmem:[#allocation8 + $0xf68] sm:$0xff]
    %v4722 = vld [vmem:[#allocation8 + $0xf70] sm:$0xff]
    %v4723 = vld [vmem:[#allocation8 + $0xf78] sm:$0xff]
    %v4724 = vld [vmem:[#allocation8 + $0xf80] sm:$0xff]
    %v4725 = vld [vmem:[#allocation8 + $0xf88] sm:$0xff]
    %v4726 = vld [vmem:[#allocation8 + $0xf90] sm:$0xff]
    %v4727 = vld [vmem:[#allocation8 + $0xf98] sm:$0xff]
    %v4728 = vld [vmem:[#allocation8 + $0xfa0] sm:$0xff]
    %v4729 = vld [vmem:[#allocation8 + $0xfa8] sm:$0xff]
    %v4730 = vld [vmem:[#allocation8 + $0xfb0] sm:$0xff]
    %v4731 = vld [vmem:[#allocation8 + $0xfb8] sm:$0xff]
    %v4732 = vld [vmem:[#allocation8 + $0xfc0] sm:$0xff]
    %v4733 = vld [vmem:[#allocation8 + $0xfc8] sm:$0xff]
    %v4734 = vld [vmem:[#allocation8 + $0xfd0] sm:$0xff]
    %v4735 = vld [vmem:[#allocation8 + $0xfd8] sm:$0xff]
    %v4736 = vld [vmem:[#allocation8 + $0xfe0] sm:$0xff]
    %v4737 = vld [vmem:[#allocation8 + $0xfe8] sm:$0xff]
    %v4738 = vld [vmem:[#allocation8 + $0xff0] sm:$0xff]
    %v4739 = vld [vmem:[#allocation8 + $0xff8] sm:$0xff]
    %v4740 = vld [vmem:[#allocation8 + $0x1000] sm:$0xff]
    %v4741 = vld [vmem:[#allocation8 + $0x1008] sm:$0xff]
    %v4742 = vld [vmem:[#allocation8 + $0x1010] sm:$0xff]
    %v4743 = vld [vmem:[#allocation8 + $0x1018] sm:$0xff]
    %v4744 = vld [vmem:[#allocation8 + $0x1020] sm:$0xff]
    %v4745 = vld [vmem:[#allocation8 + $0x1028] sm:$0xff]
    %v4746 = vld [vmem:[#allocation8 + $0x1030] sm:$0xff]
    %v4747 = vld [vmem:[#allocation8 + $0x1038] sm:$0xff]
    %v4748 = vld [vmem:[#allocation8 + $0x1040] sm:$0xff]
    %v4749 = vld [vmem:[#allocation8 + $0x1048] sm:$0xff]
    %v4750 = vld [vmem:[#allocation8 + $0x1050] sm:$0xff]
    %v4751 = vld [vmem:[#allocation8 + $0x1058] sm:$0xff]
    %v4752 = vld [vmem:[#allocation8 + $0x1060] sm:$0xff]
    %v4753 = vld [vmem:[#allocation8 + $0x1068] sm:$0xff]
    %v4754 = vld [vmem:[#allocation8 + $0x1070] sm:$0xff]
    %v4755 = vld [vmem:[#allocation8 + $0x1078] sm:$0xff]
    %v4756 = vld [vmem:[#allocation10] sm:$0x3f]
    %v4758 = vlaneseq
    %v4759 = vshrl.u32 %v4758, 7
    %v4760 = vsub.s32 0, %v4759
    %v4761 = vrot.slane %v4756, %v4760
    %v4762 = vlaneseq
    %v4763 = vshrl.u32 %v4762, 7
    %v4764 = vsub.s32 1, %v4763
    %v4765 = vrot.slane %v4756, %v4764
    %v4766 = vlaneseq
    %v4767 = vshrl.u32 %v4766, 7
    %v4768 = vsub.s32 2, %v4767
    %v4769 = vrot.slane %v4756, %v4768
    %v4770 = vlaneseq
    %v4771 = vshrl.u32 %v4770, 7
    %v4772 = vsub.s32 3, %v4771
    %v4773 = vrot.slane %v4756, %v4772
    %v4774 = vlaneseq
    %v4775 = vshrl.u32 %v4774, 7
    %v4776 = vsub.s32 4, %v4775
    %v4777 = vrot.slane %v4756, %v4776
    %v4778 = vlaneseq
    %v4779 = vshrl.u32 %v4778, 7
    %v4780 = vsub.s32 5, %v4779
    %v4781 = vrot.slane %v4756, %v4780
    %v5316 = vunpack.c.l.b16 %v4228
    %v5317 = vunpack.c.h.b16 %v4228
    %v5318 = vunpack.c.l.b16 %v4229
    %v5319 = vunpack.c.h.b16 %v4229
    %v5320 = vunpack.c.l.b16 %v4230
    %v5321 = vunpack.c.h.b16 %v4230
    %v5322 = vunpack.c.l.b16 %v4231
    %v5323 = vunpack.c.h.b16 %v4231
    %v5324 = vunpack.c.l.b16 %v4232
    %v5325 = vunpack.c.h.b16 %v4232
    %v5326 = vunpack.c.l.b16 %v4233
    %v5327 = vunpack.c.h.b16 %v4233
    %v5328 = vunpack.c.l.b16 %v4234
    %v5329 = vunpack.c.h.b16 %v4234
    %v5330 = vunpack.c.l.b16 %v4235
    %v5331 = vunpack.c.h.b16 %v4235
    %v5332 = vunpack.c.l.b16 %v4236
    %v5333 = vunpack.c.h.b16 %v4236
    %v5334 = vunpack.c.l.b16 %v4237
    %v5335 = vunpack.c.h.b16 %v4237
    %v5336 = vunpack.c.l.b16 %v4238
    %v5337 = vunpack.c.h.b16 %v4238
    %v5338 = vunpack.c.l.b16 %v4239
    %v5339 = vunpack.c.h.b16 %v4239
    %v5340 = vunpack.c.l.b16 %v4240
    %v5341 = vunpack.c.h.b16 %v4240
    %v5342 = vunpack.c.l.b16 %v4241
    %v5343 = vunpack.c.h.b16 %v4241
    %v5344 = vunpack.c.l.b16 %v4242
    %v5345 = vunpack.c.h.b16 %v4242
    %v5346 = vunpack.c.l.b16 %v4243
    %v5347 = vunpack.c.h.b16 %v4243
    %v5348 = vunpack.c.l.b16 %v4244
    %v5349 = vunpack.c.h.b16 %v4244
    %v5350 = vunpack.c.l.b16 %v4245
    %v5351 = vunpack.c.h.b16 %v4245
    %v5352 = vunpack.c.l.b16 %v4246
    %v5353 = vunpack.c.h.b16 %v4246
    %v5354 = vunpack.c.l.b16 %v4247
    %v5355 = vunpack.c.h.b16 %v4247
    %v5356 = vunpack.c.l.b16 %v4248
    %v5357 = vunpack.c.h.b16 %v4248
    %v5358 = vunpack.c.l.b16 %v4249
    %v5359 = vunpack.c.h.b16 %v4249
    %v5360 = vunpack.c.l.b16 %v4250
    %v5361 = vunpack.c.h.b16 %v4250
    %v5362 = vunpack.c.l.b16 %v4251
    %v5363 = vunpack.c.h.b16 %v4251
    %v5364 = vunpack.c.l.b16 %v4252
    %v5365 = vunpack.c.h.b16 %v4252
    %v5366 = vunpack.c.l.b16 %v4253
    %v5367 = vunpack.c.h.b16 %v4253
    %v5368 = vunpack.c.l.b16 %v4254
    %v5369 = vunpack.c.h.b16 %v4254
    %v5370 = vunpack.c.l.b16 %v4255
    %v5371 = vunpack.c.h.b16 %v4255
    %v5372 = vunpack.c.l.b16 %v4256
    %v5373 = vunpack.c.h.b16 %v4256
    %v5374 = vunpack.c.l.b16 %v4257
    %v5375 = vunpack.c.h.b16 %v4257
    %v5376 = vunpack.c.l.b16 %v4258
    %v5377 = vunpack.c.h.b16 %v4258
    %v5378 = vunpack.c.l.b16 %v4259
    %v5379 = vunpack.c.h.b16 %v4259
    %v5380 = vunpack.c.l.b16 %v4260
    %v5381 = vunpack.c.h.b16 %v4260
    %v5382 = vunpack.c.l.b16 %v4261
    %v5383 = vunpack.c.h.b16 %v4261
    %v5384 = vunpack.c.l.b16 %v4262
    %v5385 = vunpack.c.h.b16 %v4262
    %v5386 = vunpack.c.l.b16 %v4263
    %v5387 = vunpack.c.h.b16 %v4263
    %v5388 = vunpack.c.l.b16 %v4264
    %v5389 = vunpack.c.h.b16 %v4264
    %v5390 = vunpack.c.l.b16 %v4265
    %v5391 = vunpack.c.h.b16 %v4265
    %v5392 = vunpack.c.l.b16 %v4266
    %v5393 = vunpack.c.h.b16 %v4266
    %v5394 = vunpack.c.l.b16 %v4267
    %v5395 = vunpack.c.h.b16 %v4267
    %v5396 = vunpack.c.l.b16 %v4268
    %v5397 = vunpack.c.h.b16 %v4268
    %v5398 = vunpack.c.l.b16 %v4269
    %v5399 = vunpack.c.h.b16 %v4269
    %v5400 = vunpack.c.l.b16 %v4270
    %v5401 = vunpack.c.h.b16 %v4270
    %v5402 = vunpack.c.l.b16 %v4271
    %v5403 = vunpack.c.h.b16 %v4271
    %v5404 = vunpack.c.l.b16 %v4272
    %v5405 = vunpack.c.h.b16 %v4272
    %v5406 = vunpack.c.l.b16 %v4273
    %v5407 = vunpack.c.h.b16 %v4273
    %v5408 = vunpack.c.l.b16 %v4274
    %v5409 = vunpack.c.h.b16 %v4274
    %v5410 = vunpack.c.l.b16 %v4275
    %v5411 = vunpack.c.h.b16 %v4275
    %v5412 = vunpack.c.l.b16 %v4276
    %v5413 = vunpack.c.h.b16 %v4276
    %v5414 = vunpack.c.l.b16 %v4277
    %v5415 = vunpack.c.h.b16 %v4277
    %v5416 = vunpack.c.l.b16 %v4278
    %v5417 = vunpack.c.h.b16 %v4278
    %v5418 = vunpack.c.l.b16 %v4279
    %v5419 = vunpack.c.h.b16 %v4279
    %v5420 = vunpack.c.l.b16 %v4280
    %v5421 = vunpack.c.h.b16 %v4280
    %v5422 = vunpack.c.l.b16 %v4281
    %v5423 = vunpack.c.h.b16 %v4281
    %v5424 = vunpack.c.l.b16 %v4282
    %v5425 = vunpack.c.h.b16 %v4282
    %v5426 = vunpack.c.l.b16 %v4283
    %v5427 = vunpack.c.h.b16 %v4283
    %v5428 = vunpack.c.l.b16 %v4284
    %v5429 = vunpack.c.h.b16 %v4284
    %v5430 = vunpack.c.l.b16 %v4285
    %v5431 = vunpack.c.h.b16 %v4285
    %v5432 = vunpack.c.l.b16 %v4286
    %v5433 = vunpack.c.h.b16 %v4286
    %v5434 = vunpack.c.l.b16 %v4287
    %v5435 = vunpack.c.h.b16 %v4287
    %v5436 = vunpack.c.l.b16 %v4288
    %v5437 = vunpack.c.h.b16 %v4288
    %v5438 = vunpack.c.l.b16 %v4289
    %v5439 = vunpack.c.h.b16 %v4289
    %v5440 = vunpack.c.l.b16 %v4290
    %v5441 = vunpack.c.h.b16 %v4290
    %v5442 = vunpack.c.l.b16 %v4291
    %v5443 = vunpack.c.h.b16 %v4291
    %v5444 = vunpack.c.l.b16 %v4292
    %v5445 = vunpack.c.h.b16 %v4292
    %v5446 = vunpack.c.l.b16 %v4293
    %v5447 = vunpack.c.h.b16 %v4293
    %v5448 = vunpack.c.l.b16 %v4294
    %v5449 = vunpack.c.h.b16 %v4294
    %v5450 = vunpack.c.l.b16 %v4295
    %v5451 = vunpack.c.h.b16 %v4295
    %v5452 = vunpack.c.l.b16 %v4296
    %v5453 = vunpack.c.h.b16 %v4296
    %v5454 = vunpack.c.l.b16 %v4297
    %v5455 = vunpack.c.h.b16 %v4297
    %v5456 = vunpack.c.l.b16 %v4298
    %v5457 = vunpack.c.h.b16 %v4298
    %v5458 = vunpack.c.l.b16 %v4299
    %v5459 = vunpack.c.h.b16 %v4299
    %v5460 = vunpack.c.l.b16 %v4300
    %v5461 = vunpack.c.h.b16 %v4300
    %v5462 = vunpack.c.l.b16 %v4301
    %v5463 = vunpack.c.h.b16 %v4301
    %v5464 = vunpack.c.l.b16 %v4302
    %v5465 = vunpack.c.h.b16 %v4302
    %v5466 = vunpack.c.l.b16 %v4303
    %v5467 = vunpack.c.h.b16 %v4303
    %v5468 = vunpack.c.l.b16 %v4304
    %v5469 = vunpack.c.h.b16 %v4304
    %v5470 = vunpack.c.l.b16 %v4305
    %v5471 = vunpack.c.h.b16 %v4305
    %v5472 = vunpack.c.l.b16 %v4306
    %v5473 = vunpack.c.h.b16 %v4306
    %v5474 = vunpack.c.l.b16 %v4307
    %v5475 = vunpack.c.h.b16 %v4307
    %v5476 = vunpack.c.l.b16 %v4308
    %v5477 = vunpack.c.h.b16 %v4308
    %v5478 = vunpack.c.l.b16 %v4309
    %v5479 = vunpack.c.h.b16 %v4309
    %v5480 = vunpack.c.l.b16 %v4310
    %v5481 = vunpack.c.h.b16 %v4310
    %v5482 = vunpack.c.l.b16 %v4311
    %v5483 = vunpack.c.h.b16 %v4311
    %v5484 = vunpack.c.l.b16 %v4312
    %v5485 = vunpack.c.h.b16 %v4312
    %v5486 = vunpack.c.l.b16 %v4313
    %v5487 = vunpack.c.h.b16 %v4313
    %v5488 = vunpack.c.l.b16 %v4314
    %v5489 = vunpack.c.h.b16 %v4314
    %v5490 = vunpack.c.l.b16 %v4315
    %v5491 = vunpack.c.h.b16 %v4315
    %v5492 = vunpack.c.l.b16 %v4316
    %v5493 = vunpack.c.h.b16 %v4316
    %v5494 = vunpack.c.l.b16 %v4317
    %v5495 = vunpack.c.h.b16 %v4317
    %v5496 = vunpack.c.l.b16 %v4318
    %v5497 = vunpack.c.h.b16 %v4318
    %v5498 = vunpack.c.l.b16 %v4319
    %v5499 = vunpack.c.h.b16 %v4319
    %v5500 = vunpack.c.l.b16 %v4320
    %v5501 = vunpack.c.h.b16 %v4320
    %v5502 = vunpack.c.l.b16 %v4321
    %v5503 = vunpack.c.h.b16 %v4321
    %v5504 = vunpack.c.l.b16 %v4322
    %v5505 = vunpack.c.h.b16 %v4322
    %v5506 = vunpack.c.l.b16 %v4323
    %v5507 = vunpack.c.h.b16 %v4323
    %v5508 = vunpack.c.l.b16 %v4324
    %v5509 = vunpack.c.h.b16 %v4324
    %v5510 = vunpack.c.l.b16 %v4325
    %v5511 = vunpack.c.h.b16 %v4325
    %v5512 = vunpack.c.l.b16 %v4326
    %v5513 = vunpack.c.h.b16 %v4326
    %v5514 = vunpack.c.l.b16 %v4327
    %v5515 = vunpack.c.h.b16 %v4327
    %v5516 = vunpack.c.l.b16 %v4328
    %v5517 = vunpack.c.h.b16 %v4328
    %v5518 = vunpack.c.l.b16 %v4329
    %v5519 = vunpack.c.h.b16 %v4329
    %v5520 = vunpack.c.l.b16 %v4330
    %v5521 = vunpack.c.h.b16 %v4330
    %v5522 = vunpack.c.l.b16 %v4331
    %v5523 = vunpack.c.h.b16 %v4331
    %v5524 = vunpack.c.l.b16 %v4332
    %v5525 = vunpack.c.h.b16 %v4332
    %v5526 = vunpack.c.l.b16 %v4333
    %v5527 = vunpack.c.h.b16 %v4333
    %v5528 = vunpack.c.l.b16 %v4334
    %v5529 = vunpack.c.h.b16 %v4334
    %v5530 = vunpack.c.l.b16 %v4335
    %v5531 = vunpack.c.h.b16 %v4335
    %v5532 = vunpack.c.l.b16 %v4336
    %v5533 = vunpack.c.h.b16 %v4336
    %v5534 = vunpack.c.l.b16 %v4337
    %v5535 = vunpack.c.h.b16 %v4337
    %v5536 = vunpack.c.l.b16 %v4338
    %v5537 = vunpack.c.h.b16 %v4338
    %v5538 = vunpack.c.l.b16 %v4339
    %v5539 = vunpack.c.h.b16 %v4339
    %v5540 = vunpack.c.l.b16 %v4340
    %v5541 = vunpack.c.h.b16 %v4340
    %v5542 = vunpack.c.l.b16 %v4341
    %v5543 = vunpack.c.h.b16 %v4341
    %v5544 = vunpack.c.l.b16 %v4342
    %v5545 = vunpack.c.h.b16 %v4342
    %v5546 = vunpack.c.l.b16 %v4343
    %v5547 = vunpack.c.h.b16 %v4343
    %v5548 = vunpack.c.l.b16 %v4344
    %v5549 = vunpack.c.h.b16 %v4344
    %v5550 = vunpack.c.l.b16 %v4345
    %v5551 = vunpack.c.h.b16 %v4345
    %v5552 = vunpack.c.l.b16 %v4346
    %v5553 = vunpack.c.h.b16 %v4346
    %v5554 = vunpack.c.l.b16 %v4347
    %v5555 = vunpack.c.h.b16 %v4347
    %v5556 = vunpack.c.l.b16 %v4348
    %v5557 = vunpack.c.h.b16 %v4348
    %v5558 = vunpack.c.l.b16 %v4349
    %v5559 = vunpack.c.h.b16 %v4349
    %v5560 = vunpack.c.l.b16 %v4350
    %v5561 = vunpack.c.h.b16 %v4350
    %v5562 = vunpack.c.l.b16 %v4351
    %v5563 = vunpack.c.h.b16 %v4351
    %v5564 = vunpack.c.l.b16 %v4352
    %v5565 = vunpack.c.h.b16 %v4352
    %v5566 = vunpack.c.l.b16 %v4353
    %v5567 = vunpack.c.h.b16 %v4353
    %v5568 = vunpack.c.l.b16 %v4354
    %v5569 = vunpack.c.h.b16 %v4354
    %v5570 = vunpack.c.l.b16 %v4355
    %v5571 = vunpack.c.h.b16 %v4355
    %v5572 = vunpack.c.l.b16 %v4356
    %v5573 = vunpack.c.h.b16 %v4356
    %v5574 = vunpack.c.l.b16 %v4357
    %v5575 = vunpack.c.h.b16 %v4357
    %v5576 = vunpack.c.l.b16 %v4358
    %v5577 = vunpack.c.h.b16 %v4358
    %v5578 = vunpack.c.l.b16 %v4359
    %v5579 = vunpack.c.h.b16 %v4359
    %v5580 = vunpack.c.l.b16 %v4360
    %v5581 = vunpack.c.h.b16 %v4360
    %v5582 = vunpack.c.l.b16 %v4361
    %v5583 = vunpack.c.h.b16 %v4361
    %v5584 = vunpack.c.l.b16 %v4362
    %v5585 = vunpack.c.h.b16 %v4362
    %v5586 = vunpack.c.l.b16 %v4363
    %v5587 = vunpack.c.h.b16 %v4363
    %v5588 = vunpack.c.l.b16 %v4364
    %v5589 = vunpack.c.h.b16 %v4364
    %v5590 = vunpack.c.l.b16 %v4365
    %v5591 = vunpack.c.h.b16 %v4365
    %v5592 = vunpack.c.l.b16 %v4366
    %v5593 = vunpack.c.h.b16 %v4366
    %v5594 = vunpack.c.l.b16 %v4367
    %v5595 = vunpack.c.h.b16 %v4367
    %v5596 = vunpack.c.l.b16 %v4368
    %v5597 = vunpack.c.h.b16 %v4368
    %v5598 = vunpack.c.l.b16 %v4369
    %v5599 = vunpack.c.h.b16 %v4369
    %v5600 = vunpack.c.l.b16 %v4370
    %v5601 = vunpack.c.h.b16 %v4370
    %v5602 = vunpack.c.l.b16 %v4371
    %v5603 = vunpack.c.h.b16 %v4371
    %v5604 = vunpack.c.l.b16 %v4372
    %v5605 = vunpack.c.h.b16 %v4372
    %v5606 = vunpack.c.l.b16 %v4373
    %v5607 = vunpack.c.h.b16 %v4373
    %v5608 = vunpack.c.l.b16 %v4374
    %v5609 = vunpack.c.h.b16 %v4374
    %v5610 = vunpack.c.l.b16 %v4375
    %v5611 = vunpack.c.h.b16 %v4375
    %v5612 = vunpack.c.l.b16 %v4376
    %v5613 = vunpack.c.h.b16 %v4376
    %v5614 = vunpack.c.l.b16 %v4377
    %v5615 = vunpack.c.h.b16 %v4377
    %v5616 = vunpack.c.l.b16 %v4378
    %v5617 = vunpack.c.h.b16 %v4378
    %v5618 = vunpack.c.l.b16 %v4379
    %v5619 = vunpack.c.h.b16 %v4379
    %v5620 = vunpack.c.l.b16 %v4380
    %v5621 = vunpack.c.h.b16 %v4380
    %v5622 = vunpack.c.l.b16 %v4381
    %v5623 = vunpack.c.h.b16 %v4381
    %v5624 = vunpack.c.l.b16 %v4382
    %v5625 = vunpack.c.h.b16 %v4382
    %v5626 = vunpack.c.l.b16 %v4383
    %v5627 = vunpack.c.h.b16 %v4383
    %v5628 = vunpack.c.l.b16 %v4384
    %v5629 = vunpack.c.h.b16 %v4384
    %v5630 = vunpack.c.l.b16 %v4385
    %v5631 = vunpack.c.h.b16 %v4385
    %v5632 = vunpack.c.l.b16 %v4386
    %v5633 = vunpack.c.h.b16 %v4386
    %v5634 = vunpack.c.l.b16 %v4387
    %v5635 = vunpack.c.h.b16 %v4387
    %v5636 = vunpack.c.l.b16 %v4388
    %v5637 = vunpack.c.h.b16 %v4388
    %v5638 = vunpack.c.l.b16 %v4389
    %v5639 = vunpack.c.h.b16 %v4389
    %v5640 = vunpack.c.l.b16 %v4390
    %v5641 = vunpack.c.h.b16 %v4390
    %v5642 = vunpack.c.l.b16 %v4391
    %v5643 = vunpack.c.h.b16 %v4391
    %v5644 = vunpack.c.l.b16 %v4392
    %v5645 = vunpack.c.h.b16 %v4392
    %v5646 = vunpack.c.l.b16 %v4393
    %v5647 = vunpack.c.h.b16 %v4393
    %v5648 = vunpack.c.l.b16 %v4394
    %v5649 = vunpack.c.h.b16 %v4394
    %v5650 = vunpack.c.l.b16 %v4395
    %v5651 = vunpack.c.h.b16 %v4395
    %v5652 = vunpack.c.l.b16 %v4396
    %v5653 = vunpack.c.h.b16 %v4396
    %v5654 = vunpack.c.l.b16 %v4397
    %v5655 = vunpack.c.h.b16 %v4397
    %v5656 = vunpack.c.l.b16 %v4398
    %v5657 = vunpack.c.h.b16 %v4398
    %v5658 = vunpack.c.l.b16 %v4399
    %v5659 = vunpack.c.h.b16 %v4399
    %v5660 = vunpack.c.l.b16 %v4400
    %v5661 = vunpack.c.h.b16 %v4400
    %v5662 = vunpack.c.l.b16 %v4401
    %v5663 = vunpack.c.h.b16 %v4401
    %v5664 = vunpack.c.l.b16 %v4402
    %v5665 = vunpack.c.h.b16 %v4402
    %v5666 = vunpack.c.l.b16 %v4403
    %v5667 = vunpack.c.h.b16 %v4403
    %v5668 = vunpack.c.l.b16 %v4404
    %v5669 = vunpack.c.h.b16 %v4404
    %v5670 = vunpack.c.l.b16 %v4405
    %v5671 = vunpack.c.h.b16 %v4405
    %v5672 = vunpack.c.l.b16 %v4406
    %v5673 = vunpack.c.h.b16 %v4406
    %v5674 = vunpack.c.l.b16 %v4407
    %v5675 = vunpack.c.h.b16 %v4407
    %v5676 = vunpack.c.l.b16 %v4408
    %v5677 = vunpack.c.h.b16 %v4408
    %v5678 = vunpack.c.l.b16 %v4409
    %v5679 = vunpack.c.h.b16 %v4409
    %v5680 = vunpack.c.l.b16 %v4410
    %v5681 = vunpack.c.h.b16 %v4410
    %v5682 = vunpack.c.l.b16 %v4411
    %v5683 = vunpack.c.h.b16 %v4411
    %v5684 = vunpack.c.l.b16 %v4412
    %v5685 = vunpack.c.h.b16 %v4412
    %v5686 = vunpack.c.l.b16 %v4413
    %v5687 = vunpack.c.h.b16 %v4413
    %v5688 = vunpack.c.l.b16 %v4414
    %v5689 = vunpack.c.h.b16 %v4414
    %v5690 = vunpack.c.l.b16 %v4415
    %v5691 = vunpack.c.h.b16 %v4415
    %v5692 = vunpack.c.l.b16 %v4416
    %v5693 = vunpack.c.h.b16 %v4416
    %v5694 = vunpack.c.l.b16 %v4417
    %v5695 = vunpack.c.h.b16 %v4417
    %v5696 = vunpack.c.l.b16 %v4418
    %v5697 = vunpack.c.h.b16 %v4418
    %v5698 = vunpack.c.l.b16 %v4419
    %v5699 = vunpack.c.h.b16 %v4419
    %v5700 = vunpack.c.l.b16 %v4420
    %v5701 = vunpack.c.h.b16 %v4420
    %v5702 = vunpack.c.l.b16 %v4421
    %v5703 = vunpack.c.h.b16 %v4421
    %v5704 = vunpack.c.l.b16 %v4422
    %v5705 = vunpack.c.h.b16 %v4422
    %v5706 = vunpack.c.l.b16 %v4423
    %v5707 = vunpack.c.h.b16 %v4423
    %v5708 = vunpack.c.l.b16 %v4424
    %v5709 = vunpack.c.h.b16 %v4424
    %v5710 = vunpack.c.l.b16 %v4425
    %v5711 = vunpack.c.h.b16 %v4425
    %v5712 = vunpack.c.l.b16 %v4426
    %v5713 = vunpack.c.h.b16 %v4426
    %v5714 = vunpack.c.l.b16 %v4427
    %v5715 = vunpack.c.h.b16 %v4427
    %v5716 = vunpack.c.l.b16 %v4428
    %v5717 = vunpack.c.h.b16 %v4428
    %v5718 = vunpack.c.l.b16 %v4429
    %v5719 = vunpack.c.h.b16 %v4429
    %v5720 = vunpack.c.l.b16 %v4430
    %v5721 = vunpack.c.h.b16 %v4430
    %v5722 = vunpack.c.l.b16 %v4431
    %v5723 = vunpack.c.h.b16 %v4431
    %v5724 = vunpack.c.l.b16 %v4432
    %v5725 = vunpack.c.h.b16 %v4432
    %v5726 = vunpack.c.l.b16 %v4433
    %v5727 = vunpack.c.h.b16 %v4433
    %v5728 = vunpack.c.l.b16 %v4434
    %v5729 = vunpack.c.h.b16 %v4434
    %v5730 = vunpack.c.l.b16 %v4435
    %v5731 = vunpack.c.h.b16 %v4435
    %v5732 = vunpack.c.l.b16 %v4436
    %v5733 = vunpack.c.h.b16 %v4436
    %v5734 = vunpack.c.l.b16 %v4437
    %v5735 = vunpack.c.h.b16 %v4437
    %v5736 = vunpack.c.l.b16 %v4438
    %v5737 = vunpack.c.h.b16 %v4438
    %v5738 = vunpack.c.l.b16 %v4439
    %v5739 = vunpack.c.h.b16 %v4439
    %v5740 = vunpack.c.l.b16 %v4440
    %v5741 = vunpack.c.h.b16 %v4440
    %v5742 = vunpack.c.l.b16 %v4441
    %v5743 = vunpack.c.h.b16 %v4441
    %v5744 = vunpack.c.l.b16 %v4442
    %v5745 = vunpack.c.h.b16 %v4442
    %v5746 = vunpack.c.l.b16 %v4443
    %v5747 = vunpack.c.h.b16 %v4443
    %v5748 = vunpack.c.l.b16 %v4444
    %v5749 = vunpack.c.h.b16 %v4444
    %v5750 = vunpack.c.l.b16 %v4445
    %v5751 = vunpack.c.h.b16 %v4445
    %v5752 = vunpack.c.l.b16 %v4446
    %v5753 = vunpack.c.h.b16 %v4446
    %v5754 = vunpack.c.l.b16 %v4447
    %v5755 = vunpack.c.h.b16 %v4447
    %v5756 = vunpack.c.l.b16 %v4448
    %v5757 = vunpack.c.h.b16 %v4448
    %v5758 = vunpack.c.l.b16 %v4449
    %v5759 = vunpack.c.h.b16 %v4449
    %v5760 = vunpack.c.l.b16 %v4450
    %v5761 = vunpack.c.h.b16 %v4450
    %v5762 = vunpack.c.l.b16 %v4451
    %v5763 = vunpack.c.h.b16 %v4451
    %v5764 = vunpack.c.l.b16 %v4452
    %v5765 = vunpack.c.h.b16 %v4452
    %v5766 = vunpack.c.l.b16 %v4453
    %v5767 = vunpack.c.h.b16 %v4453
    %v5768 = vunpack.c.l.b16 %v4454
    %v5769 = vunpack.c.h.b16 %v4454
    %v5770 = vunpack.c.l.b16 %v4455
    %v5771 = vunpack.c.h.b16 %v4455
    %v5772 = vunpack.c.l.b16 %v4456
    %v5773 = vunpack.c.h.b16 %v4456
    %v5774 = vunpack.c.l.b16 %v4457
    %v5775 = vunpack.c.h.b16 %v4457
    %v5776 = vunpack.c.l.b16 %v4458
    %v5777 = vunpack.c.h.b16 %v4458
    %v5778 = vunpack.c.l.b16 %v4459
    %v5779 = vunpack.c.h.b16 %v4459
    %v5780 = vunpack.c.l.b16 %v4460
    %v5781 = vunpack.c.h.b16 %v4460
    %v5782 = vunpack.c.l.b16 %v4461
    %v5783 = vunpack.c.h.b16 %v4461
    %v5784 = vunpack.c.l.b16 %v4462
    %v5785 = vunpack.c.h.b16 %v4462
    %v5786 = vunpack.c.l.b16 %v4463
    %v5787 = vunpack.c.h.b16 %v4463
    %v5788 = vunpack.c.l.b16 %v4464
    %v5789 = vunpack.c.h.b16 %v4464
    %v5790 = vunpack.c.l.b16 %v4465
    %v5791 = vunpack.c.h.b16 %v4465
    %v5792 = vunpack.c.l.b16 %v4466
    %v5793 = vunpack.c.h.b16 %v4466
    %v5794 = vunpack.c.l.b16 %v4467
    %v5795 = vunpack.c.h.b16 %v4467
    %v5796 = vunpack.c.l.b16 %v4468
    %v5797 = vunpack.c.h.b16 %v4468
    %v5798 = vunpack.c.l.b16 %v4469
    %v5799 = vunpack.c.h.b16 %v4469
    %v5800 = vunpack.c.l.b16 %v4470
    %v5801 = vunpack.c.h.b16 %v4470
    %v5802 = vunpack.c.l.b16 %v4471
    %v5803 = vunpack.c.h.b16 %v4471
    %v5804 = vunpack.c.l.b16 %v4472
    %v5805 = vunpack.c.h.b16 %v4472
    %v5806 = vunpack.c.l.b16 %v4473
    %v5807 = vunpack.c.h.b16 %v4473
    %v5808 = vunpack.c.l.b16 %v4474
    %v5809 = vunpack.c.h.b16 %v4474
    %v5810 = vunpack.c.l.b16 %v4475
    %v5811 = vunpack.c.h.b16 %v4475
    %v5812 = vunpack.c.l.b16 %v4476
    %v5813 = vunpack.c.h.b16 %v4476
    %v5814 = vunpack.c.l.b16 %v4477
    %v5815 = vunpack.c.h.b16 %v4477
    %v5816 = vunpack.c.l.b16 %v4478
    %v5817 = vunpack.c.h.b16 %v4478
    %v5818 = vunpack.c.l.b16 %v4479
    %v5819 = vunpack.c.h.b16 %v4479
    %v5820 = vunpack.c.l.b16 %v4480
    %v5821 = vunpack.c.h.b16 %v4480
    %v5822 = vunpack.c.l.b16 %v4481
    %v5823 = vunpack.c.h.b16 %v4481
    %v5824 = vunpack.c.l.b16 %v4482
    %v5825 = vunpack.c.h.b16 %v4482
    %v5826 = vunpack.c.l.b16 %v4483
    %v5827 = vunpack.c.h.b16 %v4483
    %v5828 = vunpack.c.l.b16 %v4484
    %v5829 = vunpack.c.h.b16 %v4484
    %v5830 = vunpack.c.l.b16 %v4485
    %v5831 = vunpack.c.h.b16 %v4485
    %v5832 = vunpack.c.l.b16 %v4486
    %v5833 = vunpack.c.h.b16 %v4486
    %v5834 = vunpack.c.l.b16 %v4487
    %v5835 = vunpack.c.h.b16 %v4487
    %v5836 = vunpack.c.l.b16 %v4488
    %v5837 = vunpack.c.h.b16 %v4488
    %v5838 = vunpack.c.l.b16 %v4489
    %v5839 = vunpack.c.h.b16 %v4489
    %v5840 = vunpack.c.l.b16 %v4490
    %v5841 = vunpack.c.h.b16 %v4490
    %v5842 = vunpack.c.l.b16 %v4491
    %v5843 = vunpack.c.h.b16 %v4491
    %v5844 = vunpack.c.l.b16 %v4492
    %v5845 = vunpack.c.h.b16 %v4492
    %v5846 = vunpack.c.l.b16 %v4493
    %v5847 = vunpack.c.h.b16 %v4493
    %v5848 = vunpack.c.l.b16 %v4494
    %v5849 = vunpack.c.h.b16 %v4494
    %v5850 = vunpack.c.l.b16 %v4495
    %v5851 = vunpack.c.h.b16 %v4495
    %v5852 = vunpack.c.l.b16 %v4496
    %v5853 = vunpack.c.h.b16 %v4496
    %v5854 = vunpack.c.l.b16 %v4497
    %v5855 = vunpack.c.h.b16 %v4497
    %v5856 = vunpack.c.l.b16 %v4498
    %v5857 = vunpack.c.h.b16 %v4498
    %v5858 = vunpack.c.l.b16 %v4499
    %v5859 = vunpack.c.h.b16 %v4499
    %v5860 = vunpack.c.l.b16 %v4500
    %v5861 = vunpack.c.h.b16 %v4500
    %v5862 = vunpack.c.l.b16 %v4501
    %v5863 = vunpack.c.h.b16 %v4501
    %v5864 = vunpack.c.l.b16 %v4502
    %v5865 = vunpack.c.h.b16 %v4502
    %v5866 = vunpack.c.l.b16 %v4503
    %v5867 = vunpack.c.h.b16 %v4503
    %v5868 = vunpack.c.l.b16 %v4504
    %v5869 = vunpack.c.h.b16 %v4504
    %v5870 = vunpack.c.l.b16 %v4505
    %v5871 = vunpack.c.h.b16 %v4505
    %v5872 = vunpack.c.l.b16 %v4506
    %v5873 = vunpack.c.h.b16 %v4506
    %v5874 = vunpack.c.l.b16 %v4507
    %v5875 = vunpack.c.h.b16 %v4507
    %v5876 = vunpack.c.l.b16 %v4508
    %v5877 = vunpack.c.h.b16 %v4508
    %v5878 = vunpack.c.l.b16 %v4509
    %v5879 = vunpack.c.h.b16 %v4509
    %v5880 = vunpack.c.l.b16 %v4510
    %v5881 = vunpack.c.h.b16 %v4510
    %v5882 = vunpack.c.l.b16 %v4511
    %v5883 = vunpack.c.h.b16 %v4511
    %v5884 = vunpack.c.l.b16 %v4512
    %v5885 = vunpack.c.h.b16 %v4512
    %v5886 = vunpack.c.l.b16 %v4513
    %v5887 = vunpack.c.h.b16 %v4513
    %v5888 = vunpack.c.l.b16 %v4514
    %v5889 = vunpack.c.h.b16 %v4514
    %v5890 = vunpack.c.l.b16 %v4515
    %v5891 = vunpack.c.h.b16 %v4515
    %v5892 = vunpack.c.l.b16 %v4516
    %v5893 = vunpack.c.h.b16 %v4516
    %v5894 = vunpack.c.l.b16 %v4517
    %v5895 = vunpack.c.h.b16 %v4517
    %v5896 = vunpack.c.l.b16 %v4518
    %v5897 = vunpack.c.h.b16 %v4518
    %v5898 = vunpack.c.l.b16 %v4519
    %v5899 = vunpack.c.h.b16 %v4519
    %v5900 = vunpack.c.l.b16 %v4520
    %v5901 = vunpack.c.h.b16 %v4520
    %v5902 = vunpack.c.l.b16 %v4521
    %v5903 = vunpack.c.h.b16 %v4521
    %v5904 = vunpack.c.l.b16 %v4522
    %v5905 = vunpack.c.h.b16 %v4522
    %v5906 = vunpack.c.l.b16 %v4523
    %v5907 = vunpack.c.h.b16 %v4523
    %v5908 = vunpack.c.l.b16 %v4524
    %v5909 = vunpack.c.h.b16 %v4524
    %v5910 = vunpack.c.l.b16 %v4525
    %v5911 = vunpack.c.h.b16 %v4525
    %v5912 = vunpack.c.l.b16 %v4526
    %v5913 = vunpack.c.h.b16 %v4526
    %v5914 = vunpack.c.l.b16 %v4527
    %v5915 = vunpack.c.h.b16 %v4527
    %v5916 = vunpack.c.l.b16 %v4528
    %v5917 = vunpack.c.h.b16 %v4528
    %v5918 = vunpack.c.l.b16 %v4529
    %v5919 = vunpack.c.h.b16 %v4529
    %v5920 = vunpack.c.l.b16 %v4530
    %v5921 = vunpack.c.h.b16 %v4530
    %v5922 = vunpack.c.l.b16 %v4531
    %v5923 = vunpack.c.h.b16 %v4531
    %v5924 = vunpack.c.l.b16 %v4532
    %v5925 = vunpack.c.h.b16 %v4532
    %v5926 = vunpack.c.l.b16 %v4533
    %v5927 = vunpack.c.h.b16 %v4533
    %v5928 = vunpack.c.l.b16 %v4534
    %v5929 = vunpack.c.h.b16 %v4534
    %v5930 = vunpack.c.l.b16 %v4535
    %v5931 = vunpack.c.h.b16 %v4535
    %v5932 = vunpack.c.l.b16 %v4536
    %v5933 = vunpack.c.h.b16 %v4536
    %v5934 = vunpack.c.l.b16 %v4537
    %v5935 = vunpack.c.h.b16 %v4537
    %v5936 = vunpack.c.l.b16 %v4538
    %v5937 = vunpack.c.h.b16 %v4538
    %v5938 = vunpack.c.l.b16 %v4539
    %v5939 = vunpack.c.h.b16 %v4539
    %v5940 = vunpack.c.l.b16 %v4540
    %v5941 = vunpack.c.h.b16 %v4540
    %v5942 = vunpack.c.l.b16 %v4541
    %v5943 = vunpack.c.h.b16 %v4541
    %v5944 = vunpack.c.l.b16 %v4542
    %v5945 = vunpack.c.h.b16 %v4542
    %v5946 = vunpack.c.l.b16 %v4543
    %v5947 = vunpack.c.h.b16 %v4543
    %v5948 = vunpack.c.l.b16 %v4544
    %v5949 = vunpack.c.h.b16 %v4544
    %v5950 = vunpack.c.l.b16 %v4545
    %v5951 = vunpack.c.h.b16 %v4545
    %v5952 = vunpack.c.l.b16 %v4546
    %v5953 = vunpack.c.h.b16 %v4546
    %v5954 = vunpack.c.l.b16 %v4547
    %v5955 = vunpack.c.h.b16 %v4547
    %v5956 = vunpack.c.l.b16 %v4548
    %v5957 = vunpack.c.h.b16 %v4548
    %v5958 = vunpack.c.l.b16 %v4549
    %v5959 = vunpack.c.h.b16 %v4549
    %v5960 = vunpack.c.l.b16 %v4550
    %v5961 = vunpack.c.h.b16 %v4550
    %v5962 = vunpack.c.l.b16 %v4551
    %v5963 = vunpack.c.h.b16 %v4551
    %v5964 = vunpack.c.l.b16 %v4552
    %v5965 = vunpack.c.h.b16 %v4552
    %v5966 = vunpack.c.l.b16 %v4553
    %v5967 = vunpack.c.h.b16 %v4553
    %v5968 = vunpack.c.l.b16 %v4554
    %v5969 = vunpack.c.h.b16 %v4554
    %v5970 = vunpack.c.l.b16 %v4555
    %v5971 = vunpack.c.h.b16 %v4555
    %v5972 = vunpack.c.l.b16 %v4556
    %v5973 = vunpack.c.h.b16 %v4556
    %v5974 = vunpack.c.l.b16 %v4557
    %v5975 = vunpack.c.h.b16 %v4557
    %v5976 = vunpack.c.l.b16 %v4558
    %v5977 = vunpack.c.h.b16 %v4558
    %v5978 = vunpack.c.l.b16 %v4559
    %v5979 = vunpack.c.h.b16 %v4559
    %v5980 = vunpack.c.l.b16 %v4560
    %v5981 = vunpack.c.h.b16 %v4560
    %v5982 = vunpack.c.l.b16 %v4561
    %v5983 = vunpack.c.h.b16 %v4561
    %v5984 = vunpack.c.l.b16 %v4562
    %v5985 = vunpack.c.h.b16 %v4562
    %v5986 = vunpack.c.l.b16 %v4563
    %v5987 = vunpack.c.h.b16 %v4563
    %v5988 = vunpack.c.l.b16 %v4564
    %v5989 = vunpack.c.h.b16 %v4564
    %v5990 = vunpack.c.l.b16 %v4565
    %v5991 = vunpack.c.h.b16 %v4565
    %v5992 = vunpack.c.l.b16 %v4566
    %v5993 = vunpack.c.h.b16 %v4566
    %v5994 = vunpack.c.l.b16 %v4567
    %v5995 = vunpack.c.h.b16 %v4567
    %v5996 = vunpack.c.l.b16 %v4568
    %v5997 = vunpack.c.h.b16 %v4568
    %v5998 = vunpack.c.l.b16 %v4569
    %v5999 = vunpack.c.h.b16 %v4569
    %v6000 = vunpack.c.l.b16 %v4570
    %v6001 = vunpack.c.h.b16 %v4570
    %v6002 = vunpack.c.l.b16 %v4571
    %v6003 = vunpack.c.h.b16 %v4571
    %v6004 = vunpack.c.l.b16 %v4572
    %v6005 = vunpack.c.h.b16 %v4572
    %v6006 = vunpack.c.l.b16 %v4573
    %v6007 = vunpack.c.h.b16 %v4573
    %v6008 = vunpack.c.l.b16 %v4574
    %v6009 = vunpack.c.h.b16 %v4574
    %v6010 = vunpack.c.l.b16 %v4575
    %v6011 = vunpack.c.h.b16 %v4575
    %v6012 = vunpack.c.l.b16 %v4576
    %v6013 = vunpack.c.h.b16 %v4576
    %v6014 = vunpack.c.l.b16 %v4577
    %v6015 = vunpack.c.h.b16 %v4577
    %v6016 = vunpack.c.l.b16 %v4578
    %v6017 = vunpack.c.h.b16 %v4578
    %v6018 = vunpack.c.l.b16 %v4579
    %v6019 = vunpack.c.h.b16 %v4579
    %v6020 = vunpack.c.l.b16 %v4580
    %v6021 = vunpack.c.h.b16 %v4580
    %v6022 = vunpack.c.l.b16 %v4581
    %v6023 = vunpack.c.h.b16 %v4581
    %v6024 = vunpack.c.l.b16 %v4582
    %v6025 = vunpack.c.h.b16 %v4582
    %v6026 = vunpack.c.l.b16 %v4583
    %v6027 = vunpack.c.h.b16 %v4583
    %v6028 = vunpack.c.l.b16 %v4584
    %v6029 = vunpack.c.h.b16 %v4584
    %v6030 = vunpack.c.l.b16 %v4585
    %v6031 = vunpack.c.h.b16 %v4585
    %v6032 = vunpack.c.l.b16 %v4586
    %v6033 = vunpack.c.h.b16 %v4586
    %v6034 = vunpack.c.l.b16 %v4587
    %v6035 = vunpack.c.h.b16 %v4587
    %v6036 = vunpack.c.l.b16 %v4588
    %v6037 = vunpack.c.h.b16 %v4588
    %v6038 = vunpack.c.l.b16 %v4589
    %v6039 = vunpack.c.h.b16 %v4589
    %v6040 = vunpack.c.l.b16 %v4590
    %v6041 = vunpack.c.h.b16 %v4590
    %v6042 = vunpack.c.l.b16 %v4591
    %v6043 = vunpack.c.h.b16 %v4591
    %v6044 = vunpack.c.l.b16 %v4592
    %v6045 = vunpack.c.h.b16 %v4592
    %v6046 = vunpack.c.l.b16 %v4593
    %v6047 = vunpack.c.h.b16 %v4593
    %v6048 = vunpack.c.l.b16 %v4594
    %v6049 = vunpack.c.h.b16 %v4594
    %v6050 = vunpack.c.l.b16 %v4595
    %v6051 = vunpack.c.h.b16 %v4595
    %v6052 = vunpack.c.l.b16 %v4596
    %v6053 = vunpack.c.h.b16 %v4596
    %v6054 = vunpack.c.l.b16 %v4597
    %v6055 = vunpack.c.h.b16 %v4597
    %v6056 = vunpack.c.l.b16 %v4598
    %v6057 = vunpack.c.h.b16 %v4598
    %v6058 = vunpack.c.l.b16 %v4599
    %v6059 = vunpack.c.h.b16 %v4599
    %v6060 = vunpack.c.l.b16 %v4600
    %v6061 = vunpack.c.h.b16 %v4600
    %v6062 = vunpack.c.l.b16 %v4601
    %v6063 = vunpack.c.h.b16 %v4601
    %v6064 = vunpack.c.l.b16 %v4602
    %v6065 = vunpack.c.h.b16 %v4602
    %v6066 = vunpack.c.l.b16 %v4603
    %v6067 = vunpack.c.h.b16 %v4603
    %v6068 = vunpack.c.l.b16 %v4604
    %v6069 = vunpack.c.h.b16 %v4604
    %v6070 = vunpack.c.l.b16 %v4605
    %v6071 = vunpack.c.h.b16 %v4605
    %v6072 = vunpack.c.l.b16 %v4606
    %v6073 = vunpack.c.h.b16 %v4606
    %v6074 = vunpack.c.l.b16 %v4607
    %v6075 = vunpack.c.h.b16 %v4607
    %v6076 = vunpack.c.l.b16 %v4608
    %v6077 = vunpack.c.h.b16 %v4608
    %v6078 = vunpack.c.l.b16 %v4609
    %v6079 = vunpack.c.h.b16 %v4609
    %v6080 = vunpack.c.l.b16 %v4610
    %v6081 = vunpack.c.h.b16 %v4610
    %v6082 = vunpack.c.l.b16 %v4611
    %v6083 = vunpack.c.h.b16 %v4611
    %v6084 = vunpack.c.l.b16 %v4612
    %v6085 = vunpack.c.h.b16 %v4612
    %v6086 = vunpack.c.l.b16 %v4613
    %v6087 = vunpack.c.h.b16 %v4613
    %v6088 = vunpack.c.l.b16 %v4614
    %v6089 = vunpack.c.h.b16 %v4614
    %v6090 = vunpack.c.l.b16 %v4615
    %v6091 = vunpack.c.h.b16 %v4615
    %v6092 = vunpack.c.l.b16 %v4616
    %v6093 = vunpack.c.h.b16 %v4616
    %v6094 = vunpack.c.l.b16 %v4617
    %v6095 = vunpack.c.h.b16 %v4617
    %v6096 = vunpack.c.l.b16 %v4618
    %v6097 = vunpack.c.h.b16 %v4618
    %v6098 = vunpack.c.l.b16 %v4619
    %v6099 = vunpack.c.h.b16 %v4619
    %v6100 = vunpack.c.l.b16 %v4620
    %v6101 = vunpack.c.h.b16 %v4620
    %v6102 = vunpack.c.l.b16 %v4621
    %v6103 = vunpack.c.h.b16 %v4621
    %v6104 = vunpack.c.l.b16 %v4622
    %v6105 = vunpack.c.h.b16 %v4622
    %v6106 = vunpack.c.l.b16 %v4623
    %v6107 = vunpack.c.h.b16 %v4623
    %v6108 = vunpack.c.l.b16 %v4624
    %v6109 = vunpack.c.h.b16 %v4624
    %v6110 = vunpack.c.l.b16 %v4625
    %v6111 = vunpack.c.h.b16 %v4625
    %v6112 = vunpack.c.l.b16 %v4626
    %v6113 = vunpack.c.h.b16 %v4626
    %v6114 = vunpack.c.l.b16 %v4627
    %v6115 = vunpack.c.h.b16 %v4627
    %v6116 = vunpack.c.l.b16 %v4628
    %v6117 = vunpack.c.h.b16 %v4628
    %v6118 = vunpack.c.l.b16 %v4629
    %v6119 = vunpack.c.h.b16 %v4629
    %v6120 = vunpack.c.l.b16 %v4630
    %v6121 = vunpack.c.h.b16 %v4630
    %v6122 = vunpack.c.l.b16 %v4631
    %v6123 = vunpack.c.h.b16 %v4631
    %v6124 = vunpack.c.l.b16 %v4632
    %v6125 = vunpack.c.h.b16 %v4632
    %v6126 = vunpack.c.l.b16 %v4633
    %v6127 = vunpack.c.h.b16 %v4633
    %v6128 = vunpack.c.l.b16 %v4634
    %v6129 = vunpack.c.h.b16 %v4634
    %v6130 = vunpack.c.l.b16 %v4635
    %v6131 = vunpack.c.h.b16 %v4635
    %v6132 = vunpack.c.l.b16 %v4636
    %v6133 = vunpack.c.h.b16 %v4636
    %v6134 = vunpack.c.l.b16 %v4637
    %v6135 = vunpack.c.h.b16 %v4637
    %v6136 = vunpack.c.l.b16 %v4638
    %v6137 = vunpack.c.h.b16 %v4638
    %v6138 = vunpack.c.l.b16 %v4639
    %v6139 = vunpack.c.h.b16 %v4639
    %v6140 = vunpack.c.l.b16 %v4640
    %v6141 = vunpack.c.h.b16 %v4640
    %v6142 = vunpack.c.l.b16 %v4641
    %v6143 = vunpack.c.h.b16 %v4641
    %v6144 = vunpack.c.l.b16 %v4642
    %v6145 = vunpack.c.h.b16 %v4642
    %v6146 = vunpack.c.l.b16 %v4643
    %v6147 = vunpack.c.h.b16 %v4643
    %v6148 = vunpack.c.l.b16 %v4644
    %v6149 = vunpack.c.h.b16 %v4644
    %v6150 = vunpack.c.l.b16 %v4645
    %v6151 = vunpack.c.h.b16 %v4645
    %v6152 = vunpack.c.l.b16 %v4646
    %v6153 = vunpack.c.h.b16 %v4646
    %v6154 = vunpack.c.l.b16 %v4647
    %v6155 = vunpack.c.h.b16 %v4647
    %v6156 = vunpack.c.l.b16 %v4648
    %v6157 = vunpack.c.h.b16 %v4648
    %v6158 = vunpack.c.l.b16 %v4649
    %v6159 = vunpack.c.h.b16 %v4649
    %v6160 = vunpack.c.l.b16 %v4650
    %v6161 = vunpack.c.h.b16 %v4650
    %v6162 = vunpack.c.l.b16 %v4651
    %v6163 = vunpack.c.h.b16 %v4651
    %v6164 = vunpack.c.l.b16 %v4652
    %v6165 = vunpack.c.h.b16 %v4652
    %v6166 = vunpack.c.l.b16 %v4653
    %v6167 = vunpack.c.h.b16 %v4653
    %v6168 = vunpack.c.l.b16 %v4654
    %v6169 = vunpack.c.h.b16 %v4654
    %v6170 = vunpack.c.l.b16 %v4655
    %v6171 = vunpack.c.h.b16 %v4655
    %v6172 = vunpack.c.l.b16 %v4656
    %v6173 = vunpack.c.h.b16 %v4656
    %v6174 = vunpack.c.l.b16 %v4657
    %v6175 = vunpack.c.h.b16 %v4657
    %v6176 = vunpack.c.l.b16 %v4658
    %v6177 = vunpack.c.h.b16 %v4658
    %v6178 = vunpack.c.l.b16 %v4659
    %v6179 = vunpack.c.h.b16 %v4659
    %v6180 = vunpack.c.l.b16 %v4660
    %v6181 = vunpack.c.h.b16 %v4660
    %v6182 = vunpack.c.l.b16 %v4661
    %v6183 = vunpack.c.h.b16 %v4661
    %v6184 = vunpack.c.l.b16 %v4662
    %v6185 = vunpack.c.h.b16 %v4662
    %v6186 = vunpack.c.l.b16 %v4663
    %v6187 = vunpack.c.h.b16 %v4663
    %v6188 = vunpack.c.l.b16 %v4664
    %v6189 = vunpack.c.h.b16 %v4664
    %v6190 = vunpack.c.l.b16 %v4665
    %v6191 = vunpack.c.h.b16 %v4665
    %v6192 = vunpack.c.l.b16 %v4666
    %v6193 = vunpack.c.h.b16 %v4666
    %v6194 = vunpack.c.l.b16 %v4667
    %v6195 = vunpack.c.h.b16 %v4667
    %v6196 = vunpack.c.l.b16 %v4668
    %v6197 = vunpack.c.h.b16 %v4668
    %v6198 = vunpack.c.l.b16 %v4669
    %v6199 = vunpack.c.h.b16 %v4669
    %v6200 = vunpack.c.l.b16 %v4670
    %v6201 = vunpack.c.h.b16 %v4670
    %v6202 = vunpack.c.l.b16 %v4671
    %v6203 = vunpack.c.h.b16 %v4671
    %v6204 = vunpack.c.l.b16 %v4672
    %v6205 = vunpack.c.h.b16 %v4672
    %v6206 = vunpack.c.l.b16 %v4673
    %v6207 = vunpack.c.h.b16 %v4673
    %v6208 = vunpack.c.l.b16 %v4674
    %v6209 = vunpack.c.h.b16 %v4674
    %v6210 = vunpack.c.l.b16 %v4675
    %v6211 = vunpack.c.h.b16 %v4675
    %v6212 = vunpack.c.l.b16 %v4676
    %v6213 = vunpack.c.h.b16 %v4676
    %v6214 = vunpack.c.l.b16 %v4677
    %v6215 = vunpack.c.h.b16 %v4677
    %v6216 = vunpack.c.l.b16 %v4678
    %v6217 = vunpack.c.h.b16 %v4678
    %v6218 = vunpack.c.l.b16 %v4679
    %v6219 = vunpack.c.h.b16 %v4679
    %v6220 = vunpack.c.l.b16 %v4680
    %v6221 = vunpack.c.h.b16 %v4680
    %v6222 = vunpack.c.l.b16 %v4681
    %v6223 = vunpack.c.h.b16 %v4681
    %v6224 = vunpack.c.l.b16 %v4682
    %v6225 = vunpack.c.h.b16 %v4682
    %v6226 = vunpack.c.l.b16 %v4683
    %v6227 = vunpack.c.h.b16 %v4683
    %v6228 = vunpack.c.l.b16 %v4684
    %v6229 = vunpack.c.h.b16 %v4684
    %v6230 = vunpack.c.l.b16 %v4685
    %v6231 = vunpack.c.h.b16 %v4685
    %v6232 = vunpack.c.l.b16 %v4686
    %v6233 = vunpack.c.h.b16 %v4686
    %v6234 = vunpack.c.l.b16 %v4687
    %v6235 = vunpack.c.h.b16 %v4687
    %v6236 = vunpack.c.l.b16 %v4688
    %v6237 = vunpack.c.h.b16 %v4688
    %v6238 = vunpack.c.l.b16 %v4689
    %v6239 = vunpack.c.h.b16 %v4689
    %v6240 = vunpack.c.l.b16 %v4690
    %v6241 = vunpack.c.h.b16 %v4690
    %v6242 = vunpack.c.l.b16 %v4691
    %v6243 = vunpack.c.h.b16 %v4691
    %v6244 = vunpack.c.l.b16 %v4692
    %v6245 = vunpack.c.h.b16 %v4692
    %v6246 = vunpack.c.l.b16 %v4693
    %v6247 = vunpack.c.h.b16 %v4693
    %v6248 = vunpack.c.l.b16 %v4694
    %v6249 = vunpack.c.h.b16 %v4694
    %v6250 = vunpack.c.l.b16 %v4695
    %v6251 = vunpack.c.h.b16 %v4695
    %v6252 = vunpack.c.l.b16 %v4696
    %v6253 = vunpack.c.h.b16 %v4696
    %v6254 = vunpack.c.l.b16 %v4697
    %v6255 = vunpack.c.h.b16 %v4697
    %v6256 = vunpack.c.l.b16 %v4698
    %v6257 = vunpack.c.h.b16 %v4698
    %v6258 = vunpack.c.l.b16 %v4699
    %v6259 = vunpack.c.h.b16 %v4699
    %v6260 = vunpack.c.l.b16 %v4700
    %v6261 = vunpack.c.h.b16 %v4700
    %v6262 = vunpack.c.l.b16 %v4701
    %v6263 = vunpack.c.h.b16 %v4701
    %v6264 = vunpack.c.l.b16 %v4702
    %v6265 = vunpack.c.h.b16 %v4702
    %v6266 = vunpack.c.l.b16 %v4703
    %v6267 = vunpack.c.h.b16 %v4703
    %v6268 = vunpack.c.l.b16 %v4704
    %v6269 = vunpack.c.h.b16 %v4704
    %v6270 = vunpack.c.l.b16 %v4705
    %v6271 = vunpack.c.h.b16 %v4705
    %v6272 = vunpack.c.l.b16 %v4706
    %v6273 = vunpack.c.h.b16 %v4706
    %v6274 = vunpack.c.l.b16 %v4707
    %v6275 = vunpack.c.h.b16 %v4707
    %v6276 = vunpack.c.l.b16 %v4708
    %v6277 = vunpack.c.h.b16 %v4708
    %v6278 = vunpack.c.l.b16 %v4709
    %v6279 = vunpack.c.h.b16 %v4709
    %v6280 = vunpack.c.l.b16 %v4710
    %v6281 = vunpack.c.h.b16 %v4710
    %v6282 = vunpack.c.l.b16 %v4711
    %v6283 = vunpack.c.h.b16 %v4711
    %v6284 = vunpack.c.l.b16 %v4712
    %v6285 = vunpack.c.h.b16 %v4712
    %v6286 = vunpack.c.l.b16 %v4713
    %v6287 = vunpack.c.h.b16 %v4713
    %v6288 = vunpack.c.l.b16 %v4714
    %v6289 = vunpack.c.h.b16 %v4714
    %v6290 = vunpack.c.l.b16 %v4715
    %v6291 = vunpack.c.h.b16 %v4715
    %v6292 = vunpack.c.l.b16 %v4716
    %v6293 = vunpack.c.h.b16 %v4716
    %v6294 = vunpack.c.l.b16 %v4717
    %v6295 = vunpack.c.h.b16 %v4717
    %v6296 = vunpack.c.l.b16 %v4718
    %v6297 = vunpack.c.h.b16 %v4718
    %v6298 = vunpack.c.l.b16 %v4719
    %v6299 = vunpack.c.h.b16 %v4719
    %v6300 = vunpack.c.l.b16 %v4720
    %v6301 = vunpack.c.h.b16 %v4720
    %v6302 = vunpack.c.l.b16 %v4721
    %v6303 = vunpack.c.h.b16 %v4721
    %v6304 = vunpack.c.l.b16 %v4722
    %v6305 = vunpack.c.h.b16 %v4722
    %v6306 = vunpack.c.l.b16 %v4723
    %v6307 = vunpack.c.h.b16 %v4723
    %v6308 = vunpack.c.l.b16 %v4724
    %v6309 = vunpack.c.h.b16 %v4724
    %v6310 = vunpack.c.l.b16 %v4725
    %v6311 = vunpack.c.h.b16 %v4725
    %v6312 = vunpack.c.l.b16 %v4726
    %v6313 = vunpack.c.h.b16 %v4726
    %v6314 = vunpack.c.l.b16 %v4727
    %v6315 = vunpack.c.h.b16 %v4727
    %v6316 = vunpack.c.l.b16 %v4728
    %v6317 = vunpack.c.h.b16 %v4728
    %v6318 = vunpack.c.l.b16 %v4729
    %v6319 = vunpack.c.h.b16 %v4729
    %v6320 = vunpack.c.l.b16 %v4730
    %v6321 = vunpack.c.h.b16 %v4730
    %v6322 = vunpack.c.l.b16 %v4731
    %v6323 = vunpack.c.h.b16 %v4731
    %v6324 = vunpack.c.l.b16 %v4732
    %v6325 = vunpack.c.h.b16 %v4732
    %v6326 = vunpack.c.l.b16 %v4733
    %v6327 = vunpack.c.h.b16 %v4733
    %v6328 = vunpack.c.l.b16 %v4734
    %v6329 = vunpack.c.h.b16 %v4734
    %v6330 = vunpack.c.l.b16 %v4735
    %v6331 = vunpack.c.h.b16 %v4735
    %v6332 = vunpack.c.l.b16 %v4736
    %v6333 = vunpack.c.h.b16 %v4736
    %v6334 = vunpack.c.l.b16 %v4737
    %v6335 = vunpack.c.h.b16 %v4737
    %v6336 = vunpack.c.l.b16 %v4738
    %v6337 = vunpack.c.h.b16 %v4738
    %v6338 = vunpack.c.l.b16 %v4739
    %v6339 = vunpack.c.h.b16 %v4739
    %v6340 = vunpack.c.l.b16 %v4740
    %v6341 = vunpack.c.h.b16 %v4740
    %v6342 = vunpack.c.l.b16 %v4741
    %v6343 = vunpack.c.h.b16 %v4741
    %v6344 = vunpack.c.l.b16 %v4742
    %v6345 = vunpack.c.h.b16 %v4742
    %v6346 = vunpack.c.l.b16 %v4743
    %v6347 = vunpack.c.h.b16 %v4743
    %v6348 = vunpack.c.l.b16 %v4744
    %v6349 = vunpack.c.h.b16 %v4744
    %v6350 = vunpack.c.l.b16 %v4745
    %v6351 = vunpack.c.h.b16 %v4745
    %v6352 = vunpack.c.l.b16 %v4746
    %v6353 = vunpack.c.h.b16 %v4746
    %v6354 = vunpack.c.l.b16 %v4747
    %v6355 = vunpack.c.h.b16 %v4747
    %v6356 = vunpack.c.l.b16 %v4748
    %v6357 = vunpack.c.h.b16 %v4748
    %v6358 = vunpack.c.l.b16 %v4749
    %v6359 = vunpack.c.h.b16 %v4749
    %v6360 = vunpack.c.l.b16 %v4750
    %v6361 = vunpack.c.h.b16 %v4750
    %v6362 = vunpack.c.l.b16 %v4751
    %v6363 = vunpack.c.h.b16 %v4751
    %v6364 = vunpack.c.l.b16 %v4752
    %v6365 = vunpack.c.h.b16 %v4752
    %v6366 = vunpack.c.l.b16 %v4753
    %v6367 = vunpack.c.h.b16 %v4753
    %v6368 = vunpack.c.l.b16 %v4754
    %v6369 = vunpack.c.h.b16 %v4754
    %v6370 = vunpack.c.l.b16 %v4755
    %v6371 = vunpack.c.h.b16 %v4755
    %v6372 = vpack.c.b16 %v5322, %v5316
    %v6373 = vpack.c.b16 %v5323, %v5317
    %v6374 = vpack.c.b16 %v5324, %v5318
    %v6375 = vpack.c.b16 %v5325, %v5319
    %v6376 = vpack.c.b16 %v5326, %v5320
    %v6377 = vpack.c.b16 %v5327, %v5321
    %v6378 = vpack.c.b16 %v5334, %v5328
    %v6379 = vpack.c.b16 %v5335, %v5329
    %v6380 = vpack.c.b16 %v5336, %v5330
    %v6381 = vpack.c.b16 %v5337, %v5331
    %v6382 = vpack.c.b16 %v5338, %v5332
    %v6383 = vpack.c.b16 %v5339, %v5333
    %v6384 = vpack.c.b16 %v5346, %v5340
    %v6385 = vpack.c.b16 %v5347, %v5341
    %v6386 = vpack.c.b16 %v5348, %v5342
    %v6387 = vpack.c.b16 %v5349, %v5343
    %v6388 = vpack.c.b16 %v5350, %v5344
    %v6389 = vpack.c.b16 %v5351, %v5345
    %v6390 = vpack.c.b16 %v5358, %v5352
    %v6391 = vpack.c.b16 %v5359, %v5353
    %v6392 = vpack.c.b16 %v5360, %v5354
    %v6393 = vpack.c.b16 %v5361, %v5355
    %v6394 = vpack.c.b16 %v5362, %v5356
    %v6395 = vpack.c.b16 %v5363, %v5357
    %v6396 = vpack.c.b16 %v5370, %v5364
    %v6397 = vpack.c.b16 %v5371, %v5365
    %v6398 = vpack.c.b16 %v5372, %v5366
    %v6399 = vpack.c.b16 %v5373, %v5367
    %v6400 = vpack.c.b16 %v5374, %v5368
    %v6401 = vpack.c.b16 %v5375, %v5369
    %v6402 = vpack.c.b16 %v5382, %v5376
    %v6403 = vpack.c.b16 %v5383, %v5377
    %v6404 = vpack.c.b16 %v5384, %v5378
    %v6405 = vpack.c.b16 %v5385, %v5379
    %v6406 = vpack.c.b16 %v5386, %v5380
    %v6407 = vpack.c.b16 %v5387, %v5381
    %v6408 = vpack.c.b16 %v5394, %v5388
    %v6409 = vpack.c.b16 %v5395, %v5389
    %v6410 = vpack.c.b16 %v5396, %v5390
    %v6411 = vpack.c.b16 %v5397, %v5391
    %v6412 = vpack.c.b16 %v5398, %v5392
    %v6413 = vpack.c.b16 %v5399, %v5393
    %v6414 = vpack.c.b16 %v5406, %v5400
    %v6415 = vpack.c.b16 %v5407, %v5401
    %v6416 = vpack.c.b16 %v5408, %v5402
    %v6417 = vpack.c.b16 %v5409, %v5403
    %v6418 = vpack.c.b16 %v5410, %v5404
    %v6419 = vpack.c.b16 %v5411, %v5405
    %v6420 = vpack.c.b16 %v5418, %v5412
    %v6421 = vpack.c.b16 %v5419, %v5413
    %v6422 = vpack.c.b16 %v5420, %v5414
    %v6423 = vpack.c.b16 %v5421, %v5415
    %v6424 = vpack.c.b16 %v5422, %v5416
    %v6425 = vpack.c.b16 %v5423, %v5417
    %v6426 = vpack.c.b16 %v5430, %v5424
    %v6427 = vpack.c.b16 %v5431, %v5425
    %v6428 = vpack.c.b16 %v5432, %v5426
    %v6429 = vpack.c.b16 %v5433, %v5427
    %v6430 = vpack.c.b16 %v5434, %v5428
    %v6431 = vpack.c.b16 %v5435, %v5429
    %v6432 = vpack.c.b16 %v5442, %v5436
    %v6433 = vpack.c.b16 %v5443, %v5437
    %v6434 = vpack.c.b16 %v5444, %v5438
    %v6435 = vpack.c.b16 %v5445, %v5439
    %v6436 = vpack.c.b16 %v5446, %v5440
    %v6437 = vpack.c.b16 %v5447, %v5441
    %v6438 = vpack.c.b16 %v5454, %v5448
    %v6439 = vpack.c.b16 %v5455, %v5449
    %v6440 = vpack.c.b16 %v5456, %v5450
    %v6441 = vpack.c.b16 %v5457, %v5451
    %v6442 = vpack.c.b16 %v5458, %v5452
    %v6443 = vpack.c.b16 %v5459, %v5453
    %v6444 = vpack.c.b16 %v5466, %v5460
    %v6445 = vpack.c.b16 %v5467, %v5461
    %v6446 = vpack.c.b16 %v5468, %v5462
    %v6447 = vpack.c.b16 %v5469, %v5463
    %v6448 = vpack.c.b16 %v5470, %v5464
    %v6449 = vpack.c.b16 %v5471, %v5465
    %v6450 = vpack.c.b16 %v5478, %v5472
    %v6451 = vpack.c.b16 %v5479, %v5473
    %v6452 = vpack.c.b16 %v5480, %v5474
    %v6453 = vpack.c.b16 %v5481, %v5475
    %v6454 = vpack.c.b16 %v5482, %v5476
    %v6455 = vpack.c.b16 %v5483, %v5477
    %v6456 = vpack.c.b16 %v5490, %v5484
    %v6457 = vpack.c.b16 %v5491, %v5485
    %v6458 = vpack.c.b16 %v5492, %v5486
    %v6459 = vpack.c.b16 %v5493, %v5487
    %v6460 = vpack.c.b16 %v5494, %v5488
    %v6461 = vpack.c.b16 %v5495, %v5489
    %v6462 = vpack.c.b16 %v5502, %v5496
    %v6463 = vpack.c.b16 %v5503, %v5497
    %v6464 = vpack.c.b16 %v5504, %v5498
    %v6465 = vpack.c.b16 %v5505, %v5499
    %v6466 = vpack.c.b16 %v5506, %v5500
    %v6467 = vpack.c.b16 %v5507, %v5501
    %v6468 = vpack.c.b16 %v5514, %v5508
    %v6469 = vpack.c.b16 %v5515, %v5509
    %v6470 = vpack.c.b16 %v5516, %v5510
    %v6471 = vpack.c.b16 %v5517, %v5511
    %v6472 = vpack.c.b16 %v5518, %v5512
    %v6473 = vpack.c.b16 %v5519, %v5513
    %v6474 = vpack.c.b16 %v5526, %v5520
    %v6475 = vpack.c.b16 %v5527, %v5521
    %v6476 = vpack.c.b16 %v5528, %v5522
    %v6477 = vpack.c.b16 %v5529, %v5523
    %v6478 = vpack.c.b16 %v5530, %v5524
    %v6479 = vpack.c.b16 %v5531, %v5525
    %v6480 = vpack.c.b16 %v5538, %v5532
    %v6481 = vpack.c.b16 %v5539, %v5533
    %v6482 = vpack.c.b16 %v5540, %v5534
    %v6483 = vpack.c.b16 %v5541, %v5535
    %v6484 = vpack.c.b16 %v5542, %v5536
    %v6485 = vpack.c.b16 %v5543, %v5537
    %v6486 = vpack.c.b16 %v5550, %v5544
    %v6487 = vpack.c.b16 %v5551, %v5545
    %v6488 = vpack.c.b16 %v5552, %v5546
    %v6489 = vpack.c.b16 %v5553, %v5547
    %v6490 = vpack.c.b16 %v5554, %v5548
    %v6491 = vpack.c.b16 %v5555, %v5549
    %v6492 = vpack.c.b16 %v5562, %v5556
    %v6493 = vpack.c.b16 %v5563, %v5557
    %v6494 = vpack.c.b16 %v5564, %v5558
    %v6495 = vpack.c.b16 %v5565, %v5559
    %v6496 = vpack.c.b16 %v5566, %v5560
    %v6497 = vpack.c.b16 %v5567, %v5561
    %v6498 = vpack.c.b16 %v5574, %v5568
    %v6499 = vpack.c.b16 %v5575, %v5569
    %v6500 = vpack.c.b16 %v5576, %v5570
    %v6501 = vpack.c.b16 %v5577, %v5571
    %v6502 = vpack.c.b16 %v5578, %v5572
    %v6503 = vpack.c.b16 %v5579, %v5573
    %v6504 = vpack.c.b16 %v5586, %v5580
    %v6505 = vpack.c.b16 %v5587, %v5581
    %v6506 = vpack.c.b16 %v5588, %v5582
    %v6507 = vpack.c.b16 %v5589, %v5583
    %v6508 = vpack.c.b16 %v5590, %v5584
    %v6509 = vpack.c.b16 %v5591, %v5585
    %v6510 = vpack.c.b16 %v5598, %v5592
    %v6511 = vpack.c.b16 %v5599, %v5593
    %v6512 = vpack.c.b16 %v5600, %v5594
    %v6513 = vpack.c.b16 %v5601, %v5595
    %v6514 = vpack.c.b16 %v5602, %v5596
    %v6515 = vpack.c.b16 %v5603, %v5597
    %v6516 = vpack.c.b16 %v5610, %v5604
    %v6517 = vpack.c.b16 %v5611, %v5605
    %v6518 = vpack.c.b16 %v5612, %v5606
    %v6519 = vpack.c.b16 %v5613, %v5607
    %v6520 = vpack.c.b16 %v5614, %v5608
    %v6521 = vpack.c.b16 %v5615, %v5609
    %v6522 = vpack.c.b16 %v5622, %v5616
    %v6523 = vpack.c.b16 %v5623, %v5617
    %v6524 = vpack.c.b16 %v5624, %v5618
    %v6525 = vpack.c.b16 %v5625, %v5619
    %v6526 = vpack.c.b16 %v5626, %v5620
    %v6527 = vpack.c.b16 %v5627, %v5621
    %v6528 = vpack.c.b16 %v5634, %v5628
    %v6529 = vpack.c.b16 %v5635, %v5629
    %v6530 = vpack.c.b16 %v5636, %v5630
    %v6531 = vpack.c.b16 %v5637, %v5631
    %v6532 = vpack.c.b16 %v5638, %v5632
    %v6533 = vpack.c.b16 %v5639, %v5633
    %v6534 = vpack.c.b16 %v5646, %v5640
    %v6535 = vpack.c.b16 %v5647, %v5641
    %v6536 = vpack.c.b16 %v5648, %v5642
    %v6537 = vpack.c.b16 %v5649, %v5643
    %v6538 = vpack.c.b16 %v5650, %v5644
    %v6539 = vpack.c.b16 %v5651, %v5645
    %v6540 = vpack.c.b16 %v5658, %v5652
    %v6541 = vpack.c.b16 %v5659, %v5653
    %v6542 = vpack.c.b16 %v5660, %v5654
    %v6543 = vpack.c.b16 %v5661, %v5655
    %v6544 = vpack.c.b16 %v5662, %v5656
    %v6545 = vpack.c.b16 %v5663, %v5657
    %v6546 = vpack.c.b16 %v5670, %v5664
    %v6547 = vpack.c.b16 %v5671, %v5665
    %v6548 = vpack.c.b16 %v5672, %v5666
    %v6549 = vpack.c.b16 %v5673, %v5667
    %v6550 = vpack.c.b16 %v5674, %v5668
    %v6551 = vpack.c.b16 %v5675, %v5669
    %v6552 = vpack.c.b16 %v5682, %v5676
    %v6553 = vpack.c.b16 %v5683, %v5677
    %v6554 = vpack.c.b16 %v5684, %v5678
    %v6555 = vpack.c.b16 %v5685, %v5679
    %v6556 = vpack.c.b16 %v5686, %v5680
    %v6557 = vpack.c.b16 %v5687, %v5681
    %v6558 = vpack.c.b16 %v5694, %v5688
    %v6559 = vpack.c.b16 %v5695, %v5689
    %v6560 = vpack.c.b16 %v5696, %v5690
    %v6561 = vpack.c.b16 %v5697, %v5691
    %v6562 = vpack.c.b16 %v5698, %v5692
    %v6563 = vpack.c.b16 %v5699, %v5693
    %v6564 = vpack.c.b16 %v5706, %v5700
    %v6565 = vpack.c.b16 %v5707, %v5701
    %v6566 = vpack.c.b16 %v5708, %v5702
    %v6567 = vpack.c.b16 %v5709, %v5703
    %v6568 = vpack.c.b16 %v5710, %v5704
    %v6569 = vpack.c.b16 %v5711, %v5705
    %v6570 = vpack.c.b16 %v5718, %v5712
    %v6571 = vpack.c.b16 %v5719, %v5713
    %v6572 = vpack.c.b16 %v5720, %v5714
    %v6573 = vpack.c.b16 %v5721, %v5715
    %v6574 = vpack.c.b16 %v5722, %v5716
    %v6575 = vpack.c.b16 %v5723, %v5717
    %v6576 = vpack.c.b16 %v5730, %v5724
    %v6577 = vpack.c.b16 %v5731, %v5725
    %v6578 = vpack.c.b16 %v5732, %v5726
    %v6579 = vpack.c.b16 %v5733, %v5727
    %v6580 = vpack.c.b16 %v5734, %v5728
    %v6581 = vpack.c.b16 %v5735, %v5729
    %v6582 = vpack.c.b16 %v5742, %v5736
    %v6583 = vpack.c.b16 %v5743, %v5737
    %v6584 = vpack.c.b16 %v5744, %v5738
    %v6585 = vpack.c.b16 %v5745, %v5739
    %v6586 = vpack.c.b16 %v5746, %v5740
    %v6587 = vpack.c.b16 %v5747, %v5741
    %v6588 = vpack.c.b16 %v5754, %v5748
    %v6589 = vpack.c.b16 %v5755, %v5749
    %v6590 = vpack.c.b16 %v5756, %v5750
    %v6591 = vpack.c.b16 %v5757, %v5751
    %v6592 = vpack.c.b16 %v5758, %v5752
    %v6593 = vpack.c.b16 %v5759, %v5753
    %v6594 = vpack.c.b16 %v5766, %v5760
    %v6595 = vpack.c.b16 %v5767, %v5761
    %v6596 = vpack.c.b16 %v5768, %v5762
    %v6597 = vpack.c.b16 %v5769, %v5763
    %v6598 = vpack.c.b16 %v5770, %v5764
    %v6599 = vpack.c.b16 %v5771, %v5765
    %v6600 = vpack.c.b16 %v5778, %v5772
    %v6601 = vpack.c.b16 %v5779, %v5773
    %v6602 = vpack.c.b16 %v5780, %v5774
    %v6603 = vpack.c.b16 %v5781, %v5775
    %v6604 = vpack.c.b16 %v5782, %v5776
    %v6605 = vpack.c.b16 %v5783, %v5777
    %v6606 = vpack.c.b16 %v5790, %v5784
    %v6607 = vpack.c.b16 %v5791, %v5785
    %v6608 = vpack.c.b16 %v5792, %v5786
    %v6609 = vpack.c.b16 %v5793, %v5787
    %v6610 = vpack.c.b16 %v5794, %v5788
    %v6611 = vpack.c.b16 %v5795, %v5789
    %v6612 = vpack.c.b16 %v5802, %v5796
    %v6613 = vpack.c.b16 %v5803, %v5797
    %v6614 = vpack.c.b16 %v5804, %v5798
    %v6615 = vpack.c.b16 %v5805, %v5799
    %v6616 = vpack.c.b16 %v5806, %v5800
    %v6617 = vpack.c.b16 %v5807, %v5801
    %v6618 = vpack.c.b16 %v5814, %v5808
    %v6619 = vpack.c.b16 %v5815, %v5809
    %v6620 = vpack.c.b16 %v5816, %v5810
    %v6621 = vpack.c.b16 %v5817, %v5811
    %v6622 = vpack.c.b16 %v5818, %v5812
    %v6623 = vpack.c.b16 %v5819, %v5813
    %v6624 = vpack.c.b16 %v5826, %v5820
    %v6625 = vpack.c.b16 %v5827, %v5821
    %v6626 = vpack.c.b16 %v5828, %v5822
    %v6627 = vpack.c.b16 %v5829, %v5823
    %v6628 = vpack.c.b16 %v5830, %v5824
    %v6629 = vpack.c.b16 %v5831, %v5825
    %v6630 = vpack.c.b16 %v5838, %v5832
    %v6631 = vpack.c.b16 %v5839, %v5833
    %v6632 = vpack.c.b16 %v5840, %v5834
    %v6633 = vpack.c.b16 %v5841, %v5835
    %v6634 = vpack.c.b16 %v5842, %v5836
    %v6635 = vpack.c.b16 %v5843, %v5837
    %v6636 = vpack.c.b16 %v5850, %v5844
    %v6637 = vpack.c.b16 %v5851, %v5845
    %v6638 = vpack.c.b16 %v5852, %v5846
    %v6639 = vpack.c.b16 %v5853, %v5847
    %v6640 = vpack.c.b16 %v5854, %v5848
    %v6641 = vpack.c.b16 %v5855, %v5849
    %v6642 = vpack.c.b16 %v5862, %v5856
    %v6643 = vpack.c.b16 %v5863, %v5857
    %v6644 = vpack.c.b16 %v5864, %v5858
    %v6645 = vpack.c.b16 %v5865, %v5859
    %v6646 = vpack.c.b16 %v5866, %v5860
    %v6647 = vpack.c.b16 %v5867, %v5861
    %v6648 = vpack.c.b16 %v5874, %v5868
    %v6649 = vpack.c.b16 %v5875, %v5869
    %v6650 = vpack.c.b16 %v5876, %v5870
    %v6651 = vpack.c.b16 %v5877, %v5871
    %v6652 = vpack.c.b16 %v5878, %v5872
    %v6653 = vpack.c.b16 %v5879, %v5873
    %v6654 = vpack.c.b16 %v5886, %v5880
    %v6655 = vpack.c.b16 %v5887, %v5881
    %v6656 = vpack.c.b16 %v5888, %v5882
    %v6657 = vpack.c.b16 %v5889, %v5883
    %v6658 = vpack.c.b16 %v5890, %v5884
    %v6659 = vpack.c.b16 %v5891, %v5885
    %v6660 = vpack.c.b16 %v5898, %v5892
    %v6661 = vpack.c.b16 %v5899, %v5893
    %v6662 = vpack.c.b16 %v5900, %v5894
    %v6663 = vpack.c.b16 %v5901, %v5895
    %v6664 = vpack.c.b16 %v5902, %v5896
    %v6665 = vpack.c.b16 %v5903, %v5897
    %v6666 = vpack.c.b16 %v5910, %v5904
    %v6667 = vpack.c.b16 %v5911, %v5905
    %v6668 = vpack.c.b16 %v5912, %v5906
    %v6669 = vpack.c.b16 %v5913, %v5907
    %v6670 = vpack.c.b16 %v5914, %v5908
    %v6671 = vpack.c.b16 %v5915, %v5909
    %v6672 = vpack.c.b16 %v5922, %v5916
    %v6673 = vpack.c.b16 %v5923, %v5917
    %v6674 = vpack.c.b16 %v5924, %v5918
    %v6675 = vpack.c.b16 %v5925, %v5919
    %v6676 = vpack.c.b16 %v5926, %v5920
    %v6677 = vpack.c.b16 %v5927, %v5921
    %v6678 = vpack.c.b16 %v5934, %v5928
    %v6679 = vpack.c.b16 %v5935, %v5929
    %v6680 = vpack.c.b16 %v5936, %v5930
    %v6681 = vpack.c.b16 %v5937, %v5931
    %v6682 = vpack.c.b16 %v5938, %v5932
    %v6683 = vpack.c.b16 %v5939, %v5933
    %v6684 = vpack.c.b16 %v5946, %v5940
    %v6685 = vpack.c.b16 %v5947, %v5941
    %v6686 = vpack.c.b16 %v5948, %v5942
    %v6687 = vpack.c.b16 %v5949, %v5943
    %v6688 = vpack.c.b16 %v5950, %v5944
    %v6689 = vpack.c.b16 %v5951, %v5945
    %v6690 = vpack.c.b16 %v5958, %v5952
    %v6691 = vpack.c.b16 %v5959, %v5953
    %v6692 = vpack.c.b16 %v5960, %v5954
    %v6693 = vpack.c.b16 %v5961, %v5955
    %v6694 = vpack.c.b16 %v5962, %v5956
    %v6695 = vpack.c.b16 %v5963, %v5957
    %v6696 = vpack.c.b16 %v5970, %v5964
    %v6697 = vpack.c.b16 %v5971, %v5965
    %v6698 = vpack.c.b16 %v5972, %v5966
    %v6699 = vpack.c.b16 %v5973, %v5967
    %v6700 = vpack.c.b16 %v5974, %v5968
    %v6701 = vpack.c.b16 %v5975, %v5969
    %v6702 = vpack.c.b16 %v5982, %v5976
    %v6703 = vpack.c.b16 %v5983, %v5977
    %v6704 = vpack.c.b16 %v5984, %v5978
    %v6705 = vpack.c.b16 %v5985, %v5979
    %v6706 = vpack.c.b16 %v5986, %v5980
    %v6707 = vpack.c.b16 %v5987, %v5981
    %v6708 = vpack.c.b16 %v5994, %v5988
    %v6709 = vpack.c.b16 %v5995, %v5989
    %v6710 = vpack.c.b16 %v5996, %v5990
    %v6711 = vpack.c.b16 %v5997, %v5991
    %v6712 = vpack.c.b16 %v5998, %v5992
    %v6713 = vpack.c.b16 %v5999, %v5993
    %v6714 = vpack.c.b16 %v6006, %v6000
    %v6715 = vpack.c.b16 %v6007, %v6001
    %v6716 = vpack.c.b16 %v6008, %v6002
    %v6717 = vpack.c.b16 %v6009, %v6003
    %v6718 = vpack.c.b16 %v6010, %v6004
    %v6719 = vpack.c.b16 %v6011, %v6005
    %v6720 = vpack.c.b16 %v6018, %v6012
    %v6721 = vpack.c.b16 %v6019, %v6013
    %v6722 = vpack.c.b16 %v6020, %v6014
    %v6723 = vpack.c.b16 %v6021, %v6015
    %v6724 = vpack.c.b16 %v6022, %v6016
    %v6725 = vpack.c.b16 %v6023, %v6017
    %v6726 = vpack.c.b16 %v6030, %v6024
    %v6727 = vpack.c.b16 %v6031, %v6025
    %v6728 = vpack.c.b16 %v6032, %v6026
    %v6729 = vpack.c.b16 %v6033, %v6027
    %v6730 = vpack.c.b16 %v6034, %v6028
    %v6731 = vpack.c.b16 %v6035, %v6029
    %v6732 = vpack.c.b16 %v6042, %v6036
    %v6733 = vpack.c.b16 %v6043, %v6037
    %v6734 = vpack.c.b16 %v6044, %v6038
    %v6735 = vpack.c.b16 %v6045, %v6039
    %v6736 = vpack.c.b16 %v6046, %v6040
    %v6737 = vpack.c.b16 %v6047, %v6041
    %v6738 = vpack.c.b16 %v6054, %v6048
    %v6739 = vpack.c.b16 %v6055, %v6049
    %v6740 = vpack.c.b16 %v6056, %v6050
    %v6741 = vpack.c.b16 %v6057, %v6051
    %v6742 = vpack.c.b16 %v6058, %v6052
    %v6743 = vpack.c.b16 %v6059, %v6053
    %v6744 = vpack.c.b16 %v6066, %v6060
    %v6745 = vpack.c.b16 %v6067, %v6061
    %v6746 = vpack.c.b16 %v6068, %v6062
    %v6747 = vpack.c.b16 %v6069, %v6063
    %v6748 = vpack.c.b16 %v6070, %v6064
    %v6749 = vpack.c.b16 %v6071, %v6065
    %v6750 = vpack.c.b16 %v6078, %v6072
    %v6751 = vpack.c.b16 %v6079, %v6073
    %v6752 = vpack.c.b16 %v6080, %v6074
    %v6753 = vpack.c.b16 %v6081, %v6075
    %v6754 = vpack.c.b16 %v6082, %v6076
    %v6755 = vpack.c.b16 %v6083, %v6077
    %v6756 = vpack.c.b16 %v6090, %v6084
    %v6757 = vpack.c.b16 %v6091, %v6085
    %v6758 = vpack.c.b16 %v6092, %v6086
    %v6759 = vpack.c.b16 %v6093, %v6087
    %v6760 = vpack.c.b16 %v6094, %v6088
    %v6761 = vpack.c.b16 %v6095, %v6089
    %v6762 = vpack.c.b16 %v6102, %v6096
    %v6763 = vpack.c.b16 %v6103, %v6097
    %v6764 = vpack.c.b16 %v6104, %v6098
    %v6765 = vpack.c.b16 %v6105, %v6099
    %v6766 = vpack.c.b16 %v6106, %v6100
    %v6767 = vpack.c.b16 %v6107, %v6101
    %v6768 = vpack.c.b16 %v6114, %v6108
    %v6769 = vpack.c.b16 %v6115, %v6109
    %v6770 = vpack.c.b16 %v6116, %v6110
    %v6771 = vpack.c.b16 %v6117, %v6111
    %v6772 = vpack.c.b16 %v6118, %v6112
    %v6773 = vpack.c.b16 %v6119, %v6113
    %v6774 = vpack.c.b16 %v6126, %v6120
    %v6775 = vpack.c.b16 %v6127, %v6121
    %v6776 = vpack.c.b16 %v6128, %v6122
    %v6777 = vpack.c.b16 %v6129, %v6123
    %v6778 = vpack.c.b16 %v6130, %v6124
    %v6779 = vpack.c.b16 %v6131, %v6125
    %v6780 = vpack.c.b16 %v6138, %v6132
    %v6781 = vpack.c.b16 %v6139, %v6133
    %v6782 = vpack.c.b16 %v6140, %v6134
    %v6783 = vpack.c.b16 %v6141, %v6135
    %v6784 = vpack.c.b16 %v6142, %v6136
    %v6785 = vpack.c.b16 %v6143, %v6137
    %v6786 = vpack.c.b16 %v6150, %v6144
    %v6787 = vpack.c.b16 %v6151, %v6145
    %v6788 = vpack.c.b16 %v6152, %v6146
    %v6789 = vpack.c.b16 %v6153, %v6147
    %v6790 = vpack.c.b16 %v6154, %v6148
    %v6791 = vpack.c.b16 %v6155, %v6149
    %v6792 = vpack.c.b16 %v6162, %v6156
    %v6793 = vpack.c.b16 %v6163, %v6157
    %v6794 = vpack.c.b16 %v6164, %v6158
    %v6795 = vpack.c.b16 %v6165, %v6159
    %v6796 = vpack.c.b16 %v6166, %v6160
    %v6797 = vpack.c.b16 %v6167, %v6161
    %v6798 = vpack.c.b16 %v6174, %v6168
    %v6799 = vpack.c.b16 %v6175, %v6169
    %v6800 = vpack.c.b16 %v6176, %v6170
    %v6801 = vpack.c.b16 %v6177, %v6171
    %v6802 = vpack.c.b16 %v6178, %v6172
    %v6803 = vpack.c.b16 %v6179, %v6173
    %v6804 = vpack.c.b16 %v6186, %v6180
    %v6805 = vpack.c.b16 %v6187, %v6181
    %v6806 = vpack.c.b16 %v6188, %v6182
    %v6807 = vpack.c.b16 %v6189, %v6183
    %v6808 = vpack.c.b16 %v6190, %v6184
    %v6809 = vpack.c.b16 %v6191, %v6185
    %v6810 = vpack.c.b16 %v6198, %v6192
    %v6811 = vpack.c.b16 %v6199, %v6193
    %v6812 = vpack.c.b16 %v6200, %v6194
    %v6813 = vpack.c.b16 %v6201, %v6195
    %v6814 = vpack.c.b16 %v6202, %v6196
    %v6815 = vpack.c.b16 %v6203, %v6197
    %v6816 = vpack.c.b16 %v6210, %v6204
    %v6817 = vpack.c.b16 %v6211, %v6205
    %v6818 = vpack.c.b16 %v6212, %v6206
    %v6819 = vpack.c.b16 %v6213, %v6207
    %v6820 = vpack.c.b16 %v6214, %v6208
    %v6821 = vpack.c.b16 %v6215, %v6209
    %v6822 = vpack.c.b16 %v6222, %v6216
    %v6823 = vpack.c.b16 %v6223, %v6217
    %v6824 = vpack.c.b16 %v6224, %v6218
    %v6825 = vpack.c.b16 %v6225, %v6219
    %v6826 = vpack.c.b16 %v6226, %v6220
    %v6827 = vpack.c.b16 %v6227, %v6221
    %v6828 = vpack.c.b16 %v6234, %v6228
    %v6829 = vpack.c.b16 %v6235, %v6229
    %v6830 = vpack.c.b16 %v6236, %v6230
    %v6831 = vpack.c.b16 %v6237, %v6231
    %v6832 = vpack.c.b16 %v6238, %v6232
    %v6833 = vpack.c.b16 %v6239, %v6233
    %v6834 = vpack.c.b16 %v6246, %v6240
    %v6835 = vpack.c.b16 %v6247, %v6241
    %v6836 = vpack.c.b16 %v6248, %v6242
    %v6837 = vpack.c.b16 %v6249, %v6243
    %v6838 = vpack.c.b16 %v6250, %v6244
    %v6839 = vpack.c.b16 %v6251, %v6245
    %v6840 = vpack.c.b16 %v6258, %v6252
    %v6841 = vpack.c.b16 %v6259, %v6253
    %v6842 = vpack.c.b16 %v6260, %v6254
    %v6843 = vpack.c.b16 %v6261, %v6255
    %v6844 = vpack.c.b16 %v6262, %v6256
    %v6845 = vpack.c.b16 %v6263, %v6257
    %v6846 = vpack.c.b16 %v6270, %v6264
    %v6847 = vpack.c.b16 %v6271, %v6265
    %v6848 = vpack.c.b16 %v6272, %v6266
    %v6849 = vpack.c.b16 %v6273, %v6267
    %v6850 = vpack.c.b16 %v6274, %v6268
    %v6851 = vpack.c.b16 %v6275, %v6269
    %v6852 = vpack.c.b16 %v6282, %v6276
    %v6853 = vpack.c.b16 %v6283, %v6277
    %v6854 = vpack.c.b16 %v6284, %v6278
    %v6855 = vpack.c.b16 %v6285, %v6279
    %v6856 = vpack.c.b16 %v6286, %v6280
    %v6857 = vpack.c.b16 %v6287, %v6281
    %v6858 = vpack.c.b16 %v6294, %v6288
    %v6859 = vpack.c.b16 %v6295, %v6289
    %v6860 = vpack.c.b16 %v6296, %v6290
    %v6861 = vpack.c.b16 %v6297, %v6291
    %v6862 = vpack.c.b16 %v6298, %v6292
    %v6863 = vpack.c.b16 %v6299, %v6293
    %v6864 = vpack.c.b16 %v6306, %v6300
    %v6865 = vpack.c.b16 %v6307, %v6301
    %v6866 = vpack.c.b16 %v6308, %v6302
    %v6867 = vpack.c.b16 %v6309, %v6303
    %v6868 = vpack.c.b16 %v6310, %v6304
    %v6869 = vpack.c.b16 %v6311, %v6305
    %v6870 = vpack.c.b16 %v6318, %v6312
    %v6871 = vpack.c.b16 %v6319, %v6313
    %v6872 = vpack.c.b16 %v6320, %v6314
    %v6873 = vpack.c.b16 %v6321, %v6315
    %v6874 = vpack.c.b16 %v6322, %v6316
    %v6875 = vpack.c.b16 %v6323, %v6317
    %v6876 = vpack.c.b16 %v6330, %v6324
    %v6877 = vpack.c.b16 %v6331, %v6325
    %v6878 = vpack.c.b16 %v6332, %v6326
    %v6879 = vpack.c.b16 %v6333, %v6327
    %v6880 = vpack.c.b16 %v6334, %v6328
    %v6881 = vpack.c.b16 %v6335, %v6329
    %v6882 = vpack.c.b16 %v6342, %v6336
    %v6883 = vpack.c.b16 %v6343, %v6337
    %v6884 = vpack.c.b16 %v6344, %v6338
    %v6885 = vpack.c.b16 %v6345, %v6339
    %v6886 = vpack.c.b16 %v6346, %v6340
    %v6887 = vpack.c.b16 %v6347, %v6341
    %v6888 = vpack.c.b16 %v6354, %v6348
    %v6889 = vpack.c.b16 %v6355, %v6349
    %v6890 = vpack.c.b16 %v6356, %v6350
    %v6891 = vpack.c.b16 %v6357, %v6351
    %v6892 = vpack.c.b16 %v6358, %v6352
    %v6893 = vpack.c.b16 %v6359, %v6353
    %v6894 = vpack.c.b16 %v6366, %v6360
    %v6895 = vpack.c.b16 %v6367, %v6361
    %v6896 = vpack.c.b16 %v6368, %v6362
    %v6897 = vpack.c.b16 %v6369, %v6363
    %v6898 = vpack.c.b16 %v6370, %v6364
    %v6899 = vpack.c.b16 %v6371, %v6365
    %7428 = vmatprep.subr.bf16.mxu0 %v6415
    %7429 = vmatpush1.bf16.msra.mxu0 %v6414
    %7430 = vmatprep.subr.bf16.mxu0 %v6409
    %7431 = vmatpush1.bf16.msra.mxu0 %v6408
    %7432 = vmatprep.subr.bf16.mxu0 %v6403
    %7433 = vmatpush1.bf16.msra.mxu0 %v6402
    %7434 = vmatprep.subr.bf16.mxu0 %v6397
    %7435 = vmatpush1.bf16.msra.mxu0 %v6396
    %7436 = vmatprep.subr.bf16.mxu0 %v6391
    %7437 = vmatpush1.bf16.msra.mxu0 %v6390
    %7438 = vmatprep.subr.bf16.mxu0 %v6385
    %7439 = vmatpush1.bf16.msra.mxu0 %v6384
    %7440 = vmatprep.subr.bf16.mxu0 %v6379
    %7441 = vmatpush1.bf16.msra.mxu0 %v6378
    %7442 = vmatprep.subr.bf16.mxu0 %v6373
    %7443 = vmatpush1.bf16.msra.mxu0 %v6372
    %7444 = vmatprep.subr.bf16.mxu0 %v6463
    %7445 = vmatpush2.bf16.msra.mxu0 %v6462
    %7446 = vmatprep.subr.bf16.mxu0 %v6457
    %7447 = vmatpush2.bf16.msra.mxu0 %v6456
    %7448 = vmatprep.subr.bf16.mxu0 %v6451
    %7449 = vmatpush2.bf16.msra.mxu0 %v6450
    %7450 = vmatprep.subr.bf16.mxu0 %v6445
    %7451 = vmatpush2.bf16.msra.mxu0 %v6444
    %7452 = vmatprep.subr.bf16.mxu0 %v6439
    %7453 = vmatpush2.bf16.msra.mxu0 %v6438
    %7454 = vmatprep.subr.bf16.mxu0 %v6433
    %7455 = vmatpush2.bf16.msra.mxu0 %v6432
    %7456 = vmatprep.subr.bf16.mxu0 %v6427
    %7457 = vmatpush2.bf16.msra.mxu0 %v6426
    %7458 = vmatprep.subr.bf16.mxu0 %v6421
    %7459 = vmatpush2.bf16.msra.mxu0 %v6420
    %7460 = vmatprep.mubr.bf16.mxu0 %v4218
    %7461 = vmatmul.mubr.bf16.gmra.mxu0 %v4217
    %v7462 = vpop.f32.mrf.mxu0
    %v7463 = vadd.f32 %v4761, %v7462
    %v7464 = vpop.f32.mrf.mxu0
    %v7465 = vadd.f32 %v4765, %v7464
    %v7466 = vpop.f32.mrf.mxu0
    %v7467 = vadd.f32 %v4761, %v7466
    %v7468 = vpop.f32.mrf.mxu0
    %v7469 = vadd.f32 %v4765, %v7468
    %7470 = vdwg.mxu0
    %7471 = vmatprep.subr.bf16.mxu0 %v6511
    %7472 = vmatpush1.bf16.msra.mxu0 %v6510
    %7473 = vmatprep.subr.bf16.mxu0 %v6505
    %7474 = vmatpush1.bf16.msra.mxu0 %v6504
    %7475 = vmatprep.subr.bf16.mxu0 %v6499
    %7476 = vmatpush1.bf16.msra.mxu0 %v6498
    %7477 = vmatprep.subr.bf16.mxu0 %v6493
    %7478 = vmatpush1.bf16.msra.mxu0 %v6492
    %7479 = vmatprep.subr.bf16.mxu0 %v6487
    %7480 = vmatpush1.bf16.msra.mxu0 %v6486
    %7481 = vmatprep.subr.bf16.mxu0 %v6481
    %7482 = vmatpush1.bf16.msra.mxu0 %v6480
    %7483 = vmatprep.subr.bf16.mxu0 %v6475
    %7484 = vmatpush1.bf16.msra.mxu0 %v6474
    %7485 = vmatprep.subr.bf16.mxu0 %v6469
    %7486 = vmatpush1.bf16.msra.mxu0 %v6468
    %7487 = vmatprep.subr.bf16.mxu0 %v6559
    %7488 = vmatpush2.bf16.msra.mxu0 %v6558
    %7489 = vmatprep.subr.bf16.mxu0 %v6553
    %7490 = vmatpush2.bf16.msra.mxu0 %v6552
    %7491 = vmatprep.subr.bf16.mxu0 %v6547
    %7492 = vmatpush2.bf16.msra.mxu0 %v6546
    %7493 = vmatprep.subr.bf16.mxu0 %v6541
    %7494 = vmatpush2.bf16.msra.mxu0 %v6540
    %7495 = vmatprep.subr.bf16.mxu0 %v6535
    %7496 = vmatpush2.bf16.msra.mxu0 %v6534
    %7497 = vmatprep.subr.bf16.mxu0 %v6529
    %7498 = vmatpush2.bf16.msra.mxu0 %v6528
    %7499 = vmatprep.subr.bf16.mxu0 %v6523
    %7500 = vmatpush2.bf16.msra.mxu0 %v6522
    %7501 = vmatprep.subr.bf16.mxu0 %v6517
    %7502 = vmatpush2.bf16.msra.mxu0 %v6516
    %7503 = vmatprep.mubr.bf16.mxu0 %v4220
    %7504 = vmatmul.mubr.bf16.gmra.mxu0 %v4219
    %v7505 = vpop.f32.mrf.mxu0
    %v7506 = vadd.f32 %v7463, %v7505
    %v7507 = vpop.f32.mrf.mxu0
    %v7508 = vadd.f32 %v7465, %v7507
    %v7509 = vpop.f32.mrf.mxu0
    %v7510 = vadd.f32 %v7467, %v7509
    %v7511 = vpop.f32.mrf.mxu0
    %v7512 = vadd.f32 %v7469, %v7511
    %7513 = vdwg.mxu0
    %7514 = vmatprep.subr.bf16.mxu0 %v6607
    %7515 = vmatpush1.bf16.msra.mxu0 %v6606
    %7516 = vmatprep.subr.bf16.mxu0 %v6601
    %7517 = vmatpush1.bf16.msra.mxu0 %v6600
    %7518 = vmatprep.subr.bf16.mxu0 %v6595
    %7519 = vmatpush1.bf16.msra.mxu0 %v6594
    %7520 = vmatprep.subr.bf16.mxu0 %v6589
    %7521 = vmatpush1.bf16.msra.mxu0 %v6588
    %7522 = vmatprep.subr.bf16.mxu0 %v6583
    %7523 = vmatpush1.bf16.msra.mxu0 %v6582
    %7524 = vmatprep.subr.bf16.mxu0 %v6577
    %7525 = vmatpush1.bf16.msra.mxu0 %v6576
    %7526 = vmatprep.subr.bf16.mxu0 %v6571
    %7527 = vmatpush1.bf16.msra.mxu0 %v6570
    %7528 = vmatprep.subr.bf16.mxu0 %v6565
    %7529 = vmatpush1.bf16.msra.mxu0 %v6564
    %7530 = vmatprep.subr.bf16.mxu0 %v6655
    %7531 = vmatpush2.bf16.msra.mxu0 %v6654
    %7532 = vmatprep.subr.bf16.mxu0 %v6649
    %7533 = vmatpush2.bf16.msra.mxu0 %v6648
    %7534 = vmatprep.subr.bf16.mxu0 %v6643
    %7535 = vmatpush2.bf16.msra.mxu0 %v6642
    %7536 = vmatprep.subr.bf16.mxu0 %v6637
    %7537 = vmatpush2.bf16.msra.mxu0 %v6636
    %7538 = vmatprep.subr.bf16.mxu0 %v6631
    %7539 = vmatpush2.bf16.msra.mxu0 %v6630
    %7540 = vmatprep.subr.bf16.mxu0 %v6625
    %7541 = vmatpush2.bf16.msra.mxu0 %v6624
    %7542 = vmatprep.subr.bf16.mxu0 %v6619
    %7543 = vmatpush2.bf16.msra.mxu0 %v6618
    %7544 = vmatprep.subr.bf16.mxu0 %v6613
    %7545 = vmatpush2.bf16.msra.mxu0 %v6612
    %7546 = vmatprep.mubr.bf16.mxu0 %v4222
    %7547 = vmatmul.mubr.bf16.gmra.mxu0 %v4221
    %v7548 = vpop.f32.mrf.mxu0
    %v7549 = vadd.f32 %v7506, %v7548
    %v7550 = vpop.f32.mrf.mxu0
    %v7551 = vadd.f32 %v7508, %v7550
    %v7552 = vpop.f32.mrf.mxu0
    %v7553 = vadd.f32 %v7510, %v7552
    %v7554 = vpop.f32.mrf.mxu0
    %v7555 = vadd.f32 %v7512, %v7554
    %7556 = vdwg.mxu0
    %7557 = vmatprep.subr.bf16.mxu0 %v6703
    %7558 = vmatpush1.bf16.msra.mxu0 %v6702
    %7559 = vmatprep.subr.bf16.mxu0 %v6697
    %7560 = vmatpush1.bf16.msra.mxu0 %v6696
    %7561 = vmatprep.subr.bf16.mxu0 %v6691
    %7562 = vmatpush1.bf16.msra.mxu0 %v6690
    %7563 = vmatprep.subr.bf16.mxu0 %v6685
    %7564 = vmatpush1.bf16.msra.mxu0 %v6684
    %7565 = vmatprep.subr.bf16.mxu0 %v6679
    %7566 = vmatpush1.bf16.msra.mxu0 %v6678
    %7567 = vmatprep.subr.bf16.mxu0 %v6673
    %7568 = vmatpush1.bf16.msra.mxu0 %v6672
    %7569 = vmatprep.subr.bf16.mxu0 %v6667
    %7570 = vmatpush1.bf16.msra.mxu0 %v6666
    %7571 = vmatprep.subr.bf16.mxu0 %v6661
    %7572 = vmatpush1.bf16.msra.mxu0 %v6660
    %7573 = vmatprep.subr.bf16.mxu0 %v6751
    %7574 = vmatpush2.bf16.msra.mxu0 %v6750
    %7575 = vmatprep.subr.bf16.mxu0 %v6745
    %7576 = vmatpush2.bf16.msra.mxu0 %v6744
    %7577 = vmatprep.subr.bf16.mxu0 %v6739
    %7578 = vmatpush2.bf16.msra.mxu0 %v6738
    %7579 = vmatprep.subr.bf16.mxu0 %v6733
    %7580 = vmatpush2.bf16.msra.mxu0 %v6732
    %7581 = vmatprep.subr.bf16.mxu0 %v6727
    %7582 = vmatpush2.bf16.msra.mxu0 %v6726
    %7583 = vmatprep.subr.bf16.mxu0 %v6721
    %7584 = vmatpush2.bf16.msra.mxu0 %v6720
    %7585 = vmatprep.subr.bf16.mxu0 %v6715
    %7586 = vmatpush2.bf16.msra.mxu0 %v6714
    %7587 = vmatprep.subr.bf16.mxu0 %v6709
    %7588 = vmatpush2.bf16.msra.mxu0 %v6708
    %7589 = vmatprep.mubr.bf16.mxu0 %v4224
    %7590 = vmatmul.mubr.bf16.gmra.mxu0 %v4223
    %v7591 = vpop.f32.mrf.mxu0
    %v7592 = vadd.f32 %v7549, %v7591
    %v7593 = vpop.f32.mrf.mxu0
    %v7594 = vadd.f32 %v7551, %v7593
    %v7595 = vpop.f32.mrf.mxu0
    %v7596 = vadd.f32 %v7553, %v7595
    %v7597 = vpop.f32.mrf.mxu0
    %v7598 = vadd.f32 %v7555, %v7597
    %7599 = vdwg.mxu0
    %7600 = vmatprep.subr.bf16.mxu0 %v6799
    %7601 = vmatpush1.bf16.msra.mxu0 %v6798
    %7602 = vmatprep.subr.bf16.mxu0 %v6793
    %7603 = vmatpush1.bf16.msra.mxu0 %v6792
    %7604 = vmatprep.subr.bf16.mxu0 %v6787
    %7605 = vmatpush1.bf16.msra.mxu0 %v6786
    %7606 = vmatprep.subr.bf16.mxu0 %v6781
    %7607 = vmatpush1.bf16.msra.mxu0 %v6780
    %7608 = vmatprep.subr.bf16.mxu0 %v6775
    %7609 = vmatpush1.bf16.msra.mxu0 %v6774
    %7610 = vmatprep.subr.bf16.mxu0 %v6769
    %7611 = vmatpush1.bf16.msra.mxu0 %v6768
    %7612 = vmatprep.subr.bf16.mxu0 %v6763
    %7613 = vmatpush1.bf16.msra.mxu0 %v6762
    %7614 = vmatprep.subr.bf16.mxu0 %v6757
    %7615 = vmatpush1.bf16.msra.mxu0 %v6756
    %7616 = vmatprep.subr.bf16.mxu0 %v6847
    %7617 = vmatpush2.bf16.msra.mxu0 %v6846
    %7618 = vmatprep.subr.bf16.mxu0 %v6841
    %7619 = vmatpush2.bf16.msra.mxu0 %v6840
    %7620 = vmatprep.subr.bf16.mxu0 %v6835
    %7621 = vmatpush2.bf16.msra.mxu0 %v6834
    %7622 = vmatprep.subr.bf16.mxu0 %v6829
    %7623 = vmatpush2.bf16.msra.mxu0 %v6828
    %7624 = vmatprep.subr.bf16.mxu0 %v6823
    %7625 = vmatpush2.bf16.msra.mxu0 %v6822
    %7626 = vmatprep.subr.bf16.mxu0 %v6817
    %7627 = vmatpush2.bf16.msra.mxu0 %v6816
    %7628 = vmatprep.subr.bf16.mxu0 %v6811
    %7629 = vmatpush2.bf16.msra.mxu0 %v6810
    %7630 = vmatprep.subr.bf16.mxu0 %v6805
    %7631 = vmatpush2.bf16.msra.mxu0 %v6804
    %7632 = vmatprep.mubr.bf16.mxu0 %v4226
    %7633 = vmatmul.mubr.bf16.gmra.mxu0 %v4225
    %v7634 = vpop.f32.mrf.mxu0
    %v7635 = vadd.f32 %v7592, %v7634
    %v7636 = vpop.f32.mrf.mxu0
    %v7637 = vadd.f32 %v7594, %v7636
    %v7638 = vpop.f32.mrf.mxu0
    %v7639 = vadd.f32 %v7596, %v7638
    %v7640 = vpop.f32.mrf.mxu0
    %v7641 = vadd.f32 %v7598, %v7640
    %7642 = vdwg.mxu0
    %7643 = vmatprep.subr.bf16.mxu0 %v6895
    %7644 = vmatpush1.bf16.msra.mxu0 %v6894
    %7645 = vmatprep.subr.bf16.mxu0 %v6889
    %7646 = vmatpush1.bf16.msra.mxu0 %v6888
    %7647 = vmatprep.subr.bf16.mxu0 %v6883
    %7648 = vmatpush1.bf16.msra.mxu0 %v6882
    %7649 = vmatprep.subr.bf16.mxu0 %v6877
    %7650 = vmatpush1.bf16.msra.mxu0 %v6876
    %7651 = vmatprep.subr.bf16.mxu0 %v6871
    %7652 = vmatpush1.bf16.msra.mxu0 %v6870
    %7653 = vmatprep.subr.bf16.mxu0 %v6865
    %7654 = vmatpush1.bf16.msra.mxu0 %v6864
    %7655 = vmatprep.subr.bf16.mxu0 %v6859
    %7656 = vmatpush1.bf16.msra.mxu0 %v6858
    %7657 = vmatprep.subr.bf16.mxu0 %v6853
    %7658 = vmatpush1.bf16.msra.mxu0 %v6852
    %7659 = vmatprep.subr.bf16.mxu0 0
    %7660 = vmatpush2.bf16.msra.mxu0 0
    %7661 = vmatprep.subr.bf16.mxu0 0
    %7662 = vmatpush2.bf16.msra.mxu0 0
    %7663 = vmatprep.subr.bf16.mxu0 0
    %7664 = vmatpush2.bf16.msra.mxu0 0
    %7665 = vmatprep.subr.bf16.mxu0 0
    %7666 = vmatpush2.bf16.msra.mxu0 0
    %7667 = vmatprep.subr.bf16.mxu0 0
    %7668 = vmatpush2.bf16.msra.mxu0 0
    %7669 = vmatprep.subr.bf16.mxu0 0
    %7670 = vmatpush2.bf16.msra.mxu0 0
    %7671 = vmatprep.subr.bf16.mxu0 0
    %7672 = vmatpush2.bf16.msra.mxu0 0
    %7673 = vmatprep.subr.bf16.mxu0 0
    %7674 = vmatpush2.bf16.msra.mxu0 0
    %7675 = vmatprep.mubr.bf16.mxu0 0
    %7676 = vmatmul.mubr.bf16.gmra.mxu0 %v4227
    %v7677 = vpop.f32.mrf.mxu0
    %v7678 = vadd.f32 %v7635, %v7677
    %v7679 = vpop.f32.mrf.mxu0
    %v7680 = vadd.f32 %v7637, %v7679
    %v7681 = vpop.f32.mrf.mxu0
    %v7682 = vadd.f32 %v7639, %v7681
    %v7683 = vpop.f32.mrf.mxu0
    %v7684 = vadd.f32 %v7641, %v7683
    %7685 = vdwg.mxu0
    %7686 = vmatprep.subr.bf16.mxu0 %v6417
    %7687 = vmatpush1.bf16.msra.mxu0 %v6416
    %7688 = vmatprep.subr.bf16.mxu0 %v6411
    %7689 = vmatpush1.bf16.msra.mxu0 %v6410
    %7690 = vmatprep.subr.bf16.mxu0 %v6405
    %7691 = vmatpush1.bf16.msra.mxu0 %v6404
    %7692 = vmatprep.subr.bf16.mxu0 %v6399
    %7693 = vmatpush1.bf16.msra.mxu0 %v6398
    %7694 = vmatprep.subr.bf16.mxu0 %v6393
    %7695 = vmatpush1.bf16.msra.mxu0 %v6392
    %7696 = vmatprep.subr.bf16.mxu0 %v6387
    %7697 = vmatpush1.bf16.msra.mxu0 %v6386
    %7698 = vmatprep.subr.bf16.mxu0 %v6381
    %7699 = vmatpush1.bf16.msra.mxu0 %v6380
    %7700 = vmatprep.subr.bf16.mxu0 %v6375
    %7701 = vmatpush1.bf16.msra.mxu0 %v6374
    %7702 = vmatprep.subr.bf16.mxu0 %v6465
    %7703 = vmatpush2.bf16.msra.mxu0 %v6464
    %7704 = vmatprep.subr.bf16.mxu0 %v6459
    %7705 = vmatpush2.bf16.msra.mxu0 %v6458
    %7706 = vmatprep.subr.bf16.mxu0 %v6453
    %7707 = vmatpush2.bf16.msra.mxu0 %v6452
    %7708 = vmatprep.subr.bf16.mxu0 %v6447
    %7709 = vmatpush2.bf16.msra.mxu0 %v6446
    %7710 = vmatprep.subr.bf16.mxu0 %v6441
    %7711 = vmatpush2.bf16.msra.mxu0 %v6440
    %7712 = vmatprep.subr.bf16.mxu0 %v6435
    %7713 = vmatpush2.bf16.msra.mxu0 %v6434
    %7714 = vmatprep.subr.bf16.mxu0 %v6429
    %7715 = vmatpush2.bf16.msra.mxu0 %v6428
    %7716 = vmatprep.subr.bf16.mxu0 %v6423
    %7717 = vmatpush2.bf16.msra.mxu0 %v6422
    %7718 = vmatprep.mubr.bf16.mxu0 %v4218
    %7719 = vmatmul.mubr.bf16.gmra.mxu0 %v4217
    %v7720 = vpop.f32.mrf.mxu0
    %v7721 = vadd.f32 %v4769, %v7720
    %v7722 = vpop.f32.mrf.mxu0
    %v7723 = vadd.f32 %v4773, %v7722
    %v7724 = vpop.f32.mrf.mxu0
    %v7725 = vadd.f32 %v4769, %v7724
    %v7726 = vpop.f32.mrf.mxu0
    %v7727 = vadd.f32 %v4773, %v7726
    %7728 = vdwg.mxu0
    %7729 = vmatprep.subr.bf16.mxu0 %v6513
    %7730 = vmatpush1.bf16.msra.mxu0 %v6512
    %7731 = vmatprep.subr.bf16.mxu0 %v6507
    %7732 = vmatpush1.bf16.msra.mxu0 %v6506
    %7733 = vmatprep.subr.bf16.mxu0 %v6501
    %7734 = vmatpush1.bf16.msra.mxu0 %v6500
    %7735 = vmatprep.subr.bf16.mxu0 %v6495
    %7736 = vmatpush1.bf16.msra.mxu0 %v6494
    %7737 = vmatprep.subr.bf16.mxu0 %v6489
    %7738 = vmatpush1.bf16.msra.mxu0 %v6488
    %7739 = vmatprep.subr.bf16.mxu0 %v6483
    %7740 = vmatpush1.bf16.msra.mxu0 %v6482
    %7741 = vmatprep.subr.bf16.mxu0 %v6477
    %7742 = vmatpush1.bf16.msra.mxu0 %v6476
    %7743 = vmatprep.subr.bf16.mxu0 %v6471
    %7744 = vmatpush1.bf16.msra.mxu0 %v6470
    %7745 = vmatprep.subr.bf16.mxu0 %v6561
    %7746 = vmatpush2.bf16.msra.mxu0 %v6560
    %7747 = vmatprep.subr.bf16.mxu0 %v6555
    %7748 = vmatpush2.bf16.msra.mxu0 %v6554
    %7749 = vmatprep.subr.bf16.mxu0 %v6549
    %7750 = vmatpush2.bf16.msra.mxu0 %v6548
    %7751 = vmatprep.subr.bf16.mxu0 %v6543
    %7752 = vmatpush2.bf16.msra.mxu0 %v6542
    %7753 = vmatprep.subr.bf16.mxu0 %v6537
    %7754 = vmatpush2.bf16.msra.mxu0 %v6536
    %7755 = vmatprep.subr.bf16.mxu0 %v6531
    %7756 = vmatpush2.bf16.msra.mxu0 %v6530
    %7757 = vmatprep.subr.bf16.mxu0 %v6525
    %7758 = vmatpush2.bf16.msra.mxu0 %v6524
    %7759 = vmatprep.subr.bf16.mxu0 %v6519
    %7760 = vmatpush2.bf16.msra.mxu0 %v6518
    %7761 = vmatprep.mubr.bf16.mxu0 %v4220
    %7762 = vmatmul.mubr.bf16.gmra.mxu0 %v4219
    %v7763 = vpop.f32.mrf.mxu0
    %v7764 = vadd.f32 %v7721, %v7763
    %v7765 = vpop.f32.mrf.mxu0
    %v7766 = vadd.f32 %v7723, %v7765
    %v7767 = vpop.f32.mrf.mxu0
    %v7768 = vadd.f32 %v7725, %v7767
    %v7769 = vpop.f32.mrf.mxu0
    %v7770 = vadd.f32 %v7727, %v7769
    %7771 = vdwg.mxu0
    %7772 = vmatprep.subr.bf16.mxu0 %v6609
    %7773 = vmatpush1.bf16.msra.mxu0 %v6608
    %7774 = vmatprep.subr.bf16.mxu0 %v6603
    %7775 = vmatpush1.bf16.msra.mxu0 %v6602
    %7776 = vmatprep.subr.bf16.mxu0 %v6597
    %7777 = vmatpush1.bf16.msra.mxu0 %v6596
    %7778 = vmatprep.subr.bf16.mxu0 %v6591
    %7779 = vmatpush1.bf16.msra.mxu0 %v6590
    %7780 = vmatprep.subr.bf16.mxu0 %v6585
    %7781 = vmatpush1.bf16.msra.mxu0 %v6584
    %7782 = vmatprep.subr.bf16.mxu0 %v6579
    %7783 = vmatpush1.bf16.msra.mxu0 %v6578
    %7784 = vmatprep.subr.bf16.mxu0 %v6573
    %7785 = vmatpush1.bf16.msra.mxu0 %v6572
    %7786 = vmatprep.subr.bf16.mxu0 %v6567
    %7787 = vmatpush1.bf16.msra.mxu0 %v6566
    %7788 = vmatprep.subr.bf16.mxu0 %v6657
    %7789 = vmatpush2.bf16.msra.mxu0 %v6656
    %7790 = vmatprep.subr.bf16.mxu0 %v6651
    %7791 = vmatpush2.bf16.msra.mxu0 %v6650
    %7792 = vmatprep.subr.bf16.mxu0 %v6645
    %7793 = vmatpush2.bf16.msra.mxu0 %v6644
    %7794 = vmatprep.subr.bf16.mxu0 %v6639
    %7795 = vmatpush2.bf16.msra.mxu0 %v6638
    %7796 = vmatprep.subr.bf16.mxu0 %v6633
    %7797 = vmatpush2.bf16.msra.mxu0 %v6632
    %7798 = vmatprep.subr.bf16.mxu0 %v6627
    %7799 = vmatpush2.bf16.msra.mxu0 %v6626
    %7800 = vmatprep.subr.bf16.mxu0 %v6621
    %7801 = vmatpush2.bf16.msra.mxu0 %v6620
    %7802 = vmatprep.subr.bf16.mxu0 %v6615
    %7803 = vmatpush2.bf16.msra.mxu0 %v6614
    %7804 = vmatprep.mubr.bf16.mxu0 %v4222
    %7805 = vmatmul.mubr.bf16.gmra.mxu0 %v4221
    %v7806 = vpop.f32.mrf.mxu0
    %v7807 = vadd.f32 %v7764, %v7806
    %v7808 = vpop.f32.mrf.mxu0
    %v7809 = vadd.f32 %v7766, %v7808
    %v7810 = vpop.f32.mrf.mxu0
    %v7811 = vadd.f32 %v7768, %v7810
    %v7812 = vpop.f32.mrf.mxu0
    %v7813 = vadd.f32 %v7770, %v7812
    %7814 = vdwg.mxu0
    %7815 = vmatprep.subr.bf16.mxu0 %v6705
    %7816 = vmatpush1.bf16.msra.mxu0 %v6704
    %7817 = vmatprep.subr.bf16.mxu0 %v6699
    %7818 = vmatpush1.bf16.msra.mxu0 %v6698
    %7819 = vmatprep.subr.bf16.mxu0 %v6693
    %7820 = vmatpush1.bf16.msra.mxu0 %v6692
    %7821 = vmatprep.subr.bf16.mxu0 %v6687
    %7822 = vmatpush1.bf16.msra.mxu0 %v6686
    %7823 = vmatprep.subr.bf16.mxu0 %v6681
    %7824 = vmatpush1.bf16.msra.mxu0 %v6680
    %7825 = vmatprep.subr.bf16.mxu0 %v6675
    %7826 = vmatpush1.bf16.msra.mxu0 %v6674
    %7827 = vmatprep.subr.bf16.mxu0 %v6669
    %7828 = vmatpush1.bf16.msra.mxu0 %v6668
    %7829 = vmatprep.subr.bf16.mxu0 %v6663
    %7830 = vmatpush1.bf16.msra.mxu0 %v6662
    %7831 = vmatprep.subr.bf16.mxu0 %v6753
    %7832 = vmatpush2.bf16.msra.mxu0 %v6752
    %7833 = vmatprep.subr.bf16.mxu0 %v6747
    %7834 = vmatpush2.bf16.msra.mxu0 %v6746
    %7835 = vmatprep.subr.bf16.mxu0 %v6741
    %7836 = vmatpush2.bf16.msra.mxu0 %v6740
    %7837 = vmatprep.subr.bf16.mxu0 %v6735
    %7838 = vmatpush2.bf16.msra.mxu0 %v6734
    %7839 = vmatprep.subr.bf16.mxu0 %v6729
    %7840 = vmatpush2.bf16.msra.mxu0 %v6728
    %7841 = vmatprep.subr.bf16.mxu0 %v6723
    %7842 = vmatpush2.bf16.msra.mxu0 %v6722
    %7843 = vmatprep.subr.bf16.mxu0 %v6717
    %7844 = vmatpush2.bf16.msra.mxu0 %v6716
    %7845 = vmatprep.subr.bf16.mxu0 %v6711
    %7846 = vmatpush2.bf16.msra.mxu0 %v6710
    %7847 = vmatprep.mubr.bf16.mxu0 %v4224
    %7848 = vmatmul.mubr.bf16.gmra.mxu0 %v4223
    %v7849 = vpop.f32.mrf.mxu0
    %v7850 = vadd.f32 %v7807, %v7849
    %v7851 = vpop.f32.mrf.mxu0
    %v7852 = vadd.f32 %v7809, %v7851
    %v7853 = vpop.f32.mrf.mxu0
    %v7854 = vadd.f32 %v7811, %v7853
    %v7855 = vpop.f32.mrf.mxu0
    %v7856 = vadd.f32 %v7813, %v7855
    %7857 = vdwg.mxu0
    %7858 = vmatprep.subr.bf16.mxu0 %v6801
    %7859 = vmatpush1.bf16.msra.mxu0 %v6800
    %7860 = vmatprep.subr.bf16.mxu0 %v6795
    %7861 = vmatpush1.bf16.msra.mxu0 %v6794
    %7862 = vmatprep.subr.bf16.mxu0 %v6789
    %7863 = vmatpush1.bf16.msra.mxu0 %v6788
    %7864 = vmatprep.subr.bf16.mxu0 %v6783
    %7865 = vmatpush1.bf16.msra.mxu0 %v6782
    %7866 = vmatprep.subr.bf16.mxu0 %v6777
    %7867 = vmatpush1.bf16.msra.mxu0 %v6776
    %7868 = vmatprep.subr.bf16.mxu0 %v6771
    %7869 = vmatpush1.bf16.msra.mxu0 %v6770
    %7870 = vmatprep.subr.bf16.mxu0 %v6765
    %7871 = vmatpush1.bf16.msra.mxu0 %v6764
    %7872 = vmatprep.subr.bf16.mxu0 %v6759
    %7873 = vmatpush1.bf16.msra.mxu0 %v6758
    %7874 = vmatprep.subr.bf16.mxu0 %v6849
    %7875 = vmatpush2.bf16.msra.mxu0 %v6848
    %7876 = vmatprep.subr.bf16.mxu0 %v6843
    %7877 = vmatpush2.bf16.msra.mxu0 %v6842
    %7878 = vmatprep.subr.bf16.mxu0 %v6837
    %7879 = vmatpush2.bf16.msra.mxu0 %v6836
    %7880 = vmatprep.subr.bf16.mxu0 %v6831
    %7881 = vmatpush2.bf16.msra.mxu0 %v6830
    %7882 = vmatprep.subr.bf16.mxu0 %v6825
    %7883 = vmatpush2.bf16.msra.mxu0 %v6824
    %7884 = vmatprep.subr.bf16.mxu0 %v6819
    %7885 = vmatpush2.bf16.msra.mxu0 %v6818
    %7886 = vmatprep.subr.bf16.mxu0 %v6813
    %7887 = vmatpush2.bf16.msra.mxu0 %v6812
    %7888 = vmatprep.subr.bf16.mxu0 %v6807
    %7889 = vmatpush2.bf16.msra.mxu0 %v6806
    %7890 = vmatprep.mubr.bf16.mxu0 %v4226
    %7891 = vmatmul.mubr.bf16.gmra.mxu0 %v4225
    %v7892 = vpop.f32.mrf.mxu0
    %v7893 = vadd.f32 %v7850, %v7892
    %v7894 = vpop.f32.mrf.mxu0
    %v7895 = vadd.f32 %v7852, %v7894
    %v7896 = vpop.f32.mrf.mxu0
    %v7897 = vadd.f32 %v7854, %v7896
    %v7898 = vpop.f32.mrf.mxu0
    %v7899 = vadd.f32 %v7856, %v7898
    %7900 = vdwg.mxu0
    %7901 = vmatprep.subr.bf16.mxu0 %v6897
    %7902 = vmatpush1.bf16.msra.mxu0 %v6896
    %7903 = vmatprep.subr.bf16.mxu0 %v6891
    %7904 = vmatpush1.bf16.msra.mxu0 %v6890
    %7905 = vmatprep.subr.bf16.mxu0 %v6885
    %7906 = vmatpush1.bf16.msra.mxu0 %v6884
    %7907 = vmatprep.subr.bf16.mxu0 %v6879
    %7908 = vmatpush1.bf16.msra.mxu0 %v6878
    %7909 = vmatprep.subr.bf16.mxu0 %v6873
    %7910 = vmatpush1.bf16.msra.mxu0 %v6872
    %7911 = vmatprep.subr.bf16.mxu0 %v6867
    %7912 = vmatpush1.bf16.msra.mxu0 %v6866
    %7913 = vmatprep.subr.bf16.mxu0 %v6861
    %7914 = vmatpush1.bf16.msra.mxu0 %v6860
    %7915 = vmatprep.subr.bf16.mxu0 %v6855
    %7916 = vmatpush1.bf16.msra.mxu0 %v6854
    %7917 = vmatprep.subr.bf16.mxu0 0
    %7918 = vmatpush2.bf16.msra.mxu0 0
    %7919 = vmatprep.subr.bf16.mxu0 0
    %7920 = vmatpush2.bf16.msra.mxu0 0
    %7921 = vmatprep.subr.bf16.mxu0 0
    %7922 = vmatpush2.bf16.msra.mxu0 0
    %7923 = vmatprep.subr.bf16.mxu0 0
    %7924 = vmatpush2.bf16.msra.mxu0 0
    %7925 = vmatprep.subr.bf16.mxu0 0
    %7926 = vmatpush2.bf16.msra.mxu0 0
    %7927 = vmatprep.subr.bf16.mxu0 0
    %7928 = vmatpush2.bf16.msra.mxu0 0
    %7929 = vmatprep.subr.bf16.mxu0 0
    %7930 = vmatpush2.bf16.msra.mxu0 0
    %7931 = vmatprep.subr.bf16.mxu0 0
    %7932 = vmatpush2.bf16.msra.mxu0 0
    %7933 = vmatprep.mubr.bf16.mxu0 0
    %7934 = vmatmul.mubr.bf16.gmra.mxu0 %v4227
    %v7935 = vpop.f32.mrf.mxu0
    %v7936 = vadd.f32 %v7893, %v7935
    %v7937 = vpop.f32.mrf.mxu0
    %v7938 = vadd.f32 %v7895, %v7937
    %v7939 = vpop.f32.mrf.mxu0
    %v7940 = vadd.f32 %v7897, %v7939
    %v7941 = vpop.f32.mrf.mxu0
    %v7942 = vadd.f32 %v7899, %v7941
    %7943 = vdwg.mxu0
    %7944 = vmatprep.subr.bf16.mxu0 %v6419
    %7945 = vmatpush1.bf16.msra.mxu0 %v6418
    %7946 = vmatprep.subr.bf16.mxu0 %v6413
    %7947 = vmatpush1.bf16.msra.mxu0 %v6412
    %7948 = vmatprep.subr.bf16.mxu0 %v6407
    %7949 = vmatpush1.bf16.msra.mxu0 %v6406
    %7950 = vmatprep.subr.bf16.mxu0 %v6401
    %7951 = vmatpush1.bf16.msra.mxu0 %v6400
    %7952 = vmatprep.subr.bf16.mxu0 %v6395
    %7953 = vmatpush1.bf16.msra.mxu0 %v6394
    %7954 = vmatprep.subr.bf16.mxu0 %v6389
    %7955 = vmatpush1.bf16.msra.mxu0 %v6388
    %7956 = vmatprep.subr.bf16.mxu0 %v6383
    %7957 = vmatpush1.bf16.msra.mxu0 %v6382
    %7958 = vmatprep.subr.bf16.mxu0 %v6377
    %7959 = vmatpush1.bf16.msra.mxu0 %v6376
    %7960 = vmatprep.subr.bf16.mxu0 %v6467
    %7961 = vmatpush2.bf16.msra.mxu0 %v6466
    %7962 = vmatprep.subr.bf16.mxu0 %v6461
    %7963 = vmatpush2.bf16.msra.mxu0 %v6460
    %7964 = vmatprep.subr.bf16.mxu0 %v6455
    %7965 = vmatpush2.bf16.msra.mxu0 %v6454
    %7966 = vmatprep.subr.bf16.mxu0 %v6449
    %7967 = vmatpush2.bf16.msra.mxu0 %v6448
    %7968 = vmatprep.subr.bf16.mxu0 %v6443
    %7969 = vmatpush2.bf16.msra.mxu0 %v6442
    %7970 = vmatprep.subr.bf16.mxu0 %v6437
    %7971 = vmatpush2.bf16.msra.mxu0 %v6436
    %7972 = vmatprep.subr.bf16.mxu0 %v6431
    %7973 = vmatpush2.bf16.msra.mxu0 %v6430
    %7974 = vmatprep.subr.bf16.mxu0 %v6425
    %7975 = vmatpush2.bf16.msra.mxu0 %v6424
    %7976 = vmatprep.mubr.bf16.mxu0 %v4218
    %7977 = vmatmul.mubr.bf16.gmra.mxu0 %v4217
    %v7978 = vpop.f32.mrf.mxu0
    %v7979 = vadd.f32 %v4777, %v7978
    %v7980 = vpop.f32.mrf.mxu0
    %v7981 = vadd.f32 %v4781, %v7980
    %v7982 = vpop.f32.mrf.mxu0
    %v7983 = vadd.f32 %v4777, %v7982
    %v7984 = vpop.f32.mrf.mxu0
    %v7985 = vadd.f32 %v4781, %v7984
    %7986 = vdwg.mxu0
    %7987 = vmatprep.subr.bf16.mxu0 %v6515
    %7988 = vmatpush1.bf16.msra.mxu0 %v6514
    %7989 = vmatprep.subr.bf16.mxu0 %v6509
    %7990 = vmatpush1.bf16.msra.mxu0 %v6508
    %7991 = vmatprep.subr.bf16.mxu0 %v6503
    %7992 = vmatpush1.bf16.msra.mxu0 %v6502
    %7993 = vmatprep.subr.bf16.mxu0 %v6497
    %7994 = vmatpush1.bf16.msra.mxu0 %v6496
    %7995 = vmatprep.subr.bf16.mxu0 %v6491
    %7996 = vmatpush1.bf16.msra.mxu0 %v6490
    %7997 = vmatprep.subr.bf16.mxu0 %v6485
    %7998 = vmatpush1.bf16.msra.mxu0 %v6484
    %7999 = vmatprep.subr.bf16.mxu0 %v6479
    %8000 = vmatpush1.bf16.msra.mxu0 %v6478
    %8001 = vmatprep.subr.bf16.mxu0 %v6473
    %8002 = vmatpush1.bf16.msra.mxu0 %v6472
    %8003 = vmatprep.subr.bf16.mxu0 %v6563
    %8004 = vmatpush2.bf16.msra.mxu0 %v6562
    %8005 = vmatprep.subr.bf16.mxu0 %v6557
    %8006 = vmatpush2.bf16.msra.mxu0 %v6556
    %8007 = vmatprep.subr.bf16.mxu0 %v6551
    %8008 = vmatpush2.bf16.msra.mxu0 %v6550
    %8009 = vmatprep.subr.bf16.mxu0 %v6545
    %8010 = vmatpush2.bf16.msra.mxu0 %v6544
    %8011 = vmatprep.subr.bf16.mxu0 %v6539
    %8012 = vmatpush2.bf16.msra.mxu0 %v6538
    %8013 = vmatprep.subr.bf16.mxu0 %v6533
    %8014 = vmatpush2.bf16.msra.mxu0 %v6532
    %8015 = vmatprep.subr.bf16.mxu0 %v6527
    %8016 = vmatpush2.bf16.msra.mxu0 %v6526
    %8017 = vmatprep.subr.bf16.mxu0 %v6521
    %8018 = vmatpush2.bf16.msra.mxu0 %v6520
    %8019 = vmatprep.mubr.bf16.mxu0 %v4220
    %8020 = vmatmul.mubr.bf16.gmra.mxu0 %v4219
    %v8021 = vpop.f32.mrf.mxu0
    %v8022 = vadd.f32 %v7979, %v8021
    %v8023 = vpop.f32.mrf.mxu0
    %v8024 = vadd.f32 %v7981, %v8023
    %v8025 = vpop.f32.mrf.mxu0
    %v8026 = vadd.f32 %v7983, %v8025
    %v8027 = vpop.f32.mrf.mxu0
    %v8028 = vadd.f32 %v7985, %v8027
    %8029 = vdwg.mxu0
    %8030 = vmatprep.subr.bf16.mxu0 %v6611
    %8031 = vmatpush1.bf16.msra.mxu0 %v6610
    %8032 = vmatprep.subr.bf16.mxu0 %v6605
    %8033 = vmatpush1.bf16.msra.mxu0 %v6604
    %8034 = vmatprep.subr.bf16.mxu0 %v6599
    %8035 = vmatpush1.bf16.msra.mxu0 %v6598
    %8036 = vmatprep.subr.bf16.mxu0 %v6593
    %8037 = vmatpush1.bf16.msra.mxu0 %v6592
    %8038 = vmatprep.subr.bf16.mxu0 %v6587
    %8039 = vmatpush1.bf16.msra.mxu0 %v6586
    %8040 = vmatprep.subr.bf16.mxu0 %v6581
    %8041 = vmatpush1.bf16.msra.mxu0 %v6580
    %8042 = vmatprep.subr.bf16.mxu0 %v6575
    %8043 = vmatpush1.bf16.msra.mxu0 %v6574
    %8044 = vmatprep.subr.bf16.mxu0 %v6569
    %8045 = vmatpush1.bf16.msra.mxu0 %v6568
    %8046 = vmatprep.subr.bf16.mxu0 %v6659
    %8047 = vmatpush2.bf16.msra.mxu0 %v6658
    %8048 = vmatprep.subr.bf16.mxu0 %v6653
    %8049 = vmatpush2.bf16.msra.mxu0 %v6652
    %8050 = vmatprep.subr.bf16.mxu0 %v6647
    %8051 = vmatpush2.bf16.msra.mxu0 %v6646
    %8052 = vmatprep.subr.bf16.mxu0 %v6641
    %8053 = vmatpush2.bf16.msra.mxu0 %v6640
    %8054 = vmatprep.subr.bf16.mxu0 %v6635
    %8055 = vmatpush2.bf16.msra.mxu0 %v6634
    %8056 = vmatprep.subr.bf16.mxu0 %v6629
    %8057 = vmatpush2.bf16.msra.mxu0 %v6628
    %8058 = vmatprep.subr.bf16.mxu0 %v6623
    %8059 = vmatpush2.bf16.msra.mxu0 %v6622
    %8060 = vmatprep.subr.bf16.mxu0 %v6617
    %8061 = vmatpush2.bf16.msra.mxu0 %v6616
    %8062 = vmatprep.mubr.bf16.mxu0 %v4222
    %8063 = vmatmul.mubr.bf16.gmra.mxu0 %v4221
    %v8064 = vpop.f32.mrf.mxu0
    %v8065 = vadd.f32 %v8022, %v8064
    %v8066 = vpop.f32.mrf.mxu0
    %v8067 = vadd.f32 %v8024, %v8066
    %v8068 = vpop.f32.mrf.mxu0
    %v8069 = vadd.f32 %v8026, %v8068
    %v8070 = vpop.f32.mrf.mxu0
    %v8071 = vadd.f32 %v8028, %v8070
    %8072 = vdwg.mxu0
    %8073 = vmatprep.subr.bf16.mxu0 %v6707
    %8074 = vmatpush1.bf16.msra.mxu0 %v6706
    %8075 = vmatprep.subr.bf16.mxu0 %v6701
    %8076 = vmatpush1.bf16.msra.mxu0 %v6700
    %8077 = vmatprep.subr.bf16.mxu0 %v6695
    %8078 = vmatpush1.bf16.msra.mxu0 %v6694
    %8079 = vmatprep.subr.bf16.mxu0 %v6689
    %8080 = vmatpush1.bf16.msra.mxu0 %v6688
    %8081 = vmatprep.subr.bf16.mxu0 %v6683
    %8082 = vmatpush1.bf16.msra.mxu0 %v6682
    %8083 = vmatprep.subr.bf16.mxu0 %v6677
    %8084 = vmatpush1.bf16.msra.mxu0 %v6676
    %8085 = vmatprep.subr.bf16.mxu0 %v6671
    %8086 = vmatpush1.bf16.msra.mxu0 %v6670
    %8087 = vmatprep.subr.bf16.mxu0 %v6665
    %8088 = vmatpush1.bf16.msra.mxu0 %v6664
    %8089 = vmatprep.subr.bf16.mxu0 %v6755
    %8090 = vmatpush2.bf16.msra.mxu0 %v6754
    %8091 = vmatprep.subr.bf16.mxu0 %v6749
    %8092 = vmatpush2.bf16.msra.mxu0 %v6748
    %8093 = vmatprep.subr.bf16.mxu0 %v6743
    %8094 = vmatpush2.bf16.msra.mxu0 %v6742
    %8095 = vmatprep.subr.bf16.mxu0 %v6737
    %8096 = vmatpush2.bf16.msra.mxu0 %v6736
    %8097 = vmatprep.subr.bf16.mxu0 %v6731
    %8098 = vmatpush2.bf16.msra.mxu0 %v6730
    %8099 = vmatprep.subr.bf16.mxu0 %v6725
    %8100 = vmatpush2.bf16.msra.mxu0 %v6724
    %8101 = vmatprep.subr.bf16.mxu0 %v6719
    %8102 = vmatpush2.bf16.msra.mxu0 %v6718
    %8103 = vmatprep.subr.bf16.mxu0 %v6713
    %8104 = vmatpush2.bf16.msra.mxu0 %v6712
    %8105 = vmatprep.mubr.bf16.mxu0 %v4224
    %8106 = vmatmul.mubr.bf16.gmra.mxu0 %v4223
    %v8107 = vpop.f32.mrf.mxu0
    %v8108 = vadd.f32 %v8065, %v8107
    %v8109 = vpop.f32.mrf.mxu0
    %v8110 = vadd.f32 %v8067, %v8109
    %v8111 = vpop.f32.mrf.mxu0
    %v8112 = vadd.f32 %v8069, %v8111
    %v8113 = vpop.f32.mrf.mxu0
    %v8114 = vadd.f32 %v8071, %v8113
    %8115 = vdwg.mxu0
    %8116 = vmatprep.subr.bf16.mxu0 %v6803
    %8117 = vmatpush1.bf16.msra.mxu0 %v6802
    %8118 = vmatprep.subr.bf16.mxu0 %v6797
    %8119 = vmatpush1.bf16.msra.mxu0 %v6796
    %8120 = vmatprep.subr.bf16.mxu0 %v6791
    %8121 = vmatpush1.bf16.msra.mxu0 %v6790
    %8122 = vmatprep.subr.bf16.mxu0 %v6785
    %8123 = vmatpush1.bf16.msra.mxu0 %v6784
    %8124 = vmatprep.subr.bf16.mxu0 %v6779
    %8125 = vmatpush1.bf16.msra.mxu0 %v6778
    %8126 = vmatprep.subr.bf16.mxu0 %v6773
    %8127 = vmatpush1.bf16.msra.mxu0 %v6772
    %8128 = vmatprep.subr.bf16.mxu0 %v6767
    %8129 = vmatpush1.bf16.msra.mxu0 %v6766
    %8130 = vmatprep.subr.bf16.mxu0 %v6761
    %8131 = vmatpush1.bf16.msra.mxu0 %v6760
    %8132 = vmatprep.subr.bf16.mxu0 %v6851
    %8133 = vmatpush2.bf16.msra.mxu0 %v6850
    %8134 = vmatprep.subr.bf16.mxu0 %v6845
    %8135 = vmatpush2.bf16.msra.mxu0 %v6844
    %8136 = vmatprep.subr.bf16.mxu0 %v6839
    %8137 = vmatpush2.bf16.msra.mxu0 %v6838
    %8138 = vmatprep.subr.bf16.mxu0 %v6833
    %8139 = vmatpush2.bf16.msra.mxu0 %v6832
    %8140 = vmatprep.subr.bf16.mxu0 %v6827
    %8141 = vmatpush2.bf16.msra.mxu0 %v6826
    %8142 = vmatprep.subr.bf16.mxu0 %v6821
    %8143 = vmatpush2.bf16.msra.mxu0 %v6820
    %8144 = vmatprep.subr.bf16.mxu0 %v6815
    %8145 = vmatpush2.bf16.msra.mxu0 %v6814
    %8146 = vmatprep.subr.bf16.mxu0 %v6809
    %8147 = vmatpush2.bf16.msra.mxu0 %v6808
    %8148 = vmatprep.mubr.bf16.mxu0 %v4226
    %8149 = vmatmul.mubr.bf16.gmra.mxu0 %v4225
    %v8150 = vpop.f32.mrf.mxu0
    %v8151 = vadd.f32 %v8108, %v8150
    %v8152 = vpop.f32.mrf.mxu0
    %v8153 = vadd.f32 %v8110, %v8152
    %v8154 = vpop.f32.mrf.mxu0
    %v8155 = vadd.f32 %v8112, %v8154
    %v8156 = vpop.f32.mrf.mxu0
    %v8157 = vadd.f32 %v8114, %v8156
    %8158 = vdwg.mxu0
    %8159 = vmatprep.subr.bf16.mxu0 %v6899
    %8160 = vmatpush1.bf16.msra.mxu0 %v6898
    %8161 = vmatprep.subr.bf16.mxu0 %v6893
    %8162 = vmatpush1.bf16.msra.mxu0 %v6892
    %8163 = vmatprep.subr.bf16.mxu0 %v6887
    %8164 = vmatpush1.bf16.msra.mxu0 %v6886
    %8165 = vmatprep.subr.bf16.mxu0 %v6881
    %8166 = vmatpush1.bf16.msra.mxu0 %v6880
    %8167 = vmatprep.subr.bf16.mxu0 %v6875
    %8168 = vmatpush1.bf16.msra.mxu0 %v6874
    %8169 = vmatprep.subr.bf16.mxu0 %v6869
    %8170 = vmatpush1.bf16.msra.mxu0 %v6868
    %8171 = vmatprep.subr.bf16.mxu0 %v6863
    %8172 = vmatpush1.bf16.msra.mxu0 %v6862
    %8173 = vmatprep.subr.bf16.mxu0 %v6857
    %8174 = vmatpush1.bf16.msra.mxu0 %v6856
    %8175 = vmatprep.subr.bf16.mxu0 0
    %8176 = vmatpush2.bf16.msra.mxu0 0
    %8177 = vmatprep.subr.bf16.mxu0 0
    %8178 = vmatpush2.bf16.msra.mxu0 0
    %8179 = vmatprep.subr.bf16.mxu0 0
    %8180 = vmatpush2.bf16.msra.mxu0 0
    %8181 = vmatprep.subr.bf16.mxu0 0
    %8182 = vmatpush2.bf16.msra.mxu0 0
    %8183 = vmatprep.subr.bf16.mxu0 0
    %8184 = vmatpush2.bf16.msra.mxu0 0
    %8185 = vmatprep.subr.bf16.mxu0 0
    %8186 = vmatpush2.bf16.msra.mxu0 0
    %8187 = vmatprep.subr.bf16.mxu0 0
    %8188 = vmatpush2.bf16.msra.mxu0 0
    %8189 = vmatprep.subr.bf16.mxu0 0
    %8190 = vmatpush2.bf16.msra.mxu0 0
    %8191 = vmatprep.mubr.bf16.mxu0 0
    %8192 = vmatmul.mubr.bf16.gmra.mxu0 %v4227
    %v8193 = vpop.f32.mrf.mxu0
    %v8194 = vadd.f32 %v8151, %v8193
    %v8195 = vpop.f32.mrf.mxu0
    %v8196 = vadd.f32 %v8153, %v8195
    %v8197 = vpop.f32.mrf.mxu0
    %v8198 = vadd.f32 %v8155, %v8197
    %v8199 = vpop.f32.mrf.mxu0
    %v8200 = vadd.f32 %v8157, %v8199
    %8201 = vdwg.mxu0
    %v8202 = vpack.c.bf16 %v7682, %v7678
    %v8203 = vpack.c.bf16 %v7684, %v7680
    %v8204 = vpack.c.bf16 %v7940, %v7936
    %v8205 = vpack.c.bf16 %v7942, %v7938
    %v8206 = vpack.c.bf16 %v8198, %v8194
    %v8207 = vpack.c.bf16 %v8200, %v8196
    %v8214 = vunpack.c.l.b16 %v8202
    %v8215 = vunpack.c.l.b16 %v8203
    %v8216 = vunpack.c.l.b16 %v8204
    %v8217 = vunpack.c.l.b16 %v8205
    %v8218 = vunpack.c.l.b16 %v8206
    %v8219 = vunpack.c.l.b16 %v8207
    %v8220 = vunpack.c.h.b16 %v8202
    %v8221 = vunpack.c.h.b16 %v8203
    %v8222 = vunpack.c.h.b16 %v8204
    %v8223 = vunpack.c.h.b16 %v8205
    %v8224 = vunpack.c.h.b16 %v8206
    %v8225 = vunpack.c.h.b16 %v8207
    %v8226 = vpack.c.b16 %v8215, %v8214
    %v8227 = vpack.c.b16 %v8217, %v8216
    %v8228 = vpack.c.b16 %v8219, %v8218
    %v8229 = vpack.c.b16 %v8221, %v8220
    %v8230 = vpack.c.b16 %v8223, %v8222
    %v8231 = vpack.c.b16 %v8225, %v8224
    %8238 = vst [vmem:[#allocation11] sm:$0xff] %v8226
    %8239 = vst [vmem:[#allocation11 + $0x8] sm:$0xff] %v8227
    %8240 = vst [vmem:[#allocation11 + $0x10] sm:$0xff] %v8228
    %8241 = vst [vmem:[#allocation11 + $0x18] sm:$0xff] %v8229
    %8242 = vst [vmem:[#allocation11 + $0x20] sm:$0xff] %v8230
    %8243 = vst [vmem:[#allocation11 + $0x28] sm:$0xff] %v8231
    // Predicated region
    $region42: #{tpu_custom_call.1} parent=1 // pred_check
      _
    $region43: #{tpu_custom_call.1} parent=1 // pred_check_branch
      %8245 = sbr.rel (0) target = $region45
    $region44: #{tpu_custom_call.1} parent=1 // pred_region
      %s8247 = ssub.s32 768, 768
      %8248 = vsyncadd [#allocation4], %s8247
      %s8249 = sshll.u32 [#allocation11], 4
      %s8250 = int_to_ptr.vmem [resolvable:$true] %s8249
      %8255 = dma.vmem_to_hbm [thread:$0]  %s8250, 768, %s5, [#allocation4], 384, 384, 24
    $region45: #{tpu_custom_call.1} parent=1 // pred_fallthru
      _
    // Predicated region
    $region46: #{tpu_custom_call.1} parent=1 // pred_check
      _
    $region47: #{tpu_custom_call.1} parent=1 // pred_check_branch
      %8257 = sbr.rel (0) target = $region49
    $region48: #{tpu_custom_call.1} parent=1 // pred_region
      %8258 = dma.done [#allocation4], 768
    $region49: #{tpu_custom_call.1} parent=1 // pred_fallthru
      _
    %8259 = vsyncpa [#allocation3], 1
    %8260 = vsyncpa [#allocation6], 1
    %8261 = vsyncpa [#allocation9], 1
    %8262 = vsyncpa [#allocation4], 1

</llo_original>
